<compile_context>
chip_gen: v7x
topology: tpu7x:2x2x1
jax: 0.10.0
libtpu: 0.0.40
codegen_flags: <defaults>
</compile_context>

<pallas_src>
import functools
import math

import jax
import jax.numpy as jnp
from jax import lax
from jax.experimental import pallas as pl
from jax.experimental.pallas import tpu as pltpu

VOCAB_SIZE = 5755
LN_EPS = 1e-5


def _round_up(x, m):
    return ((x + m - 1) // m) * m


def _vmem_limit_bytes(est_bytes):
    # Explicit scoped-VMEM limit; never below the 32 MiB default, never above
    # 64 MiB (v7x physical).  For the small demo this stays at 32 MiB.
    return int(min(64 * 1024 * 1024, max(32 * 1024 * 1024, 2 * int(est_bytes))))


def _wspec(block_shape, index_map, buffers):
    """BlockSpec for grid-constant operands (weights / biases / LN params).

    buffers=1 keeps a single VMEM buffer (the block never changes across the
    grid, so default double-buffering only wastes VMEM).  buffers=None keeps
    the default pipelining."""
    if buffers is not None:
        try:
            return pl.BlockSpec(block_shape, index_map,
                                pipeline_mode=pl.Buffered(buffers))
        except Exception:
            pass  # older BlockSpec without pipeline_mode / Buffered(1) support
    return pl.BlockSpec(block_shape, index_map)


def _pick_block_b(B, S):
    """Batches per MHA grid step: keep >=2 grid steps (megacore) and aim for
    ~256 token rows per step so projection matmuls have a decent MXU M."""
    if B <= 1:
        return 1
    max_by_grid = max(1, B // 2)
    max_by_rows = max(1, 256 // max(S, 1))
    return max(1, min(max_by_grid, max_by_rows))


# --------------------------------------------------------------------------
# Fused multi-head self-attention + residual + LayerNorm.
# Grid = (batch blocks,), all heads handled inside one step with stacked
# weights.  rela_P=False path of the PyTorch module.
# --------------------------------------------------------------------------
def _mha_ln_kernel(x_ref, bias_ref, wq_ref, bq_ref, wk_ref, bk_ref, wv_ref,
                   bv_ref, wo_ref, bo_ref, g_ref, b_ref, o_ref, ctx_ref, *,
                   scale, num_heads, d_head, seq_len, block_b, compute_dtype,
                   eps):
    cd = compute_dtype
    S, Dh, H = seq_len, d_head, num_heads

    x3 = x_ref[...]                                        # (Bt, S, D) f32
    xf = x3.reshape(block_b * S, x3.shape[-1]).astype(cd)  # (Bt*S, D)

    # Wide QKV projections: K = D, N = H*Dh (256-multiples in realistic dims).
    q = jnp.dot(xf, wq_ref[...], preferred_element_type=jnp.float32) + bq_ref[...]
    k = jnp.dot(xf, wk_ref[...], preferred_element_type=jnp.float32) + bk_ref[...]
    v = jnp.dot(xf, wv_ref[...], preferred_element_type=jnp.float32) + bv_ref[...]

    for bb in range(block_b):
        bias = bias_ref[bb]                                # (1, S) additive
        rows = slice(bb * S, (bb + 1) * S)
        for h in range(H):
            cols = slice(h * Dh, (h + 1) * Dh)
            qh = q[rows, cols].astype(cd)
            kh = k[rows, cols].astype(cd)
            vh = v[rows, cols].astype(cd)
            # scores[q, k] = <q_q, k_k> (contract last dims, no .T)
            s = lax.dot_general(qh, kh,
                                dimension_numbers=(((1,), (1,)), ((), ())),
                                preferred_element_type=jnp.float32)
            s = s * scale + bias                           # masked keys -> -1e30
            m = jnp.max(s, axis=-1, keepdims=True)
            p = jnp.exp(s - m)
            l = jnp.sum(p, axis=-1, keepdims=True)
            # Deferred normalization: un-normalized context, one (S,1) recip.
            ctx = jnp.dot(p.astype(cd), vh, preferred_element_type=jnp.float32)
            ctx_ref[rows, cols] = ctx * pl.reciprocal(l, approx=True)

    # Single output projection over the full (H*Dh) contraction depth.
    proj = jnp.dot(ctx_ref[...].astype(cd), wo_ref[...],
                   preferred_element_type=jnp.float32) + bo_ref[...]

    # Fused residual add + LayerNorm.
    s_res = x3.reshape(block_b * S, -1).astype(jnp.float32) + proj
    mu = jnp.mean(s_res, axis=-1, keepdims=True)
    c = s_res - mu
    var = jnp.mean(c * c, axis=-1, keepdims=True)
    y = c * lax.rsqrt(var + eps) * g_ref[...] + b_ref[...]
    o_ref[...] = y.reshape(x3.shape).astype(o_ref.dtype)


def attention_layer_norm(x, mask_bias, p, gamma, beta, *, num_heads,
                         compute_dtype=jnp.bfloat16, weight_buffers=1,
                         block_b=None):
    """x: (B, S, D) f32, mask_bias: (B, 1, S) f32 additive key-mask bias.
    Returns LN(x + MHA(x)) with shape (B, S, D)."""
    B, S, D = x.shape
    HD = p["wq"].shape[1]
    d_head = HD // num_heads
    scale = 1.0 / math.sqrt(d_head)
    if block_b is None:
        block_b = _pick_block_b(B, S)
    grid_b = pl.cdiv(B, block_b)

    weight_bytes = sum(int(w.size) * w.dtype.itemsize for w in
                       (p["wq"], p["bq"], p["wk"], p["bk"], p["wv"], p["bv"],
                        p["wo"], p["bo"], gamma, beta))
    act_bytes = 2 * block_b * S * D * 4 * 2          # x/out tiles, double buf
    scratch_bytes = block_b * S * HD * 4 + 3 * block_b * S * HD * 4

    flops = int(B * (6 * S * D * HD + 4 * S * S * HD + 2 * S * HD * D))
    transcendentals = int(B * num_heads * S * S)
    bytes_accessed = int(2 * x.size * x.dtype.itemsize
                         + mask_bias.size * mask_bias.dtype.itemsize
                         + weight_bytes)

    kernel = functools.partial(_mha_ln_kernel, scale=scale,
                               num_heads=num_heads, d_head=d_head, seq_len=S,
                               block_b=block_b, compute_dtype=compute_dtype,
                               eps=LN_EPS)
    return pl.pallas_call(
        kernel,
        out_shape=jax.ShapeDtypeStruct((B, S, D), x.dtype),
        grid_spec=pltpu.PrefetchScalarGridSpec(
            num_scalar_prefetch=0,
            grid=(grid_b,),
            in_specs=[
                pl.BlockSpec((block_b, S, D), lambda b: (b, 0, 0)),   # x
                pl.BlockSpec((block_b, 1, S), lambda b: (b, 0, 0)),   # mask bias
                _wspec((D, HD), lambda b: (0, 0), weight_buffers),    # Wq
                _wspec((1, HD), lambda b: (0, 0), weight_buffers),    # bq
                _wspec((D, HD), lambda b: (0, 0), weight_buffers),    # Wk
                _wspec((1, HD), lambda b: (0, 0), weight_buffers),    # bk
                _wspec((D, HD), lambda b: (0, 0), weight_buffers),    # Wv
                _wspec((1, HD), lambda b: (0, 0), weight_buffers),    # bv
                _wspec((HD, D), lambda b: (0, 0), weight_buffers),    # Wo
                _wspec((1, D), lambda b: (0, 0), weight_buffers),     # bo
                _wspec((1, D), lambda b: (0, 0), weight_buffers),     # ln gamma
                _wspec((1, D), lambda b: (0, 0), weight_buffers),     # ln beta
            ],
            out_specs=pl.BlockSpec((block_b, S, D), lambda b: (b, 0, 0)),
            scratch_shapes=[pltpu.VMEM((block_b * S, HD), jnp.float32)],
        ),
        compiler_params=pltpu.CompilerParams(
            dimension_semantics=("parallel",),
            vmem_limit_bytes=_vmem_limit_bytes(weight_bytes + act_bytes
                                               + scratch_bytes)),
        cost_estimate=pl.CostEstimate(flops=flops,
                                      transcendentals=transcendentals,
                                      bytes_accessed=bytes_accessed),
    )(x, mask_bias, p["wq"], p["bq"], p["wk"], p["bk"], p["wv"], p["bv"],
      p["wo"], p["bo"], gamma, beta)


# --------------------------------------------------------------------------
# Fused FeedForward + residual + LayerNorm:  out = LN(x + fc2(relu(fc1(x)))).
# Resident-weight path (small d_ff) and d_ff-tiled path (large d_ff / v7x).
# --------------------------------------------------------------------------
def _ffn_ln_kernel(x_ref, w1_ref, b1_ref, w2_ref, b2_ref, g_ref, b_ref, o_ref,
                   *, compute_dtype, eps):
    cd = compute_dtype
    x = x_ref[...]
    h = jnp.dot(x.astype(cd), w1_ref[...],
                preferred_element_type=jnp.float32) + b1_ref[...]
    h = jnp.maximum(h, 0.0)
    y = jnp.dot(h.astype(cd), w2_ref[...],
                preferred_element_type=jnp.float32) + b2_ref[...]
    s = x.astype(jnp.float32) + y
    mu = jnp.mean(s, axis=-1, keepdims=True)
    c = s - mu
    var = jnp.mean(c * c, axis=-1, keepdims=True)
    o_ref[...] = (c * lax.rsqrt(var + eps) * g_ref[...]
                  + b_ref[...]).astype(o_ref.dtype)


def _ffn_ln_tiled_kernel(x_ref, w1_ref, b1_ref, w2_ref, b2_ref, g_ref, b_ref,
                         o_ref, acc_ref, *, compute_dtype, eps):
    cd = compute_dtype
    j = pl.program_id(1)

    @pl.when(j == 0)
    def _():
        acc_ref[...] = jnp.zeros_like(acc_ref)

    x = x_ref[...]
    h = jnp.dot(x.astype(cd), w1_ref[...],
                preferred_element_type=jnp.float32) + b1_ref[...]
    h = jnp.maximum(h, 0.0)
    acc_ref[...] += jnp.dot(h.astype(cd), w2_ref[...],
                            preferred_element_type=jnp.float32)

    @pl.when(j == pl.num_programs(1) - 1)
    def _():
        s = x.astype(jnp.float32) + acc_ref[...] + b2_ref[...]
        mu = jnp.mean(s, axis=-1, keepdims=True)
        c = s - mu
        var = jnp.mean(c * c, axis=-1, keepdims=True)
        o_ref[...] = (c * lax.rsqrt(var + eps) * g_ref[...]
                      + b_ref[...]).astype(o_ref.dtype)


def _pick_dff_tile(d_ff, want):
    """Largest multiple-of-128 divisor of d_ff that is <= want (or None)."""
    want = min(want, d_ff)
    t = want - want % 128
    while t >= 128:
        if d_ff % t == 0:
            return t
        t -= 128
    return None


def feed_forward_layer_norm(x, p, gamma, beta, *, compute_dtype=jnp.bfloat16,
                            tm_max=512, weight_buffers=1, dff_tile=None):
    """Returns LN(x + FFN(x)); x: (B, S, D)."""
    B, S, D = x.shape
    d_ff = p["w1"].shape[1]
    n = B * S
    x2 = x.reshape(n, D)                        # metadata-only reshape

    if n >= 16:
        tm = max(8, min(tm_max, _round_up(pl.cdiv(n, 2), 8)))  # >=2 grid steps
    else:
        tm = n
    grid_m = pl.cdiv(n, tm)

    weight_bytes = sum(int(w.size) * w.dtype.itemsize for w in
                       (p["w1"], p["b1"], p["w2"], p["b2"], gamma, beta))
    # Auto-select the d_ff-tiled path when resident weights get large (v7x).
    if dff_tile is None and weight_bytes > 16 * 1024 * 1024:
        dff_tile = 2048
    tff = _pick_dff_tile(d_ff, dff_tile) if dff_tile is not None else None

    flops = int(4 * n * D * d_ff)
    bytes_accessed = int(2 * n * D * x.dtype.itemsize + weight_bytes)
    cost = pl.CostEstimate(flops=flops, transcendentals=0,
                           bytes_accessed=bytes_accessed)

    if tff is None:
        # Resident-weight path: whole w1/w2 stay in VMEM across the grid.
        est = weight_bytes + tm * d_ff * 4 + 2 * 2 * tm * D * 4
        out = pl.pallas_call(
            functools.partial(_ffn_ln_kernel, compute_dtype=compute_dtype,
                              eps=LN_EPS),
            out_shape=jax.ShapeDtypeStruct((n, D), x.dtype),
            grid_spec=pltpu.PrefetchScalarGridSpec(
                num_scalar_prefetch=0,
                grid=(grid_m,),
                in_specs=[
                    pl.BlockSpec((tm, D), lambda i: (i, 0)),
                    _wspec((D, d_ff), lambda i: (0, 0), weight_buffers),
                    _wspec((1, d_ff), lambda i: (0, 0), weight_buffers),
                    _wspec((d_ff, D), lambda i: (0, 0), weight_buffers),
                    _wspec((1, D), lambda i: (0, 0), weight_buffers),
                    _wspec((1, D), lambda i: (0, 0), weight_buffers),
                    _wspec((1, D), lambda i: (0, 0), weight_buffers),
                ],
                out_specs=pl.BlockSpec((tm, D), lambda i: (i, 0)),
            ),
            compiler_params=pltpu.CompilerParams(
                dimension_semantics=("parallel",),
                vmem_limit_bytes=_vmem_limit_bytes(est)),
            cost_estimate=cost,
        )(x2, p["w1"], p["b1"], p["w2"], p["b2"],
          gamma.reshape(1, D), beta.reshape(1, D))
    else:
        # d_ff-tiled path: "arbitrary" chunk axis, (tm, D) f32 accumulator.
        n_ff = d_ff // tff
        est = (2 * (D * tff + tff * D) * p["w1"].dtype.itemsize
               + tm * tff * 4 + tm * D * 4 + 2 * 2 * tm * D * 4)
        out = pl.pallas_call(
            functools.partial(_ffn_ln_tiled_kernel,
                              compute_dtype=compute_dtype, eps=LN_EPS),
            out_shape=jax.ShapeDtypeStruct((n, D), x.dtype),
            grid_spec=pltpu.PrefetchScalarGridSpec(
                num_scalar_prefetch=0,
                grid=(grid_m, n_ff),
                in_specs=[
                    pl.BlockSpec((tm, D), lambda i, j: (i, 0)),
                    pl.BlockSpec((D, tff), lambda i, j: (0, j)),
                    pl.BlockSpec((1, tff), lambda i, j: (0, j)),
                    pl.BlockSpec((tff, D), lambda i, j: (j, 0)),
                    _wspec((1, D), lambda i, j: (0, 0), weight_buffers),
                    _wspec((1, D), lambda i, j: (0, 0), weight_buffers),
                    _wspec((1, D), lambda i, j: (0, 0), weight_buffers),
                ],
                out_specs=pl.BlockSpec((tm, D), lambda i, j: (i, 0)),
                scratch_shapes=[pltpu.VMEM((tm, D), jnp.float32)],
            ),
            compiler_params=pltpu.CompilerParams(
                dimension_semantics=("parallel", "arbitrary"),
                vmem_limit_bytes=_vmem_limit_bytes(est)),
            cost_estimate=cost,
        )(x2, p["w1"], p["b1"], p["w2"], p["b2"],
          gamma.reshape(1, D), beta.reshape(1, D))
    return out.reshape(B, S, D)


# --------------------------------------------------------------------------
# Full encoder forward.
# --------------------------------------------------------------------------
@functools.partial(jax.jit, static_argnames=("num_heads", "compute_dtype",
                                             "weight_buffers", "ffn_dff_tile"))
def encoder_forward(params, src, num_heads, compute_dtype=jnp.bfloat16,
                    weight_buffers=1, ffn_dff_tile=None):
    seq = src.shape[1]
    x = jnp.take(params["embedding"], src, axis=0)            # (B, S, D)
    x = x + params["pe"][None, :seq, :]                       # positional enc.
    # Additive key-mask bias, computed once (0 for real tokens, -1e30 for pad).
    mask_bias = jnp.where(src != 0, 0.0, -1e30).astype(jnp.float32)[:, None, :]
    for layer in params["layers"]:
        x = attention_layer_norm(x, mask_bias, layer["attn"], layer["ln1_g"],
                                 layer["ln1_b"], num_heads=num_heads,
                                 compute_dtype=compute_dtype,
                                 weight_buffers=weight_buffers)
        x = feed_forward_layer_norm(x, layer["ffn"], layer["ln2_g"],
                                    layer["ln2_b"],
                                    compute_dtype=compute_dtype,
                                    weight_buffers=weight_buffers,
                                    dff_tile=ffn_dff_tile)
    return x


# --------------------------------------------------------------------------
# Parameter init (mirrors nn.Linear / nn.Embedding / nn.LayerNorm defaults).
# Per-head Q/K/V weights are stacked along the output dim: (D, H*Dh).
# Weights are stored as [in, out] and pre-cast to the MXU compute dtype.
# --------------------------------------------------------------------------
def _positional_encoding(max_len, d_model):
    position = jnp.arange(max_len, dtype=jnp.float32)[:, None]
    div_term = jnp.exp(jnp.arange(0, d_model, 2, dtype=jnp.float32)
                       * (-math.log(10000.0) / d_model))
    pe = jnp.zeros((max_len, d_model), jnp.float32)
    pe = pe.at[:, 0::2].set(jnp.sin(position * div_term))
    pe = pe.at[:, 1::2].set(jnp.cos(position * div_term))
    return pe


def init_params(key, *, num_layers, dim_in, d_model, num_heads, d_ff, max_len,
                vocab_size=VOCAB_SIZE, weight_dtype=jnp.bfloat16):
    kemb, klayers = jax.random.split(key)
    embedding = jax.random.normal(kemb, (vocab_size, dim_in), jnp.float32)
    pe = _positional_encoding(max_len, dim_in)

    def linear(k, fan_in, fan_out):
        kw, kb = jax.random.split(k)
        bound = 1.0 / math.sqrt(fan_in)
        w = jax.random.uniform(kw, (fan_in, fan_out), jnp.float32, -bound, bound)
        b = jax.random.uniform(kb, (1, fan_out), jnp.float32, -bound, bound)
        return w.astype(weight_dtype), b

    def head_stack(k):
        ws, bs = [], []
        for hk in jax.random.split(k, num_heads):
            w, b = linear(hk, dim_in, d_model)   # each head is d_model wide
            ws.append(w)
            bs.append(b)
        return jnp.concatenate(ws, axis=1), jnp.concatenate(bs, axis=1)

    layers = []
    for lk in jax.random.split(klayers, num_layers):
        kq, kk_, kv, ko, k1, k2 = jax.random.split(lk, 6)
        wq, bq = head_stack(kq)                  # (D, H*Dh), (1, H*Dh)
        wk, bk = head_stack(kk_)
        wv, bv = head_stack(kv)
        wo, bo = linear(ko, num_heads * d_model, dim_in)   # (H*Dh, D), (1, D)
        w1, b1 = linear(k1, d_model, d_ff)
        w2, b2 = linear(k2, d_ff, d_model)
        layers.append({
            "attn": {"wq": wq, "bq": bq, "wk": wk, "bk": bk, "wv": wv,
                     "bv": bv, "wo": wo, "bo": bo},
            "ln1_g": jnp.ones((1, d_model), jnp.float32),
            "ln1_b": jnp.zeros((1, d_model), jnp.float32),
            "ffn": {"w1": w1, "b1": b1, "w2": w2, "b2": b2},
            "ln2_g": jnp.ones((1, d_model), jnp.float32),
            "ln2_b": jnp.zeros((1, d_model), jnp.float32),
        })
    return {"embedding": embedding, "pe": pe, "layers": layers}


# --------------------------------------------------------------------------
# Pure-JAX reference forward (same bf16 matmul casts as the kernels).
# --------------------------------------------------------------------------
def _mm(a, b, cd):
    return jnp.dot(a.astype(cd), b.astype(cd),
                   preferred_element_type=jnp.float32)


def _layer_norm_ref(x, g, b, eps=LN_EPS):
    mu = jnp.mean(x, axis=-1, keepdims=True)
    c = x - mu
    var = jnp.mean(c * c, axis=-1, keepdims=True)
    return c * lax.rsqrt(var + eps) * g + b


def reference_forward(params, src, num_heads, compute_dtype=jnp.bfloat16):
    cd = compute_dtype
    seq = src.shape[1]
    x = jnp.take(params["embedding"], src, axis=0) + params["pe"][None, :seq, :]
    bias = jnp.where(src != 0, 0.0, -1e30).astype(jnp.float32)[:, None, :]
    B, S, D = x.shape
    for layer in params["layers"]:
        a = layer["attn"]
        HD = a["wq"].shape[1]
        Dh = HD // num_heads
        scale = 1.0 / math.sqrt(Dh)
        q = _mm(x, a["wq"], cd) + a["bq"]
        k = _mm(x, a["wk"], cd) + a["bk"]
        v = _mm(x, a["wv"], cd) + a["bv"]
        qh = q.reshape(B, S, num_heads, Dh)
        kh = k.reshape(B, S, num_heads, Dh)
        vh = v.reshape(B, S, num_heads, Dh)
        s = jnp.einsum("bqhd,bkhd->bhqk", qh.astype(cd), kh.astype(cd),
                       preferred_element_type=jnp.float32) * scale
        s = s + bias[:, :, None, :]
        p = jax.nn.softmax(s, axis=-1)
        ctx = jnp.einsum("bhqk,bkhd->bqhd", p.astype(cd), vh.astype(cd),
                         preferred_element_type=jnp.float32).reshape(B, S, HD)
        attn_out = _mm(ctx, a["wo"], cd) + a["bo"]
        x = _layer_norm_ref(x + attn_out, layer["ln1_g"], layer["ln1_b"])
        f = layer["ffn"]
        h1 = jnp.maximum(_mm(x, f["w1"], cd) + f["b1"], 0.0)
        ff = _mm(h1, f["w2"], cd) + f["b2"]
        x = _layer_norm_ref(x + ff, layer["ln2_g"], layer["ln2_b"])
    return x


if __name__ == "__main__":
    num_layers = 2
    batch, seq = 2, 16
    dim_in = dim_model = 128          # lane-dense (multiple of 128) features
    num_heads = 2                     # per-head width == dim_model (per spec)
    dim_feedforward = 256
    max_len = 64

    key = jax.random.PRNGKey(0)
    kparam, ktok = jax.random.split(key)
    params = init_params(kparam, num_layers=num_layers, dim_in=dim_in,
                         d_model=dim_model, num_heads=num_heads,
                         d_ff=dim_feedforward, max_len=max_len)
    src = jax.random.randint(ktok, (batch, seq), 1, VOCAB_SIZE, dtype=jnp.int32)
    src = src.at[1, seq - 3:].set(0)   # padding tokens -> exercises src mask

    def _run(wb, **kw):
        return jax.block_until_ready(
            encoder_forward(params, src, num_heads=num_heads,
                            compute_dtype=jnp.bfloat16, weight_buffers=wb,
                            **kw))

    try:
        out = _run(1)
        wb_used = 1
    except Exception:
        # Fallback if single-buffered weight specs (pl.Buffered(1)) are not
        # supported by this jax build: keep default double-buffered pipelining.
        out = _run(None)
        wb_used = None

    # Also exercise the d_ff-tiled FFN path (auto-selected for large d_ff).
    try:
        out_tiled = _run(wb_used, ffn_dff_tile=128)
    except Exception:
        out_tiled = _run(None, ffn_dff_tile=128)

    ref = reference_forward(params, src, num_heads=num_heads,
                            compute_dtype=jnp.bfloat16)
    assert out.shape == (batch, seq, dim_model)
    assert bool(jnp.all(jnp.isfinite(out)))
    err1 = float(jnp.max(jnp.abs(out - ref)))
    err2 = float(jnp.max(jnp.abs(out_tiled - ref)))
    assert jnp.allclose(out, ref, atol=3e-2, rtol=3e-2), f"max|diff|={err1}"
    assert jnp.allclose(out_tiled, ref, atol=3e-2, rtol=3e-2), f"max|diff|={err2}"

    print("KERNEL_OK")
</pallas_src>

<mosaic_0001>
module attributes {stable_mosaic.version = 11 : i64} {
  func.func @_ffn_ln_kernel(%arg0: i32, %arg1: memref<16x128xf32, #tpu.memory_space<vmem>>, %arg2: memref<128x256xbf16, #tpu.memory_space<vmem>>, %arg3: memref<1x256xf32, #tpu.memory_space<vmem>>, %arg4: memref<256x128xbf16, #tpu.memory_space<vmem>>, %arg5: memref<1x128xf32, #tpu.memory_space<vmem>>, %arg6: memref<1x128xf32, #tpu.memory_space<vmem>>, %arg7: memref<1x128xf32, #tpu.memory_space<vmem>>, %arg8: memref<16x128xf32, #tpu.memory_space<vmem>>) attributes {dimension_semantics = [#tpu.dimension_semantics<parallel>], iteration_bounds = array<i64: 2>, scalar_prefetch = 0 : i64, scratch_operands = 0 : i64, tpu.core_type = #tpu.core_type<tc>, window_params = [{transform_indices = @transform_0, window_bounds = array<i64: 16, 128>}, {pipeline_mode = #tpu.pipeline_mode<synchronous>, transform_indices = @transform_1, window_bounds = array<i64: 128, 256>}, {pipeline_mode = #tpu.pipeline_mode<synchronous>, transform_indices = @transform_2, window_bounds = array<i64: 1, 256>}, {pipeline_mode = #tpu.pipeline_mode<synchronous>, transform_indices = @transform_3, window_bounds = array<i64: 256, 128>}, {pipeline_mode = #tpu.pipeline_mode<synchronous>, transform_indices = @transform_4, window_bounds = array<i64: 1, 128>}, {pipeline_mode = #tpu.pipeline_mode<synchronous>, transform_indices = @transform_5, window_bounds = array<i64: 1, 128>}, {pipeline_mode = #tpu.pipeline_mode<synchronous>, transform_indices = @transform_6, window_bounds = array<i64: 1, 128>}, {transform_indices = @transform_7, window_bounds = array<i64: 16, 128>}]} {
    %c0 = arith.constant 0 : index
    %c0_0 = arith.constant 0 : index
    %0 = vector.load %arg1[%c0, %c0_0] : memref<16x128xf32, #tpu.memory_space<vmem>>, vector<16x128xf32>
    %1 = arith.truncf %0 : vector<16x128xf32> to vector<16x128xbf16>
    %c0_1 = arith.constant 0 : index
    %c0_2 = arith.constant 0 : index
    %2 = vector.load %arg2[%c0_1, %c0_2] : memref<128x256xbf16, #tpu.memory_space<vmem>>, vector<128x256xbf16>
    %cst = arith.constant dense<0.000000e+00> : vector<16x256xf32>
    %3 = tpu.matmul %1, %2, %cst {dimension_numbers = #tpu.dot_dimension_numbers<[1], [0], [0], [1], [0, 0, 1, 1], [], []>} : vector<16x128xbf16>, vector<128x256xbf16>, vector<16x256xf32> -> vector<16x256xf32>
    %c0_3 = arith.constant 0 : index
    %c0_4 = arith.constant 0 : index
    %4 = vector.load %arg3[%c0_3, %c0_4] : memref<1x256xf32, #tpu.memory_space<vmem>>, vector<1x256xf32>
    %5 = vector.broadcast %4 : vector<1x256xf32> to vector<16x256xf32>
    %6 = arith.addf %3, %5 : vector<16x256xf32>
    %cst_5 = arith.constant 0.000000e+00 : f32
    %7 = vector.broadcast %cst_5 : f32 to vector<16x256xf32>
    %8 = arith.maximumf %6, %7 : vector<16x256xf32>
    %9 = arith.truncf %8 : vector<16x256xf32> to vector<16x256xbf16>
    %c0_6 = arith.constant 0 : index
    %c0_7 = arith.constant 0 : index
    %10 = vector.load %arg4[%c0_6, %c0_7] : memref<256x128xbf16, #tpu.memory_space<vmem>>, vector<256x128xbf16>
    %cst_8 = arith.constant dense<0.000000e+00> : vector<16x128xf32>
    %11 = tpu.matmul %9, %10, %cst_8 {dimension_numbers = #tpu.dot_dimension_numbers<[1], [0], [0], [1], [0, 0, 1, 1], [], []>} : vector<16x256xbf16>, vector<256x128xbf16>, vector<16x128xf32> -> vector<16x128xf32>
    %c0_9 = arith.constant 0 : index
    %c0_10 = arith.constant 0 : index
    %12 = vector.load %arg5[%c0_9, %c0_10] : memref<1x128xf32, #tpu.memory_space<vmem>>, vector<1x128xf32>
    %13 = vector.broadcast %12 : vector<1x128xf32> to vector<16x128xf32>
    %14 = arith.addf %11, %13 : vector<16x128xf32>
    %15 = arith.addf %0, %14 : vector<16x128xf32>
    %cst_11 = arith.constant dense<0.000000e+00> : vector<16xf32>
    %16 = vector.multi_reduction <add>, %15, %cst_11 [1] : vector<16x128xf32> to vector<16xf32>
    %17 = vector.shape_cast %16 : vector<16xf32> to vector<16x1xf32>
    %cst_12 = arith.constant 1.280000e+02 : f32
    %18 = vector.broadcast %cst_12 : f32 to vector<16x1xf32>
    %19 = arith.divf %17, %18 : vector<16x1xf32>
    %20 = vector.broadcast %19 : vector<16x1xf32> to vector<16x128xf32>
    %21 = arith.subf %15, %20 : vector<16x128xf32>
    %22 = arith.mulf %21, %21 : vector<16x128xf32>
    %cst_13 = arith.constant dense<0.000000e+00> : vector<16xf32>
    %23 = vector.multi_reduction <add>, %22, %cst_13 [1] : vector<16x128xf32> to vector<16xf32>
    %24 = vector.shape_cast %23 : vector<16xf32> to vector<16x1xf32>
    %cst_14 = arith.constant 1.280000e+02 : f32
    %25 = vector.broadcast %cst_14 : f32 to vector<16x1xf32>
    %26 = arith.divf %24, %25 : vector<16x1xf32>
    %cst_15 = arith.constant 9.99999974E-6 : f32
    %27 = vector.broadcast %cst_15 : f32 to vector<16x1xf32>
    %28 = arith.addf %26, %27 : vector<16x1xf32>
    %29 = math.rsqrt %28 : vector<16x1xf32>
    %30 = vector.broadcast %29 : vector<16x1xf32> to vector<16x128xf32>
    %31 = arith.mulf %21, %30 : vector<16x128xf32>
    %c0_16 = arith.constant 0 : index
    %c0_17 = arith.constant 0 : index
    %32 = vector.load %arg6[%c0_16, %c0_17] : memref<1x128xf32, #tpu.memory_space<vmem>>, vector<1x128xf32>
    %33 = vector.broadcast %32 : vector<1x128xf32> to vector<16x128xf32>
    %34 = arith.mulf %31, %33 : vector<16x128xf32>
    %c0_18 = arith.constant 0 : index
    %c0_19 = arith.constant 0 : index
    %35 = vector.load %arg7[%c0_18, %c0_19] : memref<1x128xf32, #tpu.memory_space<vmem>>, vector<1x128xf32>
    %36 = vector.broadcast %35 : vector<1x128xf32> to vector<16x128xf32>
    %37 = arith.addf %34, %36 : vector<16x128xf32>
    %c0_20 = arith.constant 0 : index
    %c0_21 = arith.constant 0 : index
    %38 = vector.load %arg8[%c0_20, %c0_21] : memref<16x128xf32, #tpu.memory_space<vmem>>, vector<16x128xf32>
    tpu.vector_store %arg8[%c0_20, %c0_21], %37 {strides = array<i32>} : memref<16x128xf32, #tpu.memory_space<vmem>>, vector<16x128xf32>,
    return
  }
  func.func @transform_0(%arg0: i32) -> (i32, i32) {
    %c0_i32 = arith.constant 0 : i32
    %c0_i32_0 = arith.constant 0 : i32
    return %arg0, %c0_i32 : i32, i32
  }
  func.func @transform_1(%arg0: i32) -> (i32, i32) {
    %c0_i32 = arith.constant 0 : i32
    %c0_i32_0 = arith.constant 0 : i32
    %c0_i32_1 = arith.constant 0 : i32
    return %c0_i32, %c0_i32_0 : i32, i32
  }
  func.func @transform_2(%arg0: i32) -> (i32, i32) {
    %c0_i32 = arith.constant 0 : i32
    %c0_i32_0 = arith.constant 0 : i32
    %c0_i32_1 = arith.constant 0 : i32
    return %c0_i32, %c0_i32_0 : i32, i32
  }
  func.func @transform_3(%arg0: i32) -> (i32, i32) {
    %c0_i32 = arith.constant 0 : i32
    %c0_i32_0 = arith.constant 0 : i32
    %c0_i32_1 = arith.constant 0 : i32
    return %c0_i32, %c0_i32_0 : i32, i32
  }
  func.func @transform_4(%arg0: i32) -> (i32, i32) {
    %c0_i32 = arith.constant 0 : i32
    %c0_i32_0 = arith.constant 0 : i32
    %c0_i32_1 = arith.constant 0 : i32
    return %c0_i32, %c0_i32_0 : i32, i32
  }
  func.func @transform_5(%arg0: i32) -> (i32, i32) {
    %c0_i32 = arith.constant 0 : i32
    %c0_i32_0 = arith.constant 0 : i32
    %c0_i32_1 = arith.constant 0 : i32
    return %c0_i32, %c0_i32_0 : i32, i32
  }
  func.func @transform_6(%arg0: i32) -> (i32, i32) {
    %c0_i32 = arith.constant 0 : i32
    %c0_i32_0 = arith.constant 0 : i32
    %c0_i32_1 = arith.constant 0 : i32
    return %c0_i32, %c0_i32_0 : i32, i32
  }
  func.func @transform_7(%arg0: i32) -> (i32, i32) {
    %c0_i32 = arith.constant 0 : i32
    %c0_i32_0 = arith.constant 0 : i32
    return %arg0, %c0_i32 : i32, i32
  }
}

module attributes {stable_mosaic.version = 11 : i64} {
  func.func @_ffn_ln_kernel(%arg0: i32, %arg1: memref<16x128xf32, #tpu.memory_space<vmem>>, %arg2: memref<128x256xbf16, #tpu.memory_space<vmem>>, %arg3: memref<1x256xf32, #tpu.memory_space<vmem>>, %arg4: memref<256x128xbf16, #tpu.memory_space<vmem>>, %arg5: memref<1x128xf32, #tpu.memory_space<vmem>>, %arg6: memref<1x128xf32, #tpu.memory_space<vmem>>, %arg7: memref<1x128xf32, #tpu.memory_space<vmem>>, %arg8: memref<16x128xf32, #tpu.memory_space<vmem>>) attributes {dimension_semantics = [#tpu.dimension_semantics<parallel>], iteration_bounds = array<i64: 2>, scalar_prefetch = 0 : i64, scratch_operands = 0 : i64, tpu.core_type = #tpu.core_type<tc>, window_params = [{transform_indices = @transform_0, window_bounds = array<i64: 16, 128>}, {pipeline_mode = #tpu.pipeline_mode<synchronous>, transform_indices = @transform_1, window_bounds = array<i64: 128, 256>}, {pipeline_mode = #tpu.pipeline_mode<synchronous>, transform_indices = @transform_2, window_bounds = array<i64: 1, 256>}, {pipeline_mode = #tpu.pipeline_mode<synchronous>, transform_indices = @transform_3, window_bounds = array<i64: 256, 128>}, {pipeline_mode = #tpu.pipeline_mode<synchronous>, transform_indices = @transform_4, window_bounds = array<i64: 1, 128>}, {pipeline_mode = #tpu.pipeline_mode<synchronous>, transform_indices = @transform_5, window_bounds = array<i64: 1, 128>}, {pipeline_mode = #tpu.pipeline_mode<synchronous>, transform_indices = @transform_6, window_bounds = array<i64: 1, 128>}, {transform_indices = @transform_7, window_bounds = array<i64: 16, 128>}]} {
    %c0 = arith.constant 0 : index
    %c0_0 = arith.constant 0 : index
    %0 = vector.load %arg1[%c0, %c0_0] : memref<16x128xf32, #tpu.memory_space<vmem>>, vector<16x128xf32>
    %1 = arith.truncf %0 : vector<16x128xf32> to vector<16x128xbf16>
    %c0_1 = arith.constant 0 : index
    %c0_2 = arith.constant 0 : index
    %2 = vector.load %arg2[%c0_1, %c0_2] : memref<128x256xbf16, #tpu.memory_space<vmem>>, vector<128x256xbf16>
    %cst = arith.constant dense<0.000000e+00> : vector<16x256xf32>
    %3 = tpu.matmul %1, %2, %cst {dimension_numbers = #tpu.dot_dimension_numbers<[1], [0], [0], [1], [0, 0, 1, 1], [], []>} : vector<16x128xbf16>, vector<128x256xbf16>, vector<16x256xf32> -> vector<16x256xf32>
    %c0_3 = arith.constant 0 : index
    %c0_4 = arith.constant 0 : index
    %4 = vector.load %arg3[%c0_3, %c0_4] : memref<1x256xf32, #tpu.memory_space<vmem>>, vector<1x256xf32>
    %5 = vector.broadcast %4 : vector<1x256xf32> to vector<16x256xf32>
    %6 = arith.addf %3, %5 : vector<16x256xf32>
    %cst_5 = arith.constant 0.000000e+00 : f32
    %7 = vector.broadcast %cst_5 : f32 to vector<16x256xf32>
    %8 = arith.maximumf %6, %7 : vector<16x256xf32>
    %9 = arith.truncf %8 : vector<16x256xf32> to vector<16x256xbf16>
    %c0_6 = arith.constant 0 : index
    %c0_7 = arith.constant 0 : index
    %10 = vector.load %arg4[%c0_6, %c0_7] : memref<256x128xbf16, #tpu.memory_space<vmem>>, vector<256x128xbf16>
    %cst_8 = arith.constant dense<0.000000e+00> : vector<16x128xf32>
    %11 = tpu.matmul %9, %10, %cst_8 {dimension_numbers = #tpu.dot_dimension_numbers<[1], [0], [0], [1], [0, 0, 1, 1], [], []>} : vector<16x256xbf16>, vector<256x128xbf16>, vector<16x128xf32> -> vector<16x128xf32>
    %c0_9 = arith.constant 0 : index
    %c0_10 = arith.constant 0 : index
    %12 = vector.load %arg5[%c0_9, %c0_10] : memref<1x128xf32, #tpu.memory_space<vmem>>, vector<1x128xf32>
    %13 = vector.broadcast %12 : vector<1x128xf32> to vector<16x128xf32>
    %14 = arith.addf %11, %13 : vector<16x128xf32>
    %15 = arith.addf %0, %14 : vector<16x128xf32>
    %cst_11 = arith.constant dense<0.000000e+00> : vector<16xf32>
    %16 = vector.multi_reduction <add>, %15, %cst_11 [1] : vector<16x128xf32> to vector<16xf32>
    %17 = vector.shape_cast %16 : vector<16xf32> to vector<16x1xf32>
    %cst_12 = arith.constant 1.280000e+02 : f32
    %18 = vector.broadcast %cst_12 : f32 to vector<16x1xf32>
    %19 = arith.divf %17, %18 : vector<16x1xf32>
    %20 = vector.broadcast %19 : vector<16x1xf32> to vector<16x128xf32>
    %21 = arith.subf %15, %20 : vector<16x128xf32>
    %22 = arith.mulf %21, %21 : vector<16x128xf32>
    %cst_13 = arith.constant dense<0.000000e+00> : vector<16xf32>
    %23 = vector.multi_reduction <add>, %22, %cst_13 [1] : vector<16x128xf32> to vector<16xf32>
    %24 = vector.shape_cast %23 : vector<16xf32> to vector<16x1xf32>
    %cst_14 = arith.constant 1.280000e+02 : f32
    %25 = vector.broadcast %cst_14 : f32 to vector<16x1xf32>
    %26 = arith.divf %24, %25 : vector<16x1xf32>
    %cst_15 = arith.constant 9.99999974E-6 : f32
    %27 = vector.broadcast %cst_15 : f32 to vector<16x1xf32>
    %28 = arith.addf %26, %27 : vector<16x1xf32>
    %29 = math.rsqrt %28 : vector<16x1xf32>
    %30 = vector.broadcast %29 : vector<16x1xf32> to vector<16x128xf32>
    %31 = arith.mulf %21, %30 : vector<16x128xf32>
    %c0_16 = arith.constant 0 : index
    %c0_17 = arith.constant 0 : index
    %32 = vector.load %arg6[%c0_16, %c0_17] : memref<1x128xf32, #tpu.memory_space<vmem>>, vector<1x128xf32>
    %33 = vector.broadcast %32 : vector<1x128xf32> to vector<16x128xf32>
    %34 = arith.mulf %31, %33 : vector<16x128xf32>
    %c0_18 = arith.constant 0 : index
    %c0_19 = arith.constant 0 : index
    %35 = vector.load %arg7[%c0_18, %c0_19] : memref<1x128xf32, #tpu.memory_space<vmem>>, vector<1x128xf32>
    %36 = vector.broadcast %35 : vector<1x128xf32> to vector<16x128xf32>
    %37 = arith.addf %34, %36 : vector<16x128xf32>
    %c0_20 = arith.constant 0 : index
    %c0_21 = arith.constant 0 : index
    %38 = vector.load %arg8[%c0_20, %c0_21] : memref<16x128xf32, #tpu.memory_space<vmem>>, vector<16x128xf32>
    tpu.vector_store %arg8[%c0_20, %c0_21], %37 {strides = array<i32>} : memref<16x128xf32, #tpu.memory_space<vmem>>, vector<16x128xf32>,
    return
  }
  func.func @transform_0(%arg0: i32) -> (i32, i32) {
    %c0_i32 = arith.constant 0 : i32
    %c0_i32_0 = arith.constant 0 : i32
    return %arg0, %c0_i32 : i32, i32
  }
  func.func @transform_1(%arg0: i32) -> (i32, i32) {
    %c0_i32 = arith.constant 0 : i32
    %c0_i32_0 = arith.constant 0 : i32
    %c0_i32_1 = arith.constant 0 : i32
    return %c0_i32, %c0_i32_0 : i32, i32
  }
  func.func @transform_2(%arg0: i32) -> (i32, i32) {
    %c0_i32 = arith.constant 0 : i32
    %c0_i32_0 = arith.constant 0 : i32
    %c0_i32_1 = arith.constant 0 : i32
    return %c0_i32, %c0_i32_0 : i32, i32
  }
  func.func @transform_3(%arg0: i32) -> (i32, i32) {
    %c0_i32 = arith.constant 0 : i32
    %c0_i32_0 = arith.constant 0 : i32
    %c0_i32_1 = arith.constant 0 : i32
    return %c0_i32, %c0_i32_0 : i32, i32
  }
  func.func @transform_4(%arg0: i32) -> (i32, i32) {
    %c0_i32 = arith.constant 0 : i32
    %c0_i32_0 = arith.constant 0 : i32
    %c0_i32_1 = arith.constant 0 : i32
    return %c0_i32, %c0_i32_0 : i32, i32
  }
  func.func @transform_5(%arg0: i32) -> (i32, i32) {
    %c0_i32 = arith.constant 0 : i32
    %c0_i32_0 = arith.constant 0 : i32
    %c0_i32_1 = arith.constant 0 : i32
    return %c0_i32, %c0_i32_0 : i32, i32
  }
  func.func @transform_6(%arg0: i32) -> (i32, i32) {
    %c0_i32 = arith.constant 0 : i32
    %c0_i32_0 = arith.constant 0 : i32
    %c0_i32_1 = arith.constant 0 : i32
    return %c0_i32, %c0_i32_0 : i32, i32
  }
  func.func @transform_7(%arg0: i32) -> (i32, i32) {
    %c0_i32 = arith.constant 0 : i32
    %c0_i32_0 = arith.constant 0 : i32
    return %arg0, %c0_i32 : i32, i32
  }
}

module attributes {stable_mosaic.version = 11 : i64} {
  func.func @_mha_ln_kernel(%arg0: i32, %arg1: memref<1x16x128xf32, #tpu.memory_space<vmem>>, %arg2: memref<1x1x16xf32, #tpu.memory_space<vmem>>, %arg3: memref<128x256xbf16, #tpu.memory_space<vmem>>, %arg4: memref<1x256xf32, #tpu.memory_space<vmem>>, %arg5: memref<128x256xbf16, #tpu.memory_space<vmem>>, %arg6: memref<1x256xf32, #tpu.memory_space<vmem>>, %arg7: memref<128x256xbf16, #tpu.memory_space<vmem>>, %arg8: memref<1x256xf32, #tpu.memory_space<vmem>>, %arg9: memref<256x128xbf16, #tpu.memory_space<vmem>>, %arg10: memref<1x128xf32, #tpu.memory_space<vmem>>, %arg11: memref<1x128xf32, #tpu.memory_space<vmem>>, %arg12: memref<1x128xf32, #tpu.memory_space<vmem>>, %arg13: memref<1x16x128xf32, #tpu.memory_space<vmem>>, %arg14: memref<16x256xf32, #tpu.memory_space<vmem>>) attributes {dimension_semantics = [#tpu.dimension_semantics<parallel>], iteration_bounds = array<i64: 2>, scalar_prefetch = 0 : i64, scratch_operands = 1 : i64, tpu.core_type = #tpu.core_type<tc>, window_params = [{transform_indices = @transform_0, window_bounds = array<i64: 1, 16, 128>}, {transform_indices = @transform_1, window_bounds = array<i64: 1, 1, 16>}, {pipeline_mode = #tpu.pipeline_mode<synchronous>, transform_indices = @transform_2, window_bounds = array<i64: 128, 256>}, {pipeline_mode = #tpu.pipeline_mode<synchronous>, transform_indices = @transform_3, window_bounds = array<i64: 1, 256>}, {pipeline_mode = #tpu.pipeline_mode<synchronous>, transform_indices = @transform_4, window_bounds = array<i64: 128, 256>}, {pipeline_mode = #tpu.pipeline_mode<synchronous>, transform_indices = @transform_5, window_bounds = array<i64: 1, 256>}, {pipeline_mode = #tpu.pipeline_mode<synchronous>, transform_indices = @transform_6, window_bounds = array<i64: 128, 256>}, {pipeline_mode = #tpu.pipeline_mode<synchronous>, transform_indices = @transform_7, window_bounds = array<i64: 1, 256>}, {pipeline_mode = #tpu.pipeline_mode<synchronous>, transform_indices = @transform_8, window_bounds = array<i64: 256, 128>}, {pipeline_mode = #tpu.pipeline_mode<synchronous>, transform_indices = @transform_9, window_bounds = array<i64: 1, 128>}, {pipeline_mode = #tpu.pipeline_mode<synchronous>, transform_indices = @transform_10, window_bounds = array<i64: 1, 128>}, {pipeline_mode = #tpu.pipeline_mode<synchronous>, transform_indices = @transform_11, window_bounds = array<i64: 1, 128>}, {transform_indices = @transform_12, window_bounds = array<i64: 1, 16, 128>}]} {
    %c0 = arith.constant 0 : index
    %c0_0 = arith.constant 0 : index
    %c0_1 = arith.constant 0 : index
    %0 = vector.load %arg1[%c0, %c0_0, %c0_1] : memref<1x16x128xf32, #tpu.memory_space<vmem>>, vector<1x16x128xf32>
    %1 = vector.shape_cast %0 : vector<1x16x128xf32> to vector<16x128xf32>
    %2 = arith.truncf %1 : vector<16x128xf32> to vector<16x128xbf16>
    %c0_2 = arith.constant 0 : index
    %c0_3 = arith.constant 0 : index
    %3 = vector.load %arg3[%c0_2, %c0_3] : memref<128x256xbf16, #tpu.memory_space<vmem>>, vector<128x256xbf16>
    %cst = arith.constant dense<0.000000e+00> : vector<16x256xf32>
    %4 = tpu.matmul %2, %3, %cst {dimension_numbers = #tpu.dot_dimension_numbers<[1], [0], [0], [1], [0, 0, 1, 1], [], []>} : vector<16x128xbf16>, vector<128x256xbf16>, vector<16x256xf32> -> vector<16x256xf32>
    %c0_4 = arith.constant 0 : index
    %c0_5 = arith.constant 0 : index
    %5 = vector.load %arg4[%c0_4, %c0_5] : memref<1x256xf32, #tpu.memory_space<vmem>>, vector<1x256xf32>
    %6 = vector.broadcast %5 : vector<1x256xf32> to vector<16x256xf32>
    %7 = arith.addf %4, %6 : vector<16x256xf32>
    %c0_6 = arith.constant 0 : index
    %c0_7 = arith.constant 0 : index
    %8 = vector.load %arg5[%c0_6, %c0_7] : memref<128x256xbf16, #tpu.memory_space<vmem>>, vector<128x256xbf16>
    %cst_8 = arith.constant dense<0.000000e+00> : vector<16x256xf32>
    %9 = tpu.matmul %2, %8, %cst_8 {dimension_numbers = #tpu.dot_dimension_numbers<[1], [0], [0], [1], [0, 0, 1, 1], [], []>} : vector<16x128xbf16>, vector<128x256xbf16>, vector<16x256xf32> -> vector<16x256xf32>
    %c0_9 = arith.constant 0 : index
    %c0_10 = arith.constant 0 : index
    %10 = vector.load %arg6[%c0_9, %c0_10] : memref<1x256xf32, #tpu.memory_space<vmem>>, vector<1x256xf32>
    %11 = vector.broadcast %10 : vector<1x256xf32> to vector<16x256xf32>
    %12 = arith.addf %9, %11 : vector<16x256xf32>
    %c0_11 = arith.constant 0 : index
    %c0_12 = arith.constant 0 : index
    %13 = vector.load %arg7[%c0_11, %c0_12] : memref<128x256xbf16, #tpu.memory_space<vmem>>, vector<128x256xbf16>
    %cst_13 = arith.constant dense<0.000000e+00> : vector<16x256xf32>
    %14 = tpu.matmul %2, %13, %cst_13 {dimension_numbers = #tpu.dot_dimension_numbers<[1], [0], [0], [1], [0, 0, 1, 1], [], []>} : vector<16x128xbf16>, vector<128x256xbf16>, vector<16x256xf32> -> vector<16x256xf32>
    %c0_14 = arith.constant 0 : index
    %c0_15 = arith.constant 0 : index
    %15 = vector.load %arg8[%c0_14, %c0_15] : memref<1x256xf32, #tpu.memory_space<vmem>>, vector<1x256xf32>
    %16 = vector.broadcast %15 : vector<1x256xf32> to vector<16x256xf32>
    %17 = arith.addf %14, %16 : vector<16x256xf32>
    %c0_16 = arith.constant 0 : index
    %c0_17 = arith.constant 0 : index
    %c0_18 = arith.constant 0 : index
    %18 = vector.load %arg2[%c0_16, %c0_17, %c0_18] : memref<1x1x16xf32, #tpu.memory_space<vmem>>, vector<1x1x16xf32>
    %19 = vector.shape_cast %18 : vector<1x1x16xf32> to vector<1x16xf32>
    %20 = vector.extract_strided_slice %7 {offsets = [0, 0], sizes = [16, 128], strides = [1, 1]} : vector<16x256xf32> to vector<16x128xf32>
    %21 = arith.truncf %20 : vector<16x128xf32> to vector<16x128xbf16>
    %22 = vector.extract_strided_slice %12 {offsets = [0, 0], sizes = [16, 128], strides = [1, 1]} : vector<16x256xf32> to vector<16x128xf32>
    %23 = arith.truncf %22 : vector<16x128xf32> to vector<16x128xbf16>
    %24 = vector.extract_strided_slice %17 {offsets = [0, 0], sizes = [16, 128], strides = [1, 1]} : vector<16x256xf32> to vector<16x128xf32>
    %25 = arith.truncf %24 : vector<16x128xf32> to vector<16x128xbf16>
    %cst_19 = arith.constant dense<0.000000e+00> : vector<16x16xf32>
    %26 = tpu.matmul %21, %23, %cst_19 {dimension_numbers = #tpu.dot_dimension_numbers<[1], [1], [0], [0], [0, 0, 1, 0], [], []>} : vector<16x128xbf16>, vector<16x128xbf16>, vector<16x16xf32> -> vector<16x16xf32>
    %cst_20 = arith.constant 0.0883883461 : f32
    %27 = vector.broadcast %cst_20 : f32 to vector<16x16xf32>
    %28 = arith.mulf %26, %27 : vector<16x16xf32>
    %29 = vector.broadcast %19 : vector<1x16xf32> to vector<16x16xf32>
    %30 = arith.addf %28, %29 : vector<16x16xf32>
    %cst_21 = arith.constant dense<0xFF800000> : vector<16xf32>
    %31 = vector.multi_reduction <maximumf>, %30, %cst_21 [1] : vector<16x16xf32> to vector<16xf32>
    %32 = vector.shape_cast %31 : vector<16xf32> to vector<16x1xf32>
    %33 = vector.broadcast %32 : vector<16x1xf32> to vector<16x16xf32>
    %34 = arith.subf %30, %33 : vector<16x16xf32>
    %35 = math.exp %34 : vector<16x16xf32>
    %cst_22 = arith.constant dense<0.000000e+00> : vector<16xf32>
    %36 = vector.multi_reduction <add>, %35, %cst_22 [1] : vector<16x16xf32> to vector<16xf32>
    %37 = vector.shape_cast %36 : vector<16xf32> to vector<16x1xf32>
    %38 = arith.truncf %35 : vector<16x16xf32> to vector<16x16xbf16>
    %cst_23 = arith.constant dense<0.000000e+00> : vector<16x128xf32>
    %39 = tpu.matmul %38, %25, %cst_23 {dimension_numbers = #tpu.dot_dimension_numbers<[1], [0], [0], [1], [0, 0, 1, 1], [], []>} : vector<16x16xbf16>, vector<16x128xbf16>, vector<16x128xf32> -> vector<16x128xf32>
    %40 = tpu.reciprocal %37 {approx = true} : vector<16x1xf32> -> vector<16x1xf32>
    %41 = vector.broadcast %40 : vector<16x1xf32> to vector<16x128xf32>
    %42 = arith.mulf %39, %41 : vector<16x128xf32>
    %c0_24 = arith.constant 0 : index
    %c0_25 = arith.constant 0 : index
    %43 = vector.load %arg14[%c0_24, %c0_25] : memref<16x256xf32, #tpu.memory_space<vmem>>, vector<16x128xf32>
    tpu.vector_store %arg14[%c0_24, %c0_25], %42 {strides = array<i32>} : memref<16x256xf32, #tpu.memory_space<vmem>>, vector<16x128xf32>,
    %44 = vector.extract_strided_slice %7 {offsets = [0, 128], sizes = [16, 128], strides = [1, 1]} : vector<16x256xf32> to vector<16x128xf32>
    %45 = arith.truncf %44 : vector<16x128xf32> to vector<16x128xbf16>
    %46 = vector.extract_strided_slice %12 {offsets = [0, 128], sizes = [16, 128], strides = [1, 1]} : vector<16x256xf32> to vector<16x128xf32>
    %47 = arith.truncf %46 : vector<16x128xf32> to vector<16x128xbf16>
    %48 = vector.extract_strided_slice %17 {offsets = [0, 128], sizes = [16, 128], strides = [1, 1]} : vector<16x256xf32> to vector<16x128xf32>
    %49 = arith.truncf %48 : vector<16x128xf32> to vector<16x128xbf16>
    %cst_26 = arith.constant dense<0.000000e+00> : vector<16x16xf32>
    %50 = tpu.matmul %45, %47, %cst_26 {dimension_numbers = #tpu.dot_dimension_numbers<[1], [1], [0], [0], [0, 0, 1, 0], [], []>} : vector<16x128xbf16>, vector<16x128xbf16>, vector<16x16xf32> -> vector<16x16xf32>
    %cst_27 = arith.constant 0.0883883461 : f32
    %51 = vector.broadcast %cst_27 : f32 to vector<16x16xf32>
    %52 = arith.mulf %50, %51 : vector<16x16xf32>
    %53 = vector.broadcast %19 : vector<1x16xf32> to vector<16x16xf32>
    %54 = arith.addf %52, %53 : vector<16x16xf32>
    %cst_28 = arith.constant dense<0xFF800000> : vector<16xf32>
    %55 = vector.multi_reduction <maximumf>, %54, %cst_28 [1] : vector<16x16xf32> to vector<16xf32>
    %56 = vector.shape_cast %55 : vector<16xf32> to vector<16x1xf32>
    %57 = vector.broadcast %56 : vector<16x1xf32> to vector<16x16xf32>
    %58 = arith.subf %54, %57 : vector<16x16xf32>
    %59 = math.exp %58 : vector<16x16xf32>
    %cst_29 = arith.constant dense<0.000000e+00> : vector<16xf32>
    %60 = vector.multi_reduction <add>, %59, %cst_29 [1] : vector<16x16xf32> to vector<16xf32>
    %61 = vector.shape_cast %60 : vector<16xf32> to vector<16x1xf32>
    %62 = arith.truncf %59 : vector<16x16xf32> to vector<16x16xbf16>
    %cst_30 = arith.constant dense<0.000000e+00> : vector<16x128xf32>
    %63 = tpu.matmul %62, %49, %cst_30 {dimension_numbers = #tpu.dot_dimension_numbers<[1], [0], [0], [1], [0, 0, 1, 1], [], []>} : vector<16x16xbf16>, vector<16x128xbf16>, vector<16x128xf32> -> vector<16x128xf32>
    %64 = tpu.reciprocal %61 {approx = true} : vector<16x1xf32> -> vector<16x1xf32>
    %65 = vector.broadcast %64 : vector<16x1xf32> to vector<16x128xf32>
    %66 = arith.mulf %63, %65 : vector<16x128xf32>
    %c0_31 = arith.constant 0 : index
    %c128 = arith.constant 128 : index
    %67 = vector.load %arg14[%c0_31, %c128] : memref<16x256xf32, #tpu.memory_space<vmem>>, vector<16x128xf32>
    tpu.vector_store %arg14[%c0_31, %c128], %66 {strides = array<i32>} : memref<16x256xf32, #tpu.memory_space<vmem>>, vector<16x128xf32>,
    %c0_32 = arith.constant 0 : index
    %c0_33 = arith.constant 0 : index
    %68 = vector.load %arg14[%c0_32, %c0_33] : memref<16x256xf32, #tpu.memory_space<vmem>>, vector<16x256xf32>
    %69 = arith.truncf %68 : vector<16x256xf32> to vector<16x256xbf16>
    %c0_34 = arith.constant 0 : index
    %c0_35 = arith.constant 0 : index
    %70 = vector.load %arg9[%c0_34, %c0_35] : memref<256x128xbf16, #tpu.memory_space<vmem>>, vector<256x128xbf16>
    %cst_36 = arith.constant dense<0.000000e+00> : vector<16x128xf32>
    %71 = tpu.matmul %69, %70, %cst_36 {dimension_numbers = #tpu.dot_dimension_numbers<[1], [0], [0], [1], [0, 0, 1, 1], [], []>} : vector<16x256xbf16>, vector<256x128xbf16>, vector<16x128xf32> -> vector<16x128xf32>
    %c0_37 = arith.constant 0 : index
    %c0_38 = arith.constant 0 : index
    %72 = vector.load %arg10[%c0_37, %c0_38] : memref<1x128xf32, #tpu.memory_space<vmem>>, vector<1x128xf32>
    %73 = vector.broadcast %72 : vector<1x128xf32> to vector<16x128xf32>
    %74 = arith.addf %71, %73 : vector<16x128xf32>
    %75 = vector.shape_cast %0 : vector<1x16x128xf32> to vector<16x128xf32>
    %76 = arith.addf %75, %74 : vector<16x128xf32>
    %cst_39 = arith.constant dense<0.000000e+00> : vector<16xf32>
    %77 = vector.multi_reduction <add>, %76, %cst_39 [1] : vector<16x128xf32> to vector<16xf32>
    %78 = vector.shape_cast %77 : vector<16xf32> to vector<16x1xf32>
    %cst_40 = arith.constant 1.280000e+02 : f32
    %79 = vector.broadcast %cst_40 : f32 to vector<16x1xf32>
    %80 = arith.divf %78, %79 : vector<16x1xf32>
    %81 = vector.broadcast %80 : vector<16x1xf32> to vector<16x128xf32>
    %82 = arith.subf %76, %81 : vector<16x128xf32>
    %83 = arith.mulf %82, %82 : vector<16x128xf32>
    %cst_41 = arith.constant dense<0.000000e+00> : vector<16xf32>
    %84 = vector.multi_reduction <add>, %83, %cst_41 [1] : vector<16x128xf32> to vector<16xf32>
    %85 = vector.shape_cast %84 : vector<16xf32> to vector<16x1xf32>
    %cst_42 = arith.constant 1.280000e+02 : f32
    %86 = vector.broadcast %cst_42 : f32 to vector<16x1xf32>
    %87 = arith.divf %85, %86 : vector<16x1xf32>
    %cst_43 = arith.constant 9.99999974E-6 : f32
    %88 = vector.broadcast %cst_43 : f32 to vector<16x1xf32>
    %89 = arith.addf %87, %88 : vector<16x1xf32>
    %90 = math.rsqrt %89 : vector<16x1xf32>
    %91 = vector.broadcast %90 : vector<16x1xf32> to vector<16x128xf32>
    %92 = arith.mulf %82, %91 : vector<16x128xf32>
    %c0_44 = arith.constant 0 : index
    %c0_45 = arith.constant 0 : index
    %93 = vector.load %arg11[%c0_44, %c0_45] : memref<1x128xf32, #tpu.memory_space<vmem>>, vector<1x128xf32>
    %94 = vector.broadcast %93 : vector<1x128xf32> to vector<16x128xf32>
    %95 = arith.mulf %92, %94 : vector<16x128xf32>
    %c0_46 = arith.constant 0 : index
    %c0_47 = arith.constant 0 : index
    %96 = vector.load %arg12[%c0_46, %c0_47] : memref<1x128xf32, #tpu.memory_space<vmem>>, vector<1x128xf32>
    %97 = vector.broadcast %96 : vector<1x128xf32> to vector<16x128xf32>
    %98 = arith.addf %95, %97 : vector<16x128xf32>
    %99 = vector.shape_cast %98 : vector<16x128xf32> to vector<1x16x128xf32>
    %c0_48 = arith.constant 0 : index
    %c0_49 = arith.constant 0 : index
    %c0_50 = arith.constant 0 : index
    %100 = vector.load %arg13[%c0_48, %c0_49, %c0_50] : memref<1x16x128xf32, #tpu.memory_space<vmem>>, vector<1x16x128xf32>
    tpu.vector_store %arg13[%c0_48, %c0_49, %c0_50], %99 {strides = array<i32>} : memref<1x16x128xf32, #tpu.memory_space<vmem>>, vector<1x16x128xf32>,
    return
  }
  func.func @transform_0(%arg0: i32) -> (i32, i32, i32) {
    %c0_i32 = arith.constant 0 : i32
    %c0_i32_0 = arith.constant 0 : i32
    %c0_i32_1 = arith.constant 0 : i32
    return %arg0, %c0_i32, %c0_i32_0 : i32, i32, i32
  }
  func.func @transform_1(%arg0: i32) -> (i32, i32, i32) {
    %c0_i32 = arith.constant 0 : i32
    %c0_i32_0 = arith.constant 0 : i32
    %c0_i32_1 = arith.constant 0 : i32
    return %arg0, %c0_i32, %c0_i32_0 : i32, i32, i32
  }
  func.func @transform_2(%arg0: i32) -> (i32, i32) {
    %c0_i32 = arith.constant 0 : i32
    %c0_i32_0 = arith.constant 0 : i32
    %c0_i32_1 = arith.constant 0 : i32
    return %c0_i32, %c0_i32_0 : i32, i32
  }
  func.func @transform_3(%arg0: i32) -> (i32, i32) {
    %c0_i32 = arith.constant 0 : i32
    %c0_i32_0 = arith.constant 0 : i32
    %c0_i32_1 = arith.constant 0 : i32
    return %c0_i32, %c0_i32_0 : i32, i32
  }
  func.func @transform_4(%arg0: i32) -> (i32, i32) {
    %c0_i32 = arith.constant 0 : i32
    %c0_i32_0 = arith.constant 0 : i32
    %c0_i32_1 = arith.constant 0 : i32
    return %c0_i32, %c0_i32_0 : i32, i32
  }
  func.func @transform_5(%arg0: i32) -> (i32, i32) {
    %c0_i32 = arith.constant 0 : i32
    %c0_i32_0 = arith.constant 0 : i32
    %c0_i32_1 = arith.constant 0 : i32
    return %c0_i32, %c0_i32_0 : i32, i32
  }
  func.func @transform_6(%arg0: i32) -> (i32, i32) {
    %c0_i32 = arith.constant 0 : i32
    %c0_i32_0 = arith.constant 0 : i32
    %c0_i32_1 = arith.constant 0 : i32
    return %c0_i32, %c0_i32_0 : i32, i32
  }
  func.func @transform_7(%arg0: i32) -> (i32, i32) {
    %c0_i32 = arith.constant 0 : i32
    %c0_i32_0 = arith.constant 0 : i32
    %c0_i32_1 = arith.constant 0 : i32
    return %c0_i32, %c0_i32_0 : i32, i32
  }
  func.func @transform_8(%arg0: i32) -> (i32, i32) {
    %c0_i32 = arith.constant 0 : i32
    %c0_i32_0 = arith.constant 0 : i32
    %c0_i32_1 = arith.constant 0 : i32
    return %c0_i32, %c0_i32_0 : i32, i32
  }
  func.func @transform_9(%arg0: i32) -> (i32, i32) {
    %c0_i32 = arith.constant 0 : i32
    %c0_i32_0 = arith.constant 0 : i32
    %c0_i32_1 = arith.constant 0 : i32
    return %c0_i32, %c0_i32_0 : i32, i32
  }
  func.func @transform_10(%arg0: i32) -> (i32, i32) {
    %c0_i32 = arith.constant 0 : i32
    %c0_i32_0 = arith.constant 0 : i32
    %c0_i32_1 = arith.constant 0 : i32
    return %c0_i32, %c0_i32_0 : i32, i32
  }
  func.func @transform_11(%arg0: i32) -> (i32, i32) {
    %c0_i32 = arith.constant 0 : i32
    %c0_i32_0 = arith.constant 0 : i32
    %c0_i32_1 = arith.constant 0 : i32
    return %c0_i32, %c0_i32_0 : i32, i32
  }
  func.func @transform_12(%arg0: i32) -> (i32, i32, i32) {
    %c0_i32 = arith.constant 0 : i32
    %c0_i32_0 = arith.constant 0 : i32
    %c0_i32_1 = arith.constant 0 : i32
    return %arg0, %c0_i32, %c0_i32_0 : i32, i32, i32
  }
}

module attributes {stable_mosaic.version = 11 : i64} {
  func.func @_mha_ln_kernel(%arg0: i32, %arg1: memref<1x16x128xf32, #tpu.memory_space<vmem>>, %arg2: memref<1x1x16xf32, #tpu.memory_space<vmem>>, %arg3: memref<128x256xbf16, #tpu.memory_space<vmem>>, %arg4: memref<1x256xf32, #tpu.memory_space<vmem>>, %arg5: memref<128x256xbf16, #tpu.memory_space<vmem>>, %arg6: memref<1x256xf32, #tpu.memory_space<vmem>>, %arg7: memref<128x256xbf16, #tpu.memory_space<vmem>>, %arg8: memref<1x256xf32, #tpu.memory_space<vmem>>, %arg9: memref<256x128xbf16, #tpu.memory_space<vmem>>, %arg10: memref<1x128xf32, #tpu.memory_space<vmem>>, %arg11: memref<1x128xf32, #tpu.memory_space<vmem>>, %arg12: memref<1x128xf32, #tpu.memory_space<vmem>>, %arg13: memref<1x16x128xf32, #tpu.memory_space<vmem>>, %arg14: memref<16x256xf32, #tpu.memory_space<vmem>>) attributes {dimension_semantics = [#tpu.dimension_semantics<parallel>], iteration_bounds = array<i64: 2>, scalar_prefetch = 0 : i64, scratch_operands = 1 : i64, tpu.core_type = #tpu.core_type<tc>, window_params = [{transform_indices = @transform_0, window_bounds = array<i64: 1, 16, 128>}, {transform_indices = @transform_1, window_bounds = array<i64: 1, 1, 16>}, {pipeline_mode = #tpu.pipeline_mode<synchronous>, transform_indices = @transform_2, window_bounds = array<i64: 128, 256>}, {pipeline_mode = #tpu.pipeline_mode<synchronous>, transform_indices = @transform_3, window_bounds = array<i64: 1, 256>}, {pipeline_mode = #tpu.pipeline_mode<synchronous>, transform_indices = @transform_4, window_bounds = array<i64: 128, 256>}, {pipeline_mode = #tpu.pipeline_mode<synchronous>, transform_indices = @transform_5, window_bounds = array<i64: 1, 256>}, {pipeline_mode = #tpu.pipeline_mode<synchronous>, transform_indices = @transform_6, window_bounds = array<i64: 128, 256>}, {pipeline_mode = #tpu.pipeline_mode<synchronous>, transform_indices = @transform_7, window_bounds = array<i64: 1, 256>}, {pipeline_mode = #tpu.pipeline_mode<synchronous>, transform_indices = @transform_8, window_bounds = array<i64: 256, 128>}, {pipeline_mode = #tpu.pipeline_mode<synchronous>, transform_indices = @transform_9, window_bounds = array<i64: 1, 128>}, {pipeline_mode = #tpu.pipeline_mode<synchronous>, transform_indices = @transform_10, window_bounds = array<i64: 1, 128>}, {pipeline_mode = #tpu.pipeline_mode<synchronous>, transform_indices = @transform_11, window_bounds = array<i64: 1, 128>}, {transform_indices = @transform_12, window_bounds = array<i64: 1, 16, 128>}]} {
    %c0 = arith.constant 0 : index
    %c0_0 = arith.constant 0 : index
    %c0_1 = arith.constant 0 : index
    %0 = vector.load %arg1[%c0, %c0_0, %c0_1] : memref<1x16x128xf32, #tpu.memory_space<vmem>>, vector<1x16x128xf32>
    %1 = vector.shape_cast %0 : vector<1x16x128xf32> to vector<16x128xf32>
    %2 = arith.truncf %1 : vector<16x128xf32> to vector<16x128xbf16>
    %c0_2 = arith.constant 0 : index
    %c0_3 = arith.constant 0 : index
    %3 = vector.load %arg3[%c0_2, %c0_3] : memref<128x256xbf16, #tpu.memory_space<vmem>>, vector<128x256xbf16>
    %cst = arith.constant dense<0.000000e+00> : vector<16x256xf32>
    %4 = tpu.matmul %2, %3, %cst {dimension_numbers = #tpu.dot_dimension_numbers<[1], [0], [0], [1], [0, 0, 1, 1], [], []>} : vector<16x128xbf16>, vector<128x256xbf16>, vector<16x256xf32> -> vector<16x256xf32>
    %c0_4 = arith.constant 0 : index
    %c0_5 = arith.constant 0 : index
    %5 = vector.load %arg4[%c0_4, %c0_5] : memref<1x256xf32, #tpu.memory_space<vmem>>, vector<1x256xf32>
    %6 = vector.broadcast %5 : vector<1x256xf32> to vector<16x256xf32>
    %7 = arith.addf %4, %6 : vector<16x256xf32>
    %c0_6 = arith.constant 0 : index
    %c0_7 = arith.constant 0 : index
    %8 = vector.load %arg5[%c0_6, %c0_7] : memref<128x256xbf16, #tpu.memory_space<vmem>>, vector<128x256xbf16>
    %cst_8 = arith.constant dense<0.000000e+00> : vector<16x256xf32>
    %9 = tpu.matmul %2, %8, %cst_8 {dimension_numbers = #tpu.dot_dimension_numbers<[1], [0], [0], [1], [0, 0, 1, 1], [], []>} : vector<16x128xbf16>, vector<128x256xbf16>, vector<16x256xf32> -> vector<16x256xf32>
    %c0_9 = arith.constant 0 : index
    %c0_10 = arith.constant 0 : index
    %10 = vector.load %arg6[%c0_9, %c0_10] : memref<1x256xf32, #tpu.memory_space<vmem>>, vector<1x256xf32>
    %11 = vector.broadcast %10 : vector<1x256xf32> to vector<16x256xf32>
    %12 = arith.addf %9, %11 : vector<16x256xf32>
    %c0_11 = arith.constant 0 : index
    %c0_12 = arith.constant 0 : index
    %13 = vector.load %arg7[%c0_11, %c0_12] : memref<128x256xbf16, #tpu.memory_space<vmem>>, vector<128x256xbf16>
    %cst_13 = arith.constant dense<0.000000e+00> : vector<16x256xf32>
    %14 = tpu.matmul %2, %13, %cst_13 {dimension_numbers = #tpu.dot_dimension_numbers<[1], [0], [0], [1], [0, 0, 1, 1], [], []>} : vector<16x128xbf16>, vector<128x256xbf16>, vector<16x256xf32> -> vector<16x256xf32>
    %c0_14 = arith.constant 0 : index
    %c0_15 = arith.constant 0 : index
    %15 = vector.load %arg8[%c0_14, %c0_15] : memref<1x256xf32, #tpu.memory_space<vmem>>, vector<1x256xf32>
    %16 = vector.broadcast %15 : vector<1x256xf32> to vector<16x256xf32>
    %17 = arith.addf %14, %16 : vector<16x256xf32>
    %c0_16 = arith.constant 0 : index
    %c0_17 = arith.constant 0 : index
    %c0_18 = arith.constant 0 : index
    %18 = vector.load %arg2[%c0_16, %c0_17, %c0_18] : memref<1x1x16xf32, #tpu.memory_space<vmem>>, vector<1x1x16xf32>
    %19 = vector.shape_cast %18 : vector<1x1x16xf32> to vector<1x16xf32>
    %20 = vector.extract_strided_slice %7 {offsets = [0, 0], sizes = [16, 128], strides = [1, 1]} : vector<16x256xf32> to vector<16x128xf32>
    %21 = arith.truncf %20 : vector<16x128xf32> to vector<16x128xbf16>
    %22 = vector.extract_strided_slice %12 {offsets = [0, 0], sizes = [16, 128], strides = [1, 1]} : vector<16x256xf32> to vector<16x128xf32>
    %23 = arith.truncf %22 : vector<16x128xf32> to vector<16x128xbf16>
    %24 = vector.extract_strided_slice %17 {offsets = [0, 0], sizes = [16, 128], strides = [1, 1]} : vector<16x256xf32> to vector<16x128xf32>
    %25 = arith.truncf %24 : vector<16x128xf32> to vector<16x128xbf16>
    %cst_19 = arith.constant dense<0.000000e+00> : vector<16x16xf32>
    %26 = tpu.matmul %21, %23, %cst_19 {dimension_numbers = #tpu.dot_dimension_numbers<[1], [1], [0], [0], [0, 0, 1, 0], [], []>} : vector<16x128xbf16>, vector<16x128xbf16>, vector<16x16xf32> -> vector<16x16xf32>
    %cst_20 = arith.constant 0.0883883461 : f32
    %27 = vector.broadcast %cst_20 : f32 to vector<16x16xf32>
    %28 = arith.mulf %26, %27 : vector<16x16xf32>
    %29 = vector.broadcast %19 : vector<1x16xf32> to vector<16x16xf32>
    %30 = arith.addf %28, %29 : vector<16x16xf32>
    %cst_21 = arith.constant dense<0xFF800000> : vector<16xf32>
    %31 = vector.multi_reduction <maximumf>, %30, %cst_21 [1] : vector<16x16xf32> to vector<16xf32>
    %32 = vector.shape_cast %31 : vector<16xf32> to vector<16x1xf32>
    %33 = vector.broadcast %32 : vector<16x1xf32> to vector<16x16xf32>
    %34 = arith.subf %30, %33 : vector<16x16xf32>
    %35 = math.exp %34 : vector<16x16xf32>
    %cst_22 = arith.constant dense<0.000000e+00> : vector<16xf32>
    %36 = vector.multi_reduction <add>, %35, %cst_22 [1] : vector<16x16xf32> to vector<16xf32>
    %37 = vector.shape_cast %36 : vector<16xf32> to vector<16x1xf32>
    %38 = arith.truncf %35 : vector<16x16xf32> to vector<16x16xbf16>
    %cst_23 = arith.constant dense<0.000000e+00> : vector<16x128xf32>
    %39 = tpu.matmul %38, %25, %cst_23 {dimension_numbers = #tpu.dot_dimension_numbers<[1], [0], [0], [1], [0, 0, 1, 1], [], []>} : vector<16x16xbf16>, vector<16x128xbf16>, vector<16x128xf32> -> vector<16x128xf32>
    %40 = tpu.reciprocal %37 {approx = true} : vector<16x1xf32> -> vector<16x1xf32>
    %41 = vector.broadcast %40 : vector<16x1xf32> to vector<16x128xf32>
    %42 = arith.mulf %39, %41 : vector<16x128xf32>
    %c0_24 = arith.constant 0 : index
    %c0_25 = arith.constant 0 : index
    %43 = vector.load %arg14[%c0_24, %c0_25] : memref<16x256xf32, #tpu.memory_space<vmem>>, vector<16x128xf32>
    tpu.vector_store %arg14[%c0_24, %c0_25], %42 {strides = array<i32>} : memref<16x256xf32, #tpu.memory_space<vmem>>, vector<16x128xf32>,
    %44 = vector.extract_strided_slice %7 {offsets = [0, 128], sizes = [16, 128], strides = [1, 1]} : vector<16x256xf32> to vector<16x128xf32>
    %45 = arith.truncf %44 : vector<16x128xf32> to vector<16x128xbf16>
    %46 = vector.extract_strided_slice %12 {offsets = [0, 128], sizes = [16, 128], strides = [1, 1]} : vector<16x256xf32> to vector<16x128xf32>
    %47 = arith.truncf %46 : vector<16x128xf32> to vector<16x128xbf16>
    %48 = vector.extract_strided_slice %17 {offsets = [0, 128], sizes = [16, 128], strides = [1, 1]} : vector<16x256xf32> to vector<16x128xf32>
    %49 = arith.truncf %48 : vector<16x128xf32> to vector<16x128xbf16>
    %cst_26 = arith.constant dense<0.000000e+00> : vector<16x16xf32>
    %50 = tpu.matmul %45, %47, %cst_26 {dimension_numbers = #tpu.dot_dimension_numbers<[1], [1], [0], [0], [0, 0, 1, 0], [], []>} : vector<16x128xbf16>, vector<16x128xbf16>, vector<16x16xf32> -> vector<16x16xf32>
    %cst_27 = arith.constant 0.0883883461 : f32
    %51 = vector.broadcast %cst_27 : f32 to vector<16x16xf32>
    %52 = arith.mulf %50, %51 : vector<16x16xf32>
    %53 = vector.broadcast %19 : vector<1x16xf32> to vector<16x16xf32>
    %54 = arith.addf %52, %53 : vector<16x16xf32>
    %cst_28 = arith.constant dense<0xFF800000> : vector<16xf32>
    %55 = vector.multi_reduction <maximumf>, %54, %cst_28 [1] : vector<16x16xf32> to vector<16xf32>
    %56 = vector.shape_cast %55 : vector<16xf32> to vector<16x1xf32>
    %57 = vector.broadcast %56 : vector<16x1xf32> to vector<16x16xf32>
    %58 = arith.subf %54, %57 : vector<16x16xf32>
    %59 = math.exp %58 : vector<16x16xf32>
    %cst_29 = arith.constant dense<0.000000e+00> : vector<16xf32>
    %60 = vector.multi_reduction <add>, %59, %cst_29 [1] : vector<16x16xf32> to vector<16xf32>
    %61 = vector.shape_cast %60 : vector<16xf32> to vector<16x1xf32>
    %62 = arith.truncf %59 : vector<16x16xf32> to vector<16x16xbf16>
    %cst_30 = arith.constant dense<0.000000e+00> : vector<16x128xf32>
    %63 = tpu.matmul %62, %49, %cst_30 {dimension_numbers = #tpu.dot_dimension_numbers<[1], [0], [0], [1], [0, 0, 1, 1], [], []>} : vector<16x16xbf16>, vector<16x128xbf16>, vector<16x128xf32> -> vector<16x128xf32>
    %64 = tpu.reciprocal %61 {approx = true} : vector<16x1xf32> -> vector<16x1xf32>
    %65 = vector.broadcast %64 : vector<16x1xf32> to vector<16x128xf32>
    %66 = arith.mulf %63, %65 : vector<16x128xf32>
    %c0_31 = arith.constant 0 : index
    %c128 = arith.constant 128 : index
    %67 = vector.load %arg14[%c0_31, %c128] : memref<16x256xf32, #tpu.memory_space<vmem>>, vector<16x128xf32>
    tpu.vector_store %arg14[%c0_31, %c128], %66 {strides = array<i32>} : memref<16x256xf32, #tpu.memory_space<vmem>>, vector<16x128xf32>,
    %c0_32 = arith.constant 0 : index
    %c0_33 = arith.constant 0 : index
    %68 = vector.load %arg14[%c0_32, %c0_33] : memref<16x256xf32, #tpu.memory_space<vmem>>, vector<16x256xf32>
    %69 = arith.truncf %68 : vector<16x256xf32> to vector<16x256xbf16>
    %c0_34 = arith.constant 0 : index
    %c0_35 = arith.constant 0 : index
    %70 = vector.load %arg9[%c0_34, %c0_35] : memref<256x128xbf16, #tpu.memory_space<vmem>>, vector<256x128xbf16>
    %cst_36 = arith.constant dense<0.000000e+00> : vector<16x128xf32>
    %71 = tpu.matmul %69, %70, %cst_36 {dimension_numbers = #tpu.dot_dimension_numbers<[1], [0], [0], [1], [0, 0, 1, 1], [], []>} : vector<16x256xbf16>, vector<256x128xbf16>, vector<16x128xf32> -> vector<16x128xf32>
    %c0_37 = arith.constant 0 : index
    %c0_38 = arith.constant 0 : index
    %72 = vector.load %arg10[%c0_37, %c0_38] : memref<1x128xf32, #tpu.memory_space<vmem>>, vector<1x128xf32>
    %73 = vector.broadcast %72 : vector<1x128xf32> to vector<16x128xf32>
    %74 = arith.addf %71, %73 : vector<16x128xf32>
    %75 = vector.shape_cast %0 : vector<1x16x128xf32> to vector<16x128xf32>
    %76 = arith.addf %75, %74 : vector<16x128xf32>
    %cst_39 = arith.constant dense<0.000000e+00> : vector<16xf32>
    %77 = vector.multi_reduction <add>, %76, %cst_39 [1] : vector<16x128xf32> to vector<16xf32>
    %78 = vector.shape_cast %77 : vector<16xf32> to vector<16x1xf32>
    %cst_40 = arith.constant 1.280000e+02 : f32
    %79 = vector.broadcast %cst_40 : f32 to vector<16x1xf32>
    %80 = arith.divf %78, %79 : vector<16x1xf32>
    %81 = vector.broadcast %80 : vector<16x1xf32> to vector<16x128xf32>
    %82 = arith.subf %76, %81 : vector<16x128xf32>
    %83 = arith.mulf %82, %82 : vector<16x128xf32>
    %cst_41 = arith.constant dense<0.000000e+00> : vector<16xf32>
    %84 = vector.multi_reduction <add>, %83, %cst_41 [1] : vector<16x128xf32> to vector<16xf32>
    %85 = vector.shape_cast %84 : vector<16xf32> to vector<16x1xf32>
    %cst_42 = arith.constant 1.280000e+02 : f32
    %86 = vector.broadcast %cst_42 : f32 to vector<16x1xf32>
    %87 = arith.divf %85, %86 : vector<16x1xf32>
    %cst_43 = arith.constant 9.99999974E-6 : f32
    %88 = vector.broadcast %cst_43 : f32 to vector<16x1xf32>
    %89 = arith.addf %87, %88 : vector<16x1xf32>
    %90 = math.rsqrt %89 : vector<16x1xf32>
    %91 = vector.broadcast %90 : vector<16x1xf32> to vector<16x128xf32>
    %92 = arith.mulf %82, %91 : vector<16x128xf32>
    %c0_44 = arith.constant 0 : index
    %c0_45 = arith.constant 0 : index
    %93 = vector.load %arg11[%c0_44, %c0_45] : memref<1x128xf32, #tpu.memory_space<vmem>>, vector<1x128xf32>
    %94 = vector.broadcast %93 : vector<1x128xf32> to vector<16x128xf32>
    %95 = arith.mulf %92, %94 : vector<16x128xf32>
    %c0_46 = arith.constant 0 : index
    %c0_47 = arith.constant 0 : index
    %96 = vector.load %arg12[%c0_46, %c0_47] : memref<1x128xf32, #tpu.memory_space<vmem>>, vector<1x128xf32>
    %97 = vector.broadcast %96 : vector<1x128xf32> to vector<16x128xf32>
    %98 = arith.addf %95, %97 : vector<16x128xf32>
    %99 = vector.shape_cast %98 : vector<16x128xf32> to vector<1x16x128xf32>
    %c0_48 = arith.constant 0 : index
    %c0_49 = arith.constant 0 : index
    %c0_50 = arith.constant 0 : index
    %100 = vector.load %arg13[%c0_48, %c0_49, %c0_50] : memref<1x16x128xf32, #tpu.memory_space<vmem>>, vector<1x16x128xf32>
    tpu.vector_store %arg13[%c0_48, %c0_49, %c0_50], %99 {strides = array<i32>} : memref<1x16x128xf32, #tpu.memory_space<vmem>>, vector<1x16x128xf32>,
    return
  }
  func.func @transform_0(%arg0: i32) -> (i32, i32, i32) {
    %c0_i32 = arith.constant 0 : i32
    %c0_i32_0 = arith.constant 0 : i32
    %c0_i32_1 = arith.constant 0 : i32
    return %arg0, %c0_i32, %c0_i32_0 : i32, i32, i32
  }
  func.func @transform_1(%arg0: i32) -> (i32, i32, i32) {
    %c0_i32 = arith.constant 0 : i32
    %c0_i32_0 = arith.constant 0 : i32
    %c0_i32_1 = arith.constant 0 : i32
    return %arg0, %c0_i32, %c0_i32_0 : i32, i32, i32
  }
  func.func @transform_2(%arg0: i32) -> (i32, i32) {
    %c0_i32 = arith.constant 0 : i32
    %c0_i32_0 = arith.constant 0 : i32
    %c0_i32_1 = arith.constant 0 : i32
    return %c0_i32, %c0_i32_0 : i32, i32
  }
  func.func @transform_3(%arg0: i32) -> (i32, i32) {
    %c0_i32 = arith.constant 0 : i32
    %c0_i32_0 = arith.constant 0 : i32
    %c0_i32_1 = arith.constant 0 : i32
    return %c0_i32, %c0_i32_0 : i32, i32
  }
  func.func @transform_4(%arg0: i32) -> (i32, i32) {
    %c0_i32 = arith.constant 0 : i32
    %c0_i32_0 = arith.constant 0 : i32
    %c0_i32_1 = arith.constant 0 : i32
    return %c0_i32, %c0_i32_0 : i32, i32
  }
  func.func @transform_5(%arg0: i32) -> (i32, i32) {
    %c0_i32 = arith.constant 0 : i32
    %c0_i32_0 = arith.constant 0 : i32
    %c0_i32_1 = arith.constant 0 : i32
    return %c0_i32, %c0_i32_0 : i32, i32
  }
  func.func @transform_6(%arg0: i32) -> (i32, i32) {
    %c0_i32 = arith.constant 0 : i32
    %c0_i32_0 = arith.constant 0 : i32
    %c0_i32_1 = arith.constant 0 : i32
    return %c0_i32, %c0_i32_0 : i32, i32
  }
  func.func @transform_7(%arg0: i32) -> (i32, i32) {
    %c0_i32 = arith.constant 0 : i32
    %c0_i32_0 = arith.constant 0 : i32
    %c0_i32_1 = arith.constant 0 : i32
    return %c0_i32, %c0_i32_0 : i32, i32
  }
  func.func @transform_8(%arg0: i32) -> (i32, i32) {
    %c0_i32 = arith.constant 0 : i32
    %c0_i32_0 = arith.constant 0 : i32
    %c0_i32_1 = arith.constant 0 : i32
    return %c0_i32, %c0_i32_0 : i32, i32
  }
  func.func @transform_9(%arg0: i32) -> (i32, i32) {
    %c0_i32 = arith.constant 0 : i32
    %c0_i32_0 = arith.constant 0 : i32
    %c0_i32_1 = arith.constant 0 : i32
    return %c0_i32, %c0_i32_0 : i32, i32
  }
  func.func @transform_10(%arg0: i32) -> (i32, i32) {
    %c0_i32 = arith.constant 0 : i32
    %c0_i32_0 = arith.constant 0 : i32
    %c0_i32_1 = arith.constant 0 : i32
    return %c0_i32, %c0_i32_0 : i32, i32
  }
  func.func @transform_11(%arg0: i32) -> (i32, i32) {
    %c0_i32 = arith.constant 0 : i32
    %c0_i32_0 = arith.constant 0 : i32
    %c0_i32_1 = arith.constant 0 : i32
    return %c0_i32, %c0_i32_0 : i32, i32
  }
  func.func @transform_12(%arg0: i32) -> (i32, i32, i32) {
    %c0_i32 = arith.constant 0 : i32
    %c0_i32_0 = arith.constant 0 : i32
    %c0_i32_1 = arith.constant 0 : i32
    return %arg0, %c0_i32, %c0_i32_0 : i32, i32, i32
  }
}

module attributes {stable_mosaic.version = 11 : i64} {
  func.func @_ffn_ln_kernel(%arg0: i32, %arg1: memref<16x128xf32, #tpu.memory_space<vmem>>, %arg2: memref<128x256xbf16, #tpu.memory_space<vmem>>, %arg3: memref<1x256xf32, #tpu.memory_space<vmem>>, %arg4: memref<256x128xbf16, #tpu.memory_space<vmem>>, %arg5: memref<1x128xf32, #tpu.memory_space<vmem>>, %arg6: memref<1x128xf32, #tpu.memory_space<vmem>>, %arg7: memref<1x128xf32, #tpu.memory_space<vmem>>, %arg8: memref<16x128xf32, #tpu.memory_space<vmem>>) attributes {dimension_semantics = [#tpu.dimension_semantics<parallel>], iteration_bounds = array<i64: 2>, scalar_prefetch = 0 : i64, scratch_operands = 0 : i64, tpu.core_type = #tpu.core_type<tc>, window_params = [{transform_indices = @transform_0, window_bounds = array<i64: 16, 128>}, {pipeline_mode = #tpu.pipeline_mode<synchronous>, transform_indices = @transform_1, window_bounds = array<i64: 128, 256>}, {pipeline_mode = #tpu.pipeline_mode<synchronous>, transform_indices = @transform_2, window_bounds = array<i64: 1, 256>}, {pipeline_mode = #tpu.pipeline_mode<synchronous>, transform_indices = @transform_3, window_bounds = array<i64: 256, 128>}, {pipeline_mode = #tpu.pipeline_mode<synchronous>, transform_indices = @transform_4, window_bounds = array<i64: 1, 128>}, {pipeline_mode = #tpu.pipeline_mode<synchronous>, transform_indices = @transform_5, window_bounds = array<i64: 1, 128>}, {pipeline_mode = #tpu.pipeline_mode<synchronous>, transform_indices = @transform_6, window_bounds = array<i64: 1, 128>}, {transform_indices = @transform_7, window_bounds = array<i64: 16, 128>}]} {
    %c0 = arith.constant 0 : index
    %c0_0 = arith.constant 0 : index
    %0 = vector.load %arg1[%c0, %c0_0] : memref<16x128xf32, #tpu.memory_space<vmem>>, vector<16x128xf32>
    %1 = arith.truncf %0 : vector<16x128xf32> to vector<16x128xbf16>
    %c0_1 = arith.constant 0 : index
    %c0_2 = arith.constant 0 : index
    %2 = vector.load %arg2[%c0_1, %c0_2] : memref<128x256xbf16, #tpu.memory_space<vmem>>, vector<128x256xbf16>
    %cst = arith.constant dense<0.000000e+00> : vector<16x256xf32>
    %3 = tpu.matmul %1, %2, %cst {dimension_numbers = #tpu.dot_dimension_numbers<[1], [0], [0], [1], [0, 0, 1, 1], [], []>} : vector<16x128xbf16>, vector<128x256xbf16>, vector<16x256xf32> -> vector<16x256xf32>
    %c0_3 = arith.constant 0 : index
    %c0_4 = arith.constant 0 : index
    %4 = vector.load %arg3[%c0_3, %c0_4] : memref<1x256xf32, #tpu.memory_space<vmem>>, vector<1x256xf32>
    %5 = vector.broadcast %4 : vector<1x256xf32> to vector<16x256xf32>
    %6 = arith.addf %3, %5 : vector<16x256xf32>
    %cst_5 = arith.constant 0.000000e+00 : f32
    %7 = vector.broadcast %cst_5 : f32 to vector<16x256xf32>
    %8 = arith.maximumf %6, %7 : vector<16x256xf32>
    %9 = arith.truncf %8 : vector<16x256xf32> to vector<16x256xbf16>
    %c0_6 = arith.constant 0 : index
    %c0_7 = arith.constant 0 : index
    %10 = vector.load %arg4[%c0_6, %c0_7] : memref<256x128xbf16, #tpu.memory_space<vmem>>, vector<256x128xbf16>
    %cst_8 = arith.constant dense<0.000000e+00> : vector<16x128xf32>
    %11 = tpu.matmul %9, %10, %cst_8 {dimension_numbers = #tpu.dot_dimension_numbers<[1], [0], [0], [1], [0, 0, 1, 1], [], []>} : vector<16x256xbf16>, vector<256x128xbf16>, vector<16x128xf32> -> vector<16x128xf32>
    %c0_9 = arith.constant 0 : index
    %c0_10 = arith.constant 0 : index
    %12 = vector.load %arg5[%c0_9, %c0_10] : memref<1x128xf32, #tpu.memory_space<vmem>>, vector<1x128xf32>
    %13 = vector.broadcast %12 : vector<1x128xf32> to vector<16x128xf32>
    %14 = arith.addf %11, %13 : vector<16x128xf32>
    %15 = arith.addf %0, %14 : vector<16x128xf32>
    %cst_11 = arith.constant dense<0.000000e+00> : vector<16xf32>
    %16 = vector.multi_reduction <add>, %15, %cst_11 [1] : vector<16x128xf32> to vector<16xf32>
    %17 = vector.shape_cast %16 : vector<16xf32> to vector<16x1xf32>
    %cst_12 = arith.constant 1.280000e+02 : f32
    %18 = vector.broadcast %cst_12 : f32 to vector<16x1xf32>
    %19 = arith.divf %17, %18 : vector<16x1xf32>
    %20 = vector.broadcast %19 : vector<16x1xf32> to vector<16x128xf32>
    %21 = arith.subf %15, %20 : vector<16x128xf32>
    %22 = arith.mulf %21, %21 : vector<16x128xf32>
    %cst_13 = arith.constant dense<0.000000e+00> : vector<16xf32>
    %23 = vector.multi_reduction <add>, %22, %cst_13 [1] : vector<16x128xf32> to vector<16xf32>
    %24 = vector.shape_cast %23 : vector<16xf32> to vector<16x1xf32>
    %cst_14 = arith.constant 1.280000e+02 : f32
    %25 = vector.broadcast %cst_14 : f32 to vector<16x1xf32>
    %26 = arith.divf %24, %25 : vector<16x1xf32>
    %cst_15 = arith.constant 9.99999974E-6 : f32
    %27 = vector.broadcast %cst_15 : f32 to vector<16x1xf32>
    %28 = arith.addf %26, %27 : vector<16x1xf32>
    %29 = math.rsqrt %28 : vector<16x1xf32>
    %30 = vector.broadcast %29 : vector<16x1xf32> to vector<16x128xf32>
    %31 = arith.mulf %21, %30 : vector<16x128xf32>
    %c0_16 = arith.constant 0 : index
    %c0_17 = arith.constant 0 : index
    %32 = vector.load %arg6[%c0_16, %c0_17] : memref<1x128xf32, #tpu.memory_space<vmem>>, vector<1x128xf32>
    %33 = vector.broadcast %32 : vector<1x128xf32> to vector<16x128xf32>
    %34 = arith.mulf %31, %33 : vector<16x128xf32>
    %c0_18 = arith.constant 0 : index
    %c0_19 = arith.constant 0 : index
    %35 = vector.load %arg7[%c0_18, %c0_19] : memref<1x128xf32, #tpu.memory_space<vmem>>, vector<1x128xf32>
    %36 = vector.broadcast %35 : vector<1x128xf32> to vector<16x128xf32>
    %37 = arith.addf %34, %36 : vector<16x128xf32>
    %c0_20 = arith.constant 0 : index
    %c0_21 = arith.constant 0 : index
    %38 = vector.load %arg8[%c0_20, %c0_21] : memref<16x128xf32, #tpu.memory_space<vmem>>, vector<16x128xf32>
    tpu.vector_store %arg8[%c0_20, %c0_21], %37 {strides = array<i32>} : memref<16x128xf32, #tpu.memory_space<vmem>>, vector<16x128xf32>,
    return
  }
  func.func @transform_0(%arg0: i32) -> (i32, i32) {
    %c0_i32 = arith.constant 0 : i32
    %c0_i32_0 = arith.constant 0 : i32
    return %arg0, %c0_i32 : i32, i32
  }
  func.func @transform_1(%arg0: i32) -> (i32, i32) {
    %c0_i32 = arith.constant 0 : i32
    %c0_i32_0 = arith.constant 0 : i32
    %c0_i32_1 = arith.constant 0 : i32
    return %c0_i32, %c0_i32_0 : i32, i32
  }
  func.func @transform_2(%arg0: i32) -> (i32, i32) {
    %c0_i32 = arith.constant 0 : i32
    %c0_i32_0 = arith.constant 0 : i32
    %c0_i32_1 = arith.constant 0 : i32
    return %c0_i32, %c0_i32_0 : i32, i32
  }
  func.func @transform_3(%arg0: i32) -> (i32, i32) {
    %c0_i32 = arith.constant 0 : i32
    %c0_i32_0 = arith.constant 0 : i32
    %c0_i32_1 = arith.constant 0 : i32
    return %c0_i32, %c0_i32_0 : i32, i32
  }
  func.func @transform_4(%arg0: i32) -> (i32, i32) {
    %c0_i32 = arith.constant 0 : i32
    %c0_i32_0 = arith.constant 0 : i32
    %c0_i32_1 = arith.constant 0 : i32
    return %c0_i32, %c0_i32_0 : i32, i32
  }
  func.func @transform_5(%arg0: i32) -> (i32, i32) {
    %c0_i32 = arith.constant 0 : i32
    %c0_i32_0 = arith.constant 0 : i32
    %c0_i32_1 = arith.constant 0 : i32
    return %c0_i32, %c0_i32_0 : i32, i32
  }
  func.func @transform_6(%arg0: i32) -> (i32, i32) {
    %c0_i32 = arith.constant 0 : i32
    %c0_i32_0 = arith.constant 0 : i32
    %c0_i32_1 = arith.constant 0 : i32
    return %c0_i32, %c0_i32_0 : i32, i32
  }
  func.func @transform_7(%arg0: i32) -> (i32, i32) {
    %c0_i32 = arith.constant 0 : i32
    %c0_i32_0 = arith.constant 0 : i32
    return %arg0, %c0_i32 : i32, i32
  }
}

module attributes {stable_mosaic.version = 11 : i64} {
  func.func @_ffn_ln_kernel(%arg0: i32, %arg1: memref<16x128xf32, #tpu.memory_space<vmem>>, %arg2: memref<128x256xbf16, #tpu.memory_space<vmem>>, %arg3: memref<1x256xf32, #tpu.memory_space<vmem>>, %arg4: memref<256x128xbf16, #tpu.memory_space<vmem>>, %arg5: memref<1x128xf32, #tpu.memory_space<vmem>>, %arg6: memref<1x128xf32, #tpu.memory_space<vmem>>, %arg7: memref<1x128xf32, #tpu.memory_space<vmem>>, %arg8: memref<16x128xf32, #tpu.memory_space<vmem>>) attributes {dimension_semantics = [#tpu.dimension_semantics<parallel>], iteration_bounds = array<i64: 2>, scalar_prefetch = 0 : i64, scratch_operands = 0 : i64, tpu.core_type = #tpu.core_type<tc>, window_params = [{transform_indices = @transform_0, window_bounds = array<i64: 16, 128>}, {pipeline_mode = #tpu.pipeline_mode<synchronous>, transform_indices = @transform_1, window_bounds = array<i64: 128, 256>}, {pipeline_mode = #tpu.pipeline_mode<synchronous>, transform_indices = @transform_2, window_bounds = array<i64: 1, 256>}, {pipeline_mode = #tpu.pipeline_mode<synchronous>, transform_indices = @transform_3, window_bounds = array<i64: 256, 128>}, {pipeline_mode = #tpu.pipeline_mode<synchronous>, transform_indices = @transform_4, window_bounds = array<i64: 1, 128>}, {pipeline_mode = #tpu.pipeline_mode<synchronous>, transform_indices = @transform_5, window_bounds = array<i64: 1, 128>}, {pipeline_mode = #tpu.pipeline_mode<synchronous>, transform_indices = @transform_6, window_bounds = array<i64: 1, 128>}, {transform_indices = @transform_7, window_bounds = array<i64: 16, 128>}]} {
    %c0 = arith.constant 0 : index
    %c0_0 = arith.constant 0 : index
    %0 = vector.load %arg1[%c0, %c0_0] : memref<16x128xf32, #tpu.memory_space<vmem>>, vector<16x128xf32>
    %1 = arith.truncf %0 : vector<16x128xf32> to vector<16x128xbf16>
    %c0_1 = arith.constant 0 : index
    %c0_2 = arith.constant 0 : index
    %2 = vector.load %arg2[%c0_1, %c0_2] : memref<128x256xbf16, #tpu.memory_space<vmem>>, vector<128x256xbf16>
    %cst = arith.constant dense<0.000000e+00> : vector<16x256xf32>
    %3 = tpu.matmul %1, %2, %cst {dimension_numbers = #tpu.dot_dimension_numbers<[1], [0], [0], [1], [0, 0, 1, 1], [], []>} : vector<16x128xbf16>, vector<128x256xbf16>, vector<16x256xf32> -> vector<16x256xf32>
    %c0_3 = arith.constant 0 : index
    %c0_4 = arith.constant 0 : index
    %4 = vector.load %arg3[%c0_3, %c0_4] : memref<1x256xf32, #tpu.memory_space<vmem>>, vector<1x256xf32>
    %5 = vector.broadcast %4 : vector<1x256xf32> to vector<16x256xf32>
    %6 = arith.addf %3, %5 : vector<16x256xf32>
    %cst_5 = arith.constant 0.000000e+00 : f32
    %7 = vector.broadcast %cst_5 : f32 to vector<16x256xf32>
    %8 = arith.maximumf %6, %7 : vector<16x256xf32>
    %9 = arith.truncf %8 : vector<16x256xf32> to vector<16x256xbf16>
    %c0_6 = arith.constant 0 : index
    %c0_7 = arith.constant 0 : index
    %10 = vector.load %arg4[%c0_6, %c0_7] : memref<256x128xbf16, #tpu.memory_space<vmem>>, vector<256x128xbf16>
    %cst_8 = arith.constant dense<0.000000e+00> : vector<16x128xf32>
    %11 = tpu.matmul %9, %10, %cst_8 {dimension_numbers = #tpu.dot_dimension_numbers<[1], [0], [0], [1], [0, 0, 1, 1], [], []>} : vector<16x256xbf16>, vector<256x128xbf16>, vector<16x128xf32> -> vector<16x128xf32>
    %c0_9 = arith.constant 0 : index
    %c0_10 = arith.constant 0 : index
    %12 = vector.load %arg5[%c0_9, %c0_10] : memref<1x128xf32, #tpu.memory_space<vmem>>, vector<1x128xf32>
    %13 = vector.broadcast %12 : vector<1x128xf32> to vector<16x128xf32>
    %14 = arith.addf %11, %13 : vector<16x128xf32>
    %15 = arith.addf %0, %14 : vector<16x128xf32>
    %cst_11 = arith.constant dense<0.000000e+00> : vector<16xf32>
    %16 = vector.multi_reduction <add>, %15, %cst_11 [1] : vector<16x128xf32> to vector<16xf32>
    %17 = vector.shape_cast %16 : vector<16xf32> to vector<16x1xf32>
    %cst_12 = arith.constant 1.280000e+02 : f32
    %18 = vector.broadcast %cst_12 : f32 to vector<16x1xf32>
    %19 = arith.divf %17, %18 : vector<16x1xf32>
    %20 = vector.broadcast %19 : vector<16x1xf32> to vector<16x128xf32>
    %21 = arith.subf %15, %20 : vector<16x128xf32>
    %22 = arith.mulf %21, %21 : vector<16x128xf32>
    %cst_13 = arith.constant dense<0.000000e+00> : vector<16xf32>
    %23 = vector.multi_reduction <add>, %22, %cst_13 [1] : vector<16x128xf32> to vector<16xf32>
    %24 = vector.shape_cast %23 : vector<16xf32> to vector<16x1xf32>
    %cst_14 = arith.constant 1.280000e+02 : f32
    %25 = vector.broadcast %cst_14 : f32 to vector<16x1xf32>
    %26 = arith.divf %24, %25 : vector<16x1xf32>
    %cst_15 = arith.constant 9.99999974E-6 : f32
    %27 = vector.broadcast %cst_15 : f32 to vector<16x1xf32>
    %28 = arith.addf %26, %27 : vector<16x1xf32>
    %29 = math.rsqrt %28 : vector<16x1xf32>
    %30 = vector.broadcast %29 : vector<16x1xf32> to vector<16x128xf32>
    %31 = arith.mulf %21, %30 : vector<16x128xf32>
    %c0_16 = arith.constant 0 : index
    %c0_17 = arith.constant 0 : index
    %32 = vector.load %arg6[%c0_16, %c0_17] : memref<1x128xf32, #tpu.memory_space<vmem>>, vector<1x128xf32>
    %33 = vector.broadcast %32 : vector<1x128xf32> to vector<16x128xf32>
    %34 = arith.mulf %31, %33 : vector<16x128xf32>
    %c0_18 = arith.constant 0 : index
    %c0_19 = arith.constant 0 : index
    %35 = vector.load %arg7[%c0_18, %c0_19] : memref<1x128xf32, #tpu.memory_space<vmem>>, vector<1x128xf32>
    %36 = vector.broadcast %35 : vector<1x128xf32> to vector<16x128xf32>
    %37 = arith.addf %34, %36 : vector<16x128xf32>
    %c0_20 = arith.constant 0 : index
    %c0_21 = arith.constant 0 : index
    %38 = vector.load %arg8[%c0_20, %c0_21] : memref<16x128xf32, #tpu.memory_space<vmem>>, vector<16x128xf32>
    tpu.vector_store %arg8[%c0_20, %c0_21], %37 {strides = array<i32>} : memref<16x128xf32, #tpu.memory_space<vmem>>, vector<16x128xf32>,
    return
  }
  func.func @transform_0(%arg0: i32) -> (i32, i32) {
    %c0_i32 = arith.constant 0 : i32
    %c0_i32_0 = arith.constant 0 : i32
    return %arg0, %c0_i32 : i32, i32
  }
  func.func @transform_1(%arg0: i32) -> (i32, i32) {
    %c0_i32 = arith.constant 0 : i32
    %c0_i32_0 = arith.constant 0 : i32
    %c0_i32_1 = arith.constant 0 : i32
    return %c0_i32, %c0_i32_0 : i32, i32
  }
  func.func @transform_2(%arg0: i32) -> (i32, i32) {
    %c0_i32 = arith.constant 0 : i32
    %c0_i32_0 = arith.constant 0 : i32
    %c0_i32_1 = arith.constant 0 : i32
    return %c0_i32, %c0_i32_0 : i32, i32
  }
  func.func @transform_3(%arg0: i32) -> (i32, i32) {
    %c0_i32 = arith.constant 0 : i32
    %c0_i32_0 = arith.constant 0 : i32
    %c0_i32_1 = arith.constant 0 : i32
    return %c0_i32, %c0_i32_0 : i32, i32
  }
  func.func @transform_4(%arg0: i32) -> (i32, i32) {
    %c0_i32 = arith.constant 0 : i32
    %c0_i32_0 = arith.constant 0 : i32
    %c0_i32_1 = arith.constant 0 : i32
    return %c0_i32, %c0_i32_0 : i32, i32
  }
  func.func @transform_5(%arg0: i32) -> (i32, i32) {
    %c0_i32 = arith.constant 0 : i32
    %c0_i32_0 = arith.constant 0 : i32
    %c0_i32_1 = arith.constant 0 : i32
    return %c0_i32, %c0_i32_0 : i32, i32
  }
  func.func @transform_6(%arg0: i32) -> (i32, i32) {
    %c0_i32 = arith.constant 0 : i32
    %c0_i32_0 = arith.constant 0 : i32
    %c0_i32_1 = arith.constant 0 : i32
    return %c0_i32, %c0_i32_0 : i32, i32
  }
  func.func @transform_7(%arg0: i32) -> (i32, i32) {
    %c0_i32 = arith.constant 0 : i32
    %c0_i32_0 = arith.constant 0 : i32
    return %arg0, %c0_i32 : i32, i32
  }
}

</mosaic_0001>

<llo_original>
// kernel: encoder_forward.7
$region0: #{encoder_forward.7}
  #allocation0 [shape = 'u32[]', space=smem, size = 0x4, offset = 0x4, fixed_abs, tag = 'smem constant byte address 0x4 - core index']
  #allocation1 [shape = 'u32[144,128]{1,0:T(1,128)}', space=vmem, size = 0x12000, scoped, tag = 'internal scratch']
  %s0 = inlined_call_operand.vmem [shape: f32[32,128], index: 0, kind: input, shape index: {}]
  %s1 = inlined_call_operand.hbm [shape: bf16[128,256], index: 1, kind: input, shape index: {}]
  %s2 = inlined_call_operand.hbm [shape: f32[1,256], index: 2, kind: input, shape index: {}]
  %s3 = inlined_call_operand.hbm [shape: bf16[256,128], index: 3, kind: input, shape index: {}]
  %s4 = inlined_call_operand.hbm [shape: f32[1,128], index: 4, kind: input, shape index: {}]
  %s5 = inlined_call_operand.hbm [shape: f32[1,128], index: 5, kind: input, shape index: {}]
  %s6 = inlined_call_operand.hbm [shape: f32[1,128], index: 6, kind: input, shape index: {}]
  %s7 = inlined_call_operand.hbm [shape: f32[32,128], index: 7, kind: output, shape index: {}]
  %s8 = sld [smem:[#allocation0]]
  $region85: #{encoder_forward.7} parent=0
    _
  %s10 = ssub.s32 1, %s8
  %s11 = scalar_select 0, %s10, %s8
  $region1: #{encoder_forward.7} parent=0
    #allocation2 [shape = 'u8[65536]{0}', space=vmem, size = 0x10000, scoped, tag = 'input window, operand 1, single buffered']
    #allocation3 [shape = 's32[2]{0}', space=sflag, size = 0x8, scoped, tag = 'scoped memory for encoder_forward.7']
    #allocation4 [shape = 's32[2]{0}', space=sflag, size = 0x8, scoped, tag = 'scoped memory for encoder_forward.7']
    #allocation5 [shape = 'u8[1024]{0}', space=vmem, size = 0x400, scoped, tag = 'input window, operand 2, single buffered']
    #allocation6 [shape = 's32[1]{0}', space=sflag, size = 0x4, scoped, tag = 'scoped memory for encoder_forward.7']
    #allocation7 [shape = 'u8[65536]{0}', space=vmem, size = 0x10000, scoped, tag = 'input window, operand 3, single buffered']
    #allocation8 [shape = 'u8[512]{0}', space=vmem, size = 0x400, scoped, tag = 'input window, operand 4, single buffered']
    #allocation9 [shape = 's32[1]{0}', space=sflag, size = 0x4, scoped, tag = 'scoped memory for encoder_forward.7']
    #allocation10 [shape = 'u8[512]{0}', space=vmem, size = 0x400, scoped, tag = 'input window, operand 5, single buffered']
    #allocation11 [shape = 'u8[512]{0}', space=vmem, size = 0x400, scoped, tag = 'input window, operand 6, single buffered']
    #allocation12 [shape = 's32[1]{0}', space=sflag, size = 0x4, scoped, tag = 'scoped memory for encoder_forward.7']
    #allocation13 [shape = 'u8[16384]{0}', space=vmem, size = 0x4000, scoped, tag = 'output window, operand 0']
    %12 = vsyncpa [#allocation3], 0
    %13 = vsyncpa [#allocation6], 0
    %14 = vsyncpa [#allocation9], 0
    %15 = vsyncpa [#allocation12], 0
    %16 = vsyncpa [#allocation4], 0
    %s17 = scalar_lea.sflag [#allocation4], 1
    %18 = vsyncpa %s17, 0
    loop: start=0, step=1, limit=4
    $region2: #{encoder_forward.7} parent=1 // loop_pre_header
      _
    $region3: #{encoder_forward.7} parent=1 // loop_header
      %s20 = sphi 0, %s24
      %p21 = scmp.ge.s32.totalorder %s20, 4
      %s30 = sphi 0, %s32
      %s33 = sphi 0, %s30
      %s34 = sphi 0, %s33
      %s50 = sphi 0, %s34
      %s54 = sphi 0, %s54
      %s56 = sphi 0, %s54
      %s57 = sphi 0, %s56
      %s71 = sphi 0, %s57
      %s75 = sphi 0, %s75
      %s77 = sphi 0, %s75
      %s78 = sphi 0, %s77
      %s92 = sphi 0, %s78
      %s96 = sphi 0, %s96
      %s98 = sphi 0, %s96
      %s99 = sphi 0, %s98
      %s113 = sphi 0, %s99
      %s117 = sphi 0, %s117
      %s119 = sphi 0, %s117
      %s120 = sphi 0, %s119
      %s134 = sphi 0, %s120
      %s138 = sphi 0, %s138
      %s140 = sphi 0, %s138
      %s141 = sphi 0, %s140
      %s155 = sphi 0, %s141
      %s159 = sphi 0, %s159
      %s161 = sphi 0, %s159
      %s162 = sphi 0, %s161
      %s176 = sphi 0, %s162
      %s182 = sphi 0, %s184
      %s185 = sphi 0, %s182
      %s186 = sphi 0, %s185
      %s202 = sphi 0, %s186
    $region4: #{encoder_forward.7} parent=1 // loop_header_branch
      %23 = sbr.rel (%p21) target = $region8
    $region5: #{encoder_forward.7} parent=1 // loop_body
      %s25 = ssub.s32 %s20, 1
      %s26 = ssub.s32 %s20, 2
      %s27 = sadd.s32 %s20, 1
      %s28 = ssub.s32 %s20, %s27
      %p29 = scmp.eq.s32.totalorder %s28, 0
      %s31 = sadd.s32 %s30, 1
      %s32 = scalar_select %p29, %s30, %s31
      %p35 = pneg %p29
      %p36 = scmp.eq.s32.totalorder %s20, 1
      %p37 = por %p35, %p36
      %p38 = scmp.ne.s32.totalorder %s30, %s33
      %p39 = scmp.eq.s32.totalorder %s20, 0
      %p40 = por %p38, %p39
      %p41 = scmp.ne.s32.totalorder %s30, %s33
      %p42 = scmp.eq.s32.totalorder %s25, 1
      %p43 = por %p41, %p42
      %p44 = scmp.ne.s32.totalorder %s33, %s34
      %p45 = scmp.eq.s32.totalorder %s25, 0
      %p46 = por %p44, %p45
      %p47 = scmp.ne.s32.totalorder %s33, %s34
      %p48 = scmp.eq.s32.totalorder %s26, 1
      %p49 = por %p47, %p48
      %p51 = scmp.ne.s32.totalorder %s34, %s50
      %p52 = scmp.eq.s32.totalorder %s26, 0
      %p53 = por %p51, %p52
      %s55 = sadd.s32 %s54, 1
      %p58 = scmp.eq.s32.totalorder %s20, 1
      %p59 = scmp.ne.s32.totalorder %s54, %s56
      %p60 = scmp.eq.s32.totalorder %s20, 0
      %p61 = por %p59, %p60
      %p62 = scmp.ne.s32.totalorder %s54, %s56
      %p63 = scmp.eq.s32.totalorder %s25, 1
      %p64 = por %p62, %p63
      %p65 = scmp.ne.s32.totalorder %s56, %s57
      %p66 = scmp.eq.s32.totalorder %s25, 0
      %p67 = por %p65, %p66
      %p68 = scmp.ne.s32.totalorder %s56, %s57
      %p69 = scmp.eq.s32.totalorder %s26, 1
      %p70 = por %p68, %p69
      %p72 = scmp.ne.s32.totalorder %s57, %s71
      %p73 = scmp.eq.s32.totalorder %s26, 0
      %p74 = por %p72, %p73
      %s76 = sadd.s32 %s75, 1
      %p79 = scmp.eq.s32.totalorder %s20, 1
      %p80 = scmp.ne.s32.totalorder %s75, %s77
      %p81 = scmp.eq.s32.totalorder %s20, 0
      %p82 = por %p80, %p81
      %p83 = scmp.ne.s32.totalorder %s75, %s77
      %p84 = scmp.eq.s32.totalorder %s25, 1
      %p85 = por %p83, %p84
      %p86 = scmp.ne.s32.totalorder %s77, %s78
      %p87 = scmp.eq.s32.totalorder %s25, 0
      %p88 = por %p86, %p87
      %p89 = scmp.ne.s32.totalorder %s77, %s78
      %p90 = scmp.eq.s32.totalorder %s26, 1
      %p91 = por %p89, %p90
      %p93 = scmp.ne.s32.totalorder %s78, %s92
      %p94 = scmp.eq.s32.totalorder %s26, 0
      %p95 = por %p93, %p94
      %s97 = sadd.s32 %s96, 1
      %p100 = scmp.eq.s32.totalorder %s20, 1
      %p101 = scmp.ne.s32.totalorder %s96, %s98
      %p102 = scmp.eq.s32.totalorder %s20, 0
      %p103 = por %p101, %p102
      %p104 = scmp.ne.s32.totalorder %s96, %s98
      %p105 = scmp.eq.s32.totalorder %s25, 1
      %p106 = por %p104, %p105
      %p107 = scmp.ne.s32.totalorder %s98, %s99
      %p108 = scmp.eq.s32.totalorder %s25, 0
      %p109 = por %p107, %p108
      %p110 = scmp.ne.s32.totalorder %s98, %s99
      %p111 = scmp.eq.s32.totalorder %s26, 1
      %p112 = por %p110, %p111
      %p114 = scmp.ne.s32.totalorder %s99, %s113
      %p115 = scmp.eq.s32.totalorder %s26, 0
      %p116 = por %p114, %p115
      %s118 = sadd.s32 %s117, 1
      %p121 = scmp.eq.s32.totalorder %s20, 1
      %p122 = scmp.ne.s32.totalorder %s117, %s119
      %p123 = scmp.eq.s32.totalorder %s20, 0
      %p124 = por %p122, %p123
      %p125 = scmp.ne.s32.totalorder %s117, %s119
      %p126 = scmp.eq.s32.totalorder %s25, 1
      %p127 = por %p125, %p126
      %p128 = scmp.ne.s32.totalorder %s119, %s120
      %p129 = scmp.eq.s32.totalorder %s25, 0
      %p130 = por %p128, %p129
      %p131 = scmp.ne.s32.totalorder %s119, %s120
      %p132 = scmp.eq.s32.totalorder %s26, 1
      %p133 = por %p131, %p132
      %p135 = scmp.ne.s32.totalorder %s120, %s134
      %p136 = scmp.eq.s32.totalorder %s26, 0
      %p137 = por %p135, %p136
      %s139 = sadd.s32 %s138, 1
      %p142 = scmp.eq.s32.totalorder %s20, 1
      %p143 = scmp.ne.s32.totalorder %s138, %s140
      %p144 = scmp.eq.s32.totalorder %s20, 0
      %p145 = por %p143, %p144
      %p146 = scmp.ne.s32.totalorder %s138, %s140
      %p147 = scmp.eq.s32.totalorder %s25, 1
      %p148 = por %p146, %p147
      %p149 = scmp.ne.s32.totalorder %s140, %s141
      %p150 = scmp.eq.s32.totalorder %s25, 0
      %p151 = por %p149, %p150
      %p152 = scmp.ne.s32.totalorder %s140, %s141
      %p153 = scmp.eq.s32.totalorder %s26, 1
      %p154 = por %p152, %p153
      %p156 = scmp.ne.s32.totalorder %s141, %s155
      %p157 = scmp.eq.s32.totalorder %s26, 0
      %p158 = por %p156, %p157
      %s160 = sadd.s32 %s159, 1
      %p163 = scmp.eq.s32.totalorder %s20, 1
      %p164 = scmp.ne.s32.totalorder %s159, %s161
      %p165 = scmp.eq.s32.totalorder %s20, 0
      %p166 = por %p164, %p165
      %p167 = scmp.ne.s32.totalorder %s159, %s161
      %p168 = scmp.eq.s32.totalorder %s25, 1
      %p169 = por %p167, %p168
      %p170 = scmp.ne.s32.totalorder %s161, %s162
      %p171 = scmp.eq.s32.totalorder %s25, 0
      %p172 = por %p170, %p171
      %p173 = scmp.ne.s32.totalorder %s161, %s162
      %p174 = scmp.eq.s32.totalorder %s26, 1
      %p175 = por %p173, %p174
      %p177 = scmp.ne.s32.totalorder %s162, %s176
      %p178 = scmp.eq.s32.totalorder %s26, 0
      %p179 = por %p177, %p178
      %s180 = ssub.s32 %s20, %s27
      %p181 = scmp.eq.s32.totalorder %s180, 0
      %s183 = sadd.s32 %s182, 1
      %s184 = scalar_select %p181, %s182, %s183
      %p187 = pneg %p181
      %p188 = scmp.eq.s32.totalorder %s20, 1
      %p189 = por %p187, %p188
      %p190 = scmp.ne.s32.totalorder %s182, %s185
      %p191 = scmp.eq.s32.totalorder %s20, 0
      %p192 = por %p190, %p191
      %p193 = scmp.ne.s32.totalorder %s182, %s185
      %p194 = scmp.eq.s32.totalorder %s25, 1
      %p195 = por %p193, %p194
      %p196 = scmp.ne.s32.totalorder %s185, %s186
      %p197 = scmp.eq.s32.totalorder %s25, 0
      %p198 = por %p196, %p197
      %p199 = scmp.ne.s32.totalorder %s185, %s186
      %p200 = scmp.eq.s32.totalorder %s26, 1
      %p201 = por %p199, %p200
      %p203 = scmp.ne.s32.totalorder %s186, %s202
      %p204 = scmp.eq.s32.totalorder %s26, 0
      %p205 = por %p203, %p204
      %p206 = scmp.le.s32.totalorder 1, %s20
      %p207 = scmp.lt.s32.totalorder %s20, 3
      %p208 = pnand %p206, %p207
      %p209 = pneg %p208
      // Predicated region
      $region9: #{encoder_forward.7} parent=5 // pred_check
        _
      $region10: #{encoder_forward.7} parent=5 // pred_check_branch
        %211 = sbr.rel (%p208) target = $region12
      $region11: #{encoder_forward.7} parent=5 // pred_region
        %s212 = ssub.s32 %s20, 1
        // Predicated region
        $region13: #{encoder_forward.7} parent=11 // pred_check
          %p213 = pneg %p67
        $region14: #{encoder_forward.7} parent=11 // pred_check_branch
          %215 = sbr.rel (%p213) target = $region16
        $region15: #{encoder_forward.7} parent=11 // pred_region
          %s217 = ssub.s32 2048, 2048
          %218 = vsyncadd [#allocation3], %s217
          %s219 = sshll.u32 [#allocation2], 4
          %s220 = int_to_ptr.vmem [resolvable:$true] %s219
          %225 = dma.hbm_to_vmem [thread:$0]  %s1, 2048, %s220, [#allocation3], 128, 128, 8
        $region16: #{encoder_forward.7} parent=11 // pred_fallthru
          _
        // Predicated region
        $region17: #{encoder_forward.7} parent=11 // pred_check
          %p226 = pneg %p88
        $region18: #{encoder_forward.7} parent=11 // pred_check_branch
          %228 = sbr.rel (%p226) target = $region20
        $region19: #{encoder_forward.7} parent=11 // pred_region
          %s230 = ssub.s32 32, 32
          %231 = vsyncadd [#allocation6], %s230
          %s233 = sshll.u32 [#allocation5], 4
          %s234 = int_to_ptr.vmem [resolvable:$true] %s233
          %236 = dma.hbm_to_vmem [thread:$0]  %s2, 32, %s234, [#allocation6]
        $region20: #{encoder_forward.7} parent=11 // pred_fallthru
          _
        // Predicated region
        $region21: #{encoder_forward.7} parent=11 // pred_check
          %p237 = pneg %p109
        $region22: #{encoder_forward.7} parent=11 // pred_check_branch
          %239 = sbr.rel (%p237) target = $region24
        $region23: #{encoder_forward.7} parent=11 // pred_region
          %s241 = ssub.s32 2048, 2048
          %242 = vsyncadd [#allocation6], %s241
          %s243 = sshll.u32 [#allocation7], 4
          %s244 = int_to_ptr.vmem [resolvable:$true] %s243
          %249 = dma.hbm_to_vmem [thread:$0]  %s3, 2048, %s244, [#allocation6], 64, 64, 4
        $region24: #{encoder_forward.7} parent=11 // pred_fallthru
          _
        // Predicated region
        $region25: #{encoder_forward.7} parent=11 // pred_check
          %p250 = pneg %p130
        $region26: #{encoder_forward.7} parent=11 // pred_check_branch
          %252 = sbr.rel (%p250) target = $region28
        $region27: #{encoder_forward.7} parent=11 // pred_region
          %s254 = ssub.s32 16, 16
          %255 = vsyncadd [#allocation9], %s254
          %s257 = sshll.u32 [#allocation8], 4
          %s258 = int_to_ptr.vmem [resolvable:$true] %s257
          %260 = dma.hbm_to_vmem [thread:$0]  %s4, 16, %s258, [#allocation9]
        $region28: #{encoder_forward.7} parent=11 // pred_fallthru
          _
        // Predicated region
        $region29: #{encoder_forward.7} parent=11 // pred_check
          %p261 = pneg %p151
        $region30: #{encoder_forward.7} parent=11 // pred_check_branch
          %263 = sbr.rel (%p261) target = $region32
        $region31: #{encoder_forward.7} parent=11 // pred_region
          %s265 = ssub.s32 16, 16
          %266 = vsyncadd [#allocation9], %s265
          %s268 = sshll.u32 [#allocation10], 4
          %s269 = int_to_ptr.vmem [resolvable:$true] %s268
          %271 = dma.hbm_to_vmem [thread:$0]  %s5, 16, %s269, [#allocation9]
        $region32: #{encoder_forward.7} parent=11 // pred_fallthru
          _
        // Predicated region
        $region33: #{encoder_forward.7} parent=11 // pred_check
          %p272 = pneg %p172
        $region34: #{encoder_forward.7} parent=11 // pred_check_branch
          %274 = sbr.rel (%p272) target = $region36
        $region35: #{encoder_forward.7} parent=11 // pred_region
          %s276 = ssub.s32 16, 16
          %277 = vsyncadd [#allocation12], %s276
          %s279 = sshll.u32 [#allocation11], 4
          %s280 = int_to_ptr.vmem [resolvable:$true] %s279
          %282 = dma.hbm_to_vmem [thread:$0]  %s6, 16, %s280, [#allocation12]
        $region36: #{encoder_forward.7} parent=11 // pred_fallthru
          _
      $region12: #{encoder_forward.7} parent=5 // pred_fallthru
        _
      %p283 = scmp.lt.s32.totalorder %s20, 2
      // Predicated region
      $region37: #{encoder_forward.7} parent=5 // pred_check
        %p284 = pneg %p283
      $region38: #{encoder_forward.7} parent=5 // pred_check_branch
        %286 = sbr.rel (%p284) target = $region40
      $region39: #{encoder_forward.7} parent=5 // pred_region
        // Predicated region
        $region41: #{encoder_forward.7} parent=39 // pred_check
          %p287 = pneg %p40
        $region42: #{encoder_forward.7} parent=39 // pred_check_branch
          %289 = sbr.rel (%p287) target = $region44
        $region43: #{encoder_forward.7} parent=39 // pred_region
          %s290 = smul.u32 2, %s20
          %p291 = scmp.lt.s32.totalorder %s290, 3
          %s292 = scalar_select %p291, %s290, 3
          %s293 = smul.addr %s292, 8
          %s294 = scalar_lea.vmem %s0, %s293
          %s295 = smul.u32 2, %s20
        $region44: #{encoder_forward.7} parent=39 // pred_fallthru
          _
      $region40: #{encoder_forward.7} parent=5 // pred_fallthru
        _
      %p296 = scmp.le.s32.totalorder 1, %s20
      %p297 = scmp.lt.s32.totalorder %s20, 3
      %p298 = pnand %p296, %p297
      %p299 = pneg %p298
      // Predicated region
      $region45: #{encoder_forward.7} parent=5 // pred_check
        _
      $region46: #{encoder_forward.7} parent=5 // pred_check_branch
        %301 = sbr.rel (%p298) target = $region48
      $region47: #{encoder_forward.7} parent=5 // pred_region
        %s302 = ssub.s32 %s20, 1
        // Predicated region
        $region49: #{encoder_forward.7} parent=47 // pred_check
          %p303 = pneg %p67
        $region50: #{encoder_forward.7} parent=47 // pred_check_branch
          %305 = sbr.rel (%p303) target = $region52
        $region51: #{encoder_forward.7} parent=47 // pred_region
          %306 = dma.done [#allocation3], 2048
        $region52: #{encoder_forward.7} parent=47 // pred_fallthru
          _
        // Predicated region
        $region53: #{encoder_forward.7} parent=47 // pred_check
          %p307 = pneg %p88
        $region54: #{encoder_forward.7} parent=47 // pred_check_branch
          %309 = sbr.rel (%p307) target = $region56
        $region55: #{encoder_forward.7} parent=47 // pred_region
          %310 = dma.done [#allocation6], 32
        $region56: #{encoder_forward.7} parent=47 // pred_fallthru
          _
        // Predicated region
        $region57: #{encoder_forward.7} parent=47 // pred_check
          %p311 = pneg %p109
        $region58: #{encoder_forward.7} parent=47 // pred_check_branch
          %313 = sbr.rel (%p311) target = $region60
        $region59: #{encoder_forward.7} parent=47 // pred_region
          %314 = dma.done [#allocation6], 2048
        $region60: #{encoder_forward.7} parent=47 // pred_fallthru
          _
        // Predicated region
        $region61: #{encoder_forward.7} parent=47 // pred_check
          %p315 = pneg %p130
        $region62: #{encoder_forward.7} parent=47 // pred_check_branch
          %317 = sbr.rel (%p315) target = $region64
        $region63: #{encoder_forward.7} parent=47 // pred_region
          %318 = dma.done [#allocation9], 16
        $region64: #{encoder_forward.7} parent=47 // pred_fallthru
          _
        // Predicated region
        $region65: #{encoder_forward.7} parent=47 // pred_check
          %p319 = pneg %p151
        $region66: #{encoder_forward.7} parent=47 // pred_check_branch
          %321 = sbr.rel (%p319) target = $region68
        $region67: #{encoder_forward.7} parent=47 // pred_region
          %322 = dma.done [#allocation9], 16
        $region68: #{encoder_forward.7} parent=47 // pred_fallthru
          _
        // Predicated region
        $region69: #{encoder_forward.7} parent=47 // pred_check
          %p323 = pneg %p172
        $region70: #{encoder_forward.7} parent=47 // pred_check_branch
          %325 = sbr.rel (%p323) target = $region72
        $region71: #{encoder_forward.7} parent=47 // pred_region
          %326 = dma.done [#allocation12], 16
        $region72: #{encoder_forward.7} parent=47 // pred_fallthru
          _
        %s327 = smul.u32 2, %s25
        %p328 = scmp.lt.s32.totalorder %s327, 3
        %s329 = scalar_select %p328, %s327, 3
        %s330 = smul.addr %s329, 8
        %s331 = scalar_lea.vmem %s0, %s330
        %p332 = pneg %p46
        %p333 = pneg %p43
        %p334 = pneg %p67
        %p335 = pneg %p64
        %p336 = pneg %p88
        %p337 = pneg %p85
        %p338 = pneg %p109
        %p339 = pneg %p106
        %p340 = pneg %p130
        %p341 = pneg %p127
        %p342 = pneg %p151
        %p343 = pneg %p148
        %p344 = pneg %p172
        %p345 = pneg %p169
        %p346 = pneg %p198
        %p347 = pneg %p195
        %s348 = sand.u32 %s185, 1
        %s349 = scalar_lea.sflag [#allocation4], %s348
        %s350 = sand.u32 %s185, 1
        %s351 = smul.addr %s350, 16
        %s352 = scalar_lea.vmem [#allocation13], %s351
        %s353 = smul.u32 2, %s25
        %p354 = scmp.lt.s32.totalorder %s353, 3
        %s355 = scalar_select %p354, %s353, 3
        %s356 = smul.addr %s355, 8
        %s357 = scalar_lea.vmem %s0, %s356
        %s358 = smul.u32 2, %s25
        %s359 = smul.u32 2, %s25
        %v361 = vld [vmem:[%s357] sm:$0xff]
        %v362 = vld [vmem:[%s357 + $0x8] sm:$0xff]
        %v363 = vpack.c.bf16 %v362, %v361
        %v364 = vld [vmem:[#allocation2] sm:$0xff]
        %v365 = vld [vmem:[#allocation2 + $0x8] sm:$0xff]
        %v366 = vld [vmem:[#allocation2 + $0x10] sm:$0xff]
        %v367 = vld [vmem:[#allocation2 + $0x18] sm:$0xff]
        %v368 = vld [vmem:[#allocation2 + $0x20] sm:$0xff]
        %v369 = vld [vmem:[#allocation2 + $0x28] sm:$0xff]
        %v370 = vld [vmem:[#allocation2 + $0x30] sm:$0xff]
        %v371 = vld [vmem:[#allocation2 + $0x38] sm:$0xff]
        %v372 = vld [vmem:[#allocation2 + $0x40] sm:$0xff]
        %v373 = vld [vmem:[#allocation2 + $0x48] sm:$0xff]
        %v374 = vld [vmem:[#allocation2 + $0x50] sm:$0xff]
        %v375 = vld [vmem:[#allocation2 + $0x58] sm:$0xff]
        %v376 = vld [vmem:[#allocation2 + $0x60] sm:$0xff]
        %v377 = vld [vmem:[#allocation2 + $0x68] sm:$0xff]
        %v378 = vld [vmem:[#allocation2 + $0x70] sm:$0xff]
        %v379 = vld [vmem:[#allocation2 + $0x78] sm:$0xff]
        %v380 = vld [vmem:[#allocation5] sm:$0x3]
        %v382 = vlaneseq
        %v383 = vshrl.u32 %v382, 7
        %v384 = vsub.s32 0, %v383
        %v385 = vrot.slane %v380, %v384
        %v386 = vlaneseq
        %v387 = vshrl.u32 %v386, 7
        %v388 = vsub.s32 1, %v387
        %v389 = vrot.slane %v380, %v388
        %v408 = vunpack.c.l.b16 %v364
        %v409 = vunpack.c.h.b16 %v364
        %v410 = vunpack.c.l.b16 %v365
        %v411 = vunpack.c.h.b16 %v365
        %v412 = vunpack.c.l.b16 %v366
        %v413 = vunpack.c.h.b16 %v366
        %v414 = vunpack.c.l.b16 %v367
        %v415 = vunpack.c.h.b16 %v367
        %v416 = vunpack.c.l.b16 %v368
        %v417 = vunpack.c.h.b16 %v368
        %v418 = vunpack.c.l.b16 %v369
        %v419 = vunpack.c.h.b16 %v369
        %v420 = vunpack.c.l.b16 %v370
        %v421 = vunpack.c.h.b16 %v370
        %v422 = vunpack.c.l.b16 %v371
        %v423 = vunpack.c.h.b16 %v371
        %v424 = vunpack.c.l.b16 %v372
        %v425 = vunpack.c.h.b16 %v372
        %v426 = vunpack.c.l.b16 %v373
        %v427 = vunpack.c.h.b16 %v373
        %v428 = vunpack.c.l.b16 %v374
        %v429 = vunpack.c.h.b16 %v374
        %v430 = vunpack.c.l.b16 %v375
        %v431 = vunpack.c.h.b16 %v375
        %v432 = vunpack.c.l.b16 %v376
        %v433 = vunpack.c.h.b16 %v376
        %v434 = vunpack.c.l.b16 %v377
        %v435 = vunpack.c.h.b16 %v377
        %v436 = vunpack.c.l.b16 %v378
        %v437 = vunpack.c.h.b16 %v378
        %v438 = vunpack.c.l.b16 %v379
        %v439 = vunpack.c.h.b16 %v379
        %v440 = vpack.c.b16 %v410, %v408
        %v441 = vpack.c.b16 %v411, %v409
        %v442 = vpack.c.b16 %v414, %v412
        %v443 = vpack.c.b16 %v415, %v413
        %v444 = vpack.c.b16 %v418, %v416
        %v445 = vpack.c.b16 %v419, %v417
        %v446 = vpack.c.b16 %v422, %v420
        %v447 = vpack.c.b16 %v423, %v421
        %v448 = vpack.c.b16 %v426, %v424
        %v449 = vpack.c.b16 %v427, %v425
        %v450 = vpack.c.b16 %v430, %v428
        %v451 = vpack.c.b16 %v431, %v429
        %v452 = vpack.c.b16 %v434, %v432
        %v453 = vpack.c.b16 %v435, %v433
        %v454 = vpack.c.b16 %v438, %v436
        %v455 = vpack.c.b16 %v439, %v437
        %472 = vmatprep.subr.bf16.mxu0 %v441
        %473 = vmatpush1.bf16.msra.mxu0 %v440
        %474 = vmatprep.subr.bf16.mxu0 %v443
        %475 = vmatpush1.bf16.msra.mxu0 %v442
        %476 = vmatprep.subr.bf16.mxu0 %v445
        %477 = vmatpush1.bf16.msra.mxu0 %v444
        %478 = vmatprep.subr.bf16.mxu0 %v447
        %479 = vmatpush1.bf16.msra.mxu0 %v446
        %480 = vmatprep.subr.bf16.mxu0 %v449
        %481 = vmatpush1.bf16.msra.mxu0 %v448
        %482 = vmatprep.subr.bf16.mxu0 %v451
        %483 = vmatpush1.bf16.msra.mxu0 %v450
        %484 = vmatprep.subr.bf16.mxu0 %v453
        %485 = vmatpush1.bf16.msra.mxu0 %v452
        %486 = vmatprep.subr.bf16.mxu0 %v455
        %487 = vmatpush1.bf16.msra.mxu0 %v454
        %488 = vmatprep.subr.bf16.mxu0 0
        %489 = vmatpush1.bf16.msra.mxu0 0
        %490 = vmatprep.subr.bf16.mxu0 0
        %491 = vmatpush1.bf16.msra.mxu0 0
        %492 = vmatprep.subr.bf16.mxu0 0
        %493 = vmatpush1.bf16.msra.mxu0 0
        %494 = vmatprep.subr.bf16.mxu0 0
        %495 = vmatpush1.bf16.msra.mxu0 0
        %496 = vmatprep.subr.bf16.mxu0 0
        %497 = vmatpush1.bf16.msra.mxu0 0
        %498 = vmatprep.subr.bf16.mxu0 0
        %499 = vmatpush1.bf16.msra.mxu0 0
        %500 = vmatprep.subr.bf16.mxu0 0
        %501 = vmatpush1.bf16.msra.mxu0 0
        %502 = vmatprep.subr.bf16.mxu0 0
        %503 = vmatpush1.bf16.msra.mxu0 0
        %504 = vmatprep.mubr.bf16.mxu0 0
        %505 = vmatmul.mubr.bf16.gmra.mrb[0].mxu0 %v363
        %v506 = vpop.f32.mrb[0].mxu0
        %v507 = vadd.f32 %v385, %v506
        %v508 = vpop.f32.mrb[0].mxu0
        %v509 = vadd.f32 %v389, %v508
        %v510 = vpop.f32.mrb[0].mxu0
        %v511 = vadd.f32 %v385, %v510
        %v512 = vpop.f32.mrb[0].mxu0
        %v513 = vadd.f32 %v389, %v512
        %514 = vdwg.mxu0
        %v515 = vmax.f32 %v507, 0.0
        %v516 = vmax.f32 %v509, 0.0
        %v517 = vmax.f32 %v511, 0.0
        %v518 = vmax.f32 %v513, 0.0
        %v519 = vpack.c.bf16 %v517, %v515
        %v520 = vpack.c.bf16 %v518, %v516
        %v521 = vld [vmem:[#allocation7] sm:$0xf]
        %v522 = vld [vmem:[#allocation7 + $0x4] sm:$0xf]
        %v523 = vld [vmem:[#allocation7 + $0x8] sm:$0xf]
        %v524 = vld [vmem:[#allocation7 + $0xc] sm:$0xf]
        %v525 = vld [vmem:[#allocation7 + $0x10] sm:$0xf]
        %v526 = vld [vmem:[#allocation7 + $0x14] sm:$0xf]
        %v527 = vld [vmem:[#allocation7 + $0x18] sm:$0xf]
        %v528 = vld [vmem:[#allocation7 + $0x1c] sm:$0xf]
        %v529 = vld [vmem:[#allocation7 + $0x20] sm:$0xf]
        %v530 = vld [vmem:[#allocation7 + $0x24] sm:$0xf]
        %v531 = vld [vmem:[#allocation7 + $0x28] sm:$0xf]
        %v532 = vld [vmem:[#allocation7 + $0x2c] sm:$0xf]
        %v533 = vld [vmem:[#allocation7 + $0x30] sm:$0xf]
        %v534 = vld [vmem:[#allocation7 + $0x34] sm:$0xf]
        %v535 = vld [vmem:[#allocation7 + $0x38] sm:$0xf]
        %v536 = vld [vmem:[#allocation7 + $0x3c] sm:$0xf]
        %v537 = vld [vmem:[#allocation7 + $0x40] sm:$0xf]
        %v538 = vld [vmem:[#allocation7 + $0x44] sm:$0xf]
        %v539 = vld [vmem:[#allocation7 + $0x48] sm:$0xf]
        %v540 = vld [vmem:[#allocation7 + $0x4c] sm:$0xf]
        %v541 = vld [vmem:[#allocation7 + $0x50] sm:$0xf]
        %v542 = vld [vmem:[#allocation7 + $0x54] sm:$0xf]
        %v543 = vld [vmem:[#allocation7 + $0x58] sm:$0xf]
        %v544 = vld [vmem:[#allocation7 + $0x5c] sm:$0xf]
        %v545 = vld [vmem:[#allocation7 + $0x60] sm:$0xf]
        %v546 = vld [vmem:[#allocation7 + $0x64] sm:$0xf]
        %v547 = vld [vmem:[#allocation7 + $0x68] sm:$0xf]
        %v548 = vld [vmem:[#allocation7 + $0x6c] sm:$0xf]
        %v549 = vld [vmem:[#allocation7 + $0x70] sm:$0xf]
        %v550 = vld [vmem:[#allocation7 + $0x74] sm:$0xf]
        %v551 = vld [vmem:[#allocation7 + $0x78] sm:$0xf]
        %v552 = vld [vmem:[#allocation7 + $0x7c] sm:$0xf]
        %v553 = vld [vmem:[#allocation8] sm:$0x1]
        %v555 = vlaneseq
        %v556 = vshrl.u32 %v555, 7
        %v557 = vsub.s32 0, %v556
        %v558 = vrot.slane %v553, %v557
        %v592 = vunpack.c.l.b16 %v521
        %v593 = vunpack.c.l.b16 %v522
        %v594 = vunpack.c.l.b16 %v523
        %v595 = vunpack.c.l.b16 %v524
        %v596 = vunpack.c.l.b16 %v525
        %v597 = vunpack.c.l.b16 %v526
        %v598 = vunpack.c.l.b16 %v527
        %v599 = vunpack.c.l.b16 %v528
        %v600 = vunpack.c.l.b16 %v529
        %v601 = vunpack.c.l.b16 %v530
        %v602 = vunpack.c.l.b16 %v531
        %v603 = vunpack.c.l.b16 %v532
        %v604 = vunpack.c.l.b16 %v533
        %v605 = vunpack.c.l.b16 %v534
        %v606 = vunpack.c.l.b16 %v535
        %v607 = vunpack.c.l.b16 %v536
        %v608 = vunpack.c.l.b16 %v537
        %v609 = vunpack.c.l.b16 %v538
        %v610 = vunpack.c.l.b16 %v539
        %v611 = vunpack.c.l.b16 %v540
        %v612 = vunpack.c.l.b16 %v541
        %v613 = vunpack.c.l.b16 %v542
        %v614 = vunpack.c.l.b16 %v543
        %v615 = vunpack.c.l.b16 %v544
        %v616 = vunpack.c.l.b16 %v545
        %v617 = vunpack.c.l.b16 %v546
        %v618 = vunpack.c.l.b16 %v547
        %v619 = vunpack.c.l.b16 %v548
        %v620 = vunpack.c.l.b16 %v549
        %v621 = vunpack.c.l.b16 %v550
        %v622 = vunpack.c.l.b16 %v551
        %v623 = vunpack.c.l.b16 %v552
        %v624 = vpack.c.b16 %v593, %v592
        %v625 = vpack.c.b16 %v595, %v594
        %v626 = vpack.c.b16 %v597, %v596
        %v627 = vpack.c.b16 %v599, %v598
        %v628 = vpack.c.b16 %v601, %v600
        %v629 = vpack.c.b16 %v603, %v602
        %v630 = vpack.c.b16 %v605, %v604
        %v631 = vpack.c.b16 %v607, %v606
        %v632 = vpack.c.b16 %v609, %v608
        %v633 = vpack.c.b16 %v611, %v610
        %v634 = vpack.c.b16 %v613, %v612
        %v635 = vpack.c.b16 %v615, %v614
        %v636 = vpack.c.b16 %v617, %v616
        %v637 = vpack.c.b16 %v619, %v618
        %v638 = vpack.c.b16 %v621, %v620
        %v639 = vpack.c.b16 %v623, %v622
        %656 = vmatprep.subr.bf16.mxu0 0
        %657 = vmatpush1.bf16.msra.mxu0 %v624
        %658 = vmatprep.subr.bf16.mxu0 0
        %659 = vmatpush1.bf16.msra.mxu0 %v625
        %660 = vmatprep.subr.bf16.mxu0 0
        %661 = vmatpush1.bf16.msra.mxu0 %v626
        %662 = vmatprep.subr.bf16.mxu0 0
        %663 = vmatpush1.bf16.msra.mxu0 %v627
        %664 = vmatprep.subr.bf16.mxu0 0
        %665 = vmatpush1.bf16.msra.mxu0 %v628
        %666 = vmatprep.subr.bf16.mxu0 0
        %667 = vmatpush1.bf16.msra.mxu0 %v629
        %668 = vmatprep.subr.bf16.mxu0 0
        %669 = vmatpush1.bf16.msra.mxu0 %v630
        %670 = vmatprep.subr.bf16.mxu0 0
        %671 = vmatpush1.bf16.msra.mxu0 %v631
        %672 = vmatprep.subr.bf16.mxu0 0
        %673 = vmatpush1.bf16.msra.mxu0 %v632
        %674 = vmatprep.subr.bf16.mxu0 0
        %675 = vmatpush1.bf16.msra.mxu0 %v633
        %676 = vmatprep.subr.bf16.mxu0 0
        %677 = vmatpush1.bf16.msra.mxu0 %v634
        %678 = vmatprep.subr.bf16.mxu0 0
        %679 = vmatpush1.bf16.msra.mxu0 %v635
        %680 = vmatprep.subr.bf16.mxu0 0
        %681 = vmatpush1.bf16.msra.mxu0 %v636
        %682 = vmatprep.subr.bf16.mxu0 0
        %683 = vmatpush1.bf16.msra.mxu0 %v637
        %684 = vmatprep.subr.bf16.mxu0 0
        %685 = vmatpush1.bf16.msra.mxu0 %v638
        %686 = vmatprep.subr.bf16.mxu0 0
        %687 = vmatpush1.bf16.msra.mxu0 %v639
        %688 = vmatprep.mubr.bf16.mxu0 %v520
        %689 = vmatmul.mubr.bf16.gmra.mrb[0].mxu0 %v519
        %v690 = vpop.f32.mrb[0].mxu0
        %v691 = vadd.f32 %v558, %v690
        %v692 = vpop.f32.mrb[0].mxu0
        %v693 = vpop.f32.mrb[0].mxu0
        %v694 = vadd.f32 %v558, %v693
        %v695 = vpop.f32.mrb[0].mxu0
        %696 = vdwg.mxu0
        %v697 = vadd.f32 %v361, %v691
        %v698 = vadd.f32 %v362, %v694
        %699 = vadd.xlane.f32.xlu0 %v697
        %v700 = vpop.xlane.xlu0 %699
        %701 = vadd.xlane.f32.xlu0 %v698
        %v702 = vpop.xlane.xlu0 %701
        %v703 = vrcp.pop 128.0
        %v704 = vmul.f32 %v700, %v703
        %v705 = vmul.f32 %v702, %v703
        %v706 = vsub.f32 %v697, %v704
        %v707 = vsub.f32 %v698, %v705
        %v708 = vmul.f32 %v706, %v706
        %v709 = vmul.f32 %v707, %v707
        %710 = vadd.xlane.f32.xlu0 %v708
        %v711 = vpop.xlane.xlu0 %710
        %712 = vadd.xlane.f32.xlu0 %v709
        %v713 = vpop.xlane.xlu0 %712
        %v714 = vmul.f32 %v711, %v703
        %v715 = vmul.f32 %v713, %v703
        %v716 = vadd.f32 %v714, 1e-05
        %v717 = vadd.f32 %v715, 1e-05
        %v718 = vrsqrt.pop %v716
        %v719 = vrsqrt.pop %v717
        %v720 = vmul.f32 %v706, %v718
        %v721 = vmul.f32 %v707, %v719
        %v722 = vld [vmem:[#allocation10] sm:$0x1]
        %v724 = vlaneseq
        %v725 = vshrl.u32 %v724, 7
        %v726 = vsub.s32 0, %v725
        %v727 = vrot.slane %v722, %v726
        %v729 = vmul.f32 %v720, %v727
        %v730 = vmul.f32 %v721, %v727
        %v731 = vld [vmem:[#allocation11] sm:$0x1]
        %v733 = vlaneseq
        %v734 = vshrl.u32 %v733, 7
        %v735 = vsub.s32 0, %v734
        %v736 = vrot.slane %v731, %v735
        %v738 = vadd.f32 %v729, %v736
        %v739 = vadd.f32 %v730, %v736
        %740 = vst [vmem:[%s352] sm:$0xff] %v738
        %741 = vst [vmem:[%s352 + $0x8] sm:$0xff] %v739
        %s742 = sand.u32 %s185, 1
        %s743 = scalar_lea.sflag [#allocation4], %s742
        %s744 = sand.u32 %s185, 1
        %s745 = smul.addr %s744, 16
        %s746 = scalar_lea.vmem [#allocation13], %s745
        // Predicated region
        $region73: #{encoder_forward.7} parent=47 // pred_check
          %p747 = pneg %p195
        $region74: #{encoder_forward.7} parent=47 // pred_check_branch
          %749 = sbr.rel (%p747) target = $region76
        $region75: #{encoder_forward.7} parent=47 // pred_region
          %s750 = smul.u32 2, %s25
          %s752 = ssub.s32 256, 256
          %753 = vsyncadd %s743, %s752
          %s754 = smul.addr %s750, 128
          %s755 = scalar_lea.hbm %s7, %s754
          %s756 = sshll.u32 %s746, 4
          %s757 = int_to_ptr.vmem [resolvable:$true] %s756
          %762 = dma.vmem_to_hbm [thread:$0]  %s757, 256, %s755, %s743, 128, 128, 8
        $region76: #{encoder_forward.7} parent=47 // pred_fallthru
          _
      $region48: #{encoder_forward.7} parent=5 // pred_fallthru
        _
      %p763 = scmp.le.s32.totalorder 2, %s20
      // Predicated region
      $region77: #{encoder_forward.7} parent=5 // pred_check
        %p764 = pneg %p763
      $region78: #{encoder_forward.7} parent=5 // pred_check_branch
        %766 = sbr.rel (%p764) target = $region80
      $region79: #{encoder_forward.7} parent=5 // pred_region
        %s767 = ssub.s32 %s20, 2
        // Predicated region
        $region81: #{encoder_forward.7} parent=79 // pred_check
          %p768 = pneg %p201
        $region82: #{encoder_forward.7} parent=79 // pred_check_branch
          %770 = sbr.rel (%p768) target = $region84
        $region83: #{encoder_forward.7} parent=79 // pred_region
          %s771 = sand.u32 %s186, 1
          %s772 = scalar_lea.sflag [#allocation4], %s771
          %s773 = sand.u32 %s186, 1
          %s774 = smul.addr %s773, 16
          %s775 = scalar_lea.vmem [#allocation13], %s774
          %776 = dma.done %s772, 256
        $region84: #{encoder_forward.7} parent=79 // pred_fallthru
          _
      $region80: #{encoder_forward.7} parent=5 // pred_fallthru
        _
    $region6: #{encoder_forward.7} parent=1 // loop_footer
      %s24 = sadd.s32 1, %s20
    $region7: #{encoder_forward.7} parent=1 // loop_footer_branch
      %19 = sbr.rel target = $region3
    $region8: #{encoder_forward.7} parent=1 // loop_exit
      _
    %777 = vsyncpa [#allocation3], 1
    %s778 = scalar_lea.sflag [#allocation3], 1
    %779 = vsyncpa %s778, 1
    %780 = vsyncpa [#allocation6], 1
    %781 = vsyncpa [#allocation9], 1
    %782 = vsyncpa [#allocation12], 1
    %783 = vsyncpa [#allocation4], 1
    %s784 = scalar_lea.sflag [#allocation4], 1
    %785 = vsyncpa %s784, 1

// kernel: encoder_forward.5
$region0: #{encoder_forward.5}
  #allocation0 [shape = 'u32[]', space=smem, size = 0x4, offset = 0x4, fixed_abs, tag = 'smem constant byte address 0x4 - core index']
  #allocation1 [shape = 'u32[144,128]{1,0:T(1,128)}', space=vmem, size = 0x12000, scoped, tag = 'internal scratch']
  %s0 = inlined_call_operand.vmem [shape: f32[32,128], index: 0, kind: input, shape index: {}]
  %s1 = inlined_call_operand.hbm [shape: bf16[128,256], index: 1, kind: input, shape index: {}]
  %s2 = inlined_call_operand.hbm [shape: f32[1,256], index: 2, kind: input, shape index: {}]
  %s3 = inlined_call_operand.hbm [shape: bf16[256,128], index: 3, kind: input, shape index: {}]
  %s4 = inlined_call_operand.hbm [shape: f32[1,128], index: 4, kind: input, shape index: {}]
  %s5 = inlined_call_operand.hbm [shape: f32[1,128], index: 5, kind: input, shape index: {}]
  %s6 = inlined_call_operand.hbm [shape: f32[1,128], index: 6, kind: input, shape index: {}]
  %s7 = inlined_call_operand.vmem [shape: f32[32,128], index: 7, kind: output, shape index: {}]
  %s8 = sld [smem:[#allocation0]]
  $region85: #{encoder_forward.5} parent=0
    _
  %s10 = ssub.s32 1, %s8
  %s11 = scalar_select 0, %s10, %s8
  $region1: #{encoder_forward.5} parent=0
    #allocation2 [shape = 'u8[65536]{0}', space=vmem, size = 0x10000, scoped, tag = 'input window, operand 1, single buffered']
    #allocation3 [shape = 's32[2]{0}', space=sflag, size = 0x8, scoped, tag = 'scoped memory for encoder_forward.5']
    #allocation4 [shape = 'u8[1024]{0}', space=vmem, size = 0x400, scoped, tag = 'input window, operand 2, single buffered']
    #allocation5 [shape = 's32[1]{0}', space=sflag, size = 0x4, scoped, tag = 'scoped memory for encoder_forward.5']
    #allocation6 [shape = 'u8[65536]{0}', space=vmem, size = 0x10000, scoped, tag = 'input window, operand 3, single buffered']
    #allocation7 [shape = 'u8[512]{0}', space=vmem, size = 0x400, scoped, tag = 'input window, operand 4, single buffered']
    #allocation8 [shape = 's32[1]{0}', space=sflag, size = 0x4, scoped, tag = 'scoped memory for encoder_forward.5']
    #allocation9 [shape = 'u8[512]{0}', space=vmem, size = 0x400, scoped, tag = 'input window, operand 5, single buffered']
    #allocation10 [shape = 'u8[512]{0}', space=vmem, size = 0x400, scoped, tag = 'input window, operand 6, single buffered']
    #allocation11 [shape = 's32[1]{0}', space=sflag, size = 0x4, scoped, tag = 'scoped memory for encoder_forward.5']
    %12 = vsyncpa [#allocation3], 0
    %13 = vsyncpa [#allocation5], 0
    %14 = vsyncpa [#allocation8], 0
    %15 = vsyncpa [#allocation11], 0
    loop: start=0, step=1, limit=4
    $region2: #{encoder_forward.5} parent=1 // loop_pre_header
      _
    $region3: #{encoder_forward.5} parent=1 // loop_header
      %s17 = sphi 0, %s21
      %p18 = scmp.ge.s32.totalorder %s17, 4
      %s27 = sphi 0, %s29
      %s30 = sphi 0, %s27
      %s31 = sphi 0, %s30
      %s47 = sphi 0, %s31
      %s51 = sphi 0, %s51
      %s53 = sphi 0, %s51
      %s54 = sphi 0, %s53
      %s68 = sphi 0, %s54
      %s72 = sphi 0, %s72
      %s74 = sphi 0, %s72
      %s75 = sphi 0, %s74
      %s89 = sphi 0, %s75
      %s93 = sphi 0, %s93
      %s95 = sphi 0, %s93
      %s96 = sphi 0, %s95
      %s110 = sphi 0, %s96
      %s114 = sphi 0, %s114
      %s116 = sphi 0, %s114
      %s117 = sphi 0, %s116
      %s131 = sphi 0, %s117
      %s135 = sphi 0, %s135
      %s137 = sphi 0, %s135
      %s138 = sphi 0, %s137
      %s152 = sphi 0, %s138
      %s156 = sphi 0, %s156
      %s158 = sphi 0, %s156
      %s159 = sphi 0, %s158
      %s173 = sphi 0, %s159
      %s179 = sphi 0, %s181
      %s182 = sphi 0, %s179
      %s183 = sphi 0, %s182
      %s199 = sphi 0, %s183
    $region4: #{encoder_forward.5} parent=1 // loop_header_branch
      %20 = sbr.rel (%p18) target = $region8
    $region5: #{encoder_forward.5} parent=1 // loop_body
      %s22 = ssub.s32 %s17, 1
      %s23 = ssub.s32 %s17, 2
      %s24 = sadd.s32 %s17, 1
      %s25 = ssub.s32 %s17, %s24
      %p26 = scmp.eq.s32.totalorder %s25, 0
      %s28 = sadd.s32 %s27, 1
      %s29 = scalar_select %p26, %s27, %s28
      %p32 = pneg %p26
      %p33 = scmp.eq.s32.totalorder %s17, 1
      %p34 = por %p32, %p33
      %p35 = scmp.ne.s32.totalorder %s27, %s30
      %p36 = scmp.eq.s32.totalorder %s17, 0
      %p37 = por %p35, %p36
      %p38 = scmp.ne.s32.totalorder %s27, %s30
      %p39 = scmp.eq.s32.totalorder %s22, 1
      %p40 = por %p38, %p39
      %p41 = scmp.ne.s32.totalorder %s30, %s31
      %p42 = scmp.eq.s32.totalorder %s22, 0
      %p43 = por %p41, %p42
      %p44 = scmp.ne.s32.totalorder %s30, %s31
      %p45 = scmp.eq.s32.totalorder %s23, 1
      %p46 = por %p44, %p45
      %p48 = scmp.ne.s32.totalorder %s31, %s47
      %p49 = scmp.eq.s32.totalorder %s23, 0
      %p50 = por %p48, %p49
      %s52 = sadd.s32 %s51, 1
      %p55 = scmp.eq.s32.totalorder %s17, 1
      %p56 = scmp.ne.s32.totalorder %s51, %s53
      %p57 = scmp.eq.s32.totalorder %s17, 0
      %p58 = por %p56, %p57
      %p59 = scmp.ne.s32.totalorder %s51, %s53
      %p60 = scmp.eq.s32.totalorder %s22, 1
      %p61 = por %p59, %p60
      %p62 = scmp.ne.s32.totalorder %s53, %s54
      %p63 = scmp.eq.s32.totalorder %s22, 0
      %p64 = por %p62, %p63
      %p65 = scmp.ne.s32.totalorder %s53, %s54
      %p66 = scmp.eq.s32.totalorder %s23, 1
      %p67 = por %p65, %p66
      %p69 = scmp.ne.s32.totalorder %s54, %s68
      %p70 = scmp.eq.s32.totalorder %s23, 0
      %p71 = por %p69, %p70
      %s73 = sadd.s32 %s72, 1
      %p76 = scmp.eq.s32.totalorder %s17, 1
      %p77 = scmp.ne.s32.totalorder %s72, %s74
      %p78 = scmp.eq.s32.totalorder %s17, 0
      %p79 = por %p77, %p78
      %p80 = scmp.ne.s32.totalorder %s72, %s74
      %p81 = scmp.eq.s32.totalorder %s22, 1
      %p82 = por %p80, %p81
      %p83 = scmp.ne.s32.totalorder %s74, %s75
      %p84 = scmp.eq.s32.totalorder %s22, 0
      %p85 = por %p83, %p84
      %p86 = scmp.ne.s32.totalorder %s74, %s75
      %p87 = scmp.eq.s32.totalorder %s23, 1
      %p88 = por %p86, %p87
      %p90 = scmp.ne.s32.totalorder %s75, %s89
      %p91 = scmp.eq.s32.totalorder %s23, 0
      %p92 = por %p90, %p91
      %s94 = sadd.s32 %s93, 1
      %p97 = scmp.eq.s32.totalorder %s17, 1
      %p98 = scmp.ne.s32.totalorder %s93, %s95
      %p99 = scmp.eq.s32.totalorder %s17, 0
      %p100 = por %p98, %p99
      %p101 = scmp.ne.s32.totalorder %s93, %s95
      %p102 = scmp.eq.s32.totalorder %s22, 1
      %p103 = por %p101, %p102
      %p104 = scmp.ne.s32.totalorder %s95, %s96
      %p105 = scmp.eq.s32.totalorder %s22, 0
      %p106 = por %p104, %p105
      %p107 = scmp.ne.s32.totalorder %s95, %s96
      %p108 = scmp.eq.s32.totalorder %s23, 1
      %p109 = por %p107, %p108
      %p111 = scmp.ne.s32.totalorder %s96, %s110
      %p112 = scmp.eq.s32.totalorder %s23, 0
      %p113 = por %p111, %p112
      %s115 = sadd.s32 %s114, 1
      %p118 = scmp.eq.s32.totalorder %s17, 1
      %p119 = scmp.ne.s32.totalorder %s114, %s116
      %p120 = scmp.eq.s32.totalorder %s17, 0
      %p121 = por %p119, %p120
      %p122 = scmp.ne.s32.totalorder %s114, %s116
      %p123 = scmp.eq.s32.totalorder %s22, 1
      %p124 = por %p122, %p123
      %p125 = scmp.ne.s32.totalorder %s116, %s117
      %p126 = scmp.eq.s32.totalorder %s22, 0
      %p127 = por %p125, %p126
      %p128 = scmp.ne.s32.totalorder %s116, %s117
      %p129 = scmp.eq.s32.totalorder %s23, 1
      %p130 = por %p128, %p129
      %p132 = scmp.ne.s32.totalorder %s117, %s131
      %p133 = scmp.eq.s32.totalorder %s23, 0
      %p134 = por %p132, %p133
      %s136 = sadd.s32 %s135, 1
      %p139 = scmp.eq.s32.totalorder %s17, 1
      %p140 = scmp.ne.s32.totalorder %s135, %s137
      %p141 = scmp.eq.s32.totalorder %s17, 0
      %p142 = por %p140, %p141
      %p143 = scmp.ne.s32.totalorder %s135, %s137
      %p144 = scmp.eq.s32.totalorder %s22, 1
      %p145 = por %p143, %p144
      %p146 = scmp.ne.s32.totalorder %s137, %s138
      %p147 = scmp.eq.s32.totalorder %s22, 0
      %p148 = por %p146, %p147
      %p149 = scmp.ne.s32.totalorder %s137, %s138
      %p150 = scmp.eq.s32.totalorder %s23, 1
      %p151 = por %p149, %p150
      %p153 = scmp.ne.s32.totalorder %s138, %s152
      %p154 = scmp.eq.s32.totalorder %s23, 0
      %p155 = por %p153, %p154
      %s157 = sadd.s32 %s156, 1
      %p160 = scmp.eq.s32.totalorder %s17, 1
      %p161 = scmp.ne.s32.totalorder %s156, %s158
      %p162 = scmp.eq.s32.totalorder %s17, 0
      %p163 = por %p161, %p162
      %p164 = scmp.ne.s32.totalorder %s156, %s158
      %p165 = scmp.eq.s32.totalorder %s22, 1
      %p166 = por %p164, %p165
      %p167 = scmp.ne.s32.totalorder %s158, %s159
      %p168 = scmp.eq.s32.totalorder %s22, 0
      %p169 = por %p167, %p168
      %p170 = scmp.ne.s32.totalorder %s158, %s159
      %p171 = scmp.eq.s32.totalorder %s23, 1
      %p172 = por %p170, %p171
      %p174 = scmp.ne.s32.totalorder %s159, %s173
      %p175 = scmp.eq.s32.totalorder %s23, 0
      %p176 = por %p174, %p175
      %s177 = ssub.s32 %s17, %s24
      %p178 = scmp.eq.s32.totalorder %s177, 0
      %s180 = sadd.s32 %s179, 1
      %s181 = scalar_select %p178, %s179, %s180
      %p184 = pneg %p178
      %p185 = scmp.eq.s32.totalorder %s17, 1
      %p186 = por %p184, %p185
      %p187 = scmp.ne.s32.totalorder %s179, %s182
      %p188 = scmp.eq.s32.totalorder %s17, 0
      %p189 = por %p187, %p188
      %p190 = scmp.ne.s32.totalorder %s179, %s182
      %p191 = scmp.eq.s32.totalorder %s22, 1
      %p192 = por %p190, %p191
      %p193 = scmp.ne.s32.totalorder %s182, %s183
      %p194 = scmp.eq.s32.totalorder %s22, 0
      %p195 = por %p193, %p194
      %p196 = scmp.ne.s32.totalorder %s182, %s183
      %p197 = scmp.eq.s32.totalorder %s23, 1
      %p198 = por %p196, %p197
      %p200 = scmp.ne.s32.totalorder %s183, %s199
      %p201 = scmp.eq.s32.totalorder %s23, 0
      %p202 = por %p200, %p201
      %p203 = scmp.le.s32.totalorder 1, %s17
      %p204 = scmp.lt.s32.totalorder %s17, 3
      %p205 = pnand %p203, %p204
      %p206 = pneg %p205
      // Predicated region
      $region9: #{encoder_forward.5} parent=5 // pred_check
        _
      $region10: #{encoder_forward.5} parent=5 // pred_check_branch
        %208 = sbr.rel (%p205) target = $region12
      $region11: #{encoder_forward.5} parent=5 // pred_region
        %s209 = ssub.s32 %s17, 1
        // Predicated region
        $region13: #{encoder_forward.5} parent=11 // pred_check
          %p210 = pneg %p64
        $region14: #{encoder_forward.5} parent=11 // pred_check_branch
          %212 = sbr.rel (%p210) target = $region16
        $region15: #{encoder_forward.5} parent=11 // pred_region
          %s214 = ssub.s32 2048, 2048
          %215 = vsyncadd [#allocation3], %s214
          %s216 = sshll.u32 [#allocation2], 4
          %s217 = int_to_ptr.vmem [resolvable:$true] %s216
          %222 = dma.hbm_to_vmem [thread:$0]  %s1, 2048, %s217, [#allocation3], 128, 128, 8
        $region16: #{encoder_forward.5} parent=11 // pred_fallthru
          _
        // Predicated region
        $region17: #{encoder_forward.5} parent=11 // pred_check
          %p223 = pneg %p85
        $region18: #{encoder_forward.5} parent=11 // pred_check_branch
          %225 = sbr.rel (%p223) target = $region20
        $region19: #{encoder_forward.5} parent=11 // pred_region
          %s227 = ssub.s32 32, 32
          %228 = vsyncadd [#allocation5], %s227
          %s230 = sshll.u32 [#allocation4], 4
          %s231 = int_to_ptr.vmem [resolvable:$true] %s230
          %233 = dma.hbm_to_vmem [thread:$0]  %s2, 32, %s231, [#allocation5]
        $region20: #{encoder_forward.5} parent=11 // pred_fallthru
          _
        // Predicated region
        $region21: #{encoder_forward.5} parent=11 // pred_check
          %p234 = pneg %p106
        $region22: #{encoder_forward.5} parent=11 // pred_check_branch
          %236 = sbr.rel (%p234) target = $region24
        $region23: #{encoder_forward.5} parent=11 // pred_region
          %s238 = ssub.s32 2048, 2048
          %239 = vsyncadd [#allocation5], %s238
          %s240 = sshll.u32 [#allocation6], 4
          %s241 = int_to_ptr.vmem [resolvable:$true] %s240
          %246 = dma.hbm_to_vmem [thread:$0]  %s3, 2048, %s241, [#allocation5], 64, 64, 4
        $region24: #{encoder_forward.5} parent=11 // pred_fallthru
          _
        // Predicated region
        $region25: #{encoder_forward.5} parent=11 // pred_check
          %p247 = pneg %p127
        $region26: #{encoder_forward.5} parent=11 // pred_check_branch
          %249 = sbr.rel (%p247) target = $region28
        $region27: #{encoder_forward.5} parent=11 // pred_region
          %s251 = ssub.s32 16, 16
          %252 = vsyncadd [#allocation8], %s251
          %s254 = sshll.u32 [#allocation7], 4
          %s255 = int_to_ptr.vmem [resolvable:$true] %s254
          %257 = dma.hbm_to_vmem [thread:$0]  %s4, 16, %s255, [#allocation8]
        $region28: #{encoder_forward.5} parent=11 // pred_fallthru
          _
        // Predicated region
        $region29: #{encoder_forward.5} parent=11 // pred_check
          %p258 = pneg %p148
        $region30: #{encoder_forward.5} parent=11 // pred_check_branch
          %260 = sbr.rel (%p258) target = $region32
        $region31: #{encoder_forward.5} parent=11 // pred_region
          %s262 = ssub.s32 16, 16
          %263 = vsyncadd [#allocation8], %s262
          %s265 = sshll.u32 [#allocation9], 4
          %s266 = int_to_ptr.vmem [resolvable:$true] %s265
          %268 = dma.hbm_to_vmem [thread:$0]  %s5, 16, %s266, [#allocation8]
        $region32: #{encoder_forward.5} parent=11 // pred_fallthru
          _
        // Predicated region
        $region33: #{encoder_forward.5} parent=11 // pred_check
          %p269 = pneg %p169
        $region34: #{encoder_forward.5} parent=11 // pred_check_branch
          %271 = sbr.rel (%p269) target = $region36
        $region35: #{encoder_forward.5} parent=11 // pred_region
          %s273 = ssub.s32 16, 16
          %274 = vsyncadd [#allocation11], %s273
          %s276 = sshll.u32 [#allocation10], 4
          %s277 = int_to_ptr.vmem [resolvable:$true] %s276
          %279 = dma.hbm_to_vmem [thread:$0]  %s6, 16, %s277, [#allocation11]
        $region36: #{encoder_forward.5} parent=11 // pred_fallthru
          _
      $region12: #{encoder_forward.5} parent=5 // pred_fallthru
        _
      %p280 = scmp.lt.s32.totalorder %s17, 2
      // Predicated region
      $region37: #{encoder_forward.5} parent=5 // pred_check
        %p281 = pneg %p280
      $region38: #{encoder_forward.5} parent=5 // pred_check_branch
        %283 = sbr.rel (%p281) target = $region40
      $region39: #{encoder_forward.5} parent=5 // pred_region
        // Predicated region
        $region41: #{encoder_forward.5} parent=39 // pred_check
          %p284 = pneg %p37
        $region42: #{encoder_forward.5} parent=39 // pred_check_branch
          %286 = sbr.rel (%p284) target = $region44
        $region43: #{encoder_forward.5} parent=39 // pred_region
          %s287 = smul.u32 2, %s17
          %p288 = scmp.lt.s32.totalorder %s287, 3
          %s289 = scalar_select %p288, %s287, 3
          %s290 = smul.addr %s289, 8
          %s291 = scalar_lea.vmem %s0, %s290
          %s292 = smul.u32 2, %s17
        $region44: #{encoder_forward.5} parent=39 // pred_fallthru
          _
      $region40: #{encoder_forward.5} parent=5 // pred_fallthru
        _
      %p293 = scmp.le.s32.totalorder 1, %s17
      %p294 = scmp.lt.s32.totalorder %s17, 3
      %p295 = pnand %p293, %p294
      %p296 = pneg %p295
      // Predicated region
      $region45: #{encoder_forward.5} parent=5 // pred_check
        _
      $region46: #{encoder_forward.5} parent=5 // pred_check_branch
        %298 = sbr.rel (%p295) target = $region48
      $region47: #{encoder_forward.5} parent=5 // pred_region
        %s299 = ssub.s32 %s17, 1
        // Predicated region
        $region49: #{encoder_forward.5} parent=47 // pred_check
          %p300 = pneg %p64
        $region50: #{encoder_forward.5} parent=47 // pred_check_branch
          %302 = sbr.rel (%p300) target = $region52
        $region51: #{encoder_forward.5} parent=47 // pred_region
          %303 = dma.done [#allocation3], 2048
        $region52: #{encoder_forward.5} parent=47 // pred_fallthru
          _
        // Predicated region
        $region53: #{encoder_forward.5} parent=47 // pred_check
          %p304 = pneg %p85
        $region54: #{encoder_forward.5} parent=47 // pred_check_branch
          %306 = sbr.rel (%p304) target = $region56
        $region55: #{encoder_forward.5} parent=47 // pred_region
          %307 = dma.done [#allocation5], 32
        $region56: #{encoder_forward.5} parent=47 // pred_fallthru
          _
        // Predicated region
        $region57: #{encoder_forward.5} parent=47 // pred_check
          %p308 = pneg %p106
        $region58: #{encoder_forward.5} parent=47 // pred_check_branch
          %310 = sbr.rel (%p308) target = $region60
        $region59: #{encoder_forward.5} parent=47 // pred_region
          %311 = dma.done [#allocation5], 2048
        $region60: #{encoder_forward.5} parent=47 // pred_fallthru
          _
        // Predicated region
        $region61: #{encoder_forward.5} parent=47 // pred_check
          %p312 = pneg %p127
        $region62: #{encoder_forward.5} parent=47 // pred_check_branch
          %314 = sbr.rel (%p312) target = $region64
        $region63: #{encoder_forward.5} parent=47 // pred_region
          %315 = dma.done [#allocation8], 16
        $region64: #{encoder_forward.5} parent=47 // pred_fallthru
          _
        // Predicated region
        $region65: #{encoder_forward.5} parent=47 // pred_check
          %p316 = pneg %p148
        $region66: #{encoder_forward.5} parent=47 // pred_check_branch
          %318 = sbr.rel (%p316) target = $region68
        $region67: #{encoder_forward.5} parent=47 // pred_region
          %319 = dma.done [#allocation8], 16
        $region68: #{encoder_forward.5} parent=47 // pred_fallthru
          _
        // Predicated region
        $region69: #{encoder_forward.5} parent=47 // pred_check
          %p320 = pneg %p169
        $region70: #{encoder_forward.5} parent=47 // pred_check_branch
          %322 = sbr.rel (%p320) target = $region72
        $region71: #{encoder_forward.5} parent=47 // pred_region
          %323 = dma.done [#allocation11], 16
        $region72: #{encoder_forward.5} parent=47 // pred_fallthru
          _
        %s324 = smul.u32 2, %s22
        %p325 = scmp.lt.s32.totalorder %s324, 3
        %s326 = scalar_select %p325, %s324, 3
        %s327 = smul.addr %s326, 8
        %s328 = scalar_lea.vmem %s0, %s327
        %p329 = pneg %p43
        %p330 = pneg %p40
        %p331 = pneg %p64
        %p332 = pneg %p61
        %p333 = pneg %p85
        %p334 = pneg %p82
        %p335 = pneg %p106
        %p336 = pneg %p103
        %p337 = pneg %p127
        %p338 = pneg %p124
        %p339 = pneg %p148
        %p340 = pneg %p145
        %p341 = pneg %p169
        %p342 = pneg %p166
        %p343 = pneg %p195
        %p344 = pneg %p192
        %s345 = smul.u32 2, %s22
        %p346 = scmp.lt.s32.totalorder %s345, 3
        %s347 = scalar_select %p346, %s345, 3
        %s348 = smul.addr %s347, 8
        %s349 = scalar_lea.vmem %s7, %s348
        %s350 = smul.u32 2, %s22
        %p351 = scmp.lt.s32.totalorder %s350, 3
        %s352 = scalar_select %p351, %s350, 3
        %s353 = smul.addr %s352, 8
        %s354 = scalar_lea.vmem %s0, %s353
        %s355 = smul.u32 2, %s22
        %s356 = smul.u32 2, %s22
        %p357 = scmp.lt.s32.totalorder %s356, 3
        %s358 = scalar_select %p357, %s356, 3
        %s359 = smul.addr %s358, 8
        %s360 = scalar_lea.vmem %s7, %s359
        %s361 = smul.u32 2, %s22
        %v363 = vld [vmem:[%s354] sm:$0xff]
        %v364 = vld [vmem:[%s354 + $0x8] sm:$0xff]
        %v365 = vpack.c.bf16 %v364, %v363
        %v366 = vld [vmem:[#allocation2] sm:$0xff]
        %v367 = vld [vmem:[#allocation2 + $0x8] sm:$0xff]
        %v368 = vld [vmem:[#allocation2 + $0x10] sm:$0xff]
        %v369 = vld [vmem:[#allocation2 + $0x18] sm:$0xff]
        %v370 = vld [vmem:[#allocation2 + $0x20] sm:$0xff]
        %v371 = vld [vmem:[#allocation2 + $0x28] sm:$0xff]
        %v372 = vld [vmem:[#allocation2 + $0x30] sm:$0xff]
        %v373 = vld [vmem:[#allocation2 + $0x38] sm:$0xff]
        %v374 = vld [vmem:[#allocation2 + $0x40] sm:$0xff]
        %v375 = vld [vmem:[#allocation2 + $0x48] sm:$0xff]
        %v376 = vld [vmem:[#allocation2 + $0x50] sm:$0xff]
        %v377 = vld [vmem:[#allocation2 + $0x58] sm:$0xff]
        %v378 = vld [vmem:[#allocation2 + $0x60] sm:$0xff]
        %v379 = vld [vmem:[#allocation2 + $0x68] sm:$0xff]
        %v380 = vld [vmem:[#allocation2 + $0x70] sm:$0xff]
        %v381 = vld [vmem:[#allocation2 + $0x78] sm:$0xff]
        %v382 = vld [vmem:[#allocation4] sm:$0x3]
        %v384 = vlaneseq
        %v385 = vshrl.u32 %v384, 7
        %v386 = vsub.s32 0, %v385
        %v387 = vrot.slane %v382, %v386
        %v388 = vlaneseq
        %v389 = vshrl.u32 %v388, 7
        %v390 = vsub.s32 1, %v389
        %v391 = vrot.slane %v382, %v390
        %v410 = vunpack.c.l.b16 %v366
        %v411 = vunpack.c.h.b16 %v366
        %v412 = vunpack.c.l.b16 %v367
        %v413 = vunpack.c.h.b16 %v367
        %v414 = vunpack.c.l.b16 %v368
        %v415 = vunpack.c.h.b16 %v368
        %v416 = vunpack.c.l.b16 %v369
        %v417 = vunpack.c.h.b16 %v369
        %v418 = vunpack.c.l.b16 %v370
        %v419 = vunpack.c.h.b16 %v370
        %v420 = vunpack.c.l.b16 %v371
        %v421 = vunpack.c.h.b16 %v371
        %v422 = vunpack.c.l.b16 %v372
        %v423 = vunpack.c.h.b16 %v372
        %v424 = vunpack.c.l.b16 %v373
        %v425 = vunpack.c.h.b16 %v373
        %v426 = vunpack.c.l.b16 %v374
        %v427 = vunpack.c.h.b16 %v374
        %v428 = vunpack.c.l.b16 %v375
        %v429 = vunpack.c.h.b16 %v375
        %v430 = vunpack.c.l.b16 %v376
        %v431 = vunpack.c.h.b16 %v376
        %v432 = vunpack.c.l.b16 %v377
        %v433 = vunpack.c.h.b16 %v377
        %v434 = vunpack.c.l.b16 %v378
        %v435 = vunpack.c.h.b16 %v378
        %v436 = vunpack.c.l.b16 %v379
        %v437 = vunpack.c.h.b16 %v379
        %v438 = vunpack.c.l.b16 %v380
        %v439 = vunpack.c.h.b16 %v380
        %v440 = vunpack.c.l.b16 %v381
        %v441 = vunpack.c.h.b16 %v381
        %v442 = vpack.c.b16 %v412, %v410
        %v443 = vpack.c.b16 %v413, %v411
        %v444 = vpack.c.b16 %v416, %v414
        %v445 = vpack.c.b16 %v417, %v415
        %v446 = vpack.c.b16 %v420, %v418
        %v447 = vpack.c.b16 %v421, %v419
        %v448 = vpack.c.b16 %v424, %v422
        %v449 = vpack.c.b16 %v425, %v423
        %v450 = vpack.c.b16 %v428, %v426
        %v451 = vpack.c.b16 %v429, %v427
        %v452 = vpack.c.b16 %v432, %v430
        %v453 = vpack.c.b16 %v433, %v431
        %v454 = vpack.c.b16 %v436, %v434
        %v455 = vpack.c.b16 %v437, %v435
        %v456 = vpack.c.b16 %v440, %v438
        %v457 = vpack.c.b16 %v441, %v439
        %474 = vmatprep.subr.bf16.mxu0 %v443
        %475 = vmatpush1.bf16.msra.mxu0 %v442
        %476 = vmatprep.subr.bf16.mxu0 %v445
        %477 = vmatpush1.bf16.msra.mxu0 %v444
        %478 = vmatprep.subr.bf16.mxu0 %v447
        %479 = vmatpush1.bf16.msra.mxu0 %v446
        %480 = vmatprep.subr.bf16.mxu0 %v449
        %481 = vmatpush1.bf16.msra.mxu0 %v448
        %482 = vmatprep.subr.bf16.mxu0 %v451
        %483 = vmatpush1.bf16.msra.mxu0 %v450
        %484 = vmatprep.subr.bf16.mxu0 %v453
        %485 = vmatpush1.bf16.msra.mxu0 %v452
        %486 = vmatprep.subr.bf16.mxu0 %v455
        %487 = vmatpush1.bf16.msra.mxu0 %v454
        %488 = vmatprep.subr.bf16.mxu0 %v457
        %489 = vmatpush1.bf16.msra.mxu0 %v456
        %490 = vmatprep.subr.bf16.mxu0 0
        %491 = vmatpush1.bf16.msra.mxu0 0
        %492 = vmatprep.subr.bf16.mxu0 0
        %493 = vmatpush1.bf16.msra.mxu0 0
        %494 = vmatprep.subr.bf16.mxu0 0
        %495 = vmatpush1.bf16.msra.mxu0 0
        %496 = vmatprep.subr.bf16.mxu0 0
        %497 = vmatpush1.bf16.msra.mxu0 0
        %498 = vmatprep.subr.bf16.mxu0 0
        %499 = vmatpush1.bf16.msra.mxu0 0
        %500 = vmatprep.subr.bf16.mxu0 0
        %501 = vmatpush1.bf16.msra.mxu0 0
        %502 = vmatprep.subr.bf16.mxu0 0
        %503 = vmatpush1.bf16.msra.mxu0 0
        %504 = vmatprep.subr.bf16.mxu0 0
        %505 = vmatpush1.bf16.msra.mxu0 0
        %506 = vmatprep.mubr.bf16.mxu0 0
        %507 = vmatmul.mubr.bf16.gmra.mrb[0].mxu0 %v365
        %v508 = vpop.f32.mrb[0].mxu0
        %v509 = vadd.f32 %v387, %v508
        %v510 = vpop.f32.mrb[0].mxu0
        %v511 = vadd.f32 %v391, %v510
        %v512 = vpop.f32.mrb[0].mxu0
        %v513 = vadd.f32 %v387, %v512
        %v514 = vpop.f32.mrb[0].mxu0
        %v515 = vadd.f32 %v391, %v514
        %516 = vdwg.mxu0
        %v517 = vmax.f32 %v509, 0.0
        %v518 = vmax.f32 %v511, 0.0
        %v519 = vmax.f32 %v513, 0.0
        %v520 = vmax.f32 %v515, 0.0
        %v521 = vpack.c.bf16 %v519, %v517
        %v522 = vpack.c.bf16 %v520, %v518
        %v523 = vld [vmem:[#allocation6] sm:$0xf]
        %v524 = vld [vmem:[#allocation6 + $0x4] sm:$0xf]
        %v525 = vld [vmem:[#allocation6 + $0x8] sm:$0xf]
        %v526 = vld [vmem:[#allocation6 + $0xc] sm:$0xf]
        %v527 = vld [vmem:[#allocation6 + $0x10] sm:$0xf]
        %v528 = vld [vmem:[#allocation6 + $0x14] sm:$0xf]
        %v529 = vld [vmem:[#allocation6 + $0x18] sm:$0xf]
        %v530 = vld [vmem:[#allocation6 + $0x1c] sm:$0xf]
        %v531 = vld [vmem:[#allocation6 + $0x20] sm:$0xf]
        %v532 = vld [vmem:[#allocation6 + $0x24] sm:$0xf]
        %v533 = vld [vmem:[#allocation6 + $0x28] sm:$0xf]
        %v534 = vld [vmem:[#allocation6 + $0x2c] sm:$0xf]
        %v535 = vld [vmem:[#allocation6 + $0x30] sm:$0xf]
        %v536 = vld [vmem:[#allocation6 + $0x34] sm:$0xf]
        %v537 = vld [vmem:[#allocation6 + $0x38] sm:$0xf]
        %v538 = vld [vmem:[#allocation6 + $0x3c] sm:$0xf]
        %v539 = vld [vmem:[#allocation6 + $0x40] sm:$0xf]
        %v540 = vld [vmem:[#allocation6 + $0x44] sm:$0xf]
        %v541 = vld [vmem:[#allocation6 + $0x48] sm:$0xf]
        %v542 = vld [vmem:[#allocation6 + $0x4c] sm:$0xf]
        %v543 = vld [vmem:[#allocation6 + $0x50] sm:$0xf]
        %v544 = vld [vmem:[#allocation6 + $0x54] sm:$0xf]
        %v545 = vld [vmem:[#allocation6 + $0x58] sm:$0xf]
        %v546 = vld [vmem:[#allocation6 + $0x5c] sm:$0xf]
        %v547 = vld [vmem:[#allocation6 + $0x60] sm:$0xf]
        %v548 = vld [vmem:[#allocation6 + $0x64] sm:$0xf]
        %v549 = vld [vmem:[#allocation6 + $0x68] sm:$0xf]
        %v550 = vld [vmem:[#allocation6 + $0x6c] sm:$0xf]
        %v551 = vld [vmem:[#allocation6 + $0x70] sm:$0xf]
        %v552 = vld [vmem:[#allocation6 + $0x74] sm:$0xf]
        %v553 = vld [vmem:[#allocation6 + $0x78] sm:$0xf]
        %v554 = vld [vmem:[#allocation6 + $0x7c] sm:$0xf]
        %v555 = vld [vmem:[#allocation7] sm:$0x1]
        %v557 = vlaneseq
        %v558 = vshrl.u32 %v557, 7
        %v559 = vsub.s32 0, %v558
        %v560 = vrot.slane %v555, %v559
        %v594 = vunpack.c.l.b16 %v523
        %v595 = vunpack.c.l.b16 %v524
        %v596 = vunpack.c.l.b16 %v525
        %v597 = vunpack.c.l.b16 %v526
        %v598 = vunpack.c.l.b16 %v527
        %v599 = vunpack.c.l.b16 %v528
        %v600 = vunpack.c.l.b16 %v529
        %v601 = vunpack.c.l.b16 %v530
        %v602 = vunpack.c.l.b16 %v531
        %v603 = vunpack.c.l.b16 %v532
        %v604 = vunpack.c.l.b16 %v533
        %v605 = vunpack.c.l.b16 %v534
        %v606 = vunpack.c.l.b16 %v535
        %v607 = vunpack.c.l.b16 %v536
        %v608 = vunpack.c.l.b16 %v537
        %v609 = vunpack.c.l.b16 %v538
        %v610 = vunpack.c.l.b16 %v539
        %v611 = vunpack.c.l.b16 %v540
        %v612 = vunpack.c.l.b16 %v541
        %v613 = vunpack.c.l.b16 %v542
        %v614 = vunpack.c.l.b16 %v543
        %v615 = vunpack.c.l.b16 %v544
        %v616 = vunpack.c.l.b16 %v545
        %v617 = vunpack.c.l.b16 %v546
        %v618 = vunpack.c.l.b16 %v547
        %v619 = vunpack.c.l.b16 %v548
        %v620 = vunpack.c.l.b16 %v549
        %v621 = vunpack.c.l.b16 %v550
        %v622 = vunpack.c.l.b16 %v551
        %v623 = vunpack.c.l.b16 %v552
        %v624 = vunpack.c.l.b16 %v553
        %v625 = vunpack.c.l.b16 %v554
        %v626 = vpack.c.b16 %v595, %v594
        %v627 = vpack.c.b16 %v597, %v596
        %v628 = vpack.c.b16 %v599, %v598
        %v629 = vpack.c.b16 %v601, %v600
        %v630 = vpack.c.b16 %v603, %v602
        %v631 = vpack.c.b16 %v605, %v604
        %v632 = vpack.c.b16 %v607, %v606
        %v633 = vpack.c.b16 %v609, %v608
        %v634 = vpack.c.b16 %v611, %v610
        %v635 = vpack.c.b16 %v613, %v612
        %v636 = vpack.c.b16 %v615, %v614
        %v637 = vpack.c.b16 %v617, %v616
        %v638 = vpack.c.b16 %v619, %v618
        %v639 = vpack.c.b16 %v621, %v620
        %v640 = vpack.c.b16 %v623, %v622
        %v641 = vpack.c.b16 %v625, %v624
        %658 = vmatprep.subr.bf16.mxu0 0
        %659 = vmatpush1.bf16.msra.mxu0 %v626
        %660 = vmatprep.subr.bf16.mxu0 0
        %661 = vmatpush1.bf16.msra.mxu0 %v627
        %662 = vmatprep.subr.bf16.mxu0 0
        %663 = vmatpush1.bf16.msra.mxu0 %v628
        %664 = vmatprep.subr.bf16.mxu0 0
        %665 = vmatpush1.bf16.msra.mxu0 %v629
        %666 = vmatprep.subr.bf16.mxu0 0
        %667 = vmatpush1.bf16.msra.mxu0 %v630
        %668 = vmatprep.subr.bf16.mxu0 0
        %669 = vmatpush1.bf16.msra.mxu0 %v631
        %670 = vmatprep.subr.bf16.mxu0 0
        %671 = vmatpush1.bf16.msra.mxu0 %v632
        %672 = vmatprep.subr.bf16.mxu0 0
        %673 = vmatpush1.bf16.msra.mxu0 %v633
        %674 = vmatprep.subr.bf16.mxu0 0
        %675 = vmatpush1.bf16.msra.mxu0 %v634
        %676 = vmatprep.subr.bf16.mxu0 0
        %677 = vmatpush1.bf16.msra.mxu0 %v635
        %678 = vmatprep.subr.bf16.mxu0 0
        %679 = vmatpush1.bf16.msra.mxu0 %v636
        %680 = vmatprep.subr.bf16.mxu0 0
        %681 = vmatpush1.bf16.msra.mxu0 %v637
        %682 = vmatprep.subr.bf16.mxu0 0
        %683 = vmatpush1.bf16.msra.mxu0 %v638
        %684 = vmatprep.subr.bf16.mxu0 0
        %685 = vmatpush1.bf16.msra.mxu0 %v639
        %686 = vmatprep.subr.bf16.mxu0 0
        %687 = vmatpush1.bf16.msra.mxu0 %v640
        %688 = vmatprep.subr.bf16.mxu0 0
        %689 = vmatpush1.bf16.msra.mxu0 %v641
        %690 = vmatprep.mubr.bf16.mxu0 %v522
        %691 = vmatmul.mubr.bf16.gmra.mrb[0].mxu0 %v521
        %v692 = vpop.f32.mrb[0].mxu0
        %v693 = vadd.f32 %v560, %v692
        %v694 = vpop.f32.mrb[0].mxu0
        %v695 = vpop.f32.mrb[0].mxu0
        %v696 = vadd.f32 %v560, %v695
        %v697 = vpop.f32.mrb[0].mxu0
        %698 = vdwg.mxu0
        %v699 = vadd.f32 %v363, %v693
        %v700 = vadd.f32 %v364, %v696
        %701 = vadd.xlane.f32.xlu0 %v699
        %v702 = vpop.xlane.xlu0 %701
        %703 = vadd.xlane.f32.xlu0 %v700
        %v704 = vpop.xlane.xlu0 %703
        %v705 = vrcp.pop 128.0
        %v706 = vmul.f32 %v702, %v705
        %v707 = vmul.f32 %v704, %v705
        %v708 = vsub.f32 %v699, %v706
        %v709 = vsub.f32 %v700, %v707
        %v710 = vmul.f32 %v708, %v708
        %v711 = vmul.f32 %v709, %v709
        %712 = vadd.xlane.f32.xlu0 %v710
        %v713 = vpop.xlane.xlu0 %712
        %714 = vadd.xlane.f32.xlu0 %v711
        %v715 = vpop.xlane.xlu0 %714
        %v716 = vmul.f32 %v713, %v705
        %v717 = vmul.f32 %v715, %v705
        %v718 = vadd.f32 %v716, 1e-05
        %v719 = vadd.f32 %v717, 1e-05
        %v720 = vrsqrt.pop %v718
        %v721 = vrsqrt.pop %v719
        %v722 = vmul.f32 %v708, %v720
        %v723 = vmul.f32 %v709, %v721
        %v724 = vld [vmem:[#allocation9] sm:$0x1]
        %v726 = vlaneseq
        %v727 = vshrl.u32 %v726, 7
        %v728 = vsub.s32 0, %v727
        %v729 = vrot.slane %v724, %v728
        %v731 = vmul.f32 %v722, %v729
        %v732 = vmul.f32 %v723, %v729
        %v733 = vld [vmem:[#allocation10] sm:$0x1]
        %v735 = vlaneseq
        %v736 = vshrl.u32 %v735, 7
        %v737 = vsub.s32 0, %v736
        %v738 = vrot.slane %v733, %v737
        %v740 = vadd.f32 %v731, %v738
        %v741 = vadd.f32 %v732, %v738
        %742 = vst [vmem:[%s360] sm:$0xff] %v740
        %743 = vst [vmem:[%s360 + $0x8] sm:$0xff] %v741
        %s744 = smul.u32 2, %s22
        %p745 = scmp.lt.s32.totalorder %s744, 3
        %s746 = scalar_select %p745, %s744, 3
        %s747 = smul.addr %s746, 8
        %s748 = scalar_lea.vmem %s7, %s747
        // Predicated region
        $region73: #{encoder_forward.5} parent=47 // pred_check
          %p749 = pneg %p192
        $region74: #{encoder_forward.5} parent=47 // pred_check_branch
          %751 = sbr.rel (%p749) target = $region76
        $region75: #{encoder_forward.5} parent=47 // pred_region
          %s752 = smul.u32 2, %s22
        $region76: #{encoder_forward.5} parent=47 // pred_fallthru
          _
      $region48: #{encoder_forward.5} parent=5 // pred_fallthru
        _
      %p753 = scmp.le.s32.totalorder 2, %s17
      // Predicated region
      $region77: #{encoder_forward.5} parent=5 // pred_check
        %p754 = pneg %p753
      $region78: #{encoder_forward.5} parent=5 // pred_check_branch
        %756 = sbr.rel (%p754) target = $region80
      $region79: #{encoder_forward.5} parent=5 // pred_region
        %s757 = ssub.s32 %s17, 2
        // Predicated region
        $region81: #{encoder_forward.5} parent=79 // pred_check
          %p758 = pneg %p198
        $region82: #{encoder_forward.5} parent=79 // pred_check_branch
          %760 = sbr.rel (%p758) target = $region84
        $region83: #{encoder_forward.5} parent=79 // pred_region
          %s761 = smul.u32 2, %s23
          %p762 = scmp.lt.s32.totalorder %s761, 3
          %s763 = scalar_select %p762, %s761, 3
          %s764 = smul.addr %s763, 8
          %s765 = scalar_lea.vmem %s7, %s764
        $region84: #{encoder_forward.5} parent=79 // pred_fallthru
          _
      $region80: #{encoder_forward.5} parent=5 // pred_fallthru
        _
    $region6: #{encoder_forward.5} parent=1 // loop_footer
      %s21 = sadd.s32 1, %s17
    $region7: #{encoder_forward.5} parent=1 // loop_footer_branch
      %16 = sbr.rel target = $region3
    $region8: #{encoder_forward.5} parent=1 // loop_exit
      _
    %766 = vsyncpa [#allocation3], 1
    %s767 = scalar_lea.sflag [#allocation3], 1
    %768 = vsyncpa %s767, 1
    %769 = vsyncpa [#allocation5], 1
    %770 = vsyncpa [#allocation8], 1
    %771 = vsyncpa [#allocation11], 1

// kernel: encoder_forward.4
$region0: #{encoder_forward.4}
  #allocation0 [shape = 'u32[]', space=smem, size = 0x4, offset = 0x4, fixed_abs, tag = 'smem constant byte address 0x4 - core index']
  #allocation1 [shape = 'u32[144,128]{1,0:T(1,128)}', space=vmem, size = 0x12000, scoped, tag = 'internal scratch']
  #allocation2 [shape = 'f32[16,256]{1,0:T(8,128)}', space=vmem, size = 0x4000, scoped, tag = 'scratch operand']
  %s0 = inlined_call_operand.vmem [shape: f32[2,16,128], index: 0, kind: input, shape index: {}]
  %s1 = inlined_call_operand.vmem [shape: f32[2,1,16], index: 1, kind: input, shape index: {}]
  %s2 = inlined_call_operand.hbm [shape: bf16[128,256], index: 2, kind: input, shape index: {}]
  %s3 = inlined_call_operand.hbm [shape: f32[1,256], index: 3, kind: input, shape index: {}]
  %s4 = inlined_call_operand.hbm [shape: bf16[128,256], index: 4, kind: input, shape index: {}]
  %s5 = inlined_call_operand.hbm [shape: f32[1,256], index: 5, kind: input, shape index: {}]
  %s6 = inlined_call_operand.hbm [shape: bf16[128,256], index: 6, kind: input, shape index: {}]
  %s7 = inlined_call_operand.hbm [shape: f32[1,256], index: 7, kind: input, shape index: {}]
  %s8 = inlined_call_operand.hbm [shape: bf16[256,128], index: 8, kind: input, shape index: {}]
  %s9 = inlined_call_operand.hbm [shape: f32[1,128], index: 9, kind: input, shape index: {}]
  %s10 = inlined_call_operand.hbm [shape: f32[1,128], index: 10, kind: input, shape index: {}]
  %s11 = inlined_call_operand.hbm [shape: f32[1,128], index: 11, kind: input, shape index: {}]
  %s12 = inlined_call_operand.vmem [shape: f32[2,16,128], index: 12, kind: output, shape index: {}]
  %s13 = sld [smem:[#allocation0]]
  $region121: #{encoder_forward.4} parent=0
    _
  %s15 = ssub.s32 1, %s13
  %s16 = scalar_select 0, %s15, %s13
  $region1: #{encoder_forward.4} parent=0
    #allocation3 [shape = 'u8[65536]{0}', space=vmem, size = 0x10000, scoped, tag = 'input window, operand 2, single buffered']
    #allocation4 [shape = 's32[2]{0}', space=sflag, size = 0x8, scoped, tag = 'scoped memory for encoder_forward.4']
    #allocation5 [shape = 'u8[1024]{0}', space=vmem, size = 0x400, scoped, tag = 'input window, operand 3, single buffered']
    #allocation6 [shape = 's32[1]{0}', space=sflag, size = 0x4, scoped, tag = 'scoped memory for encoder_forward.4']
    #allocation7 [shape = 'u8[65536]{0}', space=vmem, size = 0x10000, scoped, tag = 'input window, operand 4, single buffered']
    #allocation8 [shape = 'u8[1024]{0}', space=vmem, size = 0x400, scoped, tag = 'input window, operand 5, single buffered']
    #allocation9 [shape = 's32[1]{0}', space=sflag, size = 0x4, scoped, tag = 'scoped memory for encoder_forward.4']
    #allocation10 [shape = 'u8[65536]{0}', space=vmem, size = 0x10000, scoped, tag = 'input window, operand 6, single buffered']
    #allocation11 [shape = 'u8[1024]{0}', space=vmem, size = 0x400, scoped, tag = 'input window, operand 7, single buffered']
    #allocation12 [shape = 's32[1]{0}', space=sflag, size = 0x4, scoped, tag = 'scoped memory for encoder_forward.4']
    #allocation13 [shape = 'u8[65536]{0}', space=vmem, size = 0x10000, scoped, tag = 'input window, operand 8, single buffered']
    #allocation14 [shape = 'u8[512]{0}', space=vmem, size = 0x400, scoped, tag = 'input window, operand 9, single buffered']
    #allocation15 [shape = 's32[1]{0}', space=sflag, size = 0x4, scoped, tag = 'scoped memory for encoder_forward.4']
    #allocation16 [shape = 'u8[512]{0}', space=vmem, size = 0x400, scoped, tag = 'input window, operand 10, single buffered']
    #allocation17 [shape = 'u8[512]{0}', space=vmem, size = 0x400, scoped, tag = 'input window, operand 11, single buffered']
    #allocation18 [shape = 's32[1]{0}', space=sflag, size = 0x4, scoped, tag = 'scoped memory for encoder_forward.4']
    %17 = vsyncpa [#allocation4], 0
    %18 = vsyncpa [#allocation6], 0
    %19 = vsyncpa [#allocation9], 0
    %20 = vsyncpa [#allocation12], 0
    %21 = vsyncpa [#allocation15], 0
    %22 = vsyncpa [#allocation18], 0
    loop: start=0, step=1, limit=4
    $region2: #{encoder_forward.4} parent=1 // loop_pre_header
      _
    $region3: #{encoder_forward.4} parent=1 // loop_header
      %s24 = sphi 0, %s28
      %p25 = scmp.ge.s32.totalorder %s24, 4
      %s34 = sphi 0, %s36
      %s37 = sphi 0, %s34
      %s38 = sphi 0, %s37
      %s54 = sphi 0, %s38
      %s60 = sphi 0, %s62
      %s63 = sphi 0, %s60
      %s64 = sphi 0, %s63
      %s80 = sphi 0, %s64
      %s84 = sphi 0, %s84
      %s86 = sphi 0, %s84
      %s87 = sphi 0, %s86
      %s101 = sphi 0, %s87
      %s105 = sphi 0, %s105
      %s107 = sphi 0, %s105
      %s108 = sphi 0, %s107
      %s122 = sphi 0, %s108
      %s126 = sphi 0, %s126
      %s128 = sphi 0, %s126
      %s129 = sphi 0, %s128
      %s143 = sphi 0, %s129
      %s147 = sphi 0, %s147
      %s149 = sphi 0, %s147
      %s150 = sphi 0, %s149
      %s164 = sphi 0, %s150
      %s168 = sphi 0, %s168
      %s170 = sphi 0, %s168
      %s171 = sphi 0, %s170
      %s185 = sphi 0, %s171
      %s189 = sphi 0, %s189
      %s191 = sphi 0, %s189
      %s192 = sphi 0, %s191
      %s206 = sphi 0, %s192
      %s210 = sphi 0, %s210
      %s212 = sphi 0, %s210
      %s213 = sphi 0, %s212
      %s227 = sphi 0, %s213
      %s231 = sphi 0, %s231
      %s233 = sphi 0, %s231
      %s234 = sphi 0, %s233
      %s248 = sphi 0, %s234
      %s252 = sphi 0, %s252
      %s254 = sphi 0, %s252
      %s255 = sphi 0, %s254
      %s269 = sphi 0, %s255
      %s273 = sphi 0, %s273
      %s275 = sphi 0, %s273
      %s276 = sphi 0, %s275
      %s290 = sphi 0, %s276
      %s296 = sphi 0, %s298
      %s299 = sphi 0, %s296
      %s300 = sphi 0, %s299
      %s316 = sphi 0, %s300
    $region4: #{encoder_forward.4} parent=1 // loop_header_branch
      %27 = sbr.rel (%p25) target = $region8
    $region5: #{encoder_forward.4} parent=1 // loop_body
      %s29 = ssub.s32 %s24, 1
      %s30 = ssub.s32 %s24, 2
      %s31 = sadd.s32 %s24, 1
      %s32 = ssub.s32 %s24, %s31
      %p33 = scmp.eq.s32.totalorder %s32, 0
      %s35 = sadd.s32 %s34, 1
      %s36 = scalar_select %p33, %s34, %s35
      %p39 = pneg %p33
      %p40 = scmp.eq.s32.totalorder %s24, 1
      %p41 = por %p39, %p40
      %p42 = scmp.ne.s32.totalorder %s34, %s37
      %p43 = scmp.eq.s32.totalorder %s24, 0
      %p44 = por %p42, %p43
      %p45 = scmp.ne.s32.totalorder %s34, %s37
      %p46 = scmp.eq.s32.totalorder %s29, 1
      %p47 = por %p45, %p46
      %p48 = scmp.ne.s32.totalorder %s37, %s38
      %p49 = scmp.eq.s32.totalorder %s29, 0
      %p50 = por %p48, %p49
      %p51 = scmp.ne.s32.totalorder %s37, %s38
      %p52 = scmp.eq.s32.totalorder %s30, 1
      %p53 = por %p51, %p52
      %p55 = scmp.ne.s32.totalorder %s38, %s54
      %p56 = scmp.eq.s32.totalorder %s30, 0
      %p57 = por %p55, %p56
      %s58 = ssub.s32 %s24, %s31
      %p59 = scmp.eq.s32.totalorder %s58, 0
      %s61 = sadd.s32 %s60, 1
      %s62 = scalar_select %p59, %s60, %s61
      %p65 = pneg %p59
      %p66 = scmp.eq.s32.totalorder %s24, 1
      %p67 = por %p65, %p66
      %p68 = scmp.ne.s32.totalorder %s60, %s63
      %p69 = scmp.eq.s32.totalorder %s24, 0
      %p70 = por %p68, %p69
      %p71 = scmp.ne.s32.totalorder %s60, %s63
      %p72 = scmp.eq.s32.totalorder %s29, 1
      %p73 = por %p71, %p72
      %p74 = scmp.ne.s32.totalorder %s63, %s64
      %p75 = scmp.eq.s32.totalorder %s29, 0
      %p76 = por %p74, %p75
      %p77 = scmp.ne.s32.totalorder %s63, %s64
      %p78 = scmp.eq.s32.totalorder %s30, 1
      %p79 = por %p77, %p78
      %p81 = scmp.ne.s32.totalorder %s64, %s80
      %p82 = scmp.eq.s32.totalorder %s30, 0
      %p83 = por %p81, %p82
      %s85 = sadd.s32 %s84, 1
      %p88 = scmp.eq.s32.totalorder %s24, 1
      %p89 = scmp.ne.s32.totalorder %s84, %s86
      %p90 = scmp.eq.s32.totalorder %s24, 0
      %p91 = por %p89, %p90
      %p92 = scmp.ne.s32.totalorder %s84, %s86
      %p93 = scmp.eq.s32.totalorder %s29, 1
      %p94 = por %p92, %p93
      %p95 = scmp.ne.s32.totalorder %s86, %s87
      %p96 = scmp.eq.s32.totalorder %s29, 0
      %p97 = por %p95, %p96
      %p98 = scmp.ne.s32.totalorder %s86, %s87
      %p99 = scmp.eq.s32.totalorder %s30, 1
      %p100 = por %p98, %p99
      %p102 = scmp.ne.s32.totalorder %s87, %s101
      %p103 = scmp.eq.s32.totalorder %s30, 0
      %p104 = por %p102, %p103
      %s106 = sadd.s32 %s105, 1
      %p109 = scmp.eq.s32.totalorder %s24, 1
      %p110 = scmp.ne.s32.totalorder %s105, %s107
      %p111 = scmp.eq.s32.totalorder %s24, 0
      %p112 = por %p110, %p111
      %p113 = scmp.ne.s32.totalorder %s105, %s107
      %p114 = scmp.eq.s32.totalorder %s29, 1
      %p115 = por %p113, %p114
      %p116 = scmp.ne.s32.totalorder %s107, %s108
      %p117 = scmp.eq.s32.totalorder %s29, 0
      %p118 = por %p116, %p117
      %p119 = scmp.ne.s32.totalorder %s107, %s108
      %p120 = scmp.eq.s32.totalorder %s30, 1
      %p121 = por %p119, %p120
      %p123 = scmp.ne.s32.totalorder %s108, %s122
      %p124 = scmp.eq.s32.totalorder %s30, 0
      %p125 = por %p123, %p124
      %s127 = sadd.s32 %s126, 1
      %p130 = scmp.eq.s32.totalorder %s24, 1
      %p131 = scmp.ne.s32.totalorder %s126, %s128
      %p132 = scmp.eq.s32.totalorder %s24, 0
      %p133 = por %p131, %p132
      %p134 = scmp.ne.s32.totalorder %s126, %s128
      %p135 = scmp.eq.s32.totalorder %s29, 1
      %p136 = por %p134, %p135
      %p137 = scmp.ne.s32.totalorder %s128, %s129
      %p138 = scmp.eq.s32.totalorder %s29, 0
      %p139 = por %p137, %p138
      %p140 = scmp.ne.s32.totalorder %s128, %s129
      %p141 = scmp.eq.s32.totalorder %s30, 1
      %p142 = por %p140, %p141
      %p144 = scmp.ne.s32.totalorder %s129, %s143
      %p145 = scmp.eq.s32.totalorder %s30, 0
      %p146 = por %p144, %p145
      %s148 = sadd.s32 %s147, 1
      %p151 = scmp.eq.s32.totalorder %s24, 1
      %p152 = scmp.ne.s32.totalorder %s147, %s149
      %p153 = scmp.eq.s32.totalorder %s24, 0
      %p154 = por %p152, %p153
      %p155 = scmp.ne.s32.totalorder %s147, %s149
      %p156 = scmp.eq.s32.totalorder %s29, 1
      %p157 = por %p155, %p156
      %p158 = scmp.ne.s32.totalorder %s149, %s150
      %p159 = scmp.eq.s32.totalorder %s29, 0
      %p160 = por %p158, %p159
      %p161 = scmp.ne.s32.totalorder %s149, %s150
      %p162 = scmp.eq.s32.totalorder %s30, 1
      %p163 = por %p161, %p162
      %p165 = scmp.ne.s32.totalorder %s150, %s164
      %p166 = scmp.eq.s32.totalorder %s30, 0
      %p167 = por %p165, %p166
      %s169 = sadd.s32 %s168, 1
      %p172 = scmp.eq.s32.totalorder %s24, 1
      %p173 = scmp.ne.s32.totalorder %s168, %s170
      %p174 = scmp.eq.s32.totalorder %s24, 0
      %p175 = por %p173, %p174
      %p176 = scmp.ne.s32.totalorder %s168, %s170
      %p177 = scmp.eq.s32.totalorder %s29, 1
      %p178 = por %p176, %p177
      %p179 = scmp.ne.s32.totalorder %s170, %s171
      %p180 = scmp.eq.s32.totalorder %s29, 0
      %p181 = por %p179, %p180
      %p182 = scmp.ne.s32.totalorder %s170, %s171
      %p183 = scmp.eq.s32.totalorder %s30, 1
      %p184 = por %p182, %p183
      %p186 = scmp.ne.s32.totalorder %s171, %s185
      %p187 = scmp.eq.s32.totalorder %s30, 0
      %p188 = por %p186, %p187
      %s190 = sadd.s32 %s189, 1
      %p193 = scmp.eq.s32.totalorder %s24, 1
      %p194 = scmp.ne.s32.totalorder %s189, %s191
      %p195 = scmp.eq.s32.totalorder %s24, 0
      %p196 = por %p194, %p195
      %p197 = scmp.ne.s32.totalorder %s189, %s191
      %p198 = scmp.eq.s32.totalorder %s29, 1
      %p199 = por %p197, %p198
      %p200 = scmp.ne.s32.totalorder %s191, %s192
      %p201 = scmp.eq.s32.totalorder %s29, 0
      %p202 = por %p200, %p201
      %p203 = scmp.ne.s32.totalorder %s191, %s192
      %p204 = scmp.eq.s32.totalorder %s30, 1
      %p205 = por %p203, %p204
      %p207 = scmp.ne.s32.totalorder %s192, %s206
      %p208 = scmp.eq.s32.totalorder %s30, 0
      %p209 = por %p207, %p208
      %s211 = sadd.s32 %s210, 1
      %p214 = scmp.eq.s32.totalorder %s24, 1
      %p215 = scmp.ne.s32.totalorder %s210, %s212
      %p216 = scmp.eq.s32.totalorder %s24, 0
      %p217 = por %p215, %p216
      %p218 = scmp.ne.s32.totalorder %s210, %s212
      %p219 = scmp.eq.s32.totalorder %s29, 1
      %p220 = por %p218, %p219
      %p221 = scmp.ne.s32.totalorder %s212, %s213
      %p222 = scmp.eq.s32.totalorder %s29, 0
      %p223 = por %p221, %p222
      %p224 = scmp.ne.s32.totalorder %s212, %s213
      %p225 = scmp.eq.s32.totalorder %s30, 1
      %p226 = por %p224, %p225
      %p228 = scmp.ne.s32.totalorder %s213, %s227
      %p229 = scmp.eq.s32.totalorder %s30, 0
      %p230 = por %p228, %p229
      %s232 = sadd.s32 %s231, 1
      %p235 = scmp.eq.s32.totalorder %s24, 1
      %p236 = scmp.ne.s32.totalorder %s231, %s233
      %p237 = scmp.eq.s32.totalorder %s24, 0
      %p238 = por %p236, %p237
      %p239 = scmp.ne.s32.totalorder %s231, %s233
      %p240 = scmp.eq.s32.totalorder %s29, 1
      %p241 = por %p239, %p240
      %p242 = scmp.ne.s32.totalorder %s233, %s234
      %p243 = scmp.eq.s32.totalorder %s29, 0
      %p244 = por %p242, %p243
      %p245 = scmp.ne.s32.totalorder %s233, %s234
      %p246 = scmp.eq.s32.totalorder %s30, 1
      %p247 = por %p245, %p246
      %p249 = scmp.ne.s32.totalorder %s234, %s248
      %p250 = scmp.eq.s32.totalorder %s30, 0
      %p251 = por %p249, %p250
      %s253 = sadd.s32 %s252, 1
      %p256 = scmp.eq.s32.totalorder %s24, 1
      %p257 = scmp.ne.s32.totalorder %s252, %s254
      %p258 = scmp.eq.s32.totalorder %s24, 0
      %p259 = por %p257, %p258
      %p260 = scmp.ne.s32.totalorder %s252, %s254
      %p261 = scmp.eq.s32.totalorder %s29, 1
      %p262 = por %p260, %p261
      %p263 = scmp.ne.s32.totalorder %s254, %s255
      %p264 = scmp.eq.s32.totalorder %s29, 0
      %p265 = por %p263, %p264
      %p266 = scmp.ne.s32.totalorder %s254, %s255
      %p267 = scmp.eq.s32.totalorder %s30, 1
      %p268 = por %p266, %p267
      %p270 = scmp.ne.s32.totalorder %s255, %s269
      %p271 = scmp.eq.s32.totalorder %s30, 0
      %p272 = por %p270, %p271
      %s274 = sadd.s32 %s273, 1
      %p277 = scmp.eq.s32.totalorder %s24, 1
      %p278 = scmp.ne.s32.totalorder %s273, %s275
      %p279 = scmp.eq.s32.totalorder %s24, 0
      %p280 = por %p278, %p279
      %p281 = scmp.ne.s32.totalorder %s273, %s275
      %p282 = scmp.eq.s32.totalorder %s29, 1
      %p283 = por %p281, %p282
      %p284 = scmp.ne.s32.totalorder %s275, %s276
      %p285 = scmp.eq.s32.totalorder %s29, 0
      %p286 = por %p284, %p285
      %p287 = scmp.ne.s32.totalorder %s275, %s276
      %p288 = scmp.eq.s32.totalorder %s30, 1
      %p289 = por %p287, %p288
      %p291 = scmp.ne.s32.totalorder %s276, %s290
      %p292 = scmp.eq.s32.totalorder %s30, 0
      %p293 = por %p291, %p292
      %s294 = ssub.s32 %s24, %s31
      %p295 = scmp.eq.s32.totalorder %s294, 0
      %s297 = sadd.s32 %s296, 1
      %s298 = scalar_select %p295, %s296, %s297
      %p301 = pneg %p295
      %p302 = scmp.eq.s32.totalorder %s24, 1
      %p303 = por %p301, %p302
      %p304 = scmp.ne.s32.totalorder %s296, %s299
      %p305 = scmp.eq.s32.totalorder %s24, 0
      %p306 = por %p304, %p305
      %p307 = scmp.ne.s32.totalorder %s296, %s299
      %p308 = scmp.eq.s32.totalorder %s29, 1
      %p309 = por %p307, %p308
      %p310 = scmp.ne.s32.totalorder %s299, %s300
      %p311 = scmp.eq.s32.totalorder %s29, 0
      %p312 = por %p310, %p311
      %p313 = scmp.ne.s32.totalorder %s299, %s300
      %p314 = scmp.eq.s32.totalorder %s30, 1
      %p315 = por %p313, %p314
      %p317 = scmp.ne.s32.totalorder %s300, %s316
      %p318 = scmp.eq.s32.totalorder %s30, 0
      %p319 = por %p317, %p318
      %p320 = scmp.le.s32.totalorder 1, %s24
      %p321 = scmp.lt.s32.totalorder %s24, 3
      %p322 = pnand %p320, %p321
      %p323 = pneg %p322
      // Predicated region
      $region9: #{encoder_forward.4} parent=5 // pred_check
        _
      $region10: #{encoder_forward.4} parent=5 // pred_check_branch
        %325 = sbr.rel (%p322) target = $region12
      $region11: #{encoder_forward.4} parent=5 // pred_region
        %s326 = ssub.s32 %s24, 1
        // Predicated region
        $region13: #{encoder_forward.4} parent=11 // pred_check
          %p327 = pneg %p97
        $region14: #{encoder_forward.4} parent=11 // pred_check_branch
          %329 = sbr.rel (%p327) target = $region16
        $region15: #{encoder_forward.4} parent=11 // pred_region
          %s331 = ssub.s32 2048, 2048
          %332 = vsyncadd [#allocation4], %s331
          %s333 = sshll.u32 [#allocation3], 4
          %s334 = int_to_ptr.vmem [resolvable:$true] %s333
          %339 = dma.hbm_to_vmem [thread:$0]  %s2, 2048, %s334, [#allocation4], 128, 128, 8
        $region16: #{encoder_forward.4} parent=11 // pred_fallthru
          _
        // Predicated region
        $region17: #{encoder_forward.4} parent=11 // pred_check
          %p340 = pneg %p118
        $region18: #{encoder_forward.4} parent=11 // pred_check_branch
          %342 = sbr.rel (%p340) target = $region20
        $region19: #{encoder_forward.4} parent=11 // pred_region
          %s344 = ssub.s32 32, 32
          %345 = vsyncadd [#allocation6], %s344
          %s347 = sshll.u32 [#allocation5], 4
          %s348 = int_to_ptr.vmem [resolvable:$true] %s347
          %350 = dma.hbm_to_vmem [thread:$0]  %s3, 32, %s348, [#allocation6]
        $region20: #{encoder_forward.4} parent=11 // pred_fallthru
          _
        // Predicated region
        $region21: #{encoder_forward.4} parent=11 // pred_check
          %p351 = pneg %p139
        $region22: #{encoder_forward.4} parent=11 // pred_check_branch
          %353 = sbr.rel (%p351) target = $region24
        $region23: #{encoder_forward.4} parent=11 // pred_region
          %s355 = ssub.s32 2048, 2048
          %356 = vsyncadd [#allocation6], %s355
          %s357 = sshll.u32 [#allocation7], 4
          %s358 = int_to_ptr.vmem [resolvable:$true] %s357
          %363 = dma.hbm_to_vmem [thread:$0]  %s4, 2048, %s358, [#allocation6], 128, 128, 8
        $region24: #{encoder_forward.4} parent=11 // pred_fallthru
          _
        // Predicated region
        $region25: #{encoder_forward.4} parent=11 // pred_check
          %p364 = pneg %p160
        $region26: #{encoder_forward.4} parent=11 // pred_check_branch
          %366 = sbr.rel (%p364) target = $region28
        $region27: #{encoder_forward.4} parent=11 // pred_region
          %s368 = ssub.s32 32, 32
          %369 = vsyncadd [#allocation9], %s368
          %s371 = sshll.u32 [#allocation8], 4
          %s372 = int_to_ptr.vmem [resolvable:$true] %s371
          %374 = dma.hbm_to_vmem [thread:$0]  %s5, 32, %s372, [#allocation9]
        $region28: #{encoder_forward.4} parent=11 // pred_fallthru
          _
        // Predicated region
        $region29: #{encoder_forward.4} parent=11 // pred_check
          %p375 = pneg %p181
        $region30: #{encoder_forward.4} parent=11 // pred_check_branch
          %377 = sbr.rel (%p375) target = $region32
        $region31: #{encoder_forward.4} parent=11 // pred_region
          %s379 = ssub.s32 2048, 2048
          %380 = vsyncadd [#allocation9], %s379
          %s381 = sshll.u32 [#allocation10], 4
          %s382 = int_to_ptr.vmem [resolvable:$true] %s381
          %387 = dma.hbm_to_vmem [thread:$0]  %s6, 2048, %s382, [#allocation9], 128, 128, 8
        $region32: #{encoder_forward.4} parent=11 // pred_fallthru
          _
        // Predicated region
        $region33: #{encoder_forward.4} parent=11 // pred_check
          %p388 = pneg %p202
        $region34: #{encoder_forward.4} parent=11 // pred_check_branch
          %390 = sbr.rel (%p388) target = $region36
        $region35: #{encoder_forward.4} parent=11 // pred_region
          %s392 = ssub.s32 32, 32
          %393 = vsyncadd [#allocation12], %s392
          %s395 = sshll.u32 [#allocation11], 4
          %s396 = int_to_ptr.vmem [resolvable:$true] %s395
          %398 = dma.hbm_to_vmem [thread:$0]  %s7, 32, %s396, [#allocation12]
        $region36: #{encoder_forward.4} parent=11 // pred_fallthru
          _
        // Predicated region
        $region37: #{encoder_forward.4} parent=11 // pred_check
          %p399 = pneg %p223
        $region38: #{encoder_forward.4} parent=11 // pred_check_branch
          %401 = sbr.rel (%p399) target = $region40
        $region39: #{encoder_forward.4} parent=11 // pred_region
          %s403 = ssub.s32 2048, 2048
          %404 = vsyncadd [#allocation12], %s403
          %s405 = sshll.u32 [#allocation13], 4
          %s406 = int_to_ptr.vmem [resolvable:$true] %s405
          %411 = dma.hbm_to_vmem [thread:$0]  %s8, 2048, %s406, [#allocation12], 64, 64, 4
        $region40: #{encoder_forward.4} parent=11 // pred_fallthru
          _
        // Predicated region
        $region41: #{encoder_forward.4} parent=11 // pred_check
          %p412 = pneg %p244
        $region42: #{encoder_forward.4} parent=11 // pred_check_branch
          %414 = sbr.rel (%p412) target = $region44
        $region43: #{encoder_forward.4} parent=11 // pred_region
          %s416 = ssub.s32 16, 16
          %417 = vsyncadd [#allocation15], %s416
          %s419 = sshll.u32 [#allocation14], 4
          %s420 = int_to_ptr.vmem [resolvable:$true] %s419
          %422 = dma.hbm_to_vmem [thread:$0]  %s9, 16, %s420, [#allocation15]
        $region44: #{encoder_forward.4} parent=11 // pred_fallthru
          _
        // Predicated region
        $region45: #{encoder_forward.4} parent=11 // pred_check
          %p423 = pneg %p265
        $region46: #{encoder_forward.4} parent=11 // pred_check_branch
          %425 = sbr.rel (%p423) target = $region48
        $region47: #{encoder_forward.4} parent=11 // pred_region
          %s427 = ssub.s32 16, 16
          %428 = vsyncadd [#allocation15], %s427
          %s430 = sshll.u32 [#allocation16], 4
          %s431 = int_to_ptr.vmem [resolvable:$true] %s430
          %433 = dma.hbm_to_vmem [thread:$0]  %s10, 16, %s431, [#allocation15]
        $region48: #{encoder_forward.4} parent=11 // pred_fallthru
          _
        // Predicated region
        $region49: #{encoder_forward.4} parent=11 // pred_check
          %p434 = pneg %p286
        $region50: #{encoder_forward.4} parent=11 // pred_check_branch
          %436 = sbr.rel (%p434) target = $region52
        $region51: #{encoder_forward.4} parent=11 // pred_region
          %s438 = ssub.s32 16, 16
          %439 = vsyncadd [#allocation18], %s438
          %s441 = sshll.u32 [#allocation17], 4
          %s442 = int_to_ptr.vmem [resolvable:$true] %s441
          %444 = dma.hbm_to_vmem [thread:$0]  %s11, 16, %s442, [#allocation18]
        $region52: #{encoder_forward.4} parent=11 // pred_fallthru
          _
      $region12: #{encoder_forward.4} parent=5 // pred_fallthru
        _
      %p445 = scmp.lt.s32.totalorder %s24, 2
      // Predicated region
      $region53: #{encoder_forward.4} parent=5 // pred_check
        %p446 = pneg %p445
      $region54: #{encoder_forward.4} parent=5 // pred_check_branch
        %448 = sbr.rel (%p446) target = $region56
      $region55: #{encoder_forward.4} parent=5 // pred_region
        // Predicated region
        $region57: #{encoder_forward.4} parent=55 // pred_check
          %p449 = pneg %p44
        $region58: #{encoder_forward.4} parent=55 // pred_check_branch
          %451 = sbr.rel (%p449) target = $region60
        $region59: #{encoder_forward.4} parent=55 // pred_region
          %p452 = scmp.lt.s32.totalorder %s24, 1
          %s453 = scalar_select %p452, %s24, 1
          %s454 = smul.addr %s453, 2
          %s455 = smul.addr %s454, 8
          %s456 = scalar_lea.vmem %s0, %s455
        $region60: #{encoder_forward.4} parent=55 // pred_fallthru
          _
        // Predicated region
        $region61: #{encoder_forward.4} parent=55 // pred_check
          %p457 = pneg %p70
        $region62: #{encoder_forward.4} parent=55 // pred_check_branch
          %459 = sbr.rel (%p457) target = $region64
        $region63: #{encoder_forward.4} parent=55 // pred_region
          %p460 = scmp.lt.s32.totalorder %s24, 1
          %s461 = scalar_select %p460, %s24, 1
          %s462 = scalar_lea.vmem %s1, %s461
        $region64: #{encoder_forward.4} parent=55 // pred_fallthru
          _
      $region56: #{encoder_forward.4} parent=5 // pred_fallthru
        _
      %p463 = scmp.le.s32.totalorder 1, %s24
      %p464 = scmp.lt.s32.totalorder %s24, 3
      %p465 = pnand %p463, %p464
      %p466 = pneg %p465
      // Predicated region
      $region65: #{encoder_forward.4} parent=5 // pred_check
        _
      $region66: #{encoder_forward.4} parent=5 // pred_check_branch
        %468 = sbr.rel (%p465) target = $region68
      $region67: #{encoder_forward.4} parent=5 // pred_region
        %s469 = ssub.s32 %s24, 1
        // Predicated region
        $region69: #{encoder_forward.4} parent=67 // pred_check
          %p470 = pneg %p97
        $region70: #{encoder_forward.4} parent=67 // pred_check_branch
          %472 = sbr.rel (%p470) target = $region72
        $region71: #{encoder_forward.4} parent=67 // pred_region
          %473 = dma.done [#allocation4], 2048
        $region72: #{encoder_forward.4} parent=67 // pred_fallthru
          _
        // Predicated region
        $region73: #{encoder_forward.4} parent=67 // pred_check
          %p474 = pneg %p118
        $region74: #{encoder_forward.4} parent=67 // pred_check_branch
          %476 = sbr.rel (%p474) target = $region76
        $region75: #{encoder_forward.4} parent=67 // pred_region
          %477 = dma.done [#allocation6], 32
        $region76: #{encoder_forward.4} parent=67 // pred_fallthru
          _
        // Predicated region
        $region77: #{encoder_forward.4} parent=67 // pred_check
          %p478 = pneg %p139
        $region78: #{encoder_forward.4} parent=67 // pred_check_branch
          %480 = sbr.rel (%p478) target = $region80
        $region79: #{encoder_forward.4} parent=67 // pred_region
          %481 = dma.done [#allocation6], 2048
        $region80: #{encoder_forward.4} parent=67 // pred_fallthru
          _
        // Predicated region
        $region81: #{encoder_forward.4} parent=67 // pred_check
          %p482 = pneg %p160
        $region82: #{encoder_forward.4} parent=67 // pred_check_branch
          %484 = sbr.rel (%p482) target = $region84
        $region83: #{encoder_forward.4} parent=67 // pred_region
          %485 = dma.done [#allocation9], 32
        $region84: #{encoder_forward.4} parent=67 // pred_fallthru
          _
        // Predicated region
        $region85: #{encoder_forward.4} parent=67 // pred_check
          %p486 = pneg %p181
        $region86: #{encoder_forward.4} parent=67 // pred_check_branch
          %488 = sbr.rel (%p486) target = $region88
        $region87: #{encoder_forward.4} parent=67 // pred_region
          %489 = dma.done [#allocation9], 2048
        $region88: #{encoder_forward.4} parent=67 // pred_fallthru
          _
        // Predicated region
        $region89: #{encoder_forward.4} parent=67 // pred_check
          %p490 = pneg %p202
        $region90: #{encoder_forward.4} parent=67 // pred_check_branch
          %492 = sbr.rel (%p490) target = $region92
        $region91: #{encoder_forward.4} parent=67 // pred_region
          %493 = dma.done [#allocation12], 32
        $region92: #{encoder_forward.4} parent=67 // pred_fallthru
          _
        // Predicated region
        $region93: #{encoder_forward.4} parent=67 // pred_check
          %p494 = pneg %p223
        $region94: #{encoder_forward.4} parent=67 // pred_check_branch
          %496 = sbr.rel (%p494) target = $region96
        $region95: #{encoder_forward.4} parent=67 // pred_region
          %497 = dma.done [#allocation12], 2048
        $region96: #{encoder_forward.4} parent=67 // pred_fallthru
          _
        // Predicated region
        $region97: #{encoder_forward.4} parent=67 // pred_check
          %p498 = pneg %p244
        $region98: #{encoder_forward.4} parent=67 // pred_check_branch
          %500 = sbr.rel (%p498) target = $region100
        $region99: #{encoder_forward.4} parent=67 // pred_region
          %501 = dma.done [#allocation15], 16
        $region100: #{encoder_forward.4} parent=67 // pred_fallthru
          _
        // Predicated region
        $region101: #{encoder_forward.4} parent=67 // pred_check
          %p502 = pneg %p265
        $region102: #{encoder_forward.4} parent=67 // pred_check_branch
          %504 = sbr.rel (%p502) target = $region104
        $region103: #{encoder_forward.4} parent=67 // pred_region
          %505 = dma.done [#allocation15], 16
        $region104: #{encoder_forward.4} parent=67 // pred_fallthru
          _
        // Predicated region
        $region105: #{encoder_forward.4} parent=67 // pred_check
          %p506 = pneg %p286
        $region106: #{encoder_forward.4} parent=67 // pred_check_branch
          %508 = sbr.rel (%p506) target = $region108
        $region107: #{encoder_forward.4} parent=67 // pred_region
          %509 = dma.done [#allocation18], 16
        $region108: #{encoder_forward.4} parent=67 // pred_fallthru
          _
        %p510 = scmp.lt.s32.totalorder %s29, 1
        %s511 = scalar_select %p510, %s29, 1
        %s512 = smul.addr %s511, 2
        %s513 = smul.addr %s512, 8
        %s514 = scalar_lea.vmem %s0, %s513
        %p515 = pneg %p50
        %p516 = pneg %p47
        %p517 = scmp.lt.s32.totalorder %s29, 1
        %s518 = scalar_select %p517, %s29, 1
        %s519 = scalar_lea.vmem %s1, %s518
        %p520 = pneg %p76
        %p521 = pneg %p73
        %p522 = pneg %p97
        %p523 = pneg %p94
        %p524 = pneg %p118
        %p525 = pneg %p115
        %p526 = pneg %p139
        %p527 = pneg %p136
        %p528 = pneg %p160
        %p529 = pneg %p157
        %p530 = pneg %p181
        %p531 = pneg %p178
        %p532 = pneg %p202
        %p533 = pneg %p199
        %p534 = pneg %p223
        %p535 = pneg %p220
        %p536 = pneg %p244
        %p537 = pneg %p241
        %p538 = pneg %p265
        %p539 = pneg %p262
        %p540 = pneg %p286
        %p541 = pneg %p283
        %p542 = pneg %p312
        %p543 = pneg %p309
        %p544 = scmp.lt.s32.totalorder %s29, 1
        %s545 = scalar_select %p544, %s29, 1
        %s546 = smul.addr %s545, 2
        %s547 = smul.addr %s546, 8
        %s548 = scalar_lea.vmem %s12, %s547
        %p549 = scmp.lt.s32.totalorder %s29, 1
        %s550 = scalar_select %p549, %s29, 1
        %s551 = smul.addr %s550, 2
        %s552 = smul.addr %s551, 8
        %s553 = scalar_lea.vmem %s0, %s552
        %p554 = scmp.lt.s32.totalorder %s29, 1
        %s555 = scalar_select %p554, %s29, 1
        %s556 = scalar_lea.vmem %s1, %s555
        %p557 = scmp.lt.s32.totalorder %s29, 1
        %s558 = scalar_select %p557, %s29, 1
        %s559 = smul.addr %s558, 2
        %s560 = smul.addr %s559, 8
        %s561 = scalar_lea.vmem %s12, %s560
        %v563 = vld [vmem:[%s553] sm:$0xff]
        %v564 = vld [vmem:[%s553 + $0x8] sm:$0xff]
        %v565 = vpack.c.bf16 %v564, %v563
        %v566 = vld [vmem:[#allocation3] sm:$0xff]
        %v567 = vld [vmem:[#allocation3 + $0x8] sm:$0xff]
        %v568 = vld [vmem:[#allocation3 + $0x10] sm:$0xff]
        %v569 = vld [vmem:[#allocation3 + $0x18] sm:$0xff]
        %v570 = vld [vmem:[#allocation3 + $0x20] sm:$0xff]
        %v571 = vld [vmem:[#allocation3 + $0x28] sm:$0xff]
        %v572 = vld [vmem:[#allocation3 + $0x30] sm:$0xff]
        %v573 = vld [vmem:[#allocation3 + $0x38] sm:$0xff]
        %v574 = vld [vmem:[#allocation3 + $0x40] sm:$0xff]
        %v575 = vld [vmem:[#allocation3 + $0x48] sm:$0xff]
        %v576 = vld [vmem:[#allocation3 + $0x50] sm:$0xff]
        %v577 = vld [vmem:[#allocation3 + $0x58] sm:$0xff]
        %v578 = vld [vmem:[#allocation3 + $0x60] sm:$0xff]
        %v579 = vld [vmem:[#allocation3 + $0x68] sm:$0xff]
        %v580 = vld [vmem:[#allocation3 + $0x70] sm:$0xff]
        %v581 = vld [vmem:[#allocation3 + $0x78] sm:$0xff]
        %v582 = vld [vmem:[#allocation5] sm:$0x3]
        %v584 = vlaneseq
        %v585 = vshrl.u32 %v584, 7
        %v586 = vsub.s32 0, %v585
        %v587 = vrot.slane %v582, %v586
        %v588 = vlaneseq
        %v589 = vshrl.u32 %v588, 7
        %v590 = vsub.s32 1, %v589
        %v591 = vrot.slane %v582, %v590
        %v610 = vunpack.c.l.b16 %v566
        %v611 = vunpack.c.h.b16 %v566
        %v612 = vunpack.c.l.b16 %v567
        %v613 = vunpack.c.h.b16 %v567
        %v614 = vunpack.c.l.b16 %v568
        %v615 = vunpack.c.h.b16 %v568
        %v616 = vunpack.c.l.b16 %v569
        %v617 = vunpack.c.h.b16 %v569
        %v618 = vunpack.c.l.b16 %v570
        %v619 = vunpack.c.h.b16 %v570
        %v620 = vunpack.c.l.b16 %v571
        %v621 = vunpack.c.h.b16 %v571
        %v622 = vunpack.c.l.b16 %v572
        %v623 = vunpack.c.h.b16 %v572
        %v624 = vunpack.c.l.b16 %v573
        %v625 = vunpack.c.h.b16 %v573
        %v626 = vunpack.c.l.b16 %v574
        %v627 = vunpack.c.h.b16 %v574
        %v628 = vunpack.c.l.b16 %v575
        %v629 = vunpack.c.h.b16 %v575
        %v630 = vunpack.c.l.b16 %v576
        %v631 = vunpack.c.h.b16 %v576
        %v632 = vunpack.c.l.b16 %v577
        %v633 = vunpack.c.h.b16 %v577
        %v634 = vunpack.c.l.b16 %v578
        %v635 = vunpack.c.h.b16 %v578
        %v636 = vunpack.c.l.b16 %v579
        %v637 = vunpack.c.h.b16 %v579
        %v638 = vunpack.c.l.b16 %v580
        %v639 = vunpack.c.h.b16 %v580
        %v640 = vunpack.c.l.b16 %v581
        %v641 = vunpack.c.h.b16 %v581
        %v642 = vpack.c.b16 %v612, %v610
        %v643 = vpack.c.b16 %v613, %v611
        %v644 = vpack.c.b16 %v616, %v614
        %v645 = vpack.c.b16 %v617, %v615
        %v646 = vpack.c.b16 %v620, %v618
        %v647 = vpack.c.b16 %v621, %v619
        %v648 = vpack.c.b16 %v624, %v622
        %v649 = vpack.c.b16 %v625, %v623
        %v650 = vpack.c.b16 %v628, %v626
        %v651 = vpack.c.b16 %v629, %v627
        %v652 = vpack.c.b16 %v632, %v630
        %v653 = vpack.c.b16 %v633, %v631
        %v654 = vpack.c.b16 %v636, %v634
        %v655 = vpack.c.b16 %v637, %v635
        %v656 = vpack.c.b16 %v640, %v638
        %v657 = vpack.c.b16 %v641, %v639
        %674 = vmatprep.subr.bf16.mxu0 %v643
        %675 = vmatpush1.bf16.msra.mxu0 %v642
        %676 = vmatprep.subr.bf16.mxu0 %v645
        %677 = vmatpush1.bf16.msra.mxu0 %v644
        %678 = vmatprep.subr.bf16.mxu0 %v647
        %679 = vmatpush1.bf16.msra.mxu0 %v646
        %680 = vmatprep.subr.bf16.mxu0 %v649
        %681 = vmatpush1.bf16.msra.mxu0 %v648
        %682 = vmatprep.subr.bf16.mxu0 %v651
        %683 = vmatpush1.bf16.msra.mxu0 %v650
        %684 = vmatprep.subr.bf16.mxu0 %v653
        %685 = vmatpush1.bf16.msra.mxu0 %v652
        %686 = vmatprep.subr.bf16.mxu0 %v655
        %687 = vmatpush1.bf16.msra.mxu0 %v654
        %688 = vmatprep.subr.bf16.mxu0 %v657
        %689 = vmatpush1.bf16.msra.mxu0 %v656
        %690 = vmatprep.subr.bf16.mxu0 0
        %691 = vmatpush1.bf16.msra.mxu0 0
        %692 = vmatprep.subr.bf16.mxu0 0
        %693 = vmatpush1.bf16.msra.mxu0 0
        %694 = vmatprep.subr.bf16.mxu0 0
        %695 = vmatpush1.bf16.msra.mxu0 0
        %696 = vmatprep.subr.bf16.mxu0 0
        %697 = vmatpush1.bf16.msra.mxu0 0
        %698 = vmatprep.subr.bf16.mxu0 0
        %699 = vmatpush1.bf16.msra.mxu0 0
        %700 = vmatprep.subr.bf16.mxu0 0
        %701 = vmatpush1.bf16.msra.mxu0 0
        %702 = vmatprep.subr.bf16.mxu0 0
        %703 = vmatpush1.bf16.msra.mxu0 0
        %704 = vmatprep.subr.bf16.mxu0 0
        %705 = vmatpush1.bf16.msra.mxu0 0
        %706 = vmatprep.mubr.bf16.mxu0 0
        %707 = vmatmul.mubr.bf16.gmra.mrb[0].mxu0 %v565
        %v708 = vpop.f32.mrb[0].mxu0
        %v709 = vadd.f32 %v587, %v708
        %v710 = vpop.f32.mrb[0].mxu0
        %v711 = vadd.f32 %v591, %v710
        %v712 = vpop.f32.mrb[0].mxu0
        %v713 = vadd.f32 %v587, %v712
        %v714 = vpop.f32.mrb[0].mxu0
        %v715 = vadd.f32 %v591, %v714
        %716 = vdwg.mxu0
        %v717 = vld [vmem:[#allocation7] sm:$0xff]
        %v718 = vld [vmem:[#allocation7 + $0x8] sm:$0xff]
        %v719 = vld [vmem:[#allocation7 + $0x10] sm:$0xff]
        %v720 = vld [vmem:[#allocation7 + $0x18] sm:$0xff]
        %v721 = vld [vmem:[#allocation7 + $0x20] sm:$0xff]
        %v722 = vld [vmem:[#allocation7 + $0x28] sm:$0xff]
        %v723 = vld [vmem:[#allocation7 + $0x30] sm:$0xff]
        %v724 = vld [vmem:[#allocation7 + $0x38] sm:$0xff]
        %v725 = vld [vmem:[#allocation7 + $0x40] sm:$0xff]
        %v726 = vld [vmem:[#allocation7 + $0x48] sm:$0xff]
        %v727 = vld [vmem:[#allocation7 + $0x50] sm:$0xff]
        %v728 = vld [vmem:[#allocation7 + $0x58] sm:$0xff]
        %v729 = vld [vmem:[#allocation7 + $0x60] sm:$0xff]
        %v730 = vld [vmem:[#allocation7 + $0x68] sm:$0xff]
        %v731 = vld [vmem:[#allocation7 + $0x70] sm:$0xff]
        %v732 = vld [vmem:[#allocation7 + $0x78] sm:$0xff]
        %v733 = vld [vmem:[#allocation8] sm:$0x3]
        %v735 = vlaneseq
        %v736 = vshrl.u32 %v735, 7
        %v737 = vsub.s32 0, %v736
        %v738 = vrot.slane %v733, %v737
        %v739 = vlaneseq
        %v740 = vshrl.u32 %v739, 7
        %v741 = vsub.s32 1, %v740
        %v742 = vrot.slane %v733, %v741
        %v761 = vunpack.c.l.b16 %v717
        %v762 = vunpack.c.h.b16 %v717
        %v763 = vunpack.c.l.b16 %v718
        %v764 = vunpack.c.h.b16 %v718
        %v765 = vunpack.c.l.b16 %v719
        %v766 = vunpack.c.h.b16 %v719
        %v767 = vunpack.c.l.b16 %v720
        %v768 = vunpack.c.h.b16 %v720
        %v769 = vunpack.c.l.b16 %v721
        %v770 = vunpack.c.h.b16 %v721
        %v771 = vunpack.c.l.b16 %v722
        %v772 = vunpack.c.h.b16 %v722
        %v773 = vunpack.c.l.b16 %v723
        %v774 = vunpack.c.h.b16 %v723
        %v775 = vunpack.c.l.b16 %v724
        %v776 = vunpack.c.h.b16 %v724
        %v777 = vunpack.c.l.b16 %v725
        %v778 = vunpack.c.h.b16 %v725
        %v779 = vunpack.c.l.b16 %v726
        %v780 = vunpack.c.h.b16 %v726
        %v781 = vunpack.c.l.b16 %v727
        %v782 = vunpack.c.h.b16 %v727
        %v783 = vunpack.c.l.b16 %v728
        %v784 = vunpack.c.h.b16 %v728
        %v785 = vunpack.c.l.b16 %v729
        %v786 = vunpack.c.h.b16 %v729
        %v787 = vunpack.c.l.b16 %v730
        %v788 = vunpack.c.h.b16 %v730
        %v789 = vunpack.c.l.b16 %v731
        %v790 = vunpack.c.h.b16 %v731
        %v791 = vunpack.c.l.b16 %v732
        %v792 = vunpack.c.h.b16 %v732
        %v793 = vpack.c.b16 %v763, %v761
        %v794 = vpack.c.b16 %v764, %v762
        %v795 = vpack.c.b16 %v767, %v765
        %v796 = vpack.c.b16 %v768, %v766
        %v797 = vpack.c.b16 %v771, %v769
        %v798 = vpack.c.b16 %v772, %v770
        %v799 = vpack.c.b16 %v775, %v773
        %v800 = vpack.c.b16 %v776, %v774
        %v801 = vpack.c.b16 %v779, %v777
        %v802 = vpack.c.b16 %v780, %v778
        %v803 = vpack.c.b16 %v783, %v781
        %v804 = vpack.c.b16 %v784, %v782
        %v805 = vpack.c.b16 %v787, %v785
        %v806 = vpack.c.b16 %v788, %v786
        %v807 = vpack.c.b16 %v791, %v789
        %v808 = vpack.c.b16 %v792, %v790
        %825 = vmatprep.subr.bf16.mxu0 %v794
        %826 = vmatpush1.bf16.msra.mxu0 %v793
        %827 = vmatprep.subr.bf16.mxu0 %v796
        %828 = vmatpush1.bf16.msra.mxu0 %v795
        %829 = vmatprep.subr.bf16.mxu0 %v798
        %830 = vmatpush1.bf16.msra.mxu0 %v797
        %831 = vmatprep.subr.bf16.mxu0 %v800
        %832 = vmatpush1.bf16.msra.mxu0 %v799
        %833 = vmatprep.subr.bf16.mxu0 %v802
        %834 = vmatpush1.bf16.msra.mxu0 %v801
        %835 = vmatprep.subr.bf16.mxu0 %v804
        %836 = vmatpush1.bf16.msra.mxu0 %v803
        %837 = vmatprep.subr.bf16.mxu0 %v806
        %838 = vmatpush1.bf16.msra.mxu0 %v805
        %839 = vmatprep.subr.bf16.mxu0 %v808
        %840 = vmatpush1.bf16.msra.mxu0 %v807
        %841 = vmatprep.subr.bf16.mxu0 0
        %842 = vmatpush1.bf16.msra.mxu0 0
        %843 = vmatprep.subr.bf16.mxu0 0
        %844 = vmatpush1.bf16.msra.mxu0 0
        %845 = vmatprep.subr.bf16.mxu0 0
        %846 = vmatpush1.bf16.msra.mxu0 0
        %847 = vmatprep.subr.bf16.mxu0 0
        %848 = vmatpush1.bf16.msra.mxu0 0
        %849 = vmatprep.subr.bf16.mxu0 0
        %850 = vmatpush1.bf16.msra.mxu0 0
        %851 = vmatprep.subr.bf16.mxu0 0
        %852 = vmatpush1.bf16.msra.mxu0 0
        %853 = vmatprep.subr.bf16.mxu0 0
        %854 = vmatpush1.bf16.msra.mxu0 0
        %855 = vmatprep.subr.bf16.mxu0 0
        %856 = vmatpush1.bf16.msra.mxu0 0
        %857 = vmatprep.mubr.bf16.mxu0 0
        %858 = vmatmul.mubr.bf16.gmra.mrb[0].mxu0 %v565
        %v859 = vpop.f32.mrb[0].mxu0
        %v860 = vadd.f32 %v738, %v859
        %v861 = vpop.f32.mrb[0].mxu0
        %v862 = vadd.f32 %v742, %v861
        %v863 = vpop.f32.mrb[0].mxu0
        %v864 = vadd.f32 %v738, %v863
        %v865 = vpop.f32.mrb[0].mxu0
        %v866 = vadd.f32 %v742, %v865
        %867 = vdwg.mxu0
        %v868 = vld [vmem:[#allocation10] sm:$0xff]
        %v869 = vld [vmem:[#allocation10 + $0x8] sm:$0xff]
        %v870 = vld [vmem:[#allocation10 + $0x10] sm:$0xff]
        %v871 = vld [vmem:[#allocation10 + $0x18] sm:$0xff]
        %v872 = vld [vmem:[#allocation10 + $0x20] sm:$0xff]
        %v873 = vld [vmem:[#allocation10 + $0x28] sm:$0xff]
        %v874 = vld [vmem:[#allocation10 + $0x30] sm:$0xff]
        %v875 = vld [vmem:[#allocation10 + $0x38] sm:$0xff]
        %v876 = vld [vmem:[#allocation10 + $0x40] sm:$0xff]
        %v877 = vld [vmem:[#allocation10 + $0x48] sm:$0xff]
        %v878 = vld [vmem:[#allocation10 + $0x50] sm:$0xff]
        %v879 = vld [vmem:[#allocation10 + $0x58] sm:$0xff]
        %v880 = vld [vmem:[#allocation10 + $0x60] sm:$0xff]
        %v881 = vld [vmem:[#allocation10 + $0x68] sm:$0xff]
        %v882 = vld [vmem:[#allocation10 + $0x70] sm:$0xff]
        %v883 = vld [vmem:[#allocation10 + $0x78] sm:$0xff]
        %v884 = vld [vmem:[#allocation11] sm:$0x3]
        %v886 = vlaneseq
        %v887 = vshrl.u32 %v886, 7
        %v888 = vsub.s32 0, %v887
        %v889 = vrot.slane %v884, %v888
        %v890 = vlaneseq
        %v891 = vshrl.u32 %v890, 7
        %v892 = vsub.s32 1, %v891
        %v893 = vrot.slane %v884, %v892
        %v912 = vunpack.c.l.b16 %v868
        %v913 = vunpack.c.h.b16 %v868
        %v914 = vunpack.c.l.b16 %v869
        %v915 = vunpack.c.h.b16 %v869
        %v916 = vunpack.c.l.b16 %v870
        %v917 = vunpack.c.h.b16 %v870
        %v918 = vunpack.c.l.b16 %v871
        %v919 = vunpack.c.h.b16 %v871
        %v920 = vunpack.c.l.b16 %v872
        %v921 = vunpack.c.h.b16 %v872
        %v922 = vunpack.c.l.b16 %v873
        %v923 = vunpack.c.h.b16 %v873
        %v924 = vunpack.c.l.b16 %v874
        %v925 = vunpack.c.h.b16 %v874
        %v926 = vunpack.c.l.b16 %v875
        %v927 = vunpack.c.h.b16 %v875
        %v928 = vunpack.c.l.b16 %v876
        %v929 = vunpack.c.h.b16 %v876
        %v930 = vunpack.c.l.b16 %v877
        %v931 = vunpack.c.h.b16 %v877
        %v932 = vunpack.c.l.b16 %v878
        %v933 = vunpack.c.h.b16 %v878
        %v934 = vunpack.c.l.b16 %v879
        %v935 = vunpack.c.h.b16 %v879
        %v936 = vunpack.c.l.b16 %v880
        %v937 = vunpack.c.h.b16 %v880
        %v938 = vunpack.c.l.b16 %v881
        %v939 = vunpack.c.h.b16 %v881
        %v940 = vunpack.c.l.b16 %v882
        %v941 = vunpack.c.h.b16 %v882
        %v942 = vunpack.c.l.b16 %v883
        %v943 = vunpack.c.h.b16 %v883
        %v944 = vpack.c.b16 %v914, %v912
        %v945 = vpack.c.b16 %v915, %v913
        %v946 = vpack.c.b16 %v918, %v916
        %v947 = vpack.c.b16 %v919, %v917
        %v948 = vpack.c.b16 %v922, %v920
        %v949 = vpack.c.b16 %v923, %v921
        %v950 = vpack.c.b16 %v926, %v924
        %v951 = vpack.c.b16 %v927, %v925
        %v952 = vpack.c.b16 %v930, %v928
        %v953 = vpack.c.b16 %v931, %v929
        %v954 = vpack.c.b16 %v934, %v932
        %v955 = vpack.c.b16 %v935, %v933
        %v956 = vpack.c.b16 %v938, %v936
        %v957 = vpack.c.b16 %v939, %v937
        %v958 = vpack.c.b16 %v942, %v940
        %v959 = vpack.c.b16 %v943, %v941
        %976 = vmatprep.subr.bf16.mxu0 %v945
        %977 = vmatpush1.bf16.msra.mxu0 %v944
        %978 = vmatprep.subr.bf16.mxu0 %v947
        %979 = vmatpush1.bf16.msra.mxu0 %v946
        %980 = vmatprep.subr.bf16.mxu0 %v949
        %981 = vmatpush1.bf16.msra.mxu0 %v948
        %982 = vmatprep.subr.bf16.mxu0 %v951
        %983 = vmatpush1.bf16.msra.mxu0 %v950
        %984 = vmatprep.subr.bf16.mxu0 %v953
        %985 = vmatpush1.bf16.msra.mxu0 %v952
        %986 = vmatprep.subr.bf16.mxu0 %v955
        %987 = vmatpush1.bf16.msra.mxu0 %v954
        %988 = vmatprep.subr.bf16.mxu0 %v957
        %989 = vmatpush1.bf16.msra.mxu0 %v956
        %990 = vmatprep.subr.bf16.mxu0 %v959
        %991 = vmatpush1.bf16.msra.mxu0 %v958
        %992 = vmatprep.subr.bf16.mxu0 0
        %993 = vmatpush1.bf16.msra.mxu0 0
        %994 = vmatprep.subr.bf16.mxu0 0
        %995 = vmatpush1.bf16.msra.mxu0 0
        %996 = vmatprep.subr.bf16.mxu0 0
        %997 = vmatpush1.bf16.msra.mxu0 0
        %998 = vmatprep.subr.bf16.mxu0 0
        %999 = vmatpush1.bf16.msra.mxu0 0
        %1000 = vmatprep.subr.bf16.mxu0 0
        %1001 = vmatpush1.bf16.msra.mxu0 0
        %1002 = vmatprep.subr.bf16.mxu0 0
        %1003 = vmatpush1.bf16.msra.mxu0 0
        %1004 = vmatprep.subr.bf16.mxu0 0
        %1005 = vmatpush1.bf16.msra.mxu0 0
        %1006 = vmatprep.subr.bf16.mxu0 0
        %1007 = vmatpush1.bf16.msra.mxu0 0
        %1008 = vmatprep.mubr.bf16.mxu0 0
        %1009 = vmatmul.mubr.bf16.gmra.mrb[0].mxu0 %v565
        %v1010 = vpop.f32.mrb[0].mxu0
        %v1011 = vadd.f32 %v889, %v1010
        %v1012 = vpop.f32.mrb[0].mxu0
        %v1013 = vadd.f32 %v893, %v1012
        %v1014 = vpop.f32.mrb[0].mxu0
        %v1015 = vadd.f32 %v889, %v1014
        %v1016 = vpop.f32.mrb[0].mxu0
        %v1017 = vadd.f32 %v893, %v1016
        %1018 = vdwg.mxu0
        %v1019 = vld [vmem:[%s556] sm:$0x1]
        %v1020 = vpack.c.bf16 %v713, %v709
        %v1021 = vpack.c.bf16 %v864, %v860
        %v1022 = vpack.c.bf16 %v1015, %v1011
        %1023 = vmatprep.subr.bf16.mxu0 0
        %1024 = vmatpush1.bf16.xpose.msra.mxu0 %v1021
        %1025 = vmatprep.subr.bf16.mxu0 0
        %1026 = vmatpush1.bf16.xpose.msra.mxu0 0
        %1027 = vmatprep.subr.bf16.mxu0 0
        %1028 = vmatpush1.bf16.xpose.msra.mxu0 0
        %1029 = vmatprep.subr.bf16.mxu0 0
        %1030 = vmatpush1.bf16.xpose.msra.mxu0 0
        %1031 = vmatprep.subr.bf16.mxu0 0
        %1032 = vmatpush1.bf16.xpose.msra.mxu0 0
        %1033 = vmatprep.subr.bf16.mxu0 0
        %1034 = vmatpush1.bf16.xpose.msra.mxu0 0
        %1035 = vmatprep.subr.bf16.mxu0 0
        %1036 = vmatpush1.bf16.xpose.msra.mxu0 0
        %1037 = vmatprep.subr.bf16.mxu0 0
        %1038 = vmatpush1.bf16.xpose.msra.mxu0 0
        %1039 = vmatprep.subr.bf16.mxu0 0
        %1040 = vmatpush1.bf16.xpose.msra.mxu0 0
        %1041 = vmatprep.subr.bf16.mxu0 0
        %1042 = vmatpush1.bf16.xpose.msra.mxu0 0
        %1043 = vmatprep.subr.bf16.mxu0 0
        %1044 = vmatpush1.bf16.xpose.msra.mxu0 0
        %1045 = vmatprep.subr.bf16.mxu0 0
        %1046 = vmatpush1.bf16.xpose.msra.mxu0 0
        %1047 = vmatprep.subr.bf16.mxu0 0
        %1048 = vmatpush1.bf16.xpose.msra.mxu0 0
        %1049 = vmatprep.subr.bf16.mxu0 0
        %1050 = vmatpush1.bf16.xpose.msra.mxu0 0
        %1051 = vmatprep.subr.bf16.mxu0 0
        %1052 = vmatpush1.bf16.xpose.msra.mxu0 0
        %1053 = vmatprep.subr.bf16.mxu0 0
        %1054 = vmatpush1.bf16.xpose.msra.mxu0 0
        %1055 = vmatprep.mubr.bf16.mxu0 0
        %1056 = vmatmul.mubr.bf16.gmra.mrb[0].mxu0 %v1020
        %v1057 = vpop.f32.mrb[0].mxu0
        %v1058 = vadd.f32 0.0, %v1057
        %v1059 = vpop.f32.mrb[0].mxu0
        %v1060 = vpop.f32.mrb[0].mxu0
        %v1061 = vadd.f32 0.0, %v1060
        %v1062 = vpop.f32.mrb[0].mxu0
        %1063 = vdwg.mxu0
        %v1064 = vmul.f32 %v1058, 0.088388346
        %v1065 = vmul.f32 %v1061, 0.088388346
        %v1067 = vlaneseq
        %v1068 = vshrl.u32 %v1067, 7
        %v1069 = vsub.s32 0, %v1068
        %v1070 = vrot.slane %v1019, %v1069
        %v1072 = vadd.f32 %v1064, %v1070
        %v1073 = vadd.f32 %v1065, %v1070
        %vm1074 = vcmask 130048
        %v1075 = vsel %vm1074, %v1072, -inf
        %1076 = vmax.xlane.f32.xlu0 %v1075
        %v1077 = vpop.xlane.xlu0 %1076
        %v1078 = vsel %vm1074, %v1073, -inf
        %1079 = vmax.xlane.f32.xlu0 %v1078
        %v1080 = vpop.xlane.xlu0 %1079
        %v1081 = vsub.f32 %v1072, %v1077
        %v1082 = vsub.f32 %v1073, %v1080
        %v1083 = vmul.f32 %v1081, 1.442695
        %v1084 = vpow.pop %v1083
        %v1085 = vmul.f32 %v1082, 1.442695
        %v1086 = vpow.pop %v1085
        %v1087 = vsel %vm1074, %v1084, 0.0
        %1088 = vadd.xlane.f32.xlu0 %v1087
        %v1089 = vpop.xlane.xlu0 %1088
        %v1090 = vsel %vm1074, %v1086, 0.0
        %1091 = vadd.xlane.f32.xlu0 %v1090
        %v1092 = vpop.xlane.xlu0 %1091
        %v1093 = vpack.c.bf16 %v1086, %v1084
        %v1095 = vsel %vm1074, %v1093, 0
        %1097 = vmatprep.subr.bf16.mxu0 0
        %1098 = vmatpush1.bf16.msra.mxu0 %v1022
        %1099 = vmatprep.subr.bf16.mxu0 0
        %1100 = vmatpush1.bf16.msra.mxu0 0
        %1101 = vmatprep.subr.bf16.mxu0 0
        %1102 = vmatpush1.bf16.msra.mxu0 0
        %1103 = vmatprep.subr.bf16.mxu0 0
        %1104 = vmatpush1.bf16.msra.mxu0 0
        %1105 = vmatprep.subr.bf16.mxu0 0
        %1106 = vmatpush1.bf16.msra.mxu0 0
        %1107 = vmatprep.subr.bf16.mxu0 0
        %1108 = vmatpush1.bf16.msra.mxu0 0
        %1109 = vmatprep.subr.bf16.mxu0 0
        %1110 = vmatpush1.bf16.msra.mxu0 0
        %1111 = vmatprep.subr.bf16.mxu0 0
        %1112 = vmatpush1.bf16.msra.mxu0 0
        %1113 = vmatprep.subr.bf16.mxu0 0
        %1114 = vmatpush1.bf16.msra.mxu0 0
        %1115 = vmatprep.subr.bf16.mxu0 0
        %1116 = vmatpush1.bf16.msra.mxu0 0
        %1117 = vmatprep.subr.bf16.mxu0 0
        %1118 = vmatpush1.bf16.msra.mxu0 0
        %1119 = vmatprep.subr.bf16.mxu0 0
        %1120 = vmatpush1.bf16.msra.mxu0 0
        %1121 = vmatprep.subr.bf16.mxu0 0
        %1122 = vmatpush1.bf16.msra.mxu0 0
        %1123 = vmatprep.subr.bf16.mxu0 0
        %1124 = vmatpush1.bf16.msra.mxu0 0
        %1125 = vmatprep.subr.bf16.mxu0 0
        %1126 = vmatpush1.bf16.msra.mxu0 0
        %1127 = vmatprep.subr.bf16.mxu0 0
        %1128 = vmatpush1.bf16.msra.mxu0 0
        %1129 = vmatprep.mubr.bf16.mxu0 0
        %1130 = vmatmul.mubr.bf16.gmra.mrb[0].mxu0 %v1095
        %v1131 = vpop.f32.mrb[0].mxu0
        %v1132 = vadd.f32 0.0, %v1131
        %v1133 = vpop.f32.mrb[0].mxu0
        %v1134 = vpop.f32.mrb[0].mxu0
        %v1135 = vadd.f32 0.0, %v1134
        %v1136 = vpop.f32.mrb[0].mxu0
        %1137 = vdwg.mxu0
        %v1138 = vrcp.pop %v1089
        %v1139 = vrcp.pop %v1092
        %v1140 = vmul.f32 %v1132, %v1138
        %v1141 = vmul.f32 %v1135, %v1139
        %1142 = vst [vmem:[#allocation2] sm:$0xff] %v1140
        %1143 = vst [vmem:[#allocation2 + $0x10] sm:$0xff] %v1141
        %v1144 = vpack.c.bf16 %v715, %v711
        %v1145 = vpack.c.bf16 %v866, %v862
        %v1146 = vpack.c.bf16 %v1017, %v1013
        %1147 = vmatprep.subr.bf16.mxu0 0
        %1148 = vmatpush1.bf16.xpose.msra.mxu0 %v1145
        %1149 = vmatprep.subr.bf16.mxu0 0
        %1150 = vmatpush1.bf16.xpose.msra.mxu0 0
        %1151 = vmatprep.subr.bf16.mxu0 0
        %1152 = vmatpush1.bf16.xpose.msra.mxu0 0
        %1153 = vmatprep.subr.bf16.mxu0 0
        %1154 = vmatpush1.bf16.xpose.msra.mxu0 0
        %1155 = vmatprep.subr.bf16.mxu0 0
        %1156 = vmatpush1.bf16.xpose.msra.mxu0 0
        %1157 = vmatprep.subr.bf16.mxu0 0
        %1158 = vmatpush1.bf16.xpose.msra.mxu0 0
        %1159 = vmatprep.subr.bf16.mxu0 0
        %1160 = vmatpush1.bf16.xpose.msra.mxu0 0
        %1161 = vmatprep.subr.bf16.mxu0 0
        %1162 = vmatpush1.bf16.xpose.msra.mxu0 0
        %1163 = vmatprep.subr.bf16.mxu0 0
        %1164 = vmatpush1.bf16.xpose.msra.mxu0 0
        %1165 = vmatprep.subr.bf16.mxu0 0
        %1166 = vmatpush1.bf16.xpose.msra.mxu0 0
        %1167 = vmatprep.subr.bf16.mxu0 0
        %1168 = vmatpush1.bf16.xpose.msra.mxu0 0
        %1169 = vmatprep.subr.bf16.mxu0 0
        %1170 = vmatpush1.bf16.xpose.msra.mxu0 0
        %1171 = vmatprep.subr.bf16.mxu0 0
        %1172 = vmatpush1.bf16.xpose.msra.mxu0 0
        %1173 = vmatprep.subr.bf16.mxu0 0
        %1174 = vmatpush1.bf16.xpose.msra.mxu0 0
        %1175 = vmatprep.subr.bf16.mxu0 0
        %1176 = vmatpush1.bf16.xpose.msra.mxu0 0
        %1177 = vmatprep.subr.bf16.mxu0 0
        %1178 = vmatpush1.bf16.xpose.msra.mxu0 0
        %1179 = vmatprep.mubr.bf16.mxu0 0
        %1180 = vmatmul.mubr.bf16.gmra.mrb[0].mxu0 %v1144
        %v1181 = vpop.f32.mrb[0].mxu0
        %v1182 = vadd.f32 0.0, %v1181
        %v1183 = vpop.f32.mrb[0].mxu0
        %v1184 = vpop.f32.mrb[0].mxu0
        %v1185 = vadd.f32 0.0, %v1184
        %v1186 = vpop.f32.mrb[0].mxu0
        %1187 = vdwg.mxu0
        %v1188 = vmul.f32 %v1182, 0.088388346
        %v1189 = vmul.f32 %v1185, 0.088388346
        %v1190 = vadd.f32 %v1188, %v1070
        %v1191 = vadd.f32 %v1189, %v1070
        %v1192 = vsel %vm1074, %v1190, -inf
        %1193 = vmax.xlane.f32.xlu0 %v1192
        %v1194 = vpop.xlane.xlu0 %1193
        %v1195 = vsel %vm1074, %v1191, -inf
        %1196 = vmax.xlane.f32.xlu0 %v1195
        %v1197 = vpop.xlane.xlu0 %1196
        %v1198 = vsub.f32 %v1190, %v1194
        %v1199 = vsub.f32 %v1191, %v1197
        %v1200 = vmul.f32 %v1198, 1.442695
        %v1201 = vpow.pop %v1200
        %v1202 = vmul.f32 %v1199, 1.442695
        %v1203 = vpow.pop %v1202
        %v1204 = vsel %vm1074, %v1201, 0.0
        %1205 = vadd.xlane.f32.xlu0 %v1204
        %v1206 = vpop.xlane.xlu0 %1205
        %v1207 = vsel %vm1074, %v1203, 0.0
        %1208 = vadd.xlane.f32.xlu0 %v1207
        %v1209 = vpop.xlane.xlu0 %1208
        %v1210 = vpack.c.bf16 %v1203, %v1201
        %v1212 = vsel %vm1074, %v1210, 0
        %1214 = vmatprep.subr.bf16.mxu0 0
        %1215 = vmatpush1.bf16.msra.mxu0 %v1146
        %1216 = vmatprep.subr.bf16.mxu0 0
        %1217 = vmatpush1.bf16.msra.mxu0 0
        %1218 = vmatprep.subr.bf16.mxu0 0
        %1219 = vmatpush1.bf16.msra.mxu0 0
        %1220 = vmatprep.subr.bf16.mxu0 0
        %1221 = vmatpush1.bf16.msra.mxu0 0
        %1222 = vmatprep.subr.bf16.mxu0 0
        %1223 = vmatpush1.bf16.msra.mxu0 0
        %1224 = vmatprep.subr.bf16.mxu0 0
        %1225 = vmatpush1.bf16.msra.mxu0 0
        %1226 = vmatprep.subr.bf16.mxu0 0
        %1227 = vmatpush1.bf16.msra.mxu0 0
        %1228 = vmatprep.subr.bf16.mxu0 0
        %1229 = vmatpush1.bf16.msra.mxu0 0
        %1230 = vmatprep.subr.bf16.mxu0 0
        %1231 = vmatpush1.bf16.msra.mxu0 0
        %1232 = vmatprep.subr.bf16.mxu0 0
        %1233 = vmatpush1.bf16.msra.mxu0 0
        %1234 = vmatprep.subr.bf16.mxu0 0
        %1235 = vmatpush1.bf16.msra.mxu0 0
        %1236 = vmatprep.subr.bf16.mxu0 0
        %1237 = vmatpush1.bf16.msra.mxu0 0
        %1238 = vmatprep.subr.bf16.mxu0 0
        %1239 = vmatpush1.bf16.msra.mxu0 0
        %1240 = vmatprep.subr.bf16.mxu0 0
        %1241 = vmatpush1.bf16.msra.mxu0 0
        %1242 = vmatprep.subr.bf16.mxu0 0
        %1243 = vmatpush1.bf16.msra.mxu0 0
        %1244 = vmatprep.subr.bf16.mxu0 0
        %1245 = vmatpush1.bf16.msra.mxu0 0
        %1246 = vmatprep.mubr.bf16.mxu0 0
        %1247 = vmatmul.mubr.bf16.gmra.mrb[0].mxu0 %v1212
        %v1248 = vpop.f32.mrb[0].mxu0
        %v1249 = vadd.f32 0.0, %v1248
        %v1250 = vpop.f32.mrb[0].mxu0
        %v1251 = vpop.f32.mrb[0].mxu0
        %v1252 = vadd.f32 0.0, %v1251
        %v1253 = vpop.f32.mrb[0].mxu0
        %1254 = vdwg.mxu0
        %v1255 = vrcp.pop %v1206
        %v1256 = vrcp.pop %v1209
        %v1257 = vmul.f32 %v1249, %v1255
        %v1258 = vmul.f32 %v1252, %v1256
        %1259 = vst [vmem:[#allocation2 + $0x8] sm:$0xff] %v1257
        %1260 = vst [vmem:[#allocation2 + $0x18] sm:$0xff] %v1258
        %v1261 = vld [vmem:[#allocation2] sm:$0xff]
        %v1262 = vld [vmem:[#allocation2 + $0x8] sm:$0xff]
        %v1263 = vld [vmem:[#allocation2 + $0x10] sm:$0xff]
        %v1264 = vld [vmem:[#allocation2 + $0x18] sm:$0xff]
        %v1265 = vpack.c.bf16 %v1263, %v1261
        %v1266 = vpack.c.bf16 %v1264, %v1262
        %v1267 = vld [vmem:[#allocation13] sm:$0xf]
        %v1268 = vld [vmem:[#allocation13 + $0x4] sm:$0xf]
        %v1269 = vld [vmem:[#allocation13 + $0x8] sm:$0xf]
        %v1270 = vld [vmem:[#allocation13 + $0xc] sm:$0xf]
        %v1271 = vld [vmem:[#allocation13 + $0x10] sm:$0xf]
        %v1272 = vld [vmem:[#allocation13 + $0x14] sm:$0xf]
        %v1273 = vld [vmem:[#allocation13 + $0x18] sm:$0xf]
        %v1274 = vld [vmem:[#allocation13 + $0x1c] sm:$0xf]
        %v1275 = vld [vmem:[#allocation13 + $0x20] sm:$0xf]
        %v1276 = vld [vmem:[#allocation13 + $0x24] sm:$0xf]
        %v1277 = vld [vmem:[#allocation13 + $0x28] sm:$0xf]
        %v1278 = vld [vmem:[#allocation13 + $0x2c] sm:$0xf]
        %v1279 = vld [vmem:[#allocation13 + $0x30] sm:$0xf]
        %v1280 = vld [vmem:[#allocation13 + $0x34] sm:$0xf]
        %v1281 = vld [vmem:[#allocation13 + $0x38] sm:$0xf]
        %v1282 = vld [vmem:[#allocation13 + $0x3c] sm:$0xf]
        %v1283 = vld [vmem:[#allocation13 + $0x40] sm:$0xf]
        %v1284 = vld [vmem:[#allocation13 + $0x44] sm:$0xf]
        %v1285 = vld [vmem:[#allocation13 + $0x48] sm:$0xf]
        %v1286 = vld [vmem:[#allocation13 + $0x4c] sm:$0xf]
        %v1287 = vld [vmem:[#allocation13 + $0x50] sm:$0xf]
        %v1288 = vld [vmem:[#allocation13 + $0x54] sm:$0xf]
        %v1289 = vld [vmem:[#allocation13 + $0x58] sm:$0xf]
        %v1290 = vld [vmem:[#allocation13 + $0x5c] sm:$0xf]
        %v1291 = vld [vmem:[#allocation13 + $0x60] sm:$0xf]
        %v1292 = vld [vmem:[#allocation13 + $0x64] sm:$0xf]
        %v1293 = vld [vmem:[#allocation13 + $0x68] sm:$0xf]
        %v1294 = vld [vmem:[#allocation13 + $0x6c] sm:$0xf]
        %v1295 = vld [vmem:[#allocation13 + $0x70] sm:$0xf]
        %v1296 = vld [vmem:[#allocation13 + $0x74] sm:$0xf]
        %v1297 = vld [vmem:[#allocation13 + $0x78] sm:$0xf]
        %v1298 = vld [vmem:[#allocation13 + $0x7c] sm:$0xf]
        %v1299 = vld [vmem:[#allocation14] sm:$0x1]
        %v1301 = vlaneseq
        %v1302 = vshrl.u32 %v1301, 7
        %v1303 = vsub.s32 0, %v1302
        %v1304 = vrot.slane %v1299, %v1303
        %v1338 = vunpack.c.l.b16 %v1267
        %v1339 = vunpack.c.l.b16 %v1268
        %v1340 = vunpack.c.l.b16 %v1269
        %v1341 = vunpack.c.l.b16 %v1270
        %v1342 = vunpack.c.l.b16 %v1271
        %v1343 = vunpack.c.l.b16 %v1272
        %v1344 = vunpack.c.l.b16 %v1273
        %v1345 = vunpack.c.l.b16 %v1274
        %v1346 = vunpack.c.l.b16 %v1275
        %v1347 = vunpack.c.l.b16 %v1276
        %v1348 = vunpack.c.l.b16 %v1277
        %v1349 = vunpack.c.l.b16 %v1278
        %v1350 = vunpack.c.l.b16 %v1279
        %v1351 = vunpack.c.l.b16 %v1280
        %v1352 = vunpack.c.l.b16 %v1281
        %v1353 = vunpack.c.l.b16 %v1282
        %v1354 = vunpack.c.l.b16 %v1283
        %v1355 = vunpack.c.l.b16 %v1284
        %v1356 = vunpack.c.l.b16 %v1285
        %v1357 = vunpack.c.l.b16 %v1286
        %v1358 = vunpack.c.l.b16 %v1287
        %v1359 = vunpack.c.l.b16 %v1288
        %v1360 = vunpack.c.l.b16 %v1289
        %v1361 = vunpack.c.l.b16 %v1290
        %v1362 = vunpack.c.l.b16 %v1291
        %v1363 = vunpack.c.l.b16 %v1292
        %v1364 = vunpack.c.l.b16 %v1293
        %v1365 = vunpack.c.l.b16 %v1294
        %v1366 = vunpack.c.l.b16 %v1295
        %v1367 = vunpack.c.l.b16 %v1296
        %v1368 = vunpack.c.l.b16 %v1297
        %v1369 = vunpack.c.l.b16 %v1298
        %v1370 = vpack.c.b16 %v1339, %v1338
        %v1371 = vpack.c.b16 %v1341, %v1340
        %v1372 = vpack.c.b16 %v1343, %v1342
        %v1373 = vpack.c.b16 %v1345, %v1344
        %v1374 = vpack.c.b16 %v1347, %v1346
        %v1375 = vpack.c.b16 %v1349, %v1348
        %v1376 = vpack.c.b16 %v1351, %v1350
        %v1377 = vpack.c.b16 %v1353, %v1352
        %v1378 = vpack.c.b16 %v1355, %v1354
        %v1379 = vpack.c.b16 %v1357, %v1356
        %v1380 = vpack.c.b16 %v1359, %v1358
        %v1381 = vpack.c.b16 %v1361, %v1360
        %v1382 = vpack.c.b16 %v1363, %v1362
        %v1383 = vpack.c.b16 %v1365, %v1364
        %v1384 = vpack.c.b16 %v1367, %v1366
        %v1385 = vpack.c.b16 %v1369, %v1368
        %1402 = vmatprep.subr.bf16.mxu0 0
        %1403 = vmatpush1.bf16.msra.mxu0 %v1370
        %1404 = vmatprep.subr.bf16.mxu0 0
        %1405 = vmatpush1.bf16.msra.mxu0 %v1371
        %1406 = vmatprep.subr.bf16.mxu0 0
        %1407 = vmatpush1.bf16.msra.mxu0 %v1372
        %1408 = vmatprep.subr.bf16.mxu0 0
        %1409 = vmatpush1.bf16.msra.mxu0 %v1373
        %1410 = vmatprep.subr.bf16.mxu0 0
        %1411 = vmatpush1.bf16.msra.mxu0 %v1374
        %1412 = vmatprep.subr.bf16.mxu0 0
        %1413 = vmatpush1.bf16.msra.mxu0 %v1375
        %1414 = vmatprep.subr.bf16.mxu0 0
        %1415 = vmatpush1.bf16.msra.mxu0 %v1376
        %1416 = vmatprep.subr.bf16.mxu0 0
        %1417 = vmatpush1.bf16.msra.mxu0 %v1377
        %1418 = vmatprep.subr.bf16.mxu0 0
        %1419 = vmatpush1.bf16.msra.mxu0 %v1378
        %1420 = vmatprep.subr.bf16.mxu0 0
        %1421 = vmatpush1.bf16.msra.mxu0 %v1379
        %1422 = vmatprep.subr.bf16.mxu0 0
        %1423 = vmatpush1.bf16.msra.mxu0 %v1380
        %1424 = vmatprep.subr.bf16.mxu0 0
        %1425 = vmatpush1.bf16.msra.mxu0 %v1381
        %1426 = vmatprep.subr.bf16.mxu0 0
        %1427 = vmatpush1.bf16.msra.mxu0 %v1382
        %1428 = vmatprep.subr.bf16.mxu0 0
        %1429 = vmatpush1.bf16.msra.mxu0 %v1383
        %1430 = vmatprep.subr.bf16.mxu0 0
        %1431 = vmatpush1.bf16.msra.mxu0 %v1384
        %1432 = vmatprep.subr.bf16.mxu0 0
        %1433 = vmatpush1.bf16.msra.mxu0 %v1385
        %1434 = vmatprep.mubr.bf16.mxu0 %v1266
        %1435 = vmatmul.mubr.bf16.gmra.mrb[0].mxu0 %v1265
        %v1436 = vpop.f32.mrb[0].mxu0
        %v1437 = vadd.f32 %v1304, %v1436
        %v1438 = vpop.f32.mrb[0].mxu0
        %v1439 = vpop.f32.mrb[0].mxu0
        %v1440 = vadd.f32 %v1304, %v1439
        %v1441 = vpop.f32.mrb[0].mxu0
        %1442 = vdwg.mxu0
        %v1443 = vadd.f32 %v563, %v1437
        %v1444 = vadd.f32 %v564, %v1440
        %1445 = vadd.xlane.f32.xlu0 %v1443
        %v1446 = vpop.xlane.xlu0 %1445
        %1447 = vadd.xlane.f32.xlu0 %v1444
        %v1448 = vpop.xlane.xlu0 %1447
        %v1449 = vrcp.pop 128.0
        %v1450 = vmul.f32 %v1446, %v1449
        %v1451 = vmul.f32 %v1448, %v1449
        %v1452 = vsub.f32 %v1443, %v1450
        %v1453 = vsub.f32 %v1444, %v1451
        %v1454 = vmul.f32 %v1452, %v1452
        %v1455 = vmul.f32 %v1453, %v1453
        %1456 = vadd.xlane.f32.xlu0 %v1454
        %v1457 = vpop.xlane.xlu0 %1456
        %1458 = vadd.xlane.f32.xlu0 %v1455
        %v1459 = vpop.xlane.xlu0 %1458
        %v1460 = vmul.f32 %v1457, %v1449
        %v1461 = vmul.f32 %v1459, %v1449
        %v1462 = vadd.f32 %v1460, 1e-05
        %v1463 = vadd.f32 %v1461, 1e-05
        %v1464 = vrsqrt.pop %v1462
        %v1465 = vrsqrt.pop %v1463
        %v1466 = vmul.f32 %v1452, %v1464
        %v1467 = vmul.f32 %v1453, %v1465
        %v1468 = vld [vmem:[#allocation16] sm:$0x1]
        %v1470 = vlaneseq
        %v1471 = vshrl.u32 %v1470, 7
        %v1472 = vsub.s32 0, %v1471
        %v1473 = vrot.slane %v1468, %v1472
        %v1475 = vmul.f32 %v1466, %v1473
        %v1476 = vmul.f32 %v1467, %v1473
        %v1477 = vld [vmem:[#allocation17] sm:$0x1]
        %v1479 = vlaneseq
        %v1480 = vshrl.u32 %v1479, 7
        %v1481 = vsub.s32 0, %v1480
        %v1482 = vrot.slane %v1477, %v1481
        %v1484 = vadd.f32 %v1475, %v1482
        %v1485 = vadd.f32 %v1476, %v1482
        %1486 = vst [vmem:[%s561] sm:$0xff] %v1484
        %1487 = vst [vmem:[%s561 + $0x8] sm:$0xff] %v1485
        %p1488 = scmp.lt.s32.totalorder %s29, 1
        %s1489 = scalar_select %p1488, %s29, 1
        %s1490 = smul.addr %s1489, 2
        %s1491 = smul.addr %s1490, 8
        %s1492 = scalar_lea.vmem %s12, %s1491
        // Predicated region
        $region109: #{encoder_forward.4} parent=67 // pred_check
          %p1493 = pneg %p309
        $region110: #{encoder_forward.4} parent=67 // pred_check_branch
          %1495 = sbr.rel (%p1493) target = $region112
        $region111: #{encoder_forward.4} parent=67 // pred_region
          _
        $region112: #{encoder_forward.4} parent=67 // pred_fallthru
          _
      $region68: #{encoder_forward.4} parent=5 // pred_fallthru
        _
      %p1496 = scmp.le.s32.totalorder 2, %s24
      // Predicated region
      $region113: #{encoder_forward.4} parent=5 // pred_check
        %p1497 = pneg %p1496
      $region114: #{encoder_forward.4} parent=5 // pred_check_branch
        %1499 = sbr.rel (%p1497) target = $region116
      $region115: #{encoder_forward.4} parent=5 // pred_region
        %s1500 = ssub.s32 %s24, 2
        // Predicated region
        $region117: #{encoder_forward.4} parent=115 // pred_check
          %p1501 = pneg %p315
        $region118: #{encoder_forward.4} parent=115 // pred_check_branch
          %1503 = sbr.rel (%p1501) target = $region120
        $region119: #{encoder_forward.4} parent=115 // pred_region
          %p1504 = scmp.lt.s32.totalorder %s30, 1
          %s1505 = scalar_select %p1504, %s30, 1
          %s1506 = smul.addr %s1505, 2
          %s1507 = smul.addr %s1506, 8
          %s1508 = scalar_lea.vmem %s12, %s1507
        $region120: #{encoder_forward.4} parent=115 // pred_fallthru
          _
      $region116: #{encoder_forward.4} parent=5 // pred_fallthru
        _
    $region6: #{encoder_forward.4} parent=1 // loop_footer
      %s28 = sadd.s32 1, %s24
    $region7: #{encoder_forward.4} parent=1 // loop_footer_branch
      %23 = sbr.rel target = $region3
    $region8: #{encoder_forward.4} parent=1 // loop_exit
      _
    %1509 = vsyncpa [#allocation4], 1
    %s1510 = scalar_lea.sflag [#allocation4], 1
    %1511 = vsyncpa %s1510, 1
    %1512 = vsyncpa [#allocation6], 1
    %1513 = vsyncpa [#allocation9], 1
    %1514 = vsyncpa [#allocation12], 1
    %1515 = vsyncpa [#allocation15], 1
    %1516 = vsyncpa [#allocation18], 1

// kernel: encoder_forward.7
$region0: #{encoder_forward.7}
  #allocation0 [shape = 'u32[]', space=smem, size = 0x4, offset = 0x4, fixed_abs, tag = 'smem constant byte address 0x4 - core index']
  #allocation1 [shape = 'u32[144,128]{1,0:T(1,128)}', space=vmem, size = 0x12000, scoped, tag = 'internal scratch']
  %s0 = inlined_call_operand.vmem [shape: f32[32,128], index: 0, kind: input, shape index: {}]
  %s1 = inlined_call_operand.hbm [shape: bf16[128,256], index: 1, kind: input, shape index: {}]
  %s2 = inlined_call_operand.hbm [shape: f32[1,256], index: 2, kind: input, shape index: {}]
  %s3 = inlined_call_operand.hbm [shape: bf16[256,128], index: 3, kind: input, shape index: {}]
  %s4 = inlined_call_operand.hbm [shape: f32[1,128], index: 4, kind: input, shape index: {}]
  %s5 = inlined_call_operand.hbm [shape: f32[1,128], index: 5, kind: input, shape index: {}]
  %s6 = inlined_call_operand.hbm [shape: f32[1,128], index: 6, kind: input, shape index: {}]
  %s7 = inlined_call_operand.hbm [shape: f32[32,128], index: 7, kind: output, shape index: {}]
  %s8 = sld [smem:[#allocation0]]
  $region85: #{encoder_forward.7} parent=0
    _
  %s10 = ssub.s32 1, %s8
  %s11 = scalar_select 0, %s10, %s8
  $region1: #{encoder_forward.7} parent=0
    #allocation2 [shape = 'u8[65536]{0}', space=vmem, size = 0x10000, scoped, tag = 'input window, operand 1, single buffered']
    #allocation3 [shape = 's32[2]{0}', space=sflag, size = 0x8, scoped, tag = 'scoped memory for encoder_forward.7']
    #allocation4 [shape = 's32[2]{0}', space=sflag, size = 0x8, scoped, tag = 'scoped memory for encoder_forward.7']
    #allocation5 [shape = 'u8[1024]{0}', space=vmem, size = 0x400, scoped, tag = 'input window, operand 2, single buffered']
    #allocation6 [shape = 's32[1]{0}', space=sflag, size = 0x4, scoped, tag = 'scoped memory for encoder_forward.7']
    #allocation7 [shape = 'u8[65536]{0}', space=vmem, size = 0x10000, scoped, tag = 'input window, operand 3, single buffered']
    #allocation8 [shape = 'u8[512]{0}', space=vmem, size = 0x400, scoped, tag = 'input window, operand 4, single buffered']
    #allocation9 [shape = 's32[1]{0}', space=sflag, size = 0x4, scoped, tag = 'scoped memory for encoder_forward.7']
    #allocation10 [shape = 'u8[512]{0}', space=vmem, size = 0x400, scoped, tag = 'input window, operand 5, single buffered']
    #allocation11 [shape = 'u8[512]{0}', space=vmem, size = 0x400, scoped, tag = 'input window, operand 6, single buffered']
    #allocation12 [shape = 's32[1]{0}', space=sflag, size = 0x4, scoped, tag = 'scoped memory for encoder_forward.7']
    #allocation13 [shape = 'u8[16384]{0}', space=vmem, size = 0x4000, scoped, tag = 'output window, operand 0']
    %12 = vsyncpa [#allocation3], 0
    %13 = vsyncpa [#allocation6], 0
    %14 = vsyncpa [#allocation9], 0
    %15 = vsyncpa [#allocation12], 0
    %16 = vsyncpa [#allocation4], 0
    %s17 = scalar_lea.sflag [#allocation4], 1
    %18 = vsyncpa %s17, 0
    loop: start=0, step=1, limit=4
    $region2: #{encoder_forward.7} parent=1 // loop_pre_header
      _
    $region3: #{encoder_forward.7} parent=1 // loop_header
      %s20 = sphi 0, %s24
      %p21 = scmp.ge.s32.totalorder %s20, 4
      %s30 = sphi 0, %s32
      %s33 = sphi 0, %s30
      %s34 = sphi 0, %s33
      %s50 = sphi 0, %s34
      %s54 = sphi 0, %s54
      %s56 = sphi 0, %s54
      %s57 = sphi 0, %s56
      %s71 = sphi 0, %s57
      %s75 = sphi 0, %s75
      %s77 = sphi 0, %s75
      %s78 = sphi 0, %s77
      %s92 = sphi 0, %s78
      %s96 = sphi 0, %s96
      %s98 = sphi 0, %s96
      %s99 = sphi 0, %s98
      %s113 = sphi 0, %s99
      %s117 = sphi 0, %s117
      %s119 = sphi 0, %s117
      %s120 = sphi 0, %s119
      %s134 = sphi 0, %s120
      %s138 = sphi 0, %s138
      %s140 = sphi 0, %s138
      %s141 = sphi 0, %s140
      %s155 = sphi 0, %s141
      %s159 = sphi 0, %s159
      %s161 = sphi 0, %s159
      %s162 = sphi 0, %s161
      %s176 = sphi 0, %s162
      %s182 = sphi 0, %s184
      %s185 = sphi 0, %s182
      %s186 = sphi 0, %s185
      %s202 = sphi 0, %s186
    $region4: #{encoder_forward.7} parent=1 // loop_header_branch
      %23 = sbr.rel (%p21) target = $region8
    $region5: #{encoder_forward.7} parent=1 // loop_body
      %s25 = ssub.s32 %s20, 1
      %s26 = ssub.s32 %s20, 2
      %s27 = sadd.s32 %s20, 1
      %s28 = ssub.s32 %s20, %s27
      %p29 = scmp.eq.s32.totalorder %s28, 0
      %s31 = sadd.s32 %s30, 1
      %s32 = scalar_select %p29, %s30, %s31
      %p35 = pneg %p29
      %p36 = scmp.eq.s32.totalorder %s20, 1
      %p37 = por %p35, %p36
      %p38 = scmp.ne.s32.totalorder %s30, %s33
      %p39 = scmp.eq.s32.totalorder %s20, 0
      %p40 = por %p38, %p39
      %p41 = scmp.ne.s32.totalorder %s30, %s33
      %p42 = scmp.eq.s32.totalorder %s25, 1
      %p43 = por %p41, %p42
      %p44 = scmp.ne.s32.totalorder %s33, %s34
      %p45 = scmp.eq.s32.totalorder %s25, 0
      %p46 = por %p44, %p45
      %p47 = scmp.ne.s32.totalorder %s33, %s34
      %p48 = scmp.eq.s32.totalorder %s26, 1
      %p49 = por %p47, %p48
      %p51 = scmp.ne.s32.totalorder %s34, %s50
      %p52 = scmp.eq.s32.totalorder %s26, 0
      %p53 = por %p51, %p52
      %s55 = sadd.s32 %s54, 1
      %p58 = scmp.eq.s32.totalorder %s20, 1
      %p59 = scmp.ne.s32.totalorder %s54, %s56
      %p60 = scmp.eq.s32.totalorder %s20, 0
      %p61 = por %p59, %p60
      %p62 = scmp.ne.s32.totalorder %s54, %s56
      %p63 = scmp.eq.s32.totalorder %s25, 1
      %p64 = por %p62, %p63
      %p65 = scmp.ne.s32.totalorder %s56, %s57
      %p66 = scmp.eq.s32.totalorder %s25, 0
      %p67 = por %p65, %p66
      %p68 = scmp.ne.s32.totalorder %s56, %s57
      %p69 = scmp.eq.s32.totalorder %s26, 1
      %p70 = por %p68, %p69
      %p72 = scmp.ne.s32.totalorder %s57, %s71
      %p73 = scmp.eq.s32.totalorder %s26, 0
      %p74 = por %p72, %p73
      %s76 = sadd.s32 %s75, 1
      %p79 = scmp.eq.s32.totalorder %s20, 1
      %p80 = scmp.ne.s32.totalorder %s75, %s77
      %p81 = scmp.eq.s32.totalorder %s20, 0
      %p82 = por %p80, %p81
      %p83 = scmp.ne.s32.totalorder %s75, %s77
      %p84 = scmp.eq.s32.totalorder %s25, 1
      %p85 = por %p83, %p84
      %p86 = scmp.ne.s32.totalorder %s77, %s78
      %p87 = scmp.eq.s32.totalorder %s25, 0
      %p88 = por %p86, %p87
      %p89 = scmp.ne.s32.totalorder %s77, %s78
      %p90 = scmp.eq.s32.totalorder %s26, 1
      %p91 = por %p89, %p90
      %p93 = scmp.ne.s32.totalorder %s78, %s92
      %p94 = scmp.eq.s32.totalorder %s26, 0
      %p95 = por %p93, %p94
      %s97 = sadd.s32 %s96, 1
      %p100 = scmp.eq.s32.totalorder %s20, 1
      %p101 = scmp.ne.s32.totalorder %s96, %s98
      %p102 = scmp.eq.s32.totalorder %s20, 0
      %p103 = por %p101, %p102
      %p104 = scmp.ne.s32.totalorder %s96, %s98
      %p105 = scmp.eq.s32.totalorder %s25, 1
      %p106 = por %p104, %p105
      %p107 = scmp.ne.s32.totalorder %s98, %s99
      %p108 = scmp.eq.s32.totalorder %s25, 0
      %p109 = por %p107, %p108
      %p110 = scmp.ne.s32.totalorder %s98, %s99
      %p111 = scmp.eq.s32.totalorder %s26, 1
      %p112 = por %p110, %p111
      %p114 = scmp.ne.s32.totalorder %s99, %s113
      %p115 = scmp.eq.s32.totalorder %s26, 0
      %p116 = por %p114, %p115
      %s118 = sadd.s32 %s117, 1
      %p121 = scmp.eq.s32.totalorder %s20, 1
      %p122 = scmp.ne.s32.totalorder %s117, %s119
      %p123 = scmp.eq.s32.totalorder %s20, 0
      %p124 = por %p122, %p123
      %p125 = scmp.ne.s32.totalorder %s117, %s119
      %p126 = scmp.eq.s32.totalorder %s25, 1
      %p127 = por %p125, %p126
      %p128 = scmp.ne.s32.totalorder %s119, %s120
      %p129 = scmp.eq.s32.totalorder %s25, 0
      %p130 = por %p128, %p129
      %p131 = scmp.ne.s32.totalorder %s119, %s120
      %p132 = scmp.eq.s32.totalorder %s26, 1
      %p133 = por %p131, %p132
      %p135 = scmp.ne.s32.totalorder %s120, %s134
      %p136 = scmp.eq.s32.totalorder %s26, 0
      %p137 = por %p135, %p136
      %s139 = sadd.s32 %s138, 1
      %p142 = scmp.eq.s32.totalorder %s20, 1
      %p143 = scmp.ne.s32.totalorder %s138, %s140
      %p144 = scmp.eq.s32.totalorder %s20, 0
      %p145 = por %p143, %p144
      %p146 = scmp.ne.s32.totalorder %s138, %s140
      %p147 = scmp.eq.s32.totalorder %s25, 1
      %p148 = por %p146, %p147
      %p149 = scmp.ne.s32.totalorder %s140, %s141
      %p150 = scmp.eq.s32.totalorder %s25, 0
      %p151 = por %p149, %p150
      %p152 = scmp.ne.s32.totalorder %s140, %s141
      %p153 = scmp.eq.s32.totalorder %s26, 1
      %p154 = por %p152, %p153
      %p156 = scmp.ne.s32.totalorder %s141, %s155
      %p157 = scmp.eq.s32.totalorder %s26, 0
      %p158 = por %p156, %p157
      %s160 = sadd.s32 %s159, 1
      %p163 = scmp.eq.s32.totalorder %s20, 1
      %p164 = scmp.ne.s32.totalorder %s159, %s161
      %p165 = scmp.eq.s32.totalorder %s20, 0
      %p166 = por %p164, %p165
      %p167 = scmp.ne.s32.totalorder %s159, %s161
      %p168 = scmp.eq.s32.totalorder %s25, 1
      %p169 = por %p167, %p168
      %p170 = scmp.ne.s32.totalorder %s161, %s162
      %p171 = scmp.eq.s32.totalorder %s25, 0
      %p172 = por %p170, %p171
      %p173 = scmp.ne.s32.totalorder %s161, %s162
      %p174 = scmp.eq.s32.totalorder %s26, 1
      %p175 = por %p173, %p174
      %p177 = scmp.ne.s32.totalorder %s162, %s176
      %p178 = scmp.eq.s32.totalorder %s26, 0
      %p179 = por %p177, %p178
      %s180 = ssub.s32 %s20, %s27
      %p181 = scmp.eq.s32.totalorder %s180, 0
      %s183 = sadd.s32 %s182, 1
      %s184 = scalar_select %p181, %s182, %s183
      %p187 = pneg %p181
      %p188 = scmp.eq.s32.totalorder %s20, 1
      %p189 = por %p187, %p188
      %p190 = scmp.ne.s32.totalorder %s182, %s185
      %p191 = scmp.eq.s32.totalorder %s20, 0
      %p192 = por %p190, %p191
      %p193 = scmp.ne.s32.totalorder %s182, %s185
      %p194 = scmp.eq.s32.totalorder %s25, 1
      %p195 = por %p193, %p194
      %p196 = scmp.ne.s32.totalorder %s185, %s186
      %p197 = scmp.eq.s32.totalorder %s25, 0
      %p198 = por %p196, %p197
      %p199 = scmp.ne.s32.totalorder %s185, %s186
      %p200 = scmp.eq.s32.totalorder %s26, 1
      %p201 = por %p199, %p200
      %p203 = scmp.ne.s32.totalorder %s186, %s202
      %p204 = scmp.eq.s32.totalorder %s26, 0
      %p205 = por %p203, %p204
      %p206 = scmp.le.s32.totalorder 1, %s20
      %p207 = scmp.lt.s32.totalorder %s20, 3
      %p208 = pnand %p206, %p207
      %p209 = pneg %p208
      // Predicated region
      $region9: #{encoder_forward.7} parent=5 // pred_check
        _
      $region10: #{encoder_forward.7} parent=5 // pred_check_branch
        %211 = sbr.rel (%p208) target = $region12
      $region11: #{encoder_forward.7} parent=5 // pred_region
        %s212 = ssub.s32 %s20, 1
        // Predicated region
        $region13: #{encoder_forward.7} parent=11 // pred_check
          %p213 = pneg %p67
        $region14: #{encoder_forward.7} parent=11 // pred_check_branch
          %215 = sbr.rel (%p213) target = $region16
        $region15: #{encoder_forward.7} parent=11 // pred_region
          %s217 = ssub.s32 2048, 2048
          %218 = vsyncadd [#allocation3], %s217
          %s219 = sshll.u32 [#allocation2], 4
          %s220 = int_to_ptr.vmem [resolvable:$true] %s219
          %225 = dma.hbm_to_vmem [thread:$0]  %s1, 2048, %s220, [#allocation3], 128, 128, 8
        $region16: #{encoder_forward.7} parent=11 // pred_fallthru
          _
        // Predicated region
        $region17: #{encoder_forward.7} parent=11 // pred_check
          %p226 = pneg %p88
        $region18: #{encoder_forward.7} parent=11 // pred_check_branch
          %228 = sbr.rel (%p226) target = $region20
        $region19: #{encoder_forward.7} parent=11 // pred_region
          %s230 = ssub.s32 32, 32
          %231 = vsyncadd [#allocation6], %s230
          %s233 = sshll.u32 [#allocation5], 4
          %s234 = int_to_ptr.vmem [resolvable:$true] %s233
          %236 = dma.hbm_to_vmem [thread:$0]  %s2, 32, %s234, [#allocation6]
        $region20: #{encoder_forward.7} parent=11 // pred_fallthru
          _
        // Predicated region
        $region21: #{encoder_forward.7} parent=11 // pred_check
          %p237 = pneg %p109
        $region22: #{encoder_forward.7} parent=11 // pred_check_branch
          %239 = sbr.rel (%p237) target = $region24
        $region23: #{encoder_forward.7} parent=11 // pred_region
          %s241 = ssub.s32 2048, 2048
          %242 = vsyncadd [#allocation6], %s241
          %s243 = sshll.u32 [#allocation7], 4
          %s244 = int_to_ptr.vmem [resolvable:$true] %s243
          %249 = dma.hbm_to_vmem [thread:$0]  %s3, 2048, %s244, [#allocation6], 64, 64, 4
        $region24: #{encoder_forward.7} parent=11 // pred_fallthru
          _
        // Predicated region
        $region25: #{encoder_forward.7} parent=11 // pred_check
          %p250 = pneg %p130
        $region26: #{encoder_forward.7} parent=11 // pred_check_branch
          %252 = sbr.rel (%p250) target = $region28
        $region27: #{encoder_forward.7} parent=11 // pred_region
          %s254 = ssub.s32 16, 16
          %255 = vsyncadd [#allocation9], %s254
          %s257 = sshll.u32 [#allocation8], 4
          %s258 = int_to_ptr.vmem [resolvable:$true] %s257
          %260 = dma.hbm_to_vmem [thread:$0]  %s4, 16, %s258, [#allocation9]
        $region28: #{encoder_forward.7} parent=11 // pred_fallthru
          _
        // Predicated region
        $region29: #{encoder_forward.7} parent=11 // pred_check
          %p261 = pneg %p151
        $region30: #{encoder_forward.7} parent=11 // pred_check_branch
          %263 = sbr.rel (%p261) target = $region32
        $region31: #{encoder_forward.7} parent=11 // pred_region
          %s265 = ssub.s32 16, 16
          %266 = vsyncadd [#allocation9], %s265
          %s268 = sshll.u32 [#allocation10], 4
          %s269 = int_to_ptr.vmem [resolvable:$true] %s268
          %271 = dma.hbm_to_vmem [thread:$0]  %s5, 16, %s269, [#allocation9]
        $region32: #{encoder_forward.7} parent=11 // pred_fallthru
          _
        // Predicated region
        $region33: #{encoder_forward.7} parent=11 // pred_check
          %p272 = pneg %p172
        $region34: #{encoder_forward.7} parent=11 // pred_check_branch
          %274 = sbr.rel (%p272) target = $region36
        $region35: #{encoder_forward.7} parent=11 // pred_region
          %s276 = ssub.s32 16, 16
          %277 = vsyncadd [#allocation12], %s276
          %s279 = sshll.u32 [#allocation11], 4
          %s280 = int_to_ptr.vmem [resolvable:$true] %s279
          %282 = dma.hbm_to_vmem [thread:$0]  %s6, 16, %s280, [#allocation12]
        $region36: #{encoder_forward.7} parent=11 // pred_fallthru
          _
      $region12: #{encoder_forward.7} parent=5 // pred_fallthru
        _
      %p283 = scmp.lt.s32.totalorder %s20, 2
      // Predicated region
      $region37: #{encoder_forward.7} parent=5 // pred_check
        %p284 = pneg %p283
      $region38: #{encoder_forward.7} parent=5 // pred_check_branch
        %286 = sbr.rel (%p284) target = $region40
      $region39: #{encoder_forward.7} parent=5 // pred_region
        // Predicated region
        $region41: #{encoder_forward.7} parent=39 // pred_check
          %p287 = pneg %p40
        $region42: #{encoder_forward.7} parent=39 // pred_check_branch
          %289 = sbr.rel (%p287) target = $region44
        $region43: #{encoder_forward.7} parent=39 // pred_region
          %s290 = smul.u32 2, %s20
          %p291 = scmp.lt.s32.totalorder %s290, 3
          %s292 = scalar_select %p291, %s290, 3
          %s293 = smul.addr %s292, 8
          %s294 = scalar_lea.vmem %s0, %s293
          %s295 = smul.u32 2, %s20
        $region44: #{encoder_forward.7} parent=39 // pred_fallthru
          _
      $region40: #{encoder_forward.7} parent=5 // pred_fallthru
        _
      %p296 = scmp.le.s32.totalorder 1, %s20
      %p297 = scmp.lt.s32.totalorder %s20, 3
      %p298 = pnand %p296, %p297
      %p299 = pneg %p298
      // Predicated region
      $region45: #{encoder_forward.7} parent=5 // pred_check
        _
      $region46: #{encoder_forward.7} parent=5 // pred_check_branch
        %301 = sbr.rel (%p298) target = $region48
      $region47: #{encoder_forward.7} parent=5 // pred_region
        %s302 = ssub.s32 %s20, 1
        // Predicated region
        $region49: #{encoder_forward.7} parent=47 // pred_check
          %p303 = pneg %p67
        $region50: #{encoder_forward.7} parent=47 // pred_check_branch
          %305 = sbr.rel (%p303) target = $region52
        $region51: #{encoder_forward.7} parent=47 // pred_region
          %306 = dma.done [#allocation3], 2048
        $region52: #{encoder_forward.7} parent=47 // pred_fallthru
          _
        // Predicated region
        $region53: #{encoder_forward.7} parent=47 // pred_check
          %p307 = pneg %p88
        $region54: #{encoder_forward.7} parent=47 // pred_check_branch
          %309 = sbr.rel (%p307) target = $region56
        $region55: #{encoder_forward.7} parent=47 // pred_region
          %310 = dma.done [#allocation6], 32
        $region56: #{encoder_forward.7} parent=47 // pred_fallthru
          _
        // Predicated region
        $region57: #{encoder_forward.7} parent=47 // pred_check
          %p311 = pneg %p109
        $region58: #{encoder_forward.7} parent=47 // pred_check_branch
          %313 = sbr.rel (%p311) target = $region60
        $region59: #{encoder_forward.7} parent=47 // pred_region
          %314 = dma.done [#allocation6], 2048
        $region60: #{encoder_forward.7} parent=47 // pred_fallthru
          _
        // Predicated region
        $region61: #{encoder_forward.7} parent=47 // pred_check
          %p315 = pneg %p130
        $region62: #{encoder_forward.7} parent=47 // pred_check_branch
          %317 = sbr.rel (%p315) target = $region64
        $region63: #{encoder_forward.7} parent=47 // pred_region
          %318 = dma.done [#allocation9], 16
        $region64: #{encoder_forward.7} parent=47 // pred_fallthru
          _
        // Predicated region
        $region65: #{encoder_forward.7} parent=47 // pred_check
          %p319 = pneg %p151
        $region66: #{encoder_forward.7} parent=47 // pred_check_branch
          %321 = sbr.rel (%p319) target = $region68
        $region67: #{encoder_forward.7} parent=47 // pred_region
          %322 = dma.done [#allocation9], 16
        $region68: #{encoder_forward.7} parent=47 // pred_fallthru
          _
        // Predicated region
        $region69: #{encoder_forward.7} parent=47 // pred_check
          %p323 = pneg %p172
        $region70: #{encoder_forward.7} parent=47 // pred_check_branch
          %325 = sbr.rel (%p323) target = $region72
        $region71: #{encoder_forward.7} parent=47 // pred_region
          %326 = dma.done [#allocation12], 16
        $region72: #{encoder_forward.7} parent=47 // pred_fallthru
          _
        %s327 = smul.u32 2, %s25
        %p328 = scmp.lt.s32.totalorder %s327, 3
        %s329 = scalar_select %p328, %s327, 3
        %s330 = smul.addr %s329, 8
        %s331 = scalar_lea.vmem %s0, %s330
        %p332 = pneg %p46
        %p333 = pneg %p43
        %p334 = pneg %p67
        %p335 = pneg %p64
        %p336 = pneg %p88
        %p337 = pneg %p85
        %p338 = pneg %p109
        %p339 = pneg %p106
        %p340 = pneg %p130
        %p341 = pneg %p127
        %p342 = pneg %p151
        %p343 = pneg %p148
        %p344 = pneg %p172
        %p345 = pneg %p169
        %p346 = pneg %p198
        %p347 = pneg %p195
        %s348 = sand.u32 %s185, 1
        %s349 = scalar_lea.sflag [#allocation4], %s348
        %s350 = sand.u32 %s185, 1
        %s351 = smul.addr %s350, 16
        %s352 = scalar_lea.vmem [#allocation13], %s351
        %s353 = smul.u32 2, %s25
        %p354 = scmp.lt.s32.totalorder %s353, 3
        %s355 = scalar_select %p354, %s353, 3
        %s356 = smul.addr %s355, 8
        %s357 = scalar_lea.vmem %s0, %s356
        %s358 = smul.u32 2, %s25
        %s359 = smul.u32 2, %s25
        %v361 = vld [vmem:[%s357] sm:$0xff]
        %v362 = vld [vmem:[%s357 + $0x8] sm:$0xff]
        %v363 = vpack.c.bf16 %v362, %v361
        %v364 = vld [vmem:[#allocation2] sm:$0xff]
        %v365 = vld [vmem:[#allocation2 + $0x8] sm:$0xff]
        %v366 = vld [vmem:[#allocation2 + $0x10] sm:$0xff]
        %v367 = vld [vmem:[#allocation2 + $0x18] sm:$0xff]
        %v368 = vld [vmem:[#allocation2 + $0x20] sm:$0xff]
        %v369 = vld [vmem:[#allocation2 + $0x28] sm:$0xff]
        %v370 = vld [vmem:[#allocation2 + $0x30] sm:$0xff]
        %v371 = vld [vmem:[#allocation2 + $0x38] sm:$0xff]
        %v372 = vld [vmem:[#allocation2 + $0x40] sm:$0xff]
        %v373 = vld [vmem:[#allocation2 + $0x48] sm:$0xff]
        %v374 = vld [vmem:[#allocation2 + $0x50] sm:$0xff]
        %v375 = vld [vmem:[#allocation2 + $0x58] sm:$0xff]
        %v376 = vld [vmem:[#allocation2 + $0x60] sm:$0xff]
        %v377 = vld [vmem:[#allocation2 + $0x68] sm:$0xff]
        %v378 = vld [vmem:[#allocation2 + $0x70] sm:$0xff]
        %v379 = vld [vmem:[#allocation2 + $0x78] sm:$0xff]
        %v380 = vld [vmem:[#allocation5] sm:$0x3]
        %v382 = vlaneseq
        %v383 = vshrl.u32 %v382, 7
        %v384 = vsub.s32 0, %v383
        %v385 = vrot.slane %v380, %v384
        %v386 = vlaneseq
        %v387 = vshrl.u32 %v386, 7
        %v388 = vsub.s32 1, %v387
        %v389 = vrot.slane %v380, %v388
        %v408 = vunpack.c.l.b16 %v364
        %v409 = vunpack.c.h.b16 %v364
        %v410 = vunpack.c.l.b16 %v365
        %v411 = vunpack.c.h.b16 %v365
        %v412 = vunpack.c.l.b16 %v366
        %v413 = vunpack.c.h.b16 %v366
        %v414 = vunpack.c.l.b16 %v367
        %v415 = vunpack.c.h.b16 %v367
        %v416 = vunpack.c.l.b16 %v368
        %v417 = vunpack.c.h.b16 %v368
        %v418 = vunpack.c.l.b16 %v369
        %v419 = vunpack.c.h.b16 %v369
        %v420 = vunpack.c.l.b16 %v370
        %v421 = vunpack.c.h.b16 %v370
        %v422 = vunpack.c.l.b16 %v371
        %v423 = vunpack.c.h.b16 %v371
        %v424 = vunpack.c.l.b16 %v372
        %v425 = vunpack.c.h.b16 %v372
        %v426 = vunpack.c.l.b16 %v373
        %v427 = vunpack.c.h.b16 %v373
        %v428 = vunpack.c.l.b16 %v374
        %v429 = vunpack.c.h.b16 %v374
        %v430 = vunpack.c.l.b16 %v375
        %v431 = vunpack.c.h.b16 %v375
        %v432 = vunpack.c.l.b16 %v376
        %v433 = vunpack.c.h.b16 %v376
        %v434 = vunpack.c.l.b16 %v377
        %v435 = vunpack.c.h.b16 %v377
        %v436 = vunpack.c.l.b16 %v378
        %v437 = vunpack.c.h.b16 %v378
        %v438 = vunpack.c.l.b16 %v379
        %v439 = vunpack.c.h.b16 %v379
        %v440 = vpack.c.b16 %v410, %v408
        %v441 = vpack.c.b16 %v411, %v409
        %v442 = vpack.c.b16 %v414, %v412
        %v443 = vpack.c.b16 %v415, %v413
        %v444 = vpack.c.b16 %v418, %v416
        %v445 = vpack.c.b16 %v419, %v417
        %v446 = vpack.c.b16 %v422, %v420
        %v447 = vpack.c.b16 %v423, %v421
        %v448 = vpack.c.b16 %v426, %v424
        %v449 = vpack.c.b16 %v427, %v425
        %v450 = vpack.c.b16 %v430, %v428
        %v451 = vpack.c.b16 %v431, %v429
        %v452 = vpack.c.b16 %v434, %v432
        %v453 = vpack.c.b16 %v435, %v433
        %v454 = vpack.c.b16 %v438, %v436
        %v455 = vpack.c.b16 %v439, %v437
        %472 = vmatprep.subr.bf16.mxu0 %v441
        %473 = vmatpush1.bf16.msra.mxu0 %v440
        %474 = vmatprep.subr.bf16.mxu0 %v443
        %475 = vmatpush1.bf16.msra.mxu0 %v442
        %476 = vmatprep.subr.bf16.mxu0 %v445
        %477 = vmatpush1.bf16.msra.mxu0 %v444
        %478 = vmatprep.subr.bf16.mxu0 %v447
        %479 = vmatpush1.bf16.msra.mxu0 %v446
        %480 = vmatprep.subr.bf16.mxu0 %v449
        %481 = vmatpush1.bf16.msra.mxu0 %v448
        %482 = vmatprep.subr.bf16.mxu0 %v451
        %483 = vmatpush1.bf16.msra.mxu0 %v450
        %484 = vmatprep.subr.bf16.mxu0 %v453
        %485 = vmatpush1.bf16.msra.mxu0 %v452
        %486 = vmatprep.subr.bf16.mxu0 %v455
        %487 = vmatpush1.bf16.msra.mxu0 %v454
        %488 = vmatprep.subr.bf16.mxu0 0
        %489 = vmatpush1.bf16.msra.mxu0 0
        %490 = vmatprep.subr.bf16.mxu0 0
        %491 = vmatpush1.bf16.msra.mxu0 0
        %492 = vmatprep.subr.bf16.mxu0 0
        %493 = vmatpush1.bf16.msra.mxu0 0
        %494 = vmatprep.subr.bf16.mxu0 0
        %495 = vmatpush1.bf16.msra.mxu0 0
        %496 = vmatprep.subr.bf16.mxu0 0
        %497 = vmatpush1.bf16.msra.mxu0 0
        %498 = vmatprep.subr.bf16.mxu0 0
        %499 = vmatpush1.bf16.msra.mxu0 0
        %500 = vmatprep.subr.bf16.mxu0 0
        %501 = vmatpush1.bf16.msra.mxu0 0
        %502 = vmatprep.subr.bf16.mxu0 0
        %503 = vmatpush1.bf16.msra.mxu0 0
        %504 = vmatprep.mubr.bf16.mxu0 0
        %505 = vmatmul.mubr.bf16.gmra.mrb[0].mxu0 %v363
        %v506 = vpop.f32.mrb[0].mxu0
        %v507 = vadd.f32 %v385, %v506
        %v508 = vpop.f32.mrb[0].mxu0
        %v509 = vadd.f32 %v389, %v508
        %v510 = vpop.f32.mrb[0].mxu0
        %v511 = vadd.f32 %v385, %v510
        %v512 = vpop.f32.mrb[0].mxu0
        %v513 = vadd.f32 %v389, %v512
        %514 = vdwg.mxu0
        %v515 = vmax.f32 %v507, 0.0
        %v516 = vmax.f32 %v509, 0.0
        %v517 = vmax.f32 %v511, 0.0
        %v518 = vmax.f32 %v513, 0.0
        %v519 = vpack.c.bf16 %v517, %v515
        %v520 = vpack.c.bf16 %v518, %v516
        %v521 = vld [vmem:[#allocation7] sm:$0xf]
        %v522 = vld [vmem:[#allocation7 + $0x4] sm:$0xf]
        %v523 = vld [vmem:[#allocation7 + $0x8] sm:$0xf]
        %v524 = vld [vmem:[#allocation7 + $0xc] sm:$0xf]
        %v525 = vld [vmem:[#allocation7 + $0x10] sm:$0xf]
        %v526 = vld [vmem:[#allocation7 + $0x14] sm:$0xf]
        %v527 = vld [vmem:[#allocation7 + $0x18] sm:$0xf]
        %v528 = vld [vmem:[#allocation7 + $0x1c] sm:$0xf]
        %v529 = vld [vmem:[#allocation7 + $0x20] sm:$0xf]
        %v530 = vld [vmem:[#allocation7 + $0x24] sm:$0xf]
        %v531 = vld [vmem:[#allocation7 + $0x28] sm:$0xf]
        %v532 = vld [vmem:[#allocation7 + $0x2c] sm:$0xf]
        %v533 = vld [vmem:[#allocation7 + $0x30] sm:$0xf]
        %v534 = vld [vmem:[#allocation7 + $0x34] sm:$0xf]
        %v535 = vld [vmem:[#allocation7 + $0x38] sm:$0xf]
        %v536 = vld [vmem:[#allocation7 + $0x3c] sm:$0xf]
        %v537 = vld [vmem:[#allocation7 + $0x40] sm:$0xf]
        %v538 = vld [vmem:[#allocation7 + $0x44] sm:$0xf]
        %v539 = vld [vmem:[#allocation7 + $0x48] sm:$0xf]
        %v540 = vld [vmem:[#allocation7 + $0x4c] sm:$0xf]
        %v541 = vld [vmem:[#allocation7 + $0x50] sm:$0xf]
        %v542 = vld [vmem:[#allocation7 + $0x54] sm:$0xf]
        %v543 = vld [vmem:[#allocation7 + $0x58] sm:$0xf]
        %v544 = vld [vmem:[#allocation7 + $0x5c] sm:$0xf]
        %v545 = vld [vmem:[#allocation7 + $0x60] sm:$0xf]
        %v546 = vld [vmem:[#allocation7 + $0x64] sm:$0xf]
        %v547 = vld [vmem:[#allocation7 + $0x68] sm:$0xf]
        %v548 = vld [vmem:[#allocation7 + $0x6c] sm:$0xf]
        %v549 = vld [vmem:[#allocation7 + $0x70] sm:$0xf]
        %v550 = vld [vmem:[#allocation7 + $0x74] sm:$0xf]
        %v551 = vld [vmem:[#allocation7 + $0x78] sm:$0xf]
        %v552 = vld [vmem:[#allocation7 + $0x7c] sm:$0xf]
        %v553 = vld [vmem:[#allocation8] sm:$0x1]
        %v555 = vlaneseq
        %v556 = vshrl.u32 %v555, 7
        %v557 = vsub.s32 0, %v556
        %v558 = vrot.slane %v553, %v557
        %v592 = vunpack.c.l.b16 %v521
        %v593 = vunpack.c.l.b16 %v522
        %v594 = vunpack.c.l.b16 %v523
        %v595 = vunpack.c.l.b16 %v524
        %v596 = vunpack.c.l.b16 %v525
        %v597 = vunpack.c.l.b16 %v526
        %v598 = vunpack.c.l.b16 %v527
        %v599 = vunpack.c.l.b16 %v528
        %v600 = vunpack.c.l.b16 %v529
        %v601 = vunpack.c.l.b16 %v530
        %v602 = vunpack.c.l.b16 %v531
        %v603 = vunpack.c.l.b16 %v532
        %v604 = vunpack.c.l.b16 %v533
        %v605 = vunpack.c.l.b16 %v534
        %v606 = vunpack.c.l.b16 %v535
        %v607 = vunpack.c.l.b16 %v536
        %v608 = vunpack.c.l.b16 %v537
        %v609 = vunpack.c.l.b16 %v538
        %v610 = vunpack.c.l.b16 %v539
        %v611 = vunpack.c.l.b16 %v540
        %v612 = vunpack.c.l.b16 %v541
        %v613 = vunpack.c.l.b16 %v542
        %v614 = vunpack.c.l.b16 %v543
        %v615 = vunpack.c.l.b16 %v544
        %v616 = vunpack.c.l.b16 %v545
        %v617 = vunpack.c.l.b16 %v546
        %v618 = vunpack.c.l.b16 %v547
        %v619 = vunpack.c.l.b16 %v548
        %v620 = vunpack.c.l.b16 %v549
        %v621 = vunpack.c.l.b16 %v550
        %v622 = vunpack.c.l.b16 %v551
        %v623 = vunpack.c.l.b16 %v552
        %v624 = vpack.c.b16 %v593, %v592
        %v625 = vpack.c.b16 %v595, %v594
        %v626 = vpack.c.b16 %v597, %v596
        %v627 = vpack.c.b16 %v599, %v598
        %v628 = vpack.c.b16 %v601, %v600
        %v629 = vpack.c.b16 %v603, %v602
        %v630 = vpack.c.b16 %v605, %v604
        %v631 = vpack.c.b16 %v607, %v606
        %v632 = vpack.c.b16 %v609, %v608
        %v633 = vpack.c.b16 %v611, %v610
        %v634 = vpack.c.b16 %v613, %v612
        %v635 = vpack.c.b16 %v615, %v614
        %v636 = vpack.c.b16 %v617, %v616
        %v637 = vpack.c.b16 %v619, %v618
        %v638 = vpack.c.b16 %v621, %v620
        %v639 = vpack.c.b16 %v623, %v622
        %656 = vmatprep.subr.bf16.mxu0 0
        %657 = vmatpush1.bf16.msra.mxu0 %v624
        %658 = vmatprep.subr.bf16.mxu0 0
        %659 = vmatpush1.bf16.msra.mxu0 %v625
        %660 = vmatprep.subr.bf16.mxu0 0
        %661 = vmatpush1.bf16.msra.mxu0 %v626
        %662 = vmatprep.subr.bf16.mxu0 0
        %663 = vmatpush1.bf16.msra.mxu0 %v627
        %664 = vmatprep.subr.bf16.mxu0 0
        %665 = vmatpush1.bf16.msra.mxu0 %v628
        %666 = vmatprep.subr.bf16.mxu0 0
        %667 = vmatpush1.bf16.msra.mxu0 %v629
        %668 = vmatprep.subr.bf16.mxu0 0
        %669 = vmatpush1.bf16.msra.mxu0 %v630
        %670 = vmatprep.subr.bf16.mxu0 0
        %671 = vmatpush1.bf16.msra.mxu0 %v631
        %672 = vmatprep.subr.bf16.mxu0 0
        %673 = vmatpush1.bf16.msra.mxu0 %v632
        %674 = vmatprep.subr.bf16.mxu0 0
        %675 = vmatpush1.bf16.msra.mxu0 %v633
        %676 = vmatprep.subr.bf16.mxu0 0
        %677 = vmatpush1.bf16.msra.mxu0 %v634
        %678 = vmatprep.subr.bf16.mxu0 0
        %679 = vmatpush1.bf16.msra.mxu0 %v635
        %680 = vmatprep.subr.bf16.mxu0 0
        %681 = vmatpush1.bf16.msra.mxu0 %v636
        %682 = vmatprep.subr.bf16.mxu0 0
        %683 = vmatpush1.bf16.msra.mxu0 %v637
        %684 = vmatprep.subr.bf16.mxu0 0
        %685 = vmatpush1.bf16.msra.mxu0 %v638
        %686 = vmatprep.subr.bf16.mxu0 0
        %687 = vmatpush1.bf16.msra.mxu0 %v639
        %688 = vmatprep.mubr.bf16.mxu0 %v520
        %689 = vmatmul.mubr.bf16.gmra.mrb[0].mxu0 %v519
        %v690 = vpop.f32.mrb[0].mxu0
        %v691 = vadd.f32 %v558, %v690
        %v692 = vpop.f32.mrb[0].mxu0
        %v693 = vpop.f32.mrb[0].mxu0
        %v694 = vadd.f32 %v558, %v693
        %v695 = vpop.f32.mrb[0].mxu0
        %696 = vdwg.mxu0
        %v697 = vadd.f32 %v361, %v691
        %v698 = vadd.f32 %v362, %v694
        %699 = vadd.xlane.f32.xlu0 %v697
        %v700 = vpop.xlane.xlu0 %699
        %701 = vadd.xlane.f32.xlu0 %v698
        %v702 = vpop.xlane.xlu0 %701
        %v703 = vrcp.pop 128.0
        %v704 = vmul.f32 %v700, %v703
        %v705 = vmul.f32 %v702, %v703
        %v706 = vsub.f32 %v697, %v704
        %v707 = vsub.f32 %v698, %v705
        %v708 = vmul.f32 %v706, %v706
        %v709 = vmul.f32 %v707, %v707
        %710 = vadd.xlane.f32.xlu0 %v708
        %v711 = vpop.xlane.xlu0 %710
        %712 = vadd.xlane.f32.xlu0 %v709
        %v713 = vpop.xlane.xlu0 %712
        %v714 = vmul.f32 %v711, %v703
        %v715 = vmul.f32 %v713, %v703
        %v716 = vadd.f32 %v714, 1e-05
        %v717 = vadd.f32 %v715, 1e-05
        %v718 = vrsqrt.pop %v716
        %v719 = vrsqrt.pop %v717
        %v720 = vmul.f32 %v706, %v718
        %v721 = vmul.f32 %v707, %v719
        %v722 = vld [vmem:[#allocation10] sm:$0x1]
        %v724 = vlaneseq
        %v725 = vshrl.u32 %v724, 7
        %v726 = vsub.s32 0, %v725
        %v727 = vrot.slane %v722, %v726
        %v729 = vmul.f32 %v720, %v727
        %v730 = vmul.f32 %v721, %v727
        %v731 = vld [vmem:[#allocation11] sm:$0x1]
        %v733 = vlaneseq
        %v734 = vshrl.u32 %v733, 7
        %v735 = vsub.s32 0, %v734
        %v736 = vrot.slane %v731, %v735
        %v738 = vadd.f32 %v729, %v736
        %v739 = vadd.f32 %v730, %v736
        %740 = vst [vmem:[%s352] sm:$0xff] %v738
        %741 = vst [vmem:[%s352 + $0x8] sm:$0xff] %v739
        %s742 = sand.u32 %s185, 1
        %s743 = scalar_lea.sflag [#allocation4], %s742
        %s744 = sand.u32 %s185, 1
        %s745 = smul.addr %s744, 16
        %s746 = scalar_lea.vmem [#allocation13], %s745
        // Predicated region
        $region73: #{encoder_forward.7} parent=47 // pred_check
          %p747 = pneg %p195
        $region74: #{encoder_forward.7} parent=47 // pred_check_branch
          %749 = sbr.rel (%p747) target = $region76
        $region75: #{encoder_forward.7} parent=47 // pred_region
          %s750 = smul.u32 2, %s25
          %s752 = ssub.s32 256, 256
          %753 = vsyncadd %s743, %s752
          %s754 = smul.addr %s750, 128
          %s755 = scalar_lea.hbm %s7, %s754
          %s756 = sshll.u32 %s746, 4
          %s757 = int_to_ptr.vmem [resolvable:$true] %s756
          %762 = dma.vmem_to_hbm [thread:$0]  %s757, 256, %s755, %s743, 128, 128, 8
        $region76: #{encoder_forward.7} parent=47 // pred_fallthru
          _
      $region48: #{encoder_forward.7} parent=5 // pred_fallthru
        _
      %p763 = scmp.le.s32.totalorder 2, %s20
      // Predicated region
      $region77: #{encoder_forward.7} parent=5 // pred_check
        %p764 = pneg %p763
      $region78: #{encoder_forward.7} parent=5 // pred_check_branch
        %766 = sbr.rel (%p764) target = $region80
      $region79: #{encoder_forward.7} parent=5 // pred_region
        %s767 = ssub.s32 %s20, 2
        // Predicated region
        $region81: #{encoder_forward.7} parent=79 // pred_check
          %p768 = pneg %p201
        $region82: #{encoder_forward.7} parent=79 // pred_check_branch
          %770 = sbr.rel (%p768) target = $region84
        $region83: #{encoder_forward.7} parent=79 // pred_region
          %s771 = sand.u32 %s186, 1
          %s772 = scalar_lea.sflag [#allocation4], %s771
          %s773 = sand.u32 %s186, 1
          %s774 = smul.addr %s773, 16
          %s775 = scalar_lea.vmem [#allocation13], %s774
          %776 = dma.done %s772, 256
        $region84: #{encoder_forward.7} parent=79 // pred_fallthru
          _
      $region80: #{encoder_forward.7} parent=5 // pred_fallthru
        _
    $region6: #{encoder_forward.7} parent=1 // loop_footer
      %s24 = sadd.s32 1, %s20
    $region7: #{encoder_forward.7} parent=1 // loop_footer_branch
      %19 = sbr.rel target = $region3
    $region8: #{encoder_forward.7} parent=1 // loop_exit
      _
    %777 = vsyncpa [#allocation3], 1
    %s778 = scalar_lea.sflag [#allocation3], 1
    %779 = vsyncpa %s778, 1
    %780 = vsyncpa [#allocation6], 1
    %781 = vsyncpa [#allocation9], 1
    %782 = vsyncpa [#allocation12], 1
    %783 = vsyncpa [#allocation4], 1
    %s784 = scalar_lea.sflag [#allocation4], 1
    %785 = vsyncpa %s784, 1

// kernel: encoder_forward.5
$region0: #{encoder_forward.5}
  #allocation0 [shape = 'u32[]', space=smem, size = 0x4, offset = 0x4, fixed_abs, tag = 'smem constant byte address 0x4 - core index']
  #allocation1 [shape = 'u32[144,128]{1,0:T(1,128)}', space=vmem, size = 0x12000, scoped, tag = 'internal scratch']
  %s0 = inlined_call_operand.vmem [shape: f32[32,128], index: 0, kind: input, shape index: {}]
  %s1 = inlined_call_operand.hbm [shape: bf16[128,256], index: 1, kind: input, shape index: {}]
  %s2 = inlined_call_operand.hbm [shape: f32[1,256], index: 2, kind: input, shape index: {}]
  %s3 = inlined_call_operand.hbm [shape: bf16[256,128], index: 3, kind: input, shape index: {}]
  %s4 = inlined_call_operand.hbm [shape: f32[1,128], index: 4, kind: input, shape index: {}]
  %s5 = inlined_call_operand.hbm [shape: f32[1,128], index: 5, kind: input, shape index: {}]
  %s6 = inlined_call_operand.hbm [shape: f32[1,128], index: 6, kind: input, shape index: {}]
  %s7 = inlined_call_operand.vmem [shape: f32[32,128], index: 7, kind: output, shape index: {}]
  %s8 = sld [smem:[#allocation0]]
  $region85: #{encoder_forward.5} parent=0
    _
  %s10 = ssub.s32 1, %s8
  %s11 = scalar_select 0, %s10, %s8
  $region1: #{encoder_forward.5} parent=0
    #allocation2 [shape = 'u8[65536]{0}', space=vmem, size = 0x10000, scoped, tag = 'input window, operand 1, single buffered']
    #allocation3 [shape = 's32[2]{0}', space=sflag, size = 0x8, scoped, tag = 'scoped memory for encoder_forward.5']
    #allocation4 [shape = 'u8[1024]{0}', space=vmem, size = 0x400, scoped, tag = 'input window, operand 2, single buffered']
    #allocation5 [shape = 's32[1]{0}', space=sflag, size = 0x4, scoped, tag = 'scoped memory for encoder_forward.5']
    #allocation6 [shape = 'u8[65536]{0}', space=vmem, size = 0x10000, scoped, tag = 'input window, operand 3, single buffered']
    #allocation7 [shape = 'u8[512]{0}', space=vmem, size = 0x400, scoped, tag = 'input window, operand 4, single buffered']
    #allocation8 [shape = 's32[1]{0}', space=sflag, size = 0x4, scoped, tag = 'scoped memory for encoder_forward.5']
    #allocation9 [shape = 'u8[512]{0}', space=vmem, size = 0x400, scoped, tag = 'input window, operand 5, single buffered']
    #allocation10 [shape = 'u8[512]{0}', space=vmem, size = 0x400, scoped, tag = 'input window, operand 6, single buffered']
    #allocation11 [shape = 's32[1]{0}', space=sflag, size = 0x4, scoped, tag = 'scoped memory for encoder_forward.5']
    %12 = vsyncpa [#allocation3], 0
    %13 = vsyncpa [#allocation5], 0
    %14 = vsyncpa [#allocation8], 0
    %15 = vsyncpa [#allocation11], 0
    loop: start=0, step=1, limit=4
    $region2: #{encoder_forward.5} parent=1 // loop_pre_header
      _
    $region3: #{encoder_forward.5} parent=1 // loop_header
      %s17 = sphi 0, %s21
      %p18 = scmp.ge.s32.totalorder %s17, 4
      %s27 = sphi 0, %s29
      %s30 = sphi 0, %s27
      %s31 = sphi 0, %s30
      %s47 = sphi 0, %s31
      %s51 = sphi 0, %s51
      %s53 = sphi 0, %s51
      %s54 = sphi 0, %s53
      %s68 = sphi 0, %s54
      %s72 = sphi 0, %s72
      %s74 = sphi 0, %s72
      %s75 = sphi 0, %s74
      %s89 = sphi 0, %s75
      %s93 = sphi 0, %s93
      %s95 = sphi 0, %s93
      %s96 = sphi 0, %s95
      %s110 = sphi 0, %s96
      %s114 = sphi 0, %s114
      %s116 = sphi 0, %s114
      %s117 = sphi 0, %s116
      %s131 = sphi 0, %s117
      %s135 = sphi 0, %s135
      %s137 = sphi 0, %s135
      %s138 = sphi 0, %s137
      %s152 = sphi 0, %s138
      %s156 = sphi 0, %s156
      %s158 = sphi 0, %s156
      %s159 = sphi 0, %s158
      %s173 = sphi 0, %s159
      %s179 = sphi 0, %s181
      %s182 = sphi 0, %s179
      %s183 = sphi 0, %s182
      %s199 = sphi 0, %s183
    $region4: #{encoder_forward.5} parent=1 // loop_header_branch
      %20 = sbr.rel (%p18) target = $region8
    $region5: #{encoder_forward.5} parent=1 // loop_body
      %s22 = ssub.s32 %s17, 1
      %s23 = ssub.s32 %s17, 2
      %s24 = sadd.s32 %s17, 1
      %s25 = ssub.s32 %s17, %s24
      %p26 = scmp.eq.s32.totalorder %s25, 0
      %s28 = sadd.s32 %s27, 1
      %s29 = scalar_select %p26, %s27, %s28
      %p32 = pneg %p26
      %p33 = scmp.eq.s32.totalorder %s17, 1
      %p34 = por %p32, %p33
      %p35 = scmp.ne.s32.totalorder %s27, %s30
      %p36 = scmp.eq.s32.totalorder %s17, 0
      %p37 = por %p35, %p36
      %p38 = scmp.ne.s32.totalorder %s27, %s30
      %p39 = scmp.eq.s32.totalorder %s22, 1
      %p40 = por %p38, %p39
      %p41 = scmp.ne.s32.totalorder %s30, %s31
      %p42 = scmp.eq.s32.totalorder %s22, 0
      %p43 = por %p41, %p42
      %p44 = scmp.ne.s32.totalorder %s30, %s31
      %p45 = scmp.eq.s32.totalorder %s23, 1
      %p46 = por %p44, %p45
      %p48 = scmp.ne.s32.totalorder %s31, %s47
      %p49 = scmp.eq.s32.totalorder %s23, 0
      %p50 = por %p48, %p49
      %s52 = sadd.s32 %s51, 1
      %p55 = scmp.eq.s32.totalorder %s17, 1
      %p56 = scmp.ne.s32.totalorder %s51, %s53
      %p57 = scmp.eq.s32.totalorder %s17, 0
      %p58 = por %p56, %p57
      %p59 = scmp.ne.s32.totalorder %s51, %s53
      %p60 = scmp.eq.s32.totalorder %s22, 1
      %p61 = por %p59, %p60
      %p62 = scmp.ne.s32.totalorder %s53, %s54
      %p63 = scmp.eq.s32.totalorder %s22, 0
      %p64 = por %p62, %p63
      %p65 = scmp.ne.s32.totalorder %s53, %s54
      %p66 = scmp.eq.s32.totalorder %s23, 1
      %p67 = por %p65, %p66
      %p69 = scmp.ne.s32.totalorder %s54, %s68
      %p70 = scmp.eq.s32.totalorder %s23, 0
      %p71 = por %p69, %p70
      %s73 = sadd.s32 %s72, 1
      %p76 = scmp.eq.s32.totalorder %s17, 1
      %p77 = scmp.ne.s32.totalorder %s72, %s74
      %p78 = scmp.eq.s32.totalorder %s17, 0
      %p79 = por %p77, %p78
      %p80 = scmp.ne.s32.totalorder %s72, %s74
      %p81 = scmp.eq.s32.totalorder %s22, 1
      %p82 = por %p80, %p81
      %p83 = scmp.ne.s32.totalorder %s74, %s75
      %p84 = scmp.eq.s32.totalorder %s22, 0
      %p85 = por %p83, %p84
      %p86 = scmp.ne.s32.totalorder %s74, %s75
      %p87 = scmp.eq.s32.totalorder %s23, 1
      %p88 = por %p86, %p87
      %p90 = scmp.ne.s32.totalorder %s75, %s89
      %p91 = scmp.eq.s32.totalorder %s23, 0
      %p92 = por %p90, %p91
      %s94 = sadd.s32 %s93, 1
      %p97 = scmp.eq.s32.totalorder %s17, 1
      %p98 = scmp.ne.s32.totalorder %s93, %s95
      %p99 = scmp.eq.s32.totalorder %s17, 0
      %p100 = por %p98, %p99
      %p101 = scmp.ne.s32.totalorder %s93, %s95
      %p102 = scmp.eq.s32.totalorder %s22, 1
      %p103 = por %p101, %p102
      %p104 = scmp.ne.s32.totalorder %s95, %s96
      %p105 = scmp.eq.s32.totalorder %s22, 0
      %p106 = por %p104, %p105
      %p107 = scmp.ne.s32.totalorder %s95, %s96
      %p108 = scmp.eq.s32.totalorder %s23, 1
      %p109 = por %p107, %p108
      %p111 = scmp.ne.s32.totalorder %s96, %s110
      %p112 = scmp.eq.s32.totalorder %s23, 0
      %p113 = por %p111, %p112
      %s115 = sadd.s32 %s114, 1
      %p118 = scmp.eq.s32.totalorder %s17, 1
      %p119 = scmp.ne.s32.totalorder %s114, %s116
      %p120 = scmp.eq.s32.totalorder %s17, 0
      %p121 = por %p119, %p120
      %p122 = scmp.ne.s32.totalorder %s114, %s116
      %p123 = scmp.eq.s32.totalorder %s22, 1
      %p124 = por %p122, %p123
      %p125 = scmp.ne.s32.totalorder %s116, %s117
      %p126 = scmp.eq.s32.totalorder %s22, 0
      %p127 = por %p125, %p126
      %p128 = scmp.ne.s32.totalorder %s116, %s117
      %p129 = scmp.eq.s32.totalorder %s23, 1
      %p130 = por %p128, %p129
      %p132 = scmp.ne.s32.totalorder %s117, %s131
      %p133 = scmp.eq.s32.totalorder %s23, 0
      %p134 = por %p132, %p133
      %s136 = sadd.s32 %s135, 1
      %p139 = scmp.eq.s32.totalorder %s17, 1
      %p140 = scmp.ne.s32.totalorder %s135, %s137
      %p141 = scmp.eq.s32.totalorder %s17, 0
      %p142 = por %p140, %p141
      %p143 = scmp.ne.s32.totalorder %s135, %s137
      %p144 = scmp.eq.s32.totalorder %s22, 1
      %p145 = por %p143, %p144
      %p146 = scmp.ne.s32.totalorder %s137, %s138
      %p147 = scmp.eq.s32.totalorder %s22, 0
      %p148 = por %p146, %p147
      %p149 = scmp.ne.s32.totalorder %s137, %s138
      %p150 = scmp.eq.s32.totalorder %s23, 1
      %p151 = por %p149, %p150
      %p153 = scmp.ne.s32.totalorder %s138, %s152
      %p154 = scmp.eq.s32.totalorder %s23, 0
      %p155 = por %p153, %p154
      %s157 = sadd.s32 %s156, 1
      %p160 = scmp.eq.s32.totalorder %s17, 1
      %p161 = scmp.ne.s32.totalorder %s156, %s158
      %p162 = scmp.eq.s32.totalorder %s17, 0
      %p163 = por %p161, %p162
      %p164 = scmp.ne.s32.totalorder %s156, %s158
      %p165 = scmp.eq.s32.totalorder %s22, 1
      %p166 = por %p164, %p165
      %p167 = scmp.ne.s32.totalorder %s158, %s159
      %p168 = scmp.eq.s32.totalorder %s22, 0
      %p169 = por %p167, %p168
      %p170 = scmp.ne.s32.totalorder %s158, %s159
      %p171 = scmp.eq.s32.totalorder %s23, 1
      %p172 = por %p170, %p171
      %p174 = scmp.ne.s32.totalorder %s159, %s173
      %p175 = scmp.eq.s32.totalorder %s23, 0
      %p176 = por %p174, %p175
      %s177 = ssub.s32 %s17, %s24
      %p178 = scmp.eq.s32.totalorder %s177, 0
      %s180 = sadd.s32 %s179, 1
      %s181 = scalar_select %p178, %s179, %s180
      %p184 = pneg %p178
      %p185 = scmp.eq.s32.totalorder %s17, 1
      %p186 = por %p184, %p185
      %p187 = scmp.ne.s32.totalorder %s179, %s182
      %p188 = scmp.eq.s32.totalorder %s17, 0
      %p189 = por %p187, %p188
      %p190 = scmp.ne.s32.totalorder %s179, %s182
      %p191 = scmp.eq.s32.totalorder %s22, 1
      %p192 = por %p190, %p191
      %p193 = scmp.ne.s32.totalorder %s182, %s183
      %p194 = scmp.eq.s32.totalorder %s22, 0
      %p195 = por %p193, %p194
      %p196 = scmp.ne.s32.totalorder %s182, %s183
      %p197 = scmp.eq.s32.totalorder %s23, 1
      %p198 = por %p196, %p197
      %p200 = scmp.ne.s32.totalorder %s183, %s199
      %p201 = scmp.eq.s32.totalorder %s23, 0
      %p202 = por %p200, %p201
      %p203 = scmp.le.s32.totalorder 1, %s17
      %p204 = scmp.lt.s32.totalorder %s17, 3
      %p205 = pnand %p203, %p204
      %p206 = pneg %p205
      // Predicated region
      $region9: #{encoder_forward.5} parent=5 // pred_check
        _
      $region10: #{encoder_forward.5} parent=5 // pred_check_branch
        %208 = sbr.rel (%p205) target = $region12
      $region11: #{encoder_forward.5} parent=5 // pred_region
        %s209 = ssub.s32 %s17, 1
        // Predicated region
        $region13: #{encoder_forward.5} parent=11 // pred_check
          %p210 = pneg %p64
        $region14: #{encoder_forward.5} parent=11 // pred_check_branch
          %212 = sbr.rel (%p210) target = $region16
        $region15: #{encoder_forward.5} parent=11 // pred_region
          %s214 = ssub.s32 2048, 2048
          %215 = vsyncadd [#allocation3], %s214
          %s216 = sshll.u32 [#allocation2], 4
          %s217 = int_to_ptr.vmem [resolvable:$true] %s216
          %222 = dma.hbm_to_vmem [thread:$0]  %s1, 2048, %s217, [#allocation3], 128, 128, 8
        $region16: #{encoder_forward.5} parent=11 // pred_fallthru
          _
        // Predicated region
        $region17: #{encoder_forward.5} parent=11 // pred_check
          %p223 = pneg %p85
        $region18: #{encoder_forward.5} parent=11 // pred_check_branch
          %225 = sbr.rel (%p223) target = $region20
        $region19: #{encoder_forward.5} parent=11 // pred_region
          %s227 = ssub.s32 32, 32
          %228 = vsyncadd [#allocation5], %s227
          %s230 = sshll.u32 [#allocation4], 4
          %s231 = int_to_ptr.vmem [resolvable:$true] %s230
          %233 = dma.hbm_to_vmem [thread:$0]  %s2, 32, %s231, [#allocation5]
        $region20: #{encoder_forward.5} parent=11 // pred_fallthru
          _
        // Predicated region
        $region21: #{encoder_forward.5} parent=11 // pred_check
          %p234 = pneg %p106
        $region22: #{encoder_forward.5} parent=11 // pred_check_branch
          %236 = sbr.rel (%p234) target = $region24
        $region23: #{encoder_forward.5} parent=11 // pred_region
          %s238 = ssub.s32 2048, 2048
          %239 = vsyncadd [#allocation5], %s238
          %s240 = sshll.u32 [#allocation6], 4
          %s241 = int_to_ptr.vmem [resolvable:$true] %s240
          %246 = dma.hbm_to_vmem [thread:$0]  %s3, 2048, %s241, [#allocation5], 64, 64, 4
        $region24: #{encoder_forward.5} parent=11 // pred_fallthru
          _
        // Predicated region
        $region25: #{encoder_forward.5} parent=11 // pred_check
          %p247 = pneg %p127
        $region26: #{encoder_forward.5} parent=11 // pred_check_branch
          %249 = sbr.rel (%p247) target = $region28
        $region27: #{encoder_forward.5} parent=11 // pred_region
          %s251 = ssub.s32 16, 16
          %252 = vsyncadd [#allocation8], %s251
          %s254 = sshll.u32 [#allocation7], 4
          %s255 = int_to_ptr.vmem [resolvable:$true] %s254
          %257 = dma.hbm_to_vmem [thread:$0]  %s4, 16, %s255, [#allocation8]
        $region28: #{encoder_forward.5} parent=11 // pred_fallthru
          _
        // Predicated region
        $region29: #{encoder_forward.5} parent=11 // pred_check
          %p258 = pneg %p148
        $region30: #{encoder_forward.5} parent=11 // pred_check_branch
          %260 = sbr.rel (%p258) target = $region32
        $region31: #{encoder_forward.5} parent=11 // pred_region
          %s262 = ssub.s32 16, 16
          %263 = vsyncadd [#allocation8], %s262
          %s265 = sshll.u32 [#allocation9], 4
          %s266 = int_to_ptr.vmem [resolvable:$true] %s265
          %268 = dma.hbm_to_vmem [thread:$0]  %s5, 16, %s266, [#allocation8]
        $region32: #{encoder_forward.5} parent=11 // pred_fallthru
          _
        // Predicated region
        $region33: #{encoder_forward.5} parent=11 // pred_check
          %p269 = pneg %p169
        $region34: #{encoder_forward.5} parent=11 // pred_check_branch
          %271 = sbr.rel (%p269) target = $region36
        $region35: #{encoder_forward.5} parent=11 // pred_region
          %s273 = ssub.s32 16, 16
          %274 = vsyncadd [#allocation11], %s273
          %s276 = sshll.u32 [#allocation10], 4
          %s277 = int_to_ptr.vmem [resolvable:$true] %s276
          %279 = dma.hbm_to_vmem [thread:$0]  %s6, 16, %s277, [#allocation11]
        $region36: #{encoder_forward.5} parent=11 // pred_fallthru
          _
      $region12: #{encoder_forward.5} parent=5 // pred_fallthru
        _
      %p280 = scmp.lt.s32.totalorder %s17, 2
      // Predicated region
      $region37: #{encoder_forward.5} parent=5 // pred_check
        %p281 = pneg %p280
      $region38: #{encoder_forward.5} parent=5 // pred_check_branch
        %283 = sbr.rel (%p281) target = $region40
      $region39: #{encoder_forward.5} parent=5 // pred_region
        // Predicated region
        $region41: #{encoder_forward.5} parent=39 // pred_check
          %p284 = pneg %p37
        $region42: #{encoder_forward.5} parent=39 // pred_check_branch
          %286 = sbr.rel (%p284) target = $region44
        $region43: #{encoder_forward.5} parent=39 // pred_region
          %s287 = smul.u32 2, %s17
          %p288 = scmp.lt.s32.totalorder %s287, 3
          %s289 = scalar_select %p288, %s287, 3
          %s290 = smul.addr %s289, 8
          %s291 = scalar_lea.vmem %s0, %s290
          %s292 = smul.u32 2, %s17
        $region44: #{encoder_forward.5} parent=39 // pred_fallthru
          _
      $region40: #{encoder_forward.5} parent=5 // pred_fallthru
        _
      %p293 = scmp.le.s32.totalorder 1, %s17
      %p294 = scmp.lt.s32.totalorder %s17, 3
      %p295 = pnand %p293, %p294
      %p296 = pneg %p295
      // Predicated region
      $region45: #{encoder_forward.5} parent=5 // pred_check
        _
      $region46: #{encoder_forward.5} parent=5 // pred_check_branch
        %298 = sbr.rel (%p295) target = $region48
      $region47: #{encoder_forward.5} parent=5 // pred_region
        %s299 = ssub.s32 %s17, 1
        // Predicated region
        $region49: #{encoder_forward.5} parent=47 // pred_check
          %p300 = pneg %p64
        $region50: #{encoder_forward.5} parent=47 // pred_check_branch
          %302 = sbr.rel (%p300) target = $region52
        $region51: #{encoder_forward.5} parent=47 // pred_region
          %303 = dma.done [#allocation3], 2048
        $region52: #{encoder_forward.5} parent=47 // pred_fallthru
          _
        // Predicated region
        $region53: #{encoder_forward.5} parent=47 // pred_check
          %p304 = pneg %p85
        $region54: #{encoder_forward.5} parent=47 // pred_check_branch
          %306 = sbr.rel (%p304) target = $region56
        $region55: #{encoder_forward.5} parent=47 // pred_region
          %307 = dma.done [#allocation5], 32
        $region56: #{encoder_forward.5} parent=47 // pred_fallthru
          _
        // Predicated region
        $region57: #{encoder_forward.5} parent=47 // pred_check
          %p308 = pneg %p106
        $region58: #{encoder_forward.5} parent=47 // pred_check_branch
          %310 = sbr.rel (%p308) target = $region60
        $region59: #{encoder_forward.5} parent=47 // pred_region
          %311 = dma.done [#allocation5], 2048
        $region60: #{encoder_forward.5} parent=47 // pred_fallthru
          _
        // Predicated region
        $region61: #{encoder_forward.5} parent=47 // pred_check
          %p312 = pneg %p127
        $region62: #{encoder_forward.5} parent=47 // pred_check_branch
          %314 = sbr.rel (%p312) target = $region64
        $region63: #{encoder_forward.5} parent=47 // pred_region
          %315 = dma.done [#allocation8], 16
        $region64: #{encoder_forward.5} parent=47 // pred_fallthru
          _
        // Predicated region
        $region65: #{encoder_forward.5} parent=47 // pred_check
          %p316 = pneg %p148
        $region66: #{encoder_forward.5} parent=47 // pred_check_branch
          %318 = sbr.rel (%p316) target = $region68
        $region67: #{encoder_forward.5} parent=47 // pred_region
          %319 = dma.done [#allocation8], 16
        $region68: #{encoder_forward.5} parent=47 // pred_fallthru
          _
        // Predicated region
        $region69: #{encoder_forward.5} parent=47 // pred_check
          %p320 = pneg %p169
        $region70: #{encoder_forward.5} parent=47 // pred_check_branch
          %322 = sbr.rel (%p320) target = $region72
        $region71: #{encoder_forward.5} parent=47 // pred_region
          %323 = dma.done [#allocation11], 16
        $region72: #{encoder_forward.5} parent=47 // pred_fallthru
          _
        %s324 = smul.u32 2, %s22
        %p325 = scmp.lt.s32.totalorder %s324, 3
        %s326 = scalar_select %p325, %s324, 3
        %s327 = smul.addr %s326, 8
        %s328 = scalar_lea.vmem %s0, %s327
        %p329 = pneg %p43
        %p330 = pneg %p40
        %p331 = pneg %p64
        %p332 = pneg %p61
        %p333 = pneg %p85
        %p334 = pneg %p82
        %p335 = pneg %p106
        %p336 = pneg %p103
        %p337 = pneg %p127
        %p338 = pneg %p124
        %p339 = pneg %p148
        %p340 = pneg %p145
        %p341 = pneg %p169
        %p342 = pneg %p166
        %p343 = pneg %p195
        %p344 = pneg %p192
        %s345 = smul.u32 2, %s22
        %p346 = scmp.lt.s32.totalorder %s345, 3
        %s347 = scalar_select %p346, %s345, 3
        %s348 = smul.addr %s347, 8
        %s349 = scalar_lea.vmem %s7, %s348
        %s350 = smul.u32 2, %s22
        %p351 = scmp.lt.s32.totalorder %s350, 3
        %s352 = scalar_select %p351, %s350, 3
        %s353 = smul.addr %s352, 8
        %s354 = scalar_lea.vmem %s0, %s353
        %s355 = smul.u32 2, %s22
        %s356 = smul.u32 2, %s22
        %p357 = scmp.lt.s32.totalorder %s356, 3
        %s358 = scalar_select %p357, %s356, 3
        %s359 = smul.addr %s358, 8
        %s360 = scalar_lea.vmem %s7, %s359
        %s361 = smul.u32 2, %s22
        %v363 = vld [vmem:[%s354] sm:$0xff]
        %v364 = vld [vmem:[%s354 + $0x8] sm:$0xff]
        %v365 = vpack.c.bf16 %v364, %v363
        %v366 = vld [vmem:[#allocation2] sm:$0xff]
        %v367 = vld [vmem:[#allocation2 + $0x8] sm:$0xff]
        %v368 = vld [vmem:[#allocation2 + $0x10] sm:$0xff]
        %v369 = vld [vmem:[#allocation2 + $0x18] sm:$0xff]
        %v370 = vld [vmem:[#allocation2 + $0x20] sm:$0xff]
        %v371 = vld [vmem:[#allocation2 + $0x28] sm:$0xff]
        %v372 = vld [vmem:[#allocation2 + $0x30] sm:$0xff]
        %v373 = vld [vmem:[#allocation2 + $0x38] sm:$0xff]
        %v374 = vld [vmem:[#allocation2 + $0x40] sm:$0xff]
        %v375 = vld [vmem:[#allocation2 + $0x48] sm:$0xff]
        %v376 = vld [vmem:[#allocation2 + $0x50] sm:$0xff]
        %v377 = vld [vmem:[#allocation2 + $0x58] sm:$0xff]
        %v378 = vld [vmem:[#allocation2 + $0x60] sm:$0xff]
        %v379 = vld [vmem:[#allocation2 + $0x68] sm:$0xff]
        %v380 = vld [vmem:[#allocation2 + $0x70] sm:$0xff]
        %v381 = vld [vmem:[#allocation2 + $0x78] sm:$0xff]
        %v382 = vld [vmem:[#allocation4] sm:$0x3]
        %v384 = vlaneseq
        %v385 = vshrl.u32 %v384, 7
        %v386 = vsub.s32 0, %v385
        %v387 = vrot.slane %v382, %v386
        %v388 = vlaneseq
        %v389 = vshrl.u32 %v388, 7
        %v390 = vsub.s32 1, %v389
        %v391 = vrot.slane %v382, %v390
        %v410 = vunpack.c.l.b16 %v366
        %v411 = vunpack.c.h.b16 %v366
        %v412 = vunpack.c.l.b16 %v367
        %v413 = vunpack.c.h.b16 %v367
        %v414 = vunpack.c.l.b16 %v368
        %v415 = vunpack.c.h.b16 %v368
        %v416 = vunpack.c.l.b16 %v369
        %v417 = vunpack.c.h.b16 %v369
        %v418 = vunpack.c.l.b16 %v370
        %v419 = vunpack.c.h.b16 %v370
        %v420 = vunpack.c.l.b16 %v371
        %v421 = vunpack.c.h.b16 %v371
        %v422 = vunpack.c.l.b16 %v372
        %v423 = vunpack.c.h.b16 %v372
        %v424 = vunpack.c.l.b16 %v373
        %v425 = vunpack.c.h.b16 %v373
        %v426 = vunpack.c.l.b16 %v374
        %v427 = vunpack.c.h.b16 %v374
        %v428 = vunpack.c.l.b16 %v375
        %v429 = vunpack.c.h.b16 %v375
        %v430 = vunpack.c.l.b16 %v376
        %v431 = vunpack.c.h.b16 %v376
        %v432 = vunpack.c.l.b16 %v377
        %v433 = vunpack.c.h.b16 %v377
        %v434 = vunpack.c.l.b16 %v378
        %v435 = vunpack.c.h.b16 %v378
        %v436 = vunpack.c.l.b16 %v379
        %v437 = vunpack.c.h.b16 %v379
        %v438 = vunpack.c.l.b16 %v380
        %v439 = vunpack.c.h.b16 %v380
        %v440 = vunpack.c.l.b16 %v381
        %v441 = vunpack.c.h.b16 %v381
        %v442 = vpack.c.b16 %v412, %v410
        %v443 = vpack.c.b16 %v413, %v411
        %v444 = vpack.c.b16 %v416, %v414
        %v445 = vpack.c.b16 %v417, %v415
        %v446 = vpack.c.b16 %v420, %v418
        %v447 = vpack.c.b16 %v421, %v419
        %v448 = vpack.c.b16 %v424, %v422
        %v449 = vpack.c.b16 %v425, %v423
        %v450 = vpack.c.b16 %v428, %v426
        %v451 = vpack.c.b16 %v429, %v427
        %v452 = vpack.c.b16 %v432, %v430
        %v453 = vpack.c.b16 %v433, %v431
        %v454 = vpack.c.b16 %v436, %v434
        %v455 = vpack.c.b16 %v437, %v435
        %v456 = vpack.c.b16 %v440, %v438
        %v457 = vpack.c.b16 %v441, %v439
        %474 = vmatprep.subr.bf16.mxu0 %v443
        %475 = vmatpush1.bf16.msra.mxu0 %v442
        %476 = vmatprep.subr.bf16.mxu0 %v445
        %477 = vmatpush1.bf16.msra.mxu0 %v444
        %478 = vmatprep.subr.bf16.mxu0 %v447
        %479 = vmatpush1.bf16.msra.mxu0 %v446
        %480 = vmatprep.subr.bf16.mxu0 %v449
        %481 = vmatpush1.bf16.msra.mxu0 %v448
        %482 = vmatprep.subr.bf16.mxu0 %v451
        %483 = vmatpush1.bf16.msra.mxu0 %v450
        %484 = vmatprep.subr.bf16.mxu0 %v453
        %485 = vmatpush1.bf16.msra.mxu0 %v452
        %486 = vmatprep.subr.bf16.mxu0 %v455
        %487 = vmatpush1.bf16.msra.mxu0 %v454
        %488 = vmatprep.subr.bf16.mxu0 %v457
        %489 = vmatpush1.bf16.msra.mxu0 %v456
        %490 = vmatprep.subr.bf16.mxu0 0
        %491 = vmatpush1.bf16.msra.mxu0 0
        %492 = vmatprep.subr.bf16.mxu0 0
        %493 = vmatpush1.bf16.msra.mxu0 0
        %494 = vmatprep.subr.bf16.mxu0 0
        %495 = vmatpush1.bf16.msra.mxu0 0
        %496 = vmatprep.subr.bf16.mxu0 0
        %497 = vmatpush1.bf16.msra.mxu0 0
        %498 = vmatprep.subr.bf16.mxu0 0
        %499 = vmatpush1.bf16.msra.mxu0 0
        %500 = vmatprep.subr.bf16.mxu0 0
        %501 = vmatpush1.bf16.msra.mxu0 0
        %502 = vmatprep.subr.bf16.mxu0 0
        %503 = vmatpush1.bf16.msra.mxu0 0
        %504 = vmatprep.subr.bf16.mxu0 0
        %505 = vmatpush1.bf16.msra.mxu0 0
        %506 = vmatprep.mubr.bf16.mxu0 0
        %507 = vmatmul.mubr.bf16.gmra.mrb[0].mxu0 %v365
        %v508 = vpop.f32.mrb[0].mxu0
        %v509 = vadd.f32 %v387, %v508
        %v510 = vpop.f32.mrb[0].mxu0
        %v511 = vadd.f32 %v391, %v510
        %v512 = vpop.f32.mrb[0].mxu0
        %v513 = vadd.f32 %v387, %v512
        %v514 = vpop.f32.mrb[0].mxu0
        %v515 = vadd.f32 %v391, %v514
        %516 = vdwg.mxu0
        %v517 = vmax.f32 %v509, 0.0
        %v518 = vmax.f32 %v511, 0.0
        %v519 = vmax.f32 %v513, 0.0
        %v520 = vmax.f32 %v515, 0.0
        %v521 = vpack.c.bf16 %v519, %v517
        %v522 = vpack.c.bf16 %v520, %v518
        %v523 = vld [vmem:[#allocation6] sm:$0xf]
        %v524 = vld [vmem:[#allocation6 + $0x4] sm:$0xf]
        %v525 = vld [vmem:[#allocation6 + $0x8] sm:$0xf]
        %v526 = vld [vmem:[#allocation6 + $0xc] sm:$0xf]
        %v527 = vld [vmem:[#allocation6 + $0x10] sm:$0xf]
        %v528 = vld [vmem:[#allocation6 + $0x14] sm:$0xf]
        %v529 = vld [vmem:[#allocation6 + $0x18] sm:$0xf]
        %v530 = vld [vmem:[#allocation6 + $0x1c] sm:$0xf]
        %v531 = vld [vmem:[#allocation6 + $0x20] sm:$0xf]
        %v532 = vld [vmem:[#allocation6 + $0x24] sm:$0xf]
        %v533 = vld [vmem:[#allocation6 + $0x28] sm:$0xf]
        %v534 = vld [vmem:[#allocation6 + $0x2c] sm:$0xf]
        %v535 = vld [vmem:[#allocation6 + $0x30] sm:$0xf]
        %v536 = vld [vmem:[#allocation6 + $0x34] sm:$0xf]
        %v537 = vld [vmem:[#allocation6 + $0x38] sm:$0xf]
        %v538 = vld [vmem:[#allocation6 + $0x3c] sm:$0xf]
        %v539 = vld [vmem:[#allocation6 + $0x40] sm:$0xf]
        %v540 = vld [vmem:[#allocation6 + $0x44] sm:$0xf]
        %v541 = vld [vmem:[#allocation6 + $0x48] sm:$0xf]
        %v542 = vld [vmem:[#allocation6 + $0x4c] sm:$0xf]
        %v543 = vld [vmem:[#allocation6 + $0x50] sm:$0xf]
        %v544 = vld [vmem:[#allocation6 + $0x54] sm:$0xf]
        %v545 = vld [vmem:[#allocation6 + $0x58] sm:$0xf]
        %v546 = vld [vmem:[#allocation6 + $0x5c] sm:$0xf]
        %v547 = vld [vmem:[#allocation6 + $0x60] sm:$0xf]
        %v548 = vld [vmem:[#allocation6 + $0x64] sm:$0xf]
        %v549 = vld [vmem:[#allocation6 + $0x68] sm:$0xf]
        %v550 = vld [vmem:[#allocation6 + $0x6c] sm:$0xf]
        %v551 = vld [vmem:[#allocation6 + $0x70] sm:$0xf]
        %v552 = vld [vmem:[#allocation6 + $0x74] sm:$0xf]
        %v553 = vld [vmem:[#allocation6 + $0x78] sm:$0xf]
        %v554 = vld [vmem:[#allocation6 + $0x7c] sm:$0xf]
        %v555 = vld [vmem:[#allocation7] sm:$0x1]
        %v557 = vlaneseq
        %v558 = vshrl.u32 %v557, 7
        %v559 = vsub.s32 0, %v558
        %v560 = vrot.slane %v555, %v559
        %v594 = vunpack.c.l.b16 %v523
        %v595 = vunpack.c.l.b16 %v524
        %v596 = vunpack.c.l.b16 %v525
        %v597 = vunpack.c.l.b16 %v526
        %v598 = vunpack.c.l.b16 %v527
        %v599 = vunpack.c.l.b16 %v528
        %v600 = vunpack.c.l.b16 %v529
        %v601 = vunpack.c.l.b16 %v530
        %v602 = vunpack.c.l.b16 %v531
        %v603 = vunpack.c.l.b16 %v532
        %v604 = vunpack.c.l.b16 %v533
        %v605 = vunpack.c.l.b16 %v534
        %v606 = vunpack.c.l.b16 %v535
        %v607 = vunpack.c.l.b16 %v536
        %v608 = vunpack.c.l.b16 %v537
        %v609 = vunpack.c.l.b16 %v538
        %v610 = vunpack.c.l.b16 %v539
        %v611 = vunpack.c.l.b16 %v540
        %v612 = vunpack.c.l.b16 %v541
        %v613 = vunpack.c.l.b16 %v542
        %v614 = vunpack.c.l.b16 %v543
        %v615 = vunpack.c.l.b16 %v544
        %v616 = vunpack.c.l.b16 %v545
        %v617 = vunpack.c.l.b16 %v546
        %v618 = vunpack.c.l.b16 %v547
        %v619 = vunpack.c.l.b16 %v548
        %v620 = vunpack.c.l.b16 %v549
        %v621 = vunpack.c.l.b16 %v550
        %v622 = vunpack.c.l.b16 %v551
        %v623 = vunpack.c.l.b16 %v552
        %v624 = vunpack.c.l.b16 %v553
        %v625 = vunpack.c.l.b16 %v554
        %v626 = vpack.c.b16 %v595, %v594
        %v627 = vpack.c.b16 %v597, %v596
        %v628 = vpack.c.b16 %v599, %v598
        %v629 = vpack.c.b16 %v601, %v600
        %v630 = vpack.c.b16 %v603, %v602
        %v631 = vpack.c.b16 %v605, %v604
        %v632 = vpack.c.b16 %v607, %v606
        %v633 = vpack.c.b16 %v609, %v608
        %v634 = vpack.c.b16 %v611, %v610
        %v635 = vpack.c.b16 %v613, %v612
        %v636 = vpack.c.b16 %v615, %v614
        %v637 = vpack.c.b16 %v617, %v616
        %v638 = vpack.c.b16 %v619, %v618
        %v639 = vpack.c.b16 %v621, %v620
        %v640 = vpack.c.b16 %v623, %v622
        %v641 = vpack.c.b16 %v625, %v624
        %658 = vmatprep.subr.bf16.mxu0 0
        %659 = vmatpush1.bf16.msra.mxu0 %v626
        %660 = vmatprep.subr.bf16.mxu0 0
        %661 = vmatpush1.bf16.msra.mxu0 %v627
        %662 = vmatprep.subr.bf16.mxu0 0
        %663 = vmatpush1.bf16.msra.mxu0 %v628
        %664 = vmatprep.subr.bf16.mxu0 0
        %665 = vmatpush1.bf16.msra.mxu0 %v629
        %666 = vmatprep.subr.bf16.mxu0 0
        %667 = vmatpush1.bf16.msra.mxu0 %v630
        %668 = vmatprep.subr.bf16.mxu0 0
        %669 = vmatpush1.bf16.msra.mxu0 %v631
        %670 = vmatprep.subr.bf16.mxu0 0
        %671 = vmatpush1.bf16.msra.mxu0 %v632
        %672 = vmatprep.subr.bf16.mxu0 0
        %673 = vmatpush1.bf16.msra.mxu0 %v633
        %674 = vmatprep.subr.bf16.mxu0 0
        %675 = vmatpush1.bf16.msra.mxu0 %v634
        %676 = vmatprep.subr.bf16.mxu0 0
        %677 = vmatpush1.bf16.msra.mxu0 %v635
        %678 = vmatprep.subr.bf16.mxu0 0
        %679 = vmatpush1.bf16.msra.mxu0 %v636
        %680 = vmatprep.subr.bf16.mxu0 0
        %681 = vmatpush1.bf16.msra.mxu0 %v637
        %682 = vmatprep.subr.bf16.mxu0 0
        %683 = vmatpush1.bf16.msra.mxu0 %v638
        %684 = vmatprep.subr.bf16.mxu0 0
        %685 = vmatpush1.bf16.msra.mxu0 %v639
        %686 = vmatprep.subr.bf16.mxu0 0
        %687 = vmatpush1.bf16.msra.mxu0 %v640
        %688 = vmatprep.subr.bf16.mxu0 0
        %689 = vmatpush1.bf16.msra.mxu0 %v641
        %690 = vmatprep.mubr.bf16.mxu0 %v522
        %691 = vmatmul.mubr.bf16.gmra.mrb[0].mxu0 %v521
        %v692 = vpop.f32.mrb[0].mxu0
        %v693 = vadd.f32 %v560, %v692
        %v694 = vpop.f32.mrb[0].mxu0
        %v695 = vpop.f32.mrb[0].mxu0
        %v696 = vadd.f32 %v560, %v695
        %v697 = vpop.f32.mrb[0].mxu0
        %698 = vdwg.mxu0
        %v699 = vadd.f32 %v363, %v693
        %v700 = vadd.f32 %v364, %v696
        %701 = vadd.xlane.f32.xlu0 %v699
        %v702 = vpop.xlane.xlu0 %701
        %703 = vadd.xlane.f32.xlu0 %v700
        %v704 = vpop.xlane.xlu0 %703
        %v705 = vrcp.pop 128.0
        %v706 = vmul.f32 %v702, %v705
        %v707 = vmul.f32 %v704, %v705
        %v708 = vsub.f32 %v699, %v706
        %v709 = vsub.f32 %v700, %v707
        %v710 = vmul.f32 %v708, %v708
        %v711 = vmul.f32 %v709, %v709
        %712 = vadd.xlane.f32.xlu0 %v710
        %v713 = vpop.xlane.xlu0 %712
        %714 = vadd.xlane.f32.xlu0 %v711
        %v715 = vpop.xlane.xlu0 %714
        %v716 = vmul.f32 %v713, %v705
        %v717 = vmul.f32 %v715, %v705
        %v718 = vadd.f32 %v716, 1e-05
        %v719 = vadd.f32 %v717, 1e-05
        %v720 = vrsqrt.pop %v718
        %v721 = vrsqrt.pop %v719
        %v722 = vmul.f32 %v708, %v720
        %v723 = vmul.f32 %v709, %v721
        %v724 = vld [vmem:[#allocation9] sm:$0x1]
        %v726 = vlaneseq
        %v727 = vshrl.u32 %v726, 7
        %v728 = vsub.s32 0, %v727
        %v729 = vrot.slane %v724, %v728
        %v731 = vmul.f32 %v722, %v729
        %v732 = vmul.f32 %v723, %v729
        %v733 = vld [vmem:[#allocation10] sm:$0x1]
        %v735 = vlaneseq
        %v736 = vshrl.u32 %v735, 7
        %v737 = vsub.s32 0, %v736
        %v738 = vrot.slane %v733, %v737
        %v740 = vadd.f32 %v731, %v738
        %v741 = vadd.f32 %v732, %v738
        %742 = vst [vmem:[%s360] sm:$0xff] %v740
        %743 = vst [vmem:[%s360 + $0x8] sm:$0xff] %v741
        %s744 = smul.u32 2, %s22
        %p745 = scmp.lt.s32.totalorder %s744, 3
        %s746 = scalar_select %p745, %s744, 3
        %s747 = smul.addr %s746, 8
        %s748 = scalar_lea.vmem %s7, %s747
        // Predicated region
        $region73: #{encoder_forward.5} parent=47 // pred_check
          %p749 = pneg %p192
        $region74: #{encoder_forward.5} parent=47 // pred_check_branch
          %751 = sbr.rel (%p749) target = $region76
        $region75: #{encoder_forward.5} parent=47 // pred_region
          %s752 = smul.u32 2, %s22
        $region76: #{encoder_forward.5} parent=47 // pred_fallthru
          _
      $region48: #{encoder_forward.5} parent=5 // pred_fallthru
        _
      %p753 = scmp.le.s32.totalorder 2, %s17
      // Predicated region
      $region77: #{encoder_forward.5} parent=5 // pred_check
        %p754 = pneg %p753
      $region78: #{encoder_forward.5} parent=5 // pred_check_branch
        %756 = sbr.rel (%p754) target = $region80
      $region79: #{encoder_forward.5} parent=5 // pred_region
        %s757 = ssub.s32 %s17, 2
        // Predicated region
        $region81: #{encoder_forward.5} parent=79 // pred_check
          %p758 = pneg %p198
        $region82: #{encoder_forward.5} parent=79 // pred_check_branch
          %760 = sbr.rel (%p758) target = $region84
        $region83: #{encoder_forward.5} parent=79 // pred_region
          %s761 = smul.u32 2, %s23
          %p762 = scmp.lt.s32.totalorder %s761, 3
          %s763 = scalar_select %p762, %s761, 3
          %s764 = smul.addr %s763, 8
          %s765 = scalar_lea.vmem %s7, %s764
        $region84: #{encoder_forward.5} parent=79 // pred_fallthru
          _
      $region80: #{encoder_forward.5} parent=5 // pred_fallthru
        _
    $region6: #{encoder_forward.5} parent=1 // loop_footer
      %s21 = sadd.s32 1, %s17
    $region7: #{encoder_forward.5} parent=1 // loop_footer_branch
      %16 = sbr.rel target = $region3
    $region8: #{encoder_forward.5} parent=1 // loop_exit
      _
    %766 = vsyncpa [#allocation3], 1
    %s767 = scalar_lea.sflag [#allocation3], 1
    %768 = vsyncpa %s767, 1
    %769 = vsyncpa [#allocation5], 1
    %770 = vsyncpa [#allocation8], 1
    %771 = vsyncpa [#allocation11], 1

// kernel: encoder_forward.4
$region0: #{encoder_forward.4}
  #allocation0 [shape = 'u32[]', space=smem, size = 0x4, offset = 0x4, fixed_abs, tag = 'smem constant byte address 0x4 - core index']
  #allocation1 [shape = 'u32[144,128]{1,0:T(1,128)}', space=vmem, size = 0x12000, scoped, tag = 'internal scratch']
  #allocation2 [shape = 'f32[16,256]{1,0:T(8,128)}', space=vmem, size = 0x4000, scoped, tag = 'scratch operand']
  %s0 = inlined_call_operand.vmem [shape: f32[2,16,128], index: 0, kind: input, shape index: {}]
  %s1 = inlined_call_operand.vmem [shape: f32[2,1,16], index: 1, kind: input, shape index: {}]
  %s2 = inlined_call_operand.hbm [shape: bf16[128,256], index: 2, kind: input, shape index: {}]
  %s3 = inlined_call_operand.hbm [shape: f32[1,256], index: 3, kind: input, shape index: {}]
  %s4 = inlined_call_operand.hbm [shape: bf16[128,256], index: 4, kind: input, shape index: {}]
  %s5 = inlined_call_operand.hbm [shape: f32[1,256], index: 5, kind: input, shape index: {}]
  %s6 = inlined_call_operand.hbm [shape: bf16[128,256], index: 6, kind: input, shape index: {}]
  %s7 = inlined_call_operand.hbm [shape: f32[1,256], index: 7, kind: input, shape index: {}]
  %s8 = inlined_call_operand.hbm [shape: bf16[256,128], index: 8, kind: input, shape index: {}]
  %s9 = inlined_call_operand.hbm [shape: f32[1,128], index: 9, kind: input, shape index: {}]
  %s10 = inlined_call_operand.hbm [shape: f32[1,128], index: 10, kind: input, shape index: {}]
  %s11 = inlined_call_operand.hbm [shape: f32[1,128], index: 11, kind: input, shape index: {}]
  %s12 = inlined_call_operand.vmem [shape: f32[2,16,128], index: 12, kind: output, shape index: {}]
  %s13 = sld [smem:[#allocation0]]
  $region121: #{encoder_forward.4} parent=0
    _
  %s15 = ssub.s32 1, %s13
  %s16 = scalar_select 0, %s15, %s13
  $region1: #{encoder_forward.4} parent=0
    #allocation3 [shape = 'u8[65536]{0}', space=vmem, size = 0x10000, scoped, tag = 'input window, operand 2, single buffered']
    #allocation4 [shape = 's32[2]{0}', space=sflag, size = 0x8, scoped, tag = 'scoped memory for encoder_forward.4']
    #allocation5 [shape = 'u8[1024]{0}', space=vmem, size = 0x400, scoped, tag = 'input window, operand 3, single buffered']
    #allocation6 [shape = 's32[1]{0}', space=sflag, size = 0x4, scoped, tag = 'scoped memory for encoder_forward.4']
    #allocation7 [shape = 'u8[65536]{0}', space=vmem, size = 0x10000, scoped, tag = 'input window, operand 4, single buffered']
    #allocation8 [shape = 'u8[1024]{0}', space=vmem, size = 0x400, scoped, tag = 'input window, operand 5, single buffered']
    #allocation9 [shape = 's32[1]{0}', space=sflag, size = 0x4, scoped, tag = 'scoped memory for encoder_forward.4']
    #allocation10 [shape = 'u8[65536]{0}', space=vmem, size = 0x10000, scoped, tag = 'input window, operand 6, single buffered']
    #allocation11 [shape = 'u8[1024]{0}', space=vmem, size = 0x400, scoped, tag = 'input window, operand 7, single buffered']
    #allocation12 [shape = 's32[1]{0}', space=sflag, size = 0x4, scoped, tag = 'scoped memory for encoder_forward.4']
    #allocation13 [shape = 'u8[65536]{0}', space=vmem, size = 0x10000, scoped, tag = 'input window, operand 8, single buffered']
    #allocation14 [shape = 'u8[512]{0}', space=vmem, size = 0x400, scoped, tag = 'input window, operand 9, single buffered']
    #allocation15 [shape = 's32[1]{0}', space=sflag, size = 0x4, scoped, tag = 'scoped memory for encoder_forward.4']
    #allocation16 [shape = 'u8[512]{0}', space=vmem, size = 0x400, scoped, tag = 'input window, operand 10, single buffered']
    #allocation17 [shape = 'u8[512]{0}', space=vmem, size = 0x400, scoped, tag = 'input window, operand 11, single buffered']
    #allocation18 [shape = 's32[1]{0}', space=sflag, size = 0x4, scoped, tag = 'scoped memory for encoder_forward.4']
    %17 = vsyncpa [#allocation4], 0
    %18 = vsyncpa [#allocation6], 0
    %19 = vsyncpa [#allocation9], 0
    %20 = vsyncpa [#allocation12], 0
    %21 = vsyncpa [#allocation15], 0
    %22 = vsyncpa [#allocation18], 0
    loop: start=0, step=1, limit=4
    $region2: #{encoder_forward.4} parent=1 // loop_pre_header
      _
    $region3: #{encoder_forward.4} parent=1 // loop_header
      %s24 = sphi 0, %s28
      %p25 = scmp.ge.s32.totalorder %s24, 4
      %s34 = sphi 0, %s36
      %s37 = sphi 0, %s34
      %s38 = sphi 0, %s37
      %s54 = sphi 0, %s38
      %s60 = sphi 0, %s62
      %s63 = sphi 0, %s60
      %s64 = sphi 0, %s63
      %s80 = sphi 0, %s64
      %s84 = sphi 0, %s84
      %s86 = sphi 0, %s84
      %s87 = sphi 0, %s86
      %s101 = sphi 0, %s87
      %s105 = sphi 0, %s105
      %s107 = sphi 0, %s105
      %s108 = sphi 0, %s107
      %s122 = sphi 0, %s108
      %s126 = sphi 0, %s126
      %s128 = sphi 0, %s126
      %s129 = sphi 0, %s128
      %s143 = sphi 0, %s129
      %s147 = sphi 0, %s147
      %s149 = sphi 0, %s147
      %s150 = sphi 0, %s149
      %s164 = sphi 0, %s150
      %s168 = sphi 0, %s168
      %s170 = sphi 0, %s168
      %s171 = sphi 0, %s170
      %s185 = sphi 0, %s171
      %s189 = sphi 0, %s189
      %s191 = sphi 0, %s189
      %s192 = sphi 0, %s191
      %s206 = sphi 0, %s192
      %s210 = sphi 0, %s210
      %s212 = sphi 0, %s210
      %s213 = sphi 0, %s212
      %s227 = sphi 0, %s213
      %s231 = sphi 0, %s231
      %s233 = sphi 0, %s231
      %s234 = sphi 0, %s233
      %s248 = sphi 0, %s234
      %s252 = sphi 0, %s252
      %s254 = sphi 0, %s252
      %s255 = sphi 0, %s254
      %s269 = sphi 0, %s255
      %s273 = sphi 0, %s273
      %s275 = sphi 0, %s273
      %s276 = sphi 0, %s275
      %s290 = sphi 0, %s276
      %s296 = sphi 0, %s298
      %s299 = sphi 0, %s296
      %s300 = sphi 0, %s299
      %s316 = sphi 0, %s300
    $region4: #{encoder_forward.4} parent=1 // loop_header_branch
      %27 = sbr.rel (%p25) target = $region8
    $region5: #{encoder_forward.4} parent=1 // loop_body
      %s29 = ssub.s32 %s24, 1
      %s30 = ssub.s32 %s24, 2
      %s31 = sadd.s32 %s24, 1
      %s32 = ssub.s32 %s24, %s31
      %p33 = scmp.eq.s32.totalorder %s32, 0
      %s35 = sadd.s32 %s34, 1
      %s36 = scalar_select %p33, %s34, %s35
      %p39 = pneg %p33
      %p40 = scmp.eq.s32.totalorder %s24, 1
      %p41 = por %p39, %p40
      %p42 = scmp.ne.s32.totalorder %s34, %s37
      %p43 = scmp.eq.s32.totalorder %s24, 0
      %p44 = por %p42, %p43
      %p45 = scmp.ne.s32.totalorder %s34, %s37
      %p46 = scmp.eq.s32.totalorder %s29, 1
      %p47 = por %p45, %p46
      %p48 = scmp.ne.s32.totalorder %s37, %s38
      %p49 = scmp.eq.s32.totalorder %s29, 0
      %p50 = por %p48, %p49
      %p51 = scmp.ne.s32.totalorder %s37, %s38
      %p52 = scmp.eq.s32.totalorder %s30, 1
      %p53 = por %p51, %p52
      %p55 = scmp.ne.s32.totalorder %s38, %s54
      %p56 = scmp.eq.s32.totalorder %s30, 0
      %p57 = por %p55, %p56
      %s58 = ssub.s32 %s24, %s31
      %p59 = scmp.eq.s32.totalorder %s58, 0
      %s61 = sadd.s32 %s60, 1
      %s62 = scalar_select %p59, %s60, %s61
      %p65 = pneg %p59
      %p66 = scmp.eq.s32.totalorder %s24, 1
      %p67 = por %p65, %p66
      %p68 = scmp.ne.s32.totalorder %s60, %s63
      %p69 = scmp.eq.s32.totalorder %s24, 0
      %p70 = por %p68, %p69
      %p71 = scmp.ne.s32.totalorder %s60, %s63
      %p72 = scmp.eq.s32.totalorder %s29, 1
      %p73 = por %p71, %p72
      %p74 = scmp.ne.s32.totalorder %s63, %s64
      %p75 = scmp.eq.s32.totalorder %s29, 0
      %p76 = por %p74, %p75
      %p77 = scmp.ne.s32.totalorder %s63, %s64
      %p78 = scmp.eq.s32.totalorder %s30, 1
      %p79 = por %p77, %p78
      %p81 = scmp.ne.s32.totalorder %s64, %s80
      %p82 = scmp.eq.s32.totalorder %s30, 0
      %p83 = por %p81, %p82
      %s85 = sadd.s32 %s84, 1
      %p88 = scmp.eq.s32.totalorder %s24, 1
      %p89 = scmp.ne.s32.totalorder %s84, %s86
      %p90 = scmp.eq.s32.totalorder %s24, 0
      %p91 = por %p89, %p90
      %p92 = scmp.ne.s32.totalorder %s84, %s86
      %p93 = scmp.eq.s32.totalorder %s29, 1
      %p94 = por %p92, %p93
      %p95 = scmp.ne.s32.totalorder %s86, %s87
      %p96 = scmp.eq.s32.totalorder %s29, 0
      %p97 = por %p95, %p96
      %p98 = scmp.ne.s32.totalorder %s86, %s87
      %p99 = scmp.eq.s32.totalorder %s30, 1
      %p100 = por %p98, %p99
      %p102 = scmp.ne.s32.totalorder %s87, %s101
      %p103 = scmp.eq.s32.totalorder %s30, 0
      %p104 = por %p102, %p103
      %s106 = sadd.s32 %s105, 1
      %p109 = scmp.eq.s32.totalorder %s24, 1
      %p110 = scmp.ne.s32.totalorder %s105, %s107
      %p111 = scmp.eq.s32.totalorder %s24, 0
      %p112 = por %p110, %p111
      %p113 = scmp.ne.s32.totalorder %s105, %s107
      %p114 = scmp.eq.s32.totalorder %s29, 1
      %p115 = por %p113, %p114
      %p116 = scmp.ne.s32.totalorder %s107, %s108
      %p117 = scmp.eq.s32.totalorder %s29, 0
      %p118 = por %p116, %p117
      %p119 = scmp.ne.s32.totalorder %s107, %s108
      %p120 = scmp.eq.s32.totalorder %s30, 1
      %p121 = por %p119, %p120
      %p123 = scmp.ne.s32.totalorder %s108, %s122
      %p124 = scmp.eq.s32.totalorder %s30, 0
      %p125 = por %p123, %p124
      %s127 = sadd.s32 %s126, 1
      %p130 = scmp.eq.s32.totalorder %s24, 1
      %p131 = scmp.ne.s32.totalorder %s126, %s128
      %p132 = scmp.eq.s32.totalorder %s24, 0
      %p133 = por %p131, %p132
      %p134 = scmp.ne.s32.totalorder %s126, %s128
      %p135 = scmp.eq.s32.totalorder %s29, 1
      %p136 = por %p134, %p135
      %p137 = scmp.ne.s32.totalorder %s128, %s129
      %p138 = scmp.eq.s32.totalorder %s29, 0
      %p139 = por %p137, %p138
      %p140 = scmp.ne.s32.totalorder %s128, %s129
      %p141 = scmp.eq.s32.totalorder %s30, 1
      %p142 = por %p140, %p141
      %p144 = scmp.ne.s32.totalorder %s129, %s143
      %p145 = scmp.eq.s32.totalorder %s30, 0
      %p146 = por %p144, %p145
      %s148 = sadd.s32 %s147, 1
      %p151 = scmp.eq.s32.totalorder %s24, 1
      %p152 = scmp.ne.s32.totalorder %s147, %s149
      %p153 = scmp.eq.s32.totalorder %s24, 0
      %p154 = por %p152, %p153
      %p155 = scmp.ne.s32.totalorder %s147, %s149
      %p156 = scmp.eq.s32.totalorder %s29, 1
      %p157 = por %p155, %p156
      %p158 = scmp.ne.s32.totalorder %s149, %s150
      %p159 = scmp.eq.s32.totalorder %s29, 0
      %p160 = por %p158, %p159
      %p161 = scmp.ne.s32.totalorder %s149, %s150
      %p162 = scmp.eq.s32.totalorder %s30, 1
      %p163 = por %p161, %p162
      %p165 = scmp.ne.s32.totalorder %s150, %s164
      %p166 = scmp.eq.s32.totalorder %s30, 0
      %p167 = por %p165, %p166
      %s169 = sadd.s32 %s168, 1
      %p172 = scmp.eq.s32.totalorder %s24, 1
      %p173 = scmp.ne.s32.totalorder %s168, %s170
      %p174 = scmp.eq.s32.totalorder %s24, 0
      %p175 = por %p173, %p174
      %p176 = scmp.ne.s32.totalorder %s168, %s170
      %p177 = scmp.eq.s32.totalorder %s29, 1
      %p178 = por %p176, %p177
      %p179 = scmp.ne.s32.totalorder %s170, %s171
      %p180 = scmp.eq.s32.totalorder %s29, 0
      %p181 = por %p179, %p180
      %p182 = scmp.ne.s32.totalorder %s170, %s171
      %p183 = scmp.eq.s32.totalorder %s30, 1
      %p184 = por %p182, %p183
      %p186 = scmp.ne.s32.totalorder %s171, %s185
      %p187 = scmp.eq.s32.totalorder %s30, 0
      %p188 = por %p186, %p187
      %s190 = sadd.s32 %s189, 1
      %p193 = scmp.eq.s32.totalorder %s24, 1
      %p194 = scmp.ne.s32.totalorder %s189, %s191
      %p195 = scmp.eq.s32.totalorder %s24, 0
      %p196 = por %p194, %p195
      %p197 = scmp.ne.s32.totalorder %s189, %s191
      %p198 = scmp.eq.s32.totalorder %s29, 1
      %p199 = por %p197, %p198
      %p200 = scmp.ne.s32.totalorder %s191, %s192
      %p201 = scmp.eq.s32.totalorder %s29, 0
      %p202 = por %p200, %p201
      %p203 = scmp.ne.s32.totalorder %s191, %s192
      %p204 = scmp.eq.s32.totalorder %s30, 1
      %p205 = por %p203, %p204
      %p207 = scmp.ne.s32.totalorder %s192, %s206
      %p208 = scmp.eq.s32.totalorder %s30, 0
      %p209 = por %p207, %p208
      %s211 = sadd.s32 %s210, 1
      %p214 = scmp.eq.s32.totalorder %s24, 1
      %p215 = scmp.ne.s32.totalorder %s210, %s212
      %p216 = scmp.eq.s32.totalorder %s24, 0
      %p217 = por %p215, %p216
      %p218 = scmp.ne.s32.totalorder %s210, %s212
      %p219 = scmp.eq.s32.totalorder %s29, 1
      %p220 = por %p218, %p219
      %p221 = scmp.ne.s32.totalorder %s212, %s213
      %p222 = scmp.eq.s32.totalorder %s29, 0
      %p223 = por %p221, %p222
      %p224 = scmp.ne.s32.totalorder %s212, %s213
      %p225 = scmp.eq.s32.totalorder %s30, 1
      %p226 = por %p224, %p225
      %p228 = scmp.ne.s32.totalorder %s213, %s227
      %p229 = scmp.eq.s32.totalorder %s30, 0
      %p230 = por %p228, %p229
      %s232 = sadd.s32 %s231, 1
      %p235 = scmp.eq.s32.totalorder %s24, 1
      %p236 = scmp.ne.s32.totalorder %s231, %s233
      %p237 = scmp.eq.s32.totalorder %s24, 0
      %p238 = por %p236, %p237
      %p239 = scmp.ne.s32.totalorder %s231, %s233
      %p240 = scmp.eq.s32.totalorder %s29, 1
      %p241 = por %p239, %p240
      %p242 = scmp.ne.s32.totalorder %s233, %s234
      %p243 = scmp.eq.s32.totalorder %s29, 0
      %p244 = por %p242, %p243
      %p245 = scmp.ne.s32.totalorder %s233, %s234
      %p246 = scmp.eq.s32.totalorder %s30, 1
      %p247 = por %p245, %p246
      %p249 = scmp.ne.s32.totalorder %s234, %s248
      %p250 = scmp.eq.s32.totalorder %s30, 0
      %p251 = por %p249, %p250
      %s253 = sadd.s32 %s252, 1
      %p256 = scmp.eq.s32.totalorder %s24, 1
      %p257 = scmp.ne.s32.totalorder %s252, %s254
      %p258 = scmp.eq.s32.totalorder %s24, 0
      %p259 = por %p257, %p258
      %p260 = scmp.ne.s32.totalorder %s252, %s254
      %p261 = scmp.eq.s32.totalorder %s29, 1
      %p262 = por %p260, %p261
      %p263 = scmp.ne.s32.totalorder %s254, %s255
      %p264 = scmp.eq.s32.totalorder %s29, 0
      %p265 = por %p263, %p264
      %p266 = scmp.ne.s32.totalorder %s254, %s255
      %p267 = scmp.eq.s32.totalorder %s30, 1
      %p268 = por %p266, %p267
      %p270 = scmp.ne.s32.totalorder %s255, %s269
      %p271 = scmp.eq.s32.totalorder %s30, 0
      %p272 = por %p270, %p271
      %s274 = sadd.s32 %s273, 1
      %p277 = scmp.eq.s32.totalorder %s24, 1
      %p278 = scmp.ne.s32.totalorder %s273, %s275
      %p279 = scmp.eq.s32.totalorder %s24, 0
      %p280 = por %p278, %p279
      %p281 = scmp.ne.s32.totalorder %s273, %s275
      %p282 = scmp.eq.s32.totalorder %s29, 1
      %p283 = por %p281, %p282
      %p284 = scmp.ne.s32.totalorder %s275, %s276
      %p285 = scmp.eq.s32.totalorder %s29, 0
      %p286 = por %p284, %p285
      %p287 = scmp.ne.s32.totalorder %s275, %s276
      %p288 = scmp.eq.s32.totalorder %s30, 1
      %p289 = por %p287, %p288
      %p291 = scmp.ne.s32.totalorder %s276, %s290
      %p292 = scmp.eq.s32.totalorder %s30, 0
      %p293 = por %p291, %p292
      %s294 = ssub.s32 %s24, %s31
      %p295 = scmp.eq.s32.totalorder %s294, 0
      %s297 = sadd.s32 %s296, 1
      %s298 = scalar_select %p295, %s296, %s297
      %p301 = pneg %p295
      %p302 = scmp.eq.s32.totalorder %s24, 1
      %p303 = por %p301, %p302
      %p304 = scmp.ne.s32.totalorder %s296, %s299
      %p305 = scmp.eq.s32.totalorder %s24, 0
      %p306 = por %p304, %p305
      %p307 = scmp.ne.s32.totalorder %s296, %s299
      %p308 = scmp.eq.s32.totalorder %s29, 1
      %p309 = por %p307, %p308
      %p310 = scmp.ne.s32.totalorder %s299, %s300
      %p311 = scmp.eq.s32.totalorder %s29, 0
      %p312 = por %p310, %p311
      %p313 = scmp.ne.s32.totalorder %s299, %s300
      %p314 = scmp.eq.s32.totalorder %s30, 1
      %p315 = por %p313, %p314
      %p317 = scmp.ne.s32.totalorder %s300, %s316
      %p318 = scmp.eq.s32.totalorder %s30, 0
      %p319 = por %p317, %p318
      %p320 = scmp.le.s32.totalorder 1, %s24
      %p321 = scmp.lt.s32.totalorder %s24, 3
      %p322 = pnand %p320, %p321
      %p323 = pneg %p322
      // Predicated region
      $region9: #{encoder_forward.4} parent=5 // pred_check
        _
      $region10: #{encoder_forward.4} parent=5 // pred_check_branch
        %325 = sbr.rel (%p322) target = $region12
      $region11: #{encoder_forward.4} parent=5 // pred_region
        %s326 = ssub.s32 %s24, 1
        // Predicated region
        $region13: #{encoder_forward.4} parent=11 // pred_check
          %p327 = pneg %p97
        $region14: #{encoder_forward.4} parent=11 // pred_check_branch
          %329 = sbr.rel (%p327) target = $region16
        $region15: #{encoder_forward.4} parent=11 // pred_region
          %s331 = ssub.s32 2048, 2048
          %332 = vsyncadd [#allocation4], %s331
          %s333 = sshll.u32 [#allocation3], 4
          %s334 = int_to_ptr.vmem [resolvable:$true] %s333
          %339 = dma.hbm_to_vmem [thread:$0]  %s2, 2048, %s334, [#allocation4], 128, 128, 8
        $region16: #{encoder_forward.4} parent=11 // pred_fallthru
          _
        // Predicated region
        $region17: #{encoder_forward.4} parent=11 // pred_check
          %p340 = pneg %p118
        $region18: #{encoder_forward.4} parent=11 // pred_check_branch
          %342 = sbr.rel (%p340) target = $region20
        $region19: #{encoder_forward.4} parent=11 // pred_region
          %s344 = ssub.s32 32, 32
          %345 = vsyncadd [#allocation6], %s344
          %s347 = sshll.u32 [#allocation5], 4
          %s348 = int_to_ptr.vmem [resolvable:$true] %s347
          %350 = dma.hbm_to_vmem [thread:$0]  %s3, 32, %s348, [#allocation6]
        $region20: #{encoder_forward.4} parent=11 // pred_fallthru
          _
        // Predicated region
        $region21: #{encoder_forward.4} parent=11 // pred_check
          %p351 = pneg %p139
        $region22: #{encoder_forward.4} parent=11 // pred_check_branch
          %353 = sbr.rel (%p351) target = $region24
        $region23: #{encoder_forward.4} parent=11 // pred_region
          %s355 = ssub.s32 2048, 2048
          %356 = vsyncadd [#allocation6], %s355
          %s357 = sshll.u32 [#allocation7], 4
          %s358 = int_to_ptr.vmem [resolvable:$true] %s357
          %363 = dma.hbm_to_vmem [thread:$0]  %s4, 2048, %s358, [#allocation6], 128, 128, 8
        $region24: #{encoder_forward.4} parent=11 // pred_fallthru
          _
        // Predicated region
        $region25: #{encoder_forward.4} parent=11 // pred_check
          %p364 = pneg %p160
        $region26: #{encoder_forward.4} parent=11 // pred_check_branch
          %366 = sbr.rel (%p364) target = $region28
        $region27: #{encoder_forward.4} parent=11 // pred_region
          %s368 = ssub.s32 32, 32
          %369 = vsyncadd [#allocation9], %s368
          %s371 = sshll.u32 [#allocation8], 4
          %s372 = int_to_ptr.vmem [resolvable:$true] %s371
          %374 = dma.hbm_to_vmem [thread:$0]  %s5, 32, %s372, [#allocation9]
        $region28: #{encoder_forward.4} parent=11 // pred_fallthru
          _
        // Predicated region
        $region29: #{encoder_forward.4} parent=11 // pred_check
          %p375 = pneg %p181
        $region30: #{encoder_forward.4} parent=11 // pred_check_branch
          %377 = sbr.rel (%p375) target = $region32
        $region31: #{encoder_forward.4} parent=11 // pred_region
          %s379 = ssub.s32 2048, 2048
          %380 = vsyncadd [#allocation9], %s379
          %s381 = sshll.u32 [#allocation10], 4
          %s382 = int_to_ptr.vmem [resolvable:$true] %s381
          %387 = dma.hbm_to_vmem [thread:$0]  %s6, 2048, %s382, [#allocation9], 128, 128, 8
        $region32: #{encoder_forward.4} parent=11 // pred_fallthru
          _
        // Predicated region
        $region33: #{encoder_forward.4} parent=11 // pred_check
          %p388 = pneg %p202
        $region34: #{encoder_forward.4} parent=11 // pred_check_branch
          %390 = sbr.rel (%p388) target = $region36
        $region35: #{encoder_forward.4} parent=11 // pred_region
          %s392 = ssub.s32 32, 32
          %393 = vsyncadd [#allocation12], %s392
          %s395 = sshll.u32 [#allocation11], 4
          %s396 = int_to_ptr.vmem [resolvable:$true] %s395
          %398 = dma.hbm_to_vmem [thread:$0]  %s7, 32, %s396, [#allocation12]
        $region36: #{encoder_forward.4} parent=11 // pred_fallthru
          _
        // Predicated region
        $region37: #{encoder_forward.4} parent=11 // pred_check
          %p399 = pneg %p223
        $region38: #{encoder_forward.4} parent=11 // pred_check_branch
          %401 = sbr.rel (%p399) target = $region40
        $region39: #{encoder_forward.4} parent=11 // pred_region
          %s403 = ssub.s32 2048, 2048
          %404 = vsyncadd [#allocation12], %s403
          %s405 = sshll.u32 [#allocation13], 4
          %s406 = int_to_ptr.vmem [resolvable:$true] %s405
          %411 = dma.hbm_to_vmem [thread:$0]  %s8, 2048, %s406, [#allocation12], 64, 64, 4
        $region40: #{encoder_forward.4} parent=11 // pred_fallthru
          _
        // Predicated region
        $region41: #{encoder_forward.4} parent=11 // pred_check
          %p412 = pneg %p244
        $region42: #{encoder_forward.4} parent=11 // pred_check_branch
          %414 = sbr.rel (%p412) target = $region44
        $region43: #{encoder_forward.4} parent=11 // pred_region
          %s416 = ssub.s32 16, 16
          %417 = vsyncadd [#allocation15], %s416
          %s419 = sshll.u32 [#allocation14], 4
          %s420 = int_to_ptr.vmem [resolvable:$true] %s419
          %422 = dma.hbm_to_vmem [thread:$0]  %s9, 16, %s420, [#allocation15]
        $region44: #{encoder_forward.4} parent=11 // pred_fallthru
          _
        // Predicated region
        $region45: #{encoder_forward.4} parent=11 // pred_check
          %p423 = pneg %p265
        $region46: #{encoder_forward.4} parent=11 // pred_check_branch
          %425 = sbr.rel (%p423) target = $region48
        $region47: #{encoder_forward.4} parent=11 // pred_region
          %s427 = ssub.s32 16, 16
          %428 = vsyncadd [#allocation15], %s427
          %s430 = sshll.u32 [#allocation16], 4
          %s431 = int_to_ptr.vmem [resolvable:$true] %s430
          %433 = dma.hbm_to_vmem [thread:$0]  %s10, 16, %s431, [#allocation15]
        $region48: #{encoder_forward.4} parent=11 // pred_fallthru
          _
        // Predicated region
        $region49: #{encoder_forward.4} parent=11 // pred_check
          %p434 = pneg %p286
        $region50: #{encoder_forward.4} parent=11 // pred_check_branch
          %436 = sbr.rel (%p434) target = $region52
        $region51: #{encoder_forward.4} parent=11 // pred_region
          %s438 = ssub.s32 16, 16
          %439 = vsyncadd [#allocation18], %s438
          %s441 = sshll.u32 [#allocation17], 4
          %s442 = int_to_ptr.vmem [resolvable:$true] %s441
          %444 = dma.hbm_to_vmem [thread:$0]  %s11, 16, %s442, [#allocation18]
        $region52: #{encoder_forward.4} parent=11 // pred_fallthru
          _
      $region12: #{encoder_forward.4} parent=5 // pred_fallthru
        _
      %p445 = scmp.lt.s32.totalorder %s24, 2
      // Predicated region
      $region53: #{encoder_forward.4} parent=5 // pred_check
        %p446 = pneg %p445
      $region54: #{encoder_forward.4} parent=5 // pred_check_branch
        %448 = sbr.rel (%p446) target = $region56
      $region55: #{encoder_forward.4} parent=5 // pred_region
        // Predicated region
        $region57: #{encoder_forward.4} parent=55 // pred_check
          %p449 = pneg %p44
        $region58: #{encoder_forward.4} parent=55 // pred_check_branch
          %451 = sbr.rel (%p449) target = $region60
        $region59: #{encoder_forward.4} parent=55 // pred_region
          %p452 = scmp.lt.s32.totalorder %s24, 1
          %s453 = scalar_select %p452, %s24, 1
          %s454 = smul.addr %s453, 2
          %s455 = smul.addr %s454, 8
          %s456 = scalar_lea.vmem %s0, %s455
        $region60: #{encoder_forward.4} parent=55 // pred_fallthru
          _
        // Predicated region
        $region61: #{encoder_forward.4} parent=55 // pred_check
          %p457 = pneg %p70
        $region62: #{encoder_forward.4} parent=55 // pred_check_branch
          %459 = sbr.rel (%p457) target = $region64
        $region63: #{encoder_forward.4} parent=55 // pred_region
          %p460 = scmp.lt.s32.totalorder %s24, 1
          %s461 = scalar_select %p460, %s24, 1
          %s462 = scalar_lea.vmem %s1, %s461
        $region64: #{encoder_forward.4} parent=55 // pred_fallthru
          _
      $region56: #{encoder_forward.4} parent=5 // pred_fallthru
        _
      %p463 = scmp.le.s32.totalorder 1, %s24
      %p464 = scmp.lt.s32.totalorder %s24, 3
      %p465 = pnand %p463, %p464
      %p466 = pneg %p465
      // Predicated region
      $region65: #{encoder_forward.4} parent=5 // pred_check
        _
      $region66: #{encoder_forward.4} parent=5 // pred_check_branch
        %468 = sbr.rel (%p465) target = $region68
      $region67: #{encoder_forward.4} parent=5 // pred_region
        %s469 = ssub.s32 %s24, 1
        // Predicated region
        $region69: #{encoder_forward.4} parent=67 // pred_check
          %p470 = pneg %p97
        $region70: #{encoder_forward.4} parent=67 // pred_check_branch
          %472 = sbr.rel (%p470) target = $region72
        $region71: #{encoder_forward.4} parent=67 // pred_region
          %473 = dma.done [#allocation4], 2048
        $region72: #{encoder_forward.4} parent=67 // pred_fallthru
          _
        // Predicated region
        $region73: #{encoder_forward.4} parent=67 // pred_check
          %p474 = pneg %p118
        $region74: #{encoder_forward.4} parent=67 // pred_check_branch
          %476 = sbr.rel (%p474) target = $region76
        $region75: #{encoder_forward.4} parent=67 // pred_region
          %477 = dma.done [#allocation6], 32
        $region76: #{encoder_forward.4} parent=67 // pred_fallthru
          _
        // Predicated region
        $region77: #{encoder_forward.4} parent=67 // pred_check
          %p478 = pneg %p139
        $region78: #{encoder_forward.4} parent=67 // pred_check_branch
          %480 = sbr.rel (%p478) target = $region80
        $region79: #{encoder_forward.4} parent=67 // pred_region
          %481 = dma.done [#allocation6], 2048
        $region80: #{encoder_forward.4} parent=67 // pred_fallthru
          _
        // Predicated region
        $region81: #{encoder_forward.4} parent=67 // pred_check
          %p482 = pneg %p160
        $region82: #{encoder_forward.4} parent=67 // pred_check_branch
          %484 = sbr.rel (%p482) target = $region84
        $region83: #{encoder_forward.4} parent=67 // pred_region
          %485 = dma.done [#allocation9], 32
        $region84: #{encoder_forward.4} parent=67 // pred_fallthru
          _
        // Predicated region
        $region85: #{encoder_forward.4} parent=67 // pred_check
          %p486 = pneg %p181
        $region86: #{encoder_forward.4} parent=67 // pred_check_branch
          %488 = sbr.rel (%p486) target = $region88
        $region87: #{encoder_forward.4} parent=67 // pred_region
          %489 = dma.done [#allocation9], 2048
        $region88: #{encoder_forward.4} parent=67 // pred_fallthru
          _
        // Predicated region
        $region89: #{encoder_forward.4} parent=67 // pred_check
          %p490 = pneg %p202
        $region90: #{encoder_forward.4} parent=67 // pred_check_branch
          %492 = sbr.rel (%p490) target = $region92
        $region91: #{encoder_forward.4} parent=67 // pred_region
          %493 = dma.done [#allocation12], 32
        $region92: #{encoder_forward.4} parent=67 // pred_fallthru
          _
        // Predicated region
        $region93: #{encoder_forward.4} parent=67 // pred_check
          %p494 = pneg %p223
        $region94: #{encoder_forward.4} parent=67 // pred_check_branch
          %496 = sbr.rel (%p494) target = $region96
        $region95: #{encoder_forward.4} parent=67 // pred_region
          %497 = dma.done [#allocation12], 2048
        $region96: #{encoder_forward.4} parent=67 // pred_fallthru
          _
        // Predicated region
        $region97: #{encoder_forward.4} parent=67 // pred_check
          %p498 = pneg %p244
        $region98: #{encoder_forward.4} parent=67 // pred_check_branch
          %500 = sbr.rel (%p498) target = $region100
        $region99: #{encoder_forward.4} parent=67 // pred_region
          %501 = dma.done [#allocation15], 16
        $region100: #{encoder_forward.4} parent=67 // pred_fallthru
          _
        // Predicated region
        $region101: #{encoder_forward.4} parent=67 // pred_check
          %p502 = pneg %p265
        $region102: #{encoder_forward.4} parent=67 // pred_check_branch
          %504 = sbr.rel (%p502) target = $region104
        $region103: #{encoder_forward.4} parent=67 // pred_region
          %505 = dma.done [#allocation15], 16
        $region104: #{encoder_forward.4} parent=67 // pred_fallthru
          _
        // Predicated region
        $region105: #{encoder_forward.4} parent=67 // pred_check
          %p506 = pneg %p286
        $region106: #{encoder_forward.4} parent=67 // pred_check_branch
          %508 = sbr.rel (%p506) target = $region108
        $region107: #{encoder_forward.4} parent=67 // pred_region
          %509 = dma.done [#allocation18], 16
        $region108: #{encoder_forward.4} parent=67 // pred_fallthru
          _
        %p510 = scmp.lt.s32.totalorder %s29, 1
        %s511 = scalar_select %p510, %s29, 1
        %s512 = smul.addr %s511, 2
        %s513 = smul.addr %s512, 8
        %s514 = scalar_lea.vmem %s0, %s513
        %p515 = pneg %p50
        %p516 = pneg %p47
        %p517 = scmp.lt.s32.totalorder %s29, 1
        %s518 = scalar_select %p517, %s29, 1
        %s519 = scalar_lea.vmem %s1, %s518
        %p520 = pneg %p76
        %p521 = pneg %p73
        %p522 = pneg %p97
        %p523 = pneg %p94
        %p524 = pneg %p118
        %p525 = pneg %p115
        %p526 = pneg %p139
        %p527 = pneg %p136
        %p528 = pneg %p160
        %p529 = pneg %p157
        %p530 = pneg %p181
        %p531 = pneg %p178
        %p532 = pneg %p202
        %p533 = pneg %p199
        %p534 = pneg %p223
        %p535 = pneg %p220
        %p536 = pneg %p244
        %p537 = pneg %p241
        %p538 = pneg %p265
        %p539 = pneg %p262
        %p540 = pneg %p286
        %p541 = pneg %p283
        %p542 = pneg %p312
        %p543 = pneg %p309
        %p544 = scmp.lt.s32.totalorder %s29, 1
        %s545 = scalar_select %p544, %s29, 1
        %s546 = smul.addr %s545, 2
        %s547 = smul.addr %s546, 8
        %s548 = scalar_lea.vmem %s12, %s547
        %p549 = scmp.lt.s32.totalorder %s29, 1
        %s550 = scalar_select %p549, %s29, 1
        %s551 = smul.addr %s550, 2
        %s552 = smul.addr %s551, 8
        %s553 = scalar_lea.vmem %s0, %s552
        %p554 = scmp.lt.s32.totalorder %s29, 1
        %s555 = scalar_select %p554, %s29, 1
        %s556 = scalar_lea.vmem %s1, %s555
        %p557 = scmp.lt.s32.totalorder %s29, 1
        %s558 = scalar_select %p557, %s29, 1
        %s559 = smul.addr %s558, 2
        %s560 = smul.addr %s559, 8
        %s561 = scalar_lea.vmem %s12, %s560
        %v563 = vld [vmem:[%s553] sm:$0xff]
        %v564 = vld [vmem:[%s553 + $0x8] sm:$0xff]
        %v565 = vpack.c.bf16 %v564, %v563
        %v566 = vld [vmem:[#allocation3] sm:$0xff]
        %v567 = vld [vmem:[#allocation3 + $0x8] sm:$0xff]
        %v568 = vld [vmem:[#allocation3 + $0x10] sm:$0xff]
        %v569 = vld [vmem:[#allocation3 + $0x18] sm:$0xff]
        %v570 = vld [vmem:[#allocation3 + $0x20] sm:$0xff]
        %v571 = vld [vmem:[#allocation3 + $0x28] sm:$0xff]
        %v572 = vld [vmem:[#allocation3 + $0x30] sm:$0xff]
        %v573 = vld [vmem:[#allocation3 + $0x38] sm:$0xff]
        %v574 = vld [vmem:[#allocation3 + $0x40] sm:$0xff]
        %v575 = vld [vmem:[#allocation3 + $0x48] sm:$0xff]
        %v576 = vld [vmem:[#allocation3 + $0x50] sm:$0xff]
        %v577 = vld [vmem:[#allocation3 + $0x58] sm:$0xff]
        %v578 = vld [vmem:[#allocation3 + $0x60] sm:$0xff]
        %v579 = vld [vmem:[#allocation3 + $0x68] sm:$0xff]
        %v580 = vld [vmem:[#allocation3 + $0x70] sm:$0xff]
        %v581 = vld [vmem:[#allocation3 + $0x78] sm:$0xff]
        %v582 = vld [vmem:[#allocation5] sm:$0x3]
        %v584 = vlaneseq
        %v585 = vshrl.u32 %v584, 7
        %v586 = vsub.s32 0, %v585
        %v587 = vrot.slane %v582, %v586
        %v588 = vlaneseq
        %v589 = vshrl.u32 %v588, 7
        %v590 = vsub.s32 1, %v589
        %v591 = vrot.slane %v582, %v590
        %v610 = vunpack.c.l.b16 %v566
        %v611 = vunpack.c.h.b16 %v566
        %v612 = vunpack.c.l.b16 %v567
        %v613 = vunpack.c.h.b16 %v567
        %v614 = vunpack.c.l.b16 %v568
        %v615 = vunpack.c.h.b16 %v568
        %v616 = vunpack.c.l.b16 %v569
        %v617 = vunpack.c.h.b16 %v569
        %v618 = vunpack.c.l.b16 %v570
        %v619 = vunpack.c.h.b16 %v570
        %v620 = vunpack.c.l.b16 %v571
        %v621 = vunpack.c.h.b16 %v571
        %v622 = vunpack.c.l.b16 %v572
        %v623 = vunpack.c.h.b16 %v572
        %v624 = vunpack.c.l.b16 %v573
        %v625 = vunpack.c.h.b16 %v573
        %v626 = vunpack.c.l.b16 %v574
        %v627 = vunpack.c.h.b16 %v574
        %v628 = vunpack.c.l.b16 %v575
        %v629 = vunpack.c.h.b16 %v575
        %v630 = vunpack.c.l.b16 %v576
        %v631 = vunpack.c.h.b16 %v576
        %v632 = vunpack.c.l.b16 %v577
        %v633 = vunpack.c.h.b16 %v577
        %v634 = vunpack.c.l.b16 %v578
        %v635 = vunpack.c.h.b16 %v578
        %v636 = vunpack.c.l.b16 %v579
        %v637 = vunpack.c.h.b16 %v579
        %v638 = vunpack.c.l.b16 %v580
        %v639 = vunpack.c.h.b16 %v580
        %v640 = vunpack.c.l.b16 %v581
        %v641 = vunpack.c.h.b16 %v581
        %v642 = vpack.c.b16 %v612, %v610
        %v643 = vpack.c.b16 %v613, %v611
        %v644 = vpack.c.b16 %v616, %v614
        %v645 = vpack.c.b16 %v617, %v615
        %v646 = vpack.c.b16 %v620, %v618
        %v647 = vpack.c.b16 %v621, %v619
        %v648 = vpack.c.b16 %v624, %v622
        %v649 = vpack.c.b16 %v625, %v623
        %v650 = vpack.c.b16 %v628, %v626
        %v651 = vpack.c.b16 %v629, %v627
        %v652 = vpack.c.b16 %v632, %v630
        %v653 = vpack.c.b16 %v633, %v631
        %v654 = vpack.c.b16 %v636, %v634
        %v655 = vpack.c.b16 %v637, %v635
        %v656 = vpack.c.b16 %v640, %v638
        %v657 = vpack.c.b16 %v641, %v639
        %674 = vmatprep.subr.bf16.mxu0 %v643
        %675 = vmatpush1.bf16.msra.mxu0 %v642
        %676 = vmatprep.subr.bf16.mxu0 %v645
        %677 = vmatpush1.bf16.msra.mxu0 %v644
        %678 = vmatprep.subr.bf16.mxu0 %v647
        %679 = vmatpush1.bf16.msra.mxu0 %v646
        %680 = vmatprep.subr.bf16.mxu0 %v649
        %681 = vmatpush1.bf16.msra.mxu0 %v648
        %682 = vmatprep.subr.bf16.mxu0 %v651
        %683 = vmatpush1.bf16.msra.mxu0 %v650
        %684 = vmatprep.subr.bf16.mxu0 %v653
        %685 = vmatpush1.bf16.msra.mxu0 %v652
        %686 = vmatprep.subr.bf16.mxu0 %v655
        %687 = vmatpush1.bf16.msra.mxu0 %v654
        %688 = vmatprep.subr.bf16.mxu0 %v657
        %689 = vmatpush1.bf16.msra.mxu0 %v656
        %690 = vmatprep.subr.bf16.mxu0 0
        %691 = vmatpush1.bf16.msra.mxu0 0
        %692 = vmatprep.subr.bf16.mxu0 0
        %693 = vmatpush1.bf16.msra.mxu0 0
        %694 = vmatprep.subr.bf16.mxu0 0
        %695 = vmatpush1.bf16.msra.mxu0 0
        %696 = vmatprep.subr.bf16.mxu0 0
        %697 = vmatpush1.bf16.msra.mxu0 0
        %698 = vmatprep.subr.bf16.mxu0 0
        %699 = vmatpush1.bf16.msra.mxu0 0
        %700 = vmatprep.subr.bf16.mxu0 0
        %701 = vmatpush1.bf16.msra.mxu0 0
        %702 = vmatprep.subr.bf16.mxu0 0
        %703 = vmatpush1.bf16.msra.mxu0 0
        %704 = vmatprep.subr.bf16.mxu0 0
        %705 = vmatpush1.bf16.msra.mxu0 0
        %706 = vmatprep.mubr.bf16.mxu0 0
        %707 = vmatmul.mubr.bf16.gmra.mrb[0].mxu0 %v565
        %v708 = vpop.f32.mrb[0].mxu0
        %v709 = vadd.f32 %v587, %v708
        %v710 = vpop.f32.mrb[0].mxu0
        %v711 = vadd.f32 %v591, %v710
        %v712 = vpop.f32.mrb[0].mxu0
        %v713 = vadd.f32 %v587, %v712
        %v714 = vpop.f32.mrb[0].mxu0
        %v715 = vadd.f32 %v591, %v714
        %716 = vdwg.mxu0
        %v717 = vld [vmem:[#allocation7] sm:$0xff]
        %v718 = vld [vmem:[#allocation7 + $0x8] sm:$0xff]
        %v719 = vld [vmem:[#allocation7 + $0x10] sm:$0xff]
        %v720 = vld [vmem:[#allocation7 + $0x18] sm:$0xff]
        %v721 = vld [vmem:[#allocation7 + $0x20] sm:$0xff]
        %v722 = vld [vmem:[#allocation7 + $0x28] sm:$0xff]
        %v723 = vld [vmem:[#allocation7 + $0x30] sm:$0xff]
        %v724 = vld [vmem:[#allocation7 + $0x38] sm:$0xff]
        %v725 = vld [vmem:[#allocation7 + $0x40] sm:$0xff]
        %v726 = vld [vmem:[#allocation7 + $0x48] sm:$0xff]
        %v727 = vld [vmem:[#allocation7 + $0x50] sm:$0xff]
        %v728 = vld [vmem:[#allocation7 + $0x58] sm:$0xff]
        %v729 = vld [vmem:[#allocation7 + $0x60] sm:$0xff]
        %v730 = vld [vmem:[#allocation7 + $0x68] sm:$0xff]
        %v731 = vld [vmem:[#allocation7 + $0x70] sm:$0xff]
        %v732 = vld [vmem:[#allocation7 + $0x78] sm:$0xff]
        %v733 = vld [vmem:[#allocation8] sm:$0x3]
        %v735 = vlaneseq
        %v736 = vshrl.u32 %v735, 7
        %v737 = vsub.s32 0, %v736
        %v738 = vrot.slane %v733, %v737
        %v739 = vlaneseq
        %v740 = vshrl.u32 %v739, 7
        %v741 = vsub.s32 1, %v740
        %v742 = vrot.slane %v733, %v741
        %v761 = vunpack.c.l.b16 %v717
        %v762 = vunpack.c.h.b16 %v717
        %v763 = vunpack.c.l.b16 %v718
        %v764 = vunpack.c.h.b16 %v718
        %v765 = vunpack.c.l.b16 %v719
        %v766 = vunpack.c.h.b16 %v719
        %v767 = vunpack.c.l.b16 %v720
        %v768 = vunpack.c.h.b16 %v720
        %v769 = vunpack.c.l.b16 %v721
        %v770 = vunpack.c.h.b16 %v721
        %v771 = vunpack.c.l.b16 %v722
        %v772 = vunpack.c.h.b16 %v722
        %v773 = vunpack.c.l.b16 %v723
        %v774 = vunpack.c.h.b16 %v723
        %v775 = vunpack.c.l.b16 %v724
        %v776 = vunpack.c.h.b16 %v724
        %v777 = vunpack.c.l.b16 %v725
        %v778 = vunpack.c.h.b16 %v725
        %v779 = vunpack.c.l.b16 %v726
        %v780 = vunpack.c.h.b16 %v726
        %v781 = vunpack.c.l.b16 %v727
        %v782 = vunpack.c.h.b16 %v727
        %v783 = vunpack.c.l.b16 %v728
        %v784 = vunpack.c.h.b16 %v728
        %v785 = vunpack.c.l.b16 %v729
        %v786 = vunpack.c.h.b16 %v729
        %v787 = vunpack.c.l.b16 %v730
        %v788 = vunpack.c.h.b16 %v730
        %v789 = vunpack.c.l.b16 %v731
        %v790 = vunpack.c.h.b16 %v731
        %v791 = vunpack.c.l.b16 %v732
        %v792 = vunpack.c.h.b16 %v732
        %v793 = vpack.c.b16 %v763, %v761
        %v794 = vpack.c.b16 %v764, %v762
        %v795 = vpack.c.b16 %v767, %v765
        %v796 = vpack.c.b16 %v768, %v766
        %v797 = vpack.c.b16 %v771, %v769
        %v798 = vpack.c.b16 %v772, %v770
        %v799 = vpack.c.b16 %v775, %v773
        %v800 = vpack.c.b16 %v776, %v774
        %v801 = vpack.c.b16 %v779, %v777
        %v802 = vpack.c.b16 %v780, %v778
        %v803 = vpack.c.b16 %v783, %v781
        %v804 = vpack.c.b16 %v784, %v782
        %v805 = vpack.c.b16 %v787, %v785
        %v806 = vpack.c.b16 %v788, %v786
        %v807 = vpack.c.b16 %v791, %v789
        %v808 = vpack.c.b16 %v792, %v790
        %825 = vmatprep.subr.bf16.mxu0 %v794
        %826 = vmatpush1.bf16.msra.mxu0 %v793
        %827 = vmatprep.subr.bf16.mxu0 %v796
        %828 = vmatpush1.bf16.msra.mxu0 %v795
        %829 = vmatprep.subr.bf16.mxu0 %v798
        %830 = vmatpush1.bf16.msra.mxu0 %v797
        %831 = vmatprep.subr.bf16.mxu0 %v800
        %832 = vmatpush1.bf16.msra.mxu0 %v799
        %833 = vmatprep.subr.bf16.mxu0 %v802
        %834 = vmatpush1.bf16.msra.mxu0 %v801
        %835 = vmatprep.subr.bf16.mxu0 %v804
        %836 = vmatpush1.bf16.msra.mxu0 %v803
        %837 = vmatprep.subr.bf16.mxu0 %v806
        %838 = vmatpush1.bf16.msra.mxu0 %v805
        %839 = vmatprep.subr.bf16.mxu0 %v808
        %840 = vmatpush1.bf16.msra.mxu0 %v807
        %841 = vmatprep.subr.bf16.mxu0 0
        %842 = vmatpush1.bf16.msra.mxu0 0
        %843 = vmatprep.subr.bf16.mxu0 0
        %844 = vmatpush1.bf16.msra.mxu0 0
        %845 = vmatprep.subr.bf16.mxu0 0
        %846 = vmatpush1.bf16.msra.mxu0 0
        %847 = vmatprep.subr.bf16.mxu0 0
        %848 = vmatpush1.bf16.msra.mxu0 0
        %849 = vmatprep.subr.bf16.mxu0 0
        %850 = vmatpush1.bf16.msra.mxu0 0
        %851 = vmatprep.subr.bf16.mxu0 0
        %852 = vmatpush1.bf16.msra.mxu0 0
        %853 = vmatprep.subr.bf16.mxu0 0
        %854 = vmatpush1.bf16.msra.mxu0 0
        %855 = vmatprep.subr.bf16.mxu0 0
        %856 = vmatpush1.bf16.msra.mxu0 0
        %857 = vmatprep.mubr.bf16.mxu0 0
        %858 = vmatmul.mubr.bf16.gmra.mrb[0].mxu0 %v565
        %v859 = vpop.f32.mrb[0].mxu0
        %v860 = vadd.f32 %v738, %v859
        %v861 = vpop.f32.mrb[0].mxu0
        %v862 = vadd.f32 %v742, %v861
        %v863 = vpop.f32.mrb[0].mxu0
        %v864 = vadd.f32 %v738, %v863
        %v865 = vpop.f32.mrb[0].mxu0
        %v866 = vadd.f32 %v742, %v865
        %867 = vdwg.mxu0
        %v868 = vld [vmem:[#allocation10] sm:$0xff]
        %v869 = vld [vmem:[#allocation10 + $0x8] sm:$0xff]
        %v870 = vld [vmem:[#allocation10 + $0x10] sm:$0xff]
        %v871 = vld [vmem:[#allocation10 + $0x18] sm:$0xff]
        %v872 = vld [vmem:[#allocation10 + $0x20] sm:$0xff]
        %v873 = vld [vmem:[#allocation10 + $0x28] sm:$0xff]
        %v874 = vld [vmem:[#allocation10 + $0x30] sm:$0xff]
        %v875 = vld [vmem:[#allocation10 + $0x38] sm:$0xff]
        %v876 = vld [vmem:[#allocation10 + $0x40] sm:$0xff]
        %v877 = vld [vmem:[#allocation10 + $0x48] sm:$0xff]
        %v878 = vld [vmem:[#allocation10 + $0x50] sm:$0xff]
        %v879 = vld [vmem:[#allocation10 + $0x58] sm:$0xff]
        %v880 = vld [vmem:[#allocation10 + $0x60] sm:$0xff]
        %v881 = vld [vmem:[#allocation10 + $0x68] sm:$0xff]
        %v882 = vld [vmem:[#allocation10 + $0x70] sm:$0xff]
        %v883 = vld [vmem:[#allocation10 + $0x78] sm:$0xff]
        %v884 = vld [vmem:[#allocation11] sm:$0x3]
        %v886 = vlaneseq
        %v887 = vshrl.u32 %v886, 7
        %v888 = vsub.s32 0, %v887
        %v889 = vrot.slane %v884, %v888
        %v890 = vlaneseq
        %v891 = vshrl.u32 %v890, 7
        %v892 = vsub.s32 1, %v891
        %v893 = vrot.slane %v884, %v892
        %v912 = vunpack.c.l.b16 %v868
        %v913 = vunpack.c.h.b16 %v868
        %v914 = vunpack.c.l.b16 %v869
        %v915 = vunpack.c.h.b16 %v869
        %v916 = vunpack.c.l.b16 %v870
        %v917 = vunpack.c.h.b16 %v870
        %v918 = vunpack.c.l.b16 %v871
        %v919 = vunpack.c.h.b16 %v871
        %v920 = vunpack.c.l.b16 %v872
        %v921 = vunpack.c.h.b16 %v872
        %v922 = vunpack.c.l.b16 %v873
        %v923 = vunpack.c.h.b16 %v873
        %v924 = vunpack.c.l.b16 %v874
        %v925 = vunpack.c.h.b16 %v874
        %v926 = vunpack.c.l.b16 %v875
        %v927 = vunpack.c.h.b16 %v875
        %v928 = vunpack.c.l.b16 %v876
        %v929 = vunpack.c.h.b16 %v876
        %v930 = vunpack.c.l.b16 %v877
        %v931 = vunpack.c.h.b16 %v877
        %v932 = vunpack.c.l.b16 %v878
        %v933 = vunpack.c.h.b16 %v878
        %v934 = vunpack.c.l.b16 %v879
        %v935 = vunpack.c.h.b16 %v879
        %v936 = vunpack.c.l.b16 %v880
        %v937 = vunpack.c.h.b16 %v880
        %v938 = vunpack.c.l.b16 %v881
        %v939 = vunpack.c.h.b16 %v881
        %v940 = vunpack.c.l.b16 %v882
        %v941 = vunpack.c.h.b16 %v882
        %v942 = vunpack.c.l.b16 %v883
        %v943 = vunpack.c.h.b16 %v883
        %v944 = vpack.c.b16 %v914, %v912
        %v945 = vpack.c.b16 %v915, %v913
        %v946 = vpack.c.b16 %v918, %v916
        %v947 = vpack.c.b16 %v919, %v917
        %v948 = vpack.c.b16 %v922, %v920
        %v949 = vpack.c.b16 %v923, %v921
        %v950 = vpack.c.b16 %v926, %v924
        %v951 = vpack.c.b16 %v927, %v925
        %v952 = vpack.c.b16 %v930, %v928
        %v953 = vpack.c.b16 %v931, %v929
        %v954 = vpack.c.b16 %v934, %v932
        %v955 = vpack.c.b16 %v935, %v933
        %v956 = vpack.c.b16 %v938, %v936
        %v957 = vpack.c.b16 %v939, %v937
        %v958 = vpack.c.b16 %v942, %v940
        %v959 = vpack.c.b16 %v943, %v941
        %976 = vmatprep.subr.bf16.mxu0 %v945
        %977 = vmatpush1.bf16.msra.mxu0 %v944
        %978 = vmatprep.subr.bf16.mxu0 %v947
        %979 = vmatpush1.bf16.msra.mxu0 %v946
        %980 = vmatprep.subr.bf16.mxu0 %v949
        %981 = vmatpush1.bf16.msra.mxu0 %v948
        %982 = vmatprep.subr.bf16.mxu0 %v951
        %983 = vmatpush1.bf16.msra.mxu0 %v950
        %984 = vmatprep.subr.bf16.mxu0 %v953
        %985 = vmatpush1.bf16.msra.mxu0 %v952
        %986 = vmatprep.subr.bf16.mxu0 %v955
        %987 = vmatpush1.bf16.msra.mxu0 %v954
        %988 = vmatprep.subr.bf16.mxu0 %v957
        %989 = vmatpush1.bf16.msra.mxu0 %v956
        %990 = vmatprep.subr.bf16.mxu0 %v959
        %991 = vmatpush1.bf16.msra.mxu0 %v958
        %992 = vmatprep.subr.bf16.mxu0 0
        %993 = vmatpush1.bf16.msra.mxu0 0
        %994 = vmatprep.subr.bf16.mxu0 0
        %995 = vmatpush1.bf16.msra.mxu0 0
        %996 = vmatprep.subr.bf16.mxu0 0
        %997 = vmatpush1.bf16.msra.mxu0 0
        %998 = vmatprep.subr.bf16.mxu0 0
        %999 = vmatpush1.bf16.msra.mxu0 0
        %1000 = vmatprep.subr.bf16.mxu0 0
        %1001 = vmatpush1.bf16.msra.mxu0 0
        %1002 = vmatprep.subr.bf16.mxu0 0
        %1003 = vmatpush1.bf16.msra.mxu0 0
        %1004 = vmatprep.subr.bf16.mxu0 0
        %1005 = vmatpush1.bf16.msra.mxu0 0
        %1006 = vmatprep.subr.bf16.mxu0 0
        %1007 = vmatpush1.bf16.msra.mxu0 0
        %1008 = vmatprep.mubr.bf16.mxu0 0
        %1009 = vmatmul.mubr.bf16.gmra.mrb[0].mxu0 %v565
        %v1010 = vpop.f32.mrb[0].mxu0
        %v1011 = vadd.f32 %v889, %v1010
        %v1012 = vpop.f32.mrb[0].mxu0
        %v1013 = vadd.f32 %v893, %v1012
        %v1014 = vpop.f32.mrb[0].mxu0
        %v1015 = vadd.f32 %v889, %v1014
        %v1016 = vpop.f32.mrb[0].mxu0
        %v1017 = vadd.f32 %v893, %v1016
        %1018 = vdwg.mxu0
        %v1019 = vld [vmem:[%s556] sm:$0x1]
        %v1020 = vpack.c.bf16 %v713, %v709
        %v1021 = vpack.c.bf16 %v864, %v860
        %v1022 = vpack.c.bf16 %v1015, %v1011
        %1023 = vmatprep.subr.bf16.mxu0 0
        %1024 = vmatpush1.bf16.xpose.msra.mxu0 %v1021
        %1025 = vmatprep.subr.bf16.mxu0 0
        %1026 = vmatpush1.bf16.xpose.msra.mxu0 0
        %1027 = vmatprep.subr.bf16.mxu0 0
        %1028 = vmatpush1.bf16.xpose.msra.mxu0 0
        %1029 = vmatprep.subr.bf16.mxu0 0
        %1030 = vmatpush1.bf16.xpose.msra.mxu0 0
        %1031 = vmatprep.subr.bf16.mxu0 0
        %1032 = vmatpush1.bf16.xpose.msra.mxu0 0
        %1033 = vmatprep.subr.bf16.mxu0 0
        %1034 = vmatpush1.bf16.xpose.msra.mxu0 0
        %1035 = vmatprep.subr.bf16.mxu0 0
        %1036 = vmatpush1.bf16.xpose.msra.mxu0 0
        %1037 = vmatprep.subr.bf16.mxu0 0
        %1038 = vmatpush1.bf16.xpose.msra.mxu0 0
        %1039 = vmatprep.subr.bf16.mxu0 0
        %1040 = vmatpush1.bf16.xpose.msra.mxu0 0
        %1041 = vmatprep.subr.bf16.mxu0 0
        %1042 = vmatpush1.bf16.xpose.msra.mxu0 0
        %1043 = vmatprep.subr.bf16.mxu0 0
        %1044 = vmatpush1.bf16.xpose.msra.mxu0 0
        %1045 = vmatprep.subr.bf16.mxu0 0
        %1046 = vmatpush1.bf16.xpose.msra.mxu0 0
        %1047 = vmatprep.subr.bf16.mxu0 0
        %1048 = vmatpush1.bf16.xpose.msra.mxu0 0
        %1049 = vmatprep.subr.bf16.mxu0 0
        %1050 = vmatpush1.bf16.xpose.msra.mxu0 0
        %1051 = vmatprep.subr.bf16.mxu0 0
        %1052 = vmatpush1.bf16.xpose.msra.mxu0 0
        %1053 = vmatprep.subr.bf16.mxu0 0
        %1054 = vmatpush1.bf16.xpose.msra.mxu0 0
        %1055 = vmatprep.mubr.bf16.mxu0 0
        %1056 = vmatmul.mubr.bf16.gmra.mrb[0].mxu0 %v1020
        %v1057 = vpop.f32.mrb[0].mxu0
        %v1058 = vadd.f32 0.0, %v1057
        %v1059 = vpop.f32.mrb[0].mxu0
        %v1060 = vpop.f32.mrb[0].mxu0
        %v1061 = vadd.f32 0.0, %v1060
        %v1062 = vpop.f32.mrb[0].mxu0
        %1063 = vdwg.mxu0
        %v1064 = vmul.f32 %v1058, 0.088388346
        %v1065 = vmul.f32 %v1061, 0.088388346
        %v1067 = vlaneseq
        %v1068 = vshrl.u32 %v1067, 7
        %v1069 = vsub.s32 0, %v1068
        %v1070 = vrot.slane %v1019, %v1069
        %v1072 = vadd.f32 %v1064, %v1070
        %v1073 = vadd.f32 %v1065, %v1070
        %vm1074 = vcmask 130048
        %v1075 = vsel %vm1074, %v1072, -inf
        %1076 = vmax.xlane.f32.xlu0 %v1075
        %v1077 = vpop.xlane.xlu0 %1076
        %v1078 = vsel %vm1074, %v1073, -inf
        %1079 = vmax.xlane.f32.xlu0 %v1078
        %v1080 = vpop.xlane.xlu0 %1079
        %v1081 = vsub.f32 %v1072, %v1077
        %v1082 = vsub.f32 %v1073, %v1080
        %v1083 = vmul.f32 %v1081, 1.442695
        %v1084 = vpow.pop %v1083
        %v1085 = vmul.f32 %v1082, 1.442695
        %v1086 = vpow.pop %v1085
        %v1087 = vsel %vm1074, %v1084, 0.0
        %1088 = vadd.xlane.f32.xlu0 %v1087
        %v1089 = vpop.xlane.xlu0 %1088
        %v1090 = vsel %vm1074, %v1086, 0.0
        %1091 = vadd.xlane.f32.xlu0 %v1090
        %v1092 = vpop.xlane.xlu0 %1091
        %v1093 = vpack.c.bf16 %v1086, %v1084
        %v1095 = vsel %vm1074, %v1093, 0
        %1097 = vmatprep.subr.bf16.mxu0 0
        %1098 = vmatpush1.bf16.msra.mxu0 %v1022
        %1099 = vmatprep.subr.bf16.mxu0 0
        %1100 = vmatpush1.bf16.msra.mxu0 0
        %1101 = vmatprep.subr.bf16.mxu0 0
        %1102 = vmatpush1.bf16.msra.mxu0 0
        %1103 = vmatprep.subr.bf16.mxu0 0
        %1104 = vmatpush1.bf16.msra.mxu0 0
        %1105 = vmatprep.subr.bf16.mxu0 0
        %1106 = vmatpush1.bf16.msra.mxu0 0
        %1107 = vmatprep.subr.bf16.mxu0 0
        %1108 = vmatpush1.bf16.msra.mxu0 0
        %1109 = vmatprep.subr.bf16.mxu0 0
        %1110 = vmatpush1.bf16.msra.mxu0 0
        %1111 = vmatprep.subr.bf16.mxu0 0
        %1112 = vmatpush1.bf16.msra.mxu0 0
        %1113 = vmatprep.subr.bf16.mxu0 0
        %1114 = vmatpush1.bf16.msra.mxu0 0
        %1115 = vmatprep.subr.bf16.mxu0 0
        %1116 = vmatpush1.bf16.msra.mxu0 0
        %1117 = vmatprep.subr.bf16.mxu0 0
        %1118 = vmatpush1.bf16.msra.mxu0 0
        %1119 = vmatprep.subr.bf16.mxu0 0
        %1120 = vmatpush1.bf16.msra.mxu0 0
        %1121 = vmatprep.subr.bf16.mxu0 0
        %1122 = vmatpush1.bf16.msra.mxu0 0
        %1123 = vmatprep.subr.bf16.mxu0 0
        %1124 = vmatpush1.bf16.msra.mxu0 0
        %1125 = vmatprep.subr.bf16.mxu0 0
        %1126 = vmatpush1.bf16.msra.mxu0 0
        %1127 = vmatprep.subr.bf16.mxu0 0
        %1128 = vmatpush1.bf16.msra.mxu0 0
        %1129 = vmatprep.mubr.bf16.mxu0 0
        %1130 = vmatmul.mubr.bf16.gmra.mrb[0].mxu0 %v1095
        %v1131 = vpop.f32.mrb[0].mxu0
        %v1132 = vadd.f32 0.0, %v1131
        %v1133 = vpop.f32.mrb[0].mxu0
        %v1134 = vpop.f32.mrb[0].mxu0
        %v1135 = vadd.f32 0.0, %v1134
        %v1136 = vpop.f32.mrb[0].mxu0
        %1137 = vdwg.mxu0
        %v1138 = vrcp.pop %v1089
        %v1139 = vrcp.pop %v1092
        %v1140 = vmul.f32 %v1132, %v1138
        %v1141 = vmul.f32 %v1135, %v1139
        %1142 = vst [vmem:[#allocation2] sm:$0xff] %v1140
        %1143 = vst [vmem:[#allocation2 + $0x10] sm:$0xff] %v1141
        %v1144 = vpack.c.bf16 %v715, %v711
        %v1145 = vpack.c.bf16 %v866, %v862
        %v1146 = vpack.c.bf16 %v1017, %v1013
        %1147 = vmatprep.subr.bf16.mxu0 0
        %1148 = vmatpush1.bf16.xpose.msra.mxu0 %v1145
        %1149 = vmatprep.subr.bf16.mxu0 0
        %1150 = vmatpush1.bf16.xpose.msra.mxu0 0
        %1151 = vmatprep.subr.bf16.mxu0 0
        %1152 = vmatpush1.bf16.xpose.msra.mxu0 0
        %1153 = vmatprep.subr.bf16.mxu0 0
        %1154 = vmatpush1.bf16.xpose.msra.mxu0 0
        %1155 = vmatprep.subr.bf16.mxu0 0
        %1156 = vmatpush1.bf16.xpose.msra.mxu0 0
        %1157 = vmatprep.subr.bf16.mxu0 0
        %1158 = vmatpush1.bf16.xpose.msra.mxu0 0
        %1159 = vmatprep.subr.bf16.mxu0 0
        %1160 = vmatpush1.bf16.xpose.msra.mxu0 0
        %1161 = vmatprep.subr.bf16.mxu0 0
        %1162 = vmatpush1.bf16.xpose.msra.mxu0 0
        %1163 = vmatprep.subr.bf16.mxu0 0
        %1164 = vmatpush1.bf16.xpose.msra.mxu0 0
        %1165 = vmatprep.subr.bf16.mxu0 0
        %1166 = vmatpush1.bf16.xpose.msra.mxu0 0
        %1167 = vmatprep.subr.bf16.mxu0 0
        %1168 = vmatpush1.bf16.xpose.msra.mxu0 0
        %1169 = vmatprep.subr.bf16.mxu0 0
        %1170 = vmatpush1.bf16.xpose.msra.mxu0 0
        %1171 = vmatprep.subr.bf16.mxu0 0
        %1172 = vmatpush1.bf16.xpose.msra.mxu0 0
        %1173 = vmatprep.subr.bf16.mxu0 0
        %1174 = vmatpush1.bf16.xpose.msra.mxu0 0
        %1175 = vmatprep.subr.bf16.mxu0 0
        %1176 = vmatpush1.bf16.xpose.msra.mxu0 0
        %1177 = vmatprep.subr.bf16.mxu0 0
        %1178 = vmatpush1.bf16.xpose.msra.mxu0 0
        %1179 = vmatprep.mubr.bf16.mxu0 0
        %1180 = vmatmul.mubr.bf16.gmra.mrb[0].mxu0 %v1144
        %v1181 = vpop.f32.mrb[0].mxu0
        %v1182 = vadd.f32 0.0, %v1181
        %v1183 = vpop.f32.mrb[0].mxu0
        %v1184 = vpop.f32.mrb[0].mxu0
        %v1185 = vadd.f32 0.0, %v1184
        %v1186 = vpop.f32.mrb[0].mxu0
        %1187 = vdwg.mxu0
        %v1188 = vmul.f32 %v1182, 0.088388346
        %v1189 = vmul.f32 %v1185, 0.088388346
        %v1190 = vadd.f32 %v1188, %v1070
        %v1191 = vadd.f32 %v1189, %v1070
        %v1192 = vsel %vm1074, %v1190, -inf
        %1193 = vmax.xlane.f32.xlu0 %v1192
        %v1194 = vpop.xlane.xlu0 %1193
        %v1195 = vsel %vm1074, %v1191, -inf
        %1196 = vmax.xlane.f32.xlu0 %v1195
        %v1197 = vpop.xlane.xlu0 %1196
        %v1198 = vsub.f32 %v1190, %v1194
        %v1199 = vsub.f32 %v1191, %v1197
        %v1200 = vmul.f32 %v1198, 1.442695
        %v1201 = vpow.pop %v1200
        %v1202 = vmul.f32 %v1199, 1.442695
        %v1203 = vpow.pop %v1202
        %v1204 = vsel %vm1074, %v1201, 0.0
        %1205 = vadd.xlane.f32.xlu0 %v1204
        %v1206 = vpop.xlane.xlu0 %1205
        %v1207 = vsel %vm1074, %v1203, 0.0
        %1208 = vadd.xlane.f32.xlu0 %v1207
        %v1209 = vpop.xlane.xlu0 %1208
        %v1210 = vpack.c.bf16 %v1203, %v1201
        %v1212 = vsel %vm1074, %v1210, 0
        %1214 = vmatprep.subr.bf16.mxu0 0
        %1215 = vmatpush1.bf16.msra.mxu0 %v1146
        %1216 = vmatprep.subr.bf16.mxu0 0
        %1217 = vmatpush1.bf16.msra.mxu0 0
        %1218 = vmatprep.subr.bf16.mxu0 0
        %1219 = vmatpush1.bf16.msra.mxu0 0
        %1220 = vmatprep.subr.bf16.mxu0 0
        %1221 = vmatpush1.bf16.msra.mxu0 0
        %1222 = vmatprep.subr.bf16.mxu0 0
        %1223 = vmatpush1.bf16.msra.mxu0 0
        %1224 = vmatprep.subr.bf16.mxu0 0
        %1225 = vmatpush1.bf16.msra.mxu0 0
        %1226 = vmatprep.subr.bf16.mxu0 0
        %1227 = vmatpush1.bf16.msra.mxu0 0
        %1228 = vmatprep.subr.bf16.mxu0 0
        %1229 = vmatpush1.bf16.msra.mxu0 0
        %1230 = vmatprep.subr.bf16.mxu0 0
        %1231 = vmatpush1.bf16.msra.mxu0 0
        %1232 = vmatprep.subr.bf16.mxu0 0
        %1233 = vmatpush1.bf16.msra.mxu0 0
        %1234 = vmatprep.subr.bf16.mxu0 0
        %1235 = vmatpush1.bf16.msra.mxu0 0
        %1236 = vmatprep.subr.bf16.mxu0 0
        %1237 = vmatpush1.bf16.msra.mxu0 0
        %1238 = vmatprep.subr.bf16.mxu0 0
        %1239 = vmatpush1.bf16.msra.mxu0 0
        %1240 = vmatprep.subr.bf16.mxu0 0
        %1241 = vmatpush1.bf16.msra.mxu0 0
        %1242 = vmatprep.subr.bf16.mxu0 0
        %1243 = vmatpush1.bf16.msra.mxu0 0
        %1244 = vmatprep.subr.bf16.mxu0 0
        %1245 = vmatpush1.bf16.msra.mxu0 0
        %1246 = vmatprep.mubr.bf16.mxu0 0
        %1247 = vmatmul.mubr.bf16.gmra.mrb[0].mxu0 %v1212
        %v1248 = vpop.f32.mrb[0].mxu0
        %v1249 = vadd.f32 0.0, %v1248
        %v1250 = vpop.f32.mrb[0].mxu0
        %v1251 = vpop.f32.mrb[0].mxu0
        %v1252 = vadd.f32 0.0, %v1251
        %v1253 = vpop.f32.mrb[0].mxu0
        %1254 = vdwg.mxu0
        %v1255 = vrcp.pop %v1206
        %v1256 = vrcp.pop %v1209
        %v1257 = vmul.f32 %v1249, %v1255
        %v1258 = vmul.f32 %v1252, %v1256
        %1259 = vst [vmem:[#allocation2 + $0x8] sm:$0xff] %v1257
        %1260 = vst [vmem:[#allocation2 + $0x18] sm:$0xff] %v1258
        %v1261 = vld [vmem:[#allocation2] sm:$0xff]
        %v1262 = vld [vmem:[#allocation2 + $0x8] sm:$0xff]
        %v1263 = vld [vmem:[#allocation2 + $0x10] sm:$0xff]
        %v1264 = vld [vmem:[#allocation2 + $0x18] sm:$0xff]
        %v1265 = vpack.c.bf16 %v1263, %v1261
        %v1266 = vpack.c.bf16 %v1264, %v1262
        %v1267 = vld [vmem:[#allocation13] sm:$0xf]
        %v1268 = vld [vmem:[#allocation13 + $0x4] sm:$0xf]
        %v1269 = vld [vmem:[#allocation13 + $0x8] sm:$0xf]
        %v1270 = vld [vmem:[#allocation13 + $0xc] sm:$0xf]
        %v1271 = vld [vmem:[#allocation13 + $0x10] sm:$0xf]
        %v1272 = vld [vmem:[#allocation13 + $0x14] sm:$0xf]
        %v1273 = vld [vmem:[#allocation13 + $0x18] sm:$0xf]
        %v1274 = vld [vmem:[#allocation13 + $0x1c] sm:$0xf]
        %v1275 = vld [vmem:[#allocation13 + $0x20] sm:$0xf]
        %v1276 = vld [vmem:[#allocation13 + $0x24] sm:$0xf]
        %v1277 = vld [vmem:[#allocation13 + $0x28] sm:$0xf]
        %v1278 = vld [vmem:[#allocation13 + $0x2c] sm:$0xf]
        %v1279 = vld [vmem:[#allocation13 + $0x30] sm:$0xf]
        %v1280 = vld [vmem:[#allocation13 + $0x34] sm:$0xf]
        %v1281 = vld [vmem:[#allocation13 + $0x38] sm:$0xf]
        %v1282 = vld [vmem:[#allocation13 + $0x3c] sm:$0xf]
        %v1283 = vld [vmem:[#allocation13 + $0x40] sm:$0xf]
        %v1284 = vld [vmem:[#allocation13 + $0x44] sm:$0xf]
        %v1285 = vld [vmem:[#allocation13 + $0x48] sm:$0xf]
        %v1286 = vld [vmem:[#allocation13 + $0x4c] sm:$0xf]
        %v1287 = vld [vmem:[#allocation13 + $0x50] sm:$0xf]
        %v1288 = vld [vmem:[#allocation13 + $0x54] sm:$0xf]
        %v1289 = vld [vmem:[#allocation13 + $0x58] sm:$0xf]
        %v1290 = vld [vmem:[#allocation13 + $0x5c] sm:$0xf]
        %v1291 = vld [vmem:[#allocation13 + $0x60] sm:$0xf]
        %v1292 = vld [vmem:[#allocation13 + $0x64] sm:$0xf]
        %v1293 = vld [vmem:[#allocation13 + $0x68] sm:$0xf]
        %v1294 = vld [vmem:[#allocation13 + $0x6c] sm:$0xf]
        %v1295 = vld [vmem:[#allocation13 + $0x70] sm:$0xf]
        %v1296 = vld [vmem:[#allocation13 + $0x74] sm:$0xf]
        %v1297 = vld [vmem:[#allocation13 + $0x78] sm:$0xf]
        %v1298 = vld [vmem:[#allocation13 + $0x7c] sm:$0xf]
        %v1299 = vld [vmem:[#allocation14] sm:$0x1]
        %v1301 = vlaneseq
        %v1302 = vshrl.u32 %v1301, 7
        %v1303 = vsub.s32 0, %v1302
        %v1304 = vrot.slane %v1299, %v1303
        %v1338 = vunpack.c.l.b16 %v1267
        %v1339 = vunpack.c.l.b16 %v1268
        %v1340 = vunpack.c.l.b16 %v1269
        %v1341 = vunpack.c.l.b16 %v1270
        %v1342 = vunpack.c.l.b16 %v1271
        %v1343 = vunpack.c.l.b16 %v1272
        %v1344 = vunpack.c.l.b16 %v1273
        %v1345 = vunpack.c.l.b16 %v1274
        %v1346 = vunpack.c.l.b16 %v1275
        %v1347 = vunpack.c.l.b16 %v1276
        %v1348 = vunpack.c.l.b16 %v1277
        %v1349 = vunpack.c.l.b16 %v1278
        %v1350 = vunpack.c.l.b16 %v1279
        %v1351 = vunpack.c.l.b16 %v1280
        %v1352 = vunpack.c.l.b16 %v1281
        %v1353 = vunpack.c.l.b16 %v1282
        %v1354 = vunpack.c.l.b16 %v1283
        %v1355 = vunpack.c.l.b16 %v1284
        %v1356 = vunpack.c.l.b16 %v1285
        %v1357 = vunpack.c.l.b16 %v1286
        %v1358 = vunpack.c.l.b16 %v1287
        %v1359 = vunpack.c.l.b16 %v1288
        %v1360 = vunpack.c.l.b16 %v1289
        %v1361 = vunpack.c.l.b16 %v1290
        %v1362 = vunpack.c.l.b16 %v1291
        %v1363 = vunpack.c.l.b16 %v1292
        %v1364 = vunpack.c.l.b16 %v1293
        %v1365 = vunpack.c.l.b16 %v1294
        %v1366 = vunpack.c.l.b16 %v1295
        %v1367 = vunpack.c.l.b16 %v1296
        %v1368 = vunpack.c.l.b16 %v1297
        %v1369 = vunpack.c.l.b16 %v1298
        %v1370 = vpack.c.b16 %v1339, %v1338
        %v1371 = vpack.c.b16 %v1341, %v1340
        %v1372 = vpack.c.b16 %v1343, %v1342
        %v1373 = vpack.c.b16 %v1345, %v1344
        %v1374 = vpack.c.b16 %v1347, %v1346
        %v1375 = vpack.c.b16 %v1349, %v1348
        %v1376 = vpack.c.b16 %v1351, %v1350
        %v1377 = vpack.c.b16 %v1353, %v1352
        %v1378 = vpack.c.b16 %v1355, %v1354
        %v1379 = vpack.c.b16 %v1357, %v1356
        %v1380 = vpack.c.b16 %v1359, %v1358
        %v1381 = vpack.c.b16 %v1361, %v1360
        %v1382 = vpack.c.b16 %v1363, %v1362
        %v1383 = vpack.c.b16 %v1365, %v1364
        %v1384 = vpack.c.b16 %v1367, %v1366
        %v1385 = vpack.c.b16 %v1369, %v1368
        %1402 = vmatprep.subr.bf16.mxu0 0
        %1403 = vmatpush1.bf16.msra.mxu0 %v1370
        %1404 = vmatprep.subr.bf16.mxu0 0
        %1405 = vmatpush1.bf16.msra.mxu0 %v1371
        %1406 = vmatprep.subr.bf16.mxu0 0
        %1407 = vmatpush1.bf16.msra.mxu0 %v1372
        %1408 = vmatprep.subr.bf16.mxu0 0
        %1409 = vmatpush1.bf16.msra.mxu0 %v1373
        %1410 = vmatprep.subr.bf16.mxu0 0
        %1411 = vmatpush1.bf16.msra.mxu0 %v1374
        %1412 = vmatprep.subr.bf16.mxu0 0
        %1413 = vmatpush1.bf16.msra.mxu0 %v1375
        %1414 = vmatprep.subr.bf16.mxu0 0
        %1415 = vmatpush1.bf16.msra.mxu0 %v1376
        %1416 = vmatprep.subr.bf16.mxu0 0
        %1417 = vmatpush1.bf16.msra.mxu0 %v1377
        %1418 = vmatprep.subr.bf16.mxu0 0
        %1419 = vmatpush1.bf16.msra.mxu0 %v1378
        %1420 = vmatprep.subr.bf16.mxu0 0
        %1421 = vmatpush1.bf16.msra.mxu0 %v1379
        %1422 = vmatprep.subr.bf16.mxu0 0
        %1423 = vmatpush1.bf16.msra.mxu0 %v1380
        %1424 = vmatprep.subr.bf16.mxu0 0
        %1425 = vmatpush1.bf16.msra.mxu0 %v1381
        %1426 = vmatprep.subr.bf16.mxu0 0
        %1427 = vmatpush1.bf16.msra.mxu0 %v1382
        %1428 = vmatprep.subr.bf16.mxu0 0
        %1429 = vmatpush1.bf16.msra.mxu0 %v1383
        %1430 = vmatprep.subr.bf16.mxu0 0
        %1431 = vmatpush1.bf16.msra.mxu0 %v1384
        %1432 = vmatprep.subr.bf16.mxu0 0
        %1433 = vmatpush1.bf16.msra.mxu0 %v1385
        %1434 = vmatprep.mubr.bf16.mxu0 %v1266
        %1435 = vmatmul.mubr.bf16.gmra.mrb[0].mxu0 %v1265
        %v1436 = vpop.f32.mrb[0].mxu0
        %v1437 = vadd.f32 %v1304, %v1436
        %v1438 = vpop.f32.mrb[0].mxu0
        %v1439 = vpop.f32.mrb[0].mxu0
        %v1440 = vadd.f32 %v1304, %v1439
        %v1441 = vpop.f32.mrb[0].mxu0
        %1442 = vdwg.mxu0
        %v1443 = vadd.f32 %v563, %v1437
        %v1444 = vadd.f32 %v564, %v1440
        %1445 = vadd.xlane.f32.xlu0 %v1443
        %v1446 = vpop.xlane.xlu0 %1445
        %1447 = vadd.xlane.f32.xlu0 %v1444
        %v1448 = vpop.xlane.xlu0 %1447
        %v1449 = vrcp.pop 128.0
        %v1450 = vmul.f32 %v1446, %v1449
        %v1451 = vmul.f32 %v1448, %v1449
        %v1452 = vsub.f32 %v1443, %v1450
        %v1453 = vsub.f32 %v1444, %v1451
        %v1454 = vmul.f32 %v1452, %v1452
        %v1455 = vmul.f32 %v1453, %v1453
        %1456 = vadd.xlane.f32.xlu0 %v1454
        %v1457 = vpop.xlane.xlu0 %1456
        %1458 = vadd.xlane.f32.xlu0 %v1455
        %v1459 = vpop.xlane.xlu0 %1458
        %v1460 = vmul.f32 %v1457, %v1449
        %v1461 = vmul.f32 %v1459, %v1449
        %v1462 = vadd.f32 %v1460, 1e-05
        %v1463 = vadd.f32 %v1461, 1e-05
        %v1464 = vrsqrt.pop %v1462
        %v1465 = vrsqrt.pop %v1463
        %v1466 = vmul.f32 %v1452, %v1464
        %v1467 = vmul.f32 %v1453, %v1465
        %v1468 = vld [vmem:[#allocation16] sm:$0x1]
        %v1470 = vlaneseq
        %v1471 = vshrl.u32 %v1470, 7
        %v1472 = vsub.s32 0, %v1471
        %v1473 = vrot.slane %v1468, %v1472
        %v1475 = vmul.f32 %v1466, %v1473
        %v1476 = vmul.f32 %v1467, %v1473
        %v1477 = vld [vmem:[#allocation17] sm:$0x1]
        %v1479 = vlaneseq
        %v1480 = vshrl.u32 %v1479, 7
        %v1481 = vsub.s32 0, %v1480
        %v1482 = vrot.slane %v1477, %v1481
        %v1484 = vadd.f32 %v1475, %v1482
        %v1485 = vadd.f32 %v1476, %v1482
        %1486 = vst [vmem:[%s561] sm:$0xff] %v1484
        %1487 = vst [vmem:[%s561 + $0x8] sm:$0xff] %v1485
        %p1488 = scmp.lt.s32.totalorder %s29, 1
        %s1489 = scalar_select %p1488, %s29, 1
        %s1490 = smul.addr %s1489, 2
        %s1491 = smul.addr %s1490, 8
        %s1492 = scalar_lea.vmem %s12, %s1491
        // Predicated region
        $region109: #{encoder_forward.4} parent=67 // pred_check
          %p1493 = pneg %p309
        $region110: #{encoder_forward.4} parent=67 // pred_check_branch
          %1495 = sbr.rel (%p1493) target = $region112
        $region111: #{encoder_forward.4} parent=67 // pred_region
          _
        $region112: #{encoder_forward.4} parent=67 // pred_fallthru
          _
      $region68: #{encoder_forward.4} parent=5 // pred_fallthru
        _
      %p1496 = scmp.le.s32.totalorder 2, %s24
      // Predicated region
      $region113: #{encoder_forward.4} parent=5 // pred_check
        %p1497 = pneg %p1496
      $region114: #{encoder_forward.4} parent=5 // pred_check_branch
        %1499 = sbr.rel (%p1497) target = $region116
      $region115: #{encoder_forward.4} parent=5 // pred_region
        %s1500 = ssub.s32 %s24, 2
        // Predicated region
        $region117: #{encoder_forward.4} parent=115 // pred_check
          %p1501 = pneg %p315
        $region118: #{encoder_forward.4} parent=115 // pred_check_branch
          %1503 = sbr.rel (%p1501) target = $region120
        $region119: #{encoder_forward.4} parent=115 // pred_region
          %p1504 = scmp.lt.s32.totalorder %s30, 1
          %s1505 = scalar_select %p1504, %s30, 1
          %s1506 = smul.addr %s1505, 2
          %s1507 = smul.addr %s1506, 8
          %s1508 = scalar_lea.vmem %s12, %s1507
        $region120: #{encoder_forward.4} parent=115 // pred_fallthru
          _
      $region116: #{encoder_forward.4} parent=5 // pred_fallthru
        _
    $region6: #{encoder_forward.4} parent=1 // loop_footer
      %s28 = sadd.s32 1, %s24
    $region7: #{encoder_forward.4} parent=1 // loop_footer_branch
      %23 = sbr.rel target = $region3
    $region8: #{encoder_forward.4} parent=1 // loop_exit
      _
    %1509 = vsyncpa [#allocation4], 1
    %s1510 = scalar_lea.sflag [#allocation4], 1
    %1511 = vsyncpa %s1510, 1
    %1512 = vsyncpa [#allocation6], 1
    %1513 = vsyncpa [#allocation9], 1
    %1514 = vsyncpa [#allocation12], 1
    %1515 = vsyncpa [#allocation15], 1
    %1516 = vsyncpa [#allocation18], 1

</llo_original>
